<compile_context>
chip_gen: v7x
topology: tpu7x:2x2x1
jax: 0.10.0
libtpu: 0.0.40
codegen_flags: <defaults>
</compile_context>

<pallas_src>
import jax
import jax.numpy as jnp
from jax.experimental import pallas as pl
from jax.experimental.pallas import tpu as pltpu


# ------------------------------ Pallas kernel ------------------------------ #

def _reflect_pad_into(pad_ref, val, H, W):
    """Write `val` (N, H, W, C) into pad_ref (N, H+2, W+2, C) with ReflectionPad2d(1)."""
    pad_ref[:, 1:H + 1, 1:W + 1, :] = val                          # interior
    pad_ref[:, 1:H + 1, 0:1, :] = val[:, :, 1:2, :]                # left  halo <- col 1
    pad_ref[:, 1:H + 1, W + 1:W + 2, :] = val[:, :, W - 2:W - 1, :]  # right halo <- col W-2
    # Top/bottom halos re-read rows just written (valid under same-ref program order),
    # which also fills the corners with the correct reflected values.
    pad_ref[:, 0:1, :, :] = pad_ref[:, 2:3, :, :]                  # top    row <- padded row 2
    pad_ref[:, H + 1:H + 2, :, :] = pad_ref[:, H - 1:H, :, :]      # bottom row <- padded row H-1


def _tap_patch(pad_ref, taps, H, W, M):
    """Gather the given 3x3 taps (k = kh*3 + kw), concat channel-wise -> (M, len(taps)*C) bf16."""
    parts = []
    for k in taps:
        dh, dw = k // 3, k % 3
        parts.append(pad_ref[:, dh:dh + H, dw:dw + W, :])          # slice the ref directly
    p = parts[0] if len(parts) == 1 else jnp.concatenate(parts, axis=-1)
    return p.reshape(M, -1).astype(jnp.bfloat16)


def _flow_predictor_kernel(x_ref, w1p_ref, w1l_ref, sh1_ref, w2p_ref, w2l_ref, b2_ref,
                           o_ref, xpad_ref, ypad_ref):
    """Fused FlowPredictor forward for the whole (small) batch in one step.

    x_ref:   (N, H, W, Cin)        unpadded input
    w1p_ref: (4, 2*Cin, C1)  bf16  conv1 weights, taps 0..7 pair-packed along K (BN scale folded)
    w1l_ref: (Cin, C1)       bf16  conv1 weights, tap 8
    sh1_ref: (1, C1)               folded BN shift  (beta - mean*s + s*bias1)
    w2p_ref: (2, 4*C1, Cout) bf16  conv2 weights, taps 0..7 quad-packed along K
    w2l_ref: (C1, Cout)      bf16  conv2 weights, tap 8
    b2_ref:  (Cout, 1)             conv2 bias
    o_ref:   (Cout, N*H*W)         lane-dense output (NCHW flattened, batch-major in lanes)
    xpad_ref:(N, H+2, W+2, Cin)    VMEM scratch (reflect-padded input)
    ypad_ref:(N, H+2, W+2, C1)     VMEM scratch (reflect-padded intermediate)
    """
    N, Hp, Wp, _ = xpad_ref.shape
    H, W = Hp - 2, Wp - 2
    C1 = ypad_ref.shape[-1]
    Cout = o_ref.shape[0]
    M = N * H * W

    # --- SameBlock2d: reflect-pad -> conv3x3 (BN scale folded into weights) -> +shift -> ReLU
    _reflect_pad_into(xpad_ref, x_ref[...], H, W)
    acc1 = jnp.zeros((M, C1), jnp.float32)
    for g in range(4):                                   # pair-packed taps: K = 2*Cin
        patch = _tap_patch(xpad_ref, (2 * g, 2 * g + 1), H, W, M)
        acc1 = acc1 + jnp.dot(patch, w1p_ref[g], preferred_element_type=jnp.float32)
    patch = _tap_patch(xpad_ref, (8,), H, W, M)          # leftover tap: K = Cin
    acc1 = acc1 + jnp.dot(patch, w1l_ref[...], preferred_element_type=jnp.float32)
    y = jnp.maximum(acc1 + sh1_ref[...], 0.0)            # (M, C1) f32

    # --- ReflectionPad2d(1) -> Conv2d(C1 -> Cout), computed transposed for a lane-dense output.
    _reflect_pad_into(ypad_ref, y.reshape(N, H, W, C1), H, W)
    dnums = (((0,), (1,)), ((), ()))                     # contract K: (K, Cout) x (M, K) -> (Cout, M)
    acc2 = jnp.zeros((Cout, M), jnp.float32)
    for g in range(2):                                   # quad-packed taps: K = 4*C1
        patch = _tap_patch(ypad_ref, (4 * g, 4 * g + 1, 4 * g + 2, 4 * g + 3), H, W, M)
        acc2 = acc2 + jax.lax.dot_general(w2p_ref[g], patch, dimension_numbers=dnums,
                                          preferred_element_type=jnp.float32)
    patch = _tap_patch(ypad_ref, (8,), H, W, M)          # leftover tap: K = C1
    acc2 = acc2 + jax.lax.dot_general(w2l_ref[...], patch, dimension_numbers=dnums,
                                      preferred_element_type=jnp.float32)

    o_ref[...] = (acc2 + b2_ref[...]).astype(o_ref.dtype)


# ------------------------------ host wrappers ------------------------------ #

def _flow_predictor_pallas(x_nhwc, w1p, w1l, sh1, w2p, w2l, b2):
    N, H, W, Cin = x_nhwc.shape
    C1 = w1l.shape[-1]
    Cout = w2l.shape[-1]
    M = N * H * W

    flops = 2 * M * 9 * (Cin * C1 + C1 * Cout)
    bytes_accessed = (x_nhwc.size * 4
                      + (w1p.size + w1l.size + w2p.size + w2l.size) * 2
                      + (sh1.size + b2.size) * 4
                      + Cout * M * 4)

    return pl.pallas_call(
        _flow_predictor_kernel,
        out_shape=jax.ShapeDtypeStruct((Cout, M), jnp.float32),
        grid=(1,),                                       # batch folded into M: one step
        in_specs=[
            pl.BlockSpec((N, H, W, Cin), lambda i: (0, 0, 0, 0)),
            pl.BlockSpec(w1p.shape, lambda i: (0, 0, 0)),
            pl.BlockSpec(w1l.shape, lambda i: (0, 0)),
            pl.BlockSpec(sh1.shape, lambda i: (0, 0)),
            pl.BlockSpec(w2p.shape, lambda i: (0, 0, 0)),
            pl.BlockSpec(w2l.shape, lambda i: (0, 0)),
            pl.BlockSpec(b2.shape, lambda i: (0, 0)),
        ],
        out_specs=pl.BlockSpec((Cout, M), lambda i: (0, 0)),
        scratch_shapes=[
            pltpu.VMEM((N, H + 2, W + 2, Cin), jnp.float32),
            pltpu.VMEM((N, H + 2, W + 2, C1), jnp.float32),
        ],
        compiler_params=pltpu.CompilerParams(
            dimension_semantics=("arbitrary",),
            vmem_limit_bytes=32 * 1024 * 1024,           # usage here is well under 1 MiB
        ),
        cost_estimate=pl.CostEstimate(flops=flops, transcendentals=0,
                                      bytes_accessed=bytes_accessed),
    )(x_nhwc, w1p, w1l, sh1, w2p, w2l, b2)


def init_flow_predictor_params(key, input_channel=64, output_channel=2):
    """Deterministic synthetic parameters matching FlowPredictor.__init__ shapes."""
    c1 = 32
    ks = jax.random.split(key, 8)
    w1 = 0.05 * jax.random.normal(ks[0], (c1, input_channel, 3, 3), jnp.float32)
    b1 = 0.05 * jax.random.normal(ks[1], (c1,), jnp.float32)
    gamma = 1.0 + 0.1 * jax.random.normal(ks[2], (c1,), jnp.float32)
    beta = 0.1 * jax.random.normal(ks[3], (c1,), jnp.float32)
    rmean = 0.1 * jax.random.normal(ks[4], (c1,), jnp.float32)
    rvar = 0.5 + jax.random.uniform(ks[5], (c1,), jnp.float32)
    w2 = 0.05 * jax.random.normal(ks[6], (output_channel, c1, 3, 3), jnp.float32)
    b2 = 0.05 * jax.random.normal(ks[7], (output_channel,), jnp.float32)

    def repack(w):  # (Cout, Cin, 3, 3) -> (9, Cin, Cout), k = kh*3 + kw
        return jnp.transpose(w, (2, 3, 1, 0)).reshape(9, w.shape[1], w.shape[0])

    return dict(w1=repack(w1), b1=b1, gamma=gamma, beta=beta, rmean=rmean,
                rvar=rvar, w2=repack(w2), b2=b2)


def flow_predictor_forward(params, x_nchw):
    """Forward pass of FlowPredictor. Input/output are NCHW like PyTorch."""
    x = jnp.transpose(x_nchw, (0, 2, 3, 1)).astype(jnp.float32)   # NCHW -> NHWC (lane = C)
    N, H, W, _ = x.shape

    eps = 1e-5
    sc1 = params["gamma"] * jax.lax.rsqrt(params["rvar"] + eps)           # (C1,)
    # conv1 bias + BN fold:  BN(conv + b1) == conv(x, w1*s) + (s*b1 + beta - mean*s)
    sh1 = params["beta"] - params["rmean"] * sc1 + sc1 * params["b1"]     # (C1,)
    w1 = params["w1"] * sc1[None, None, :]                                # scale folded into weights
    w2 = params["w2"]
    C1 = w1.shape[-1]
    Cout = w2.shape[-1]

    # K-pack taps so the MXU contraction is ~128 wide (pairs of Cin=64, quads of C1=32), bf16.
    w1p = jnp.stack([jnp.concatenate([w1[2 * g], w1[2 * g + 1]], axis=0)
                     for g in range(4)], axis=0).astype(jnp.bfloat16)     # (4, 2*Cin, C1)
    w1l = w1[8].astype(jnp.bfloat16)                                      # (Cin, C1)
    w2p = jnp.stack([jnp.concatenate([w2[4 * g + t] for t in range(4)], axis=0)
                     for g in range(2)], axis=0).astype(jnp.bfloat16)     # (2, 4*C1, Cout)
    w2l = w2[8].astype(jnp.bfloat16)                                      # (C1, Cout)

    out = _flow_predictor_pallas(
        x, w1p, w1l, sh1.reshape(1, C1).astype(jnp.float32),
        w2p, w2l, params["b2"].reshape(Cout, 1).astype(jnp.float32))      # (Cout, N*H*W)

    # Lane-dense kernel output -> NCHW; touches only N*Cout*H*W*4 bytes (4 KB here).
    return jnp.transpose(out.reshape(Cout, N, H, W), (1, 0, 2, 3))


def _reference_forward(params, x_nchw):
    """Pure-JAX (XLA) reference of the same FlowPredictor forward, for validation."""
    x = jnp.transpose(x_nchw, (0, 2, 3, 1)).astype(jnp.float32)

    def conv3x3_reflect(z, w9, b):
        w = w9.reshape(3, 3, w9.shape[1], w9.shape[2])            # HWIO
        zp = jnp.pad(z, ((0, 0), (1, 1), (1, 1), (0, 0)), mode="reflect")
        y = jax.lax.conv_general_dilated(
            zp, w, (1, 1), "VALID",
            dimension_numbers=("NHWC", "HWIO", "NHWC"),
            precision=jax.lax.Precision.HIGHEST)
        return y + b

    eps = 1e-5
    scale = params["gamma"] * jax.lax.rsqrt(params["rvar"] + eps)
    shift = params["beta"] - params["rmean"] * scale
    y = jnp.maximum(conv3x3_reflect(x, params["w1"], params["b1"]) * scale + shift, 0.0)
    out = conv3x3_reflect(y, params["w2"], params["b2"])
    return jnp.transpose(out, (0, 3, 1, 2))


if __name__ == "__main__":
    key = jax.random.PRNGKey(0)
    pkey, xkey = jax.random.split(key)
    params = init_flow_predictor_params(pkey, input_channel=64, output_channel=2)
    x = jax.random.normal(xkey, (2, 64, 16, 16), jnp.float32)      # NCHW like PyTorch

    out = jax.block_until_ready(jax.jit(flow_predictor_forward)(params, x))
    assert out.shape == (2, 2, 16, 16), out.shape
    assert bool(jnp.all(jnp.isfinite(out)))

    ref = jax.block_until_ready(jax.jit(_reference_forward)(params, x))
    assert bool(jnp.allclose(out, ref, rtol=2e-2, atol=2e-2)), \
        float(jnp.max(jnp.abs(out - ref)))
    print("KERNEL_OK")
</pallas_src>

<mosaic_0001>
module attributes {stable_mosaic.version = 11 : i64} {
  func.func @_flow_predictor_kernel(%arg0: i32, %arg1: memref<2x16x16x64xf32, #tpu.memory_space<vmem>>, %arg2: memref<4x128x32xbf16, #tpu.memory_space<vmem>>, %arg3: memref<64x32xbf16, #tpu.memory_space<vmem>>, %arg4: memref<1x32xf32, #tpu.memory_space<vmem>>, %arg5: memref<2x128x2xbf16, #tpu.memory_space<vmem>>, %arg6: memref<32x2xbf16, #tpu.memory_space<vmem>>, %arg7: memref<2x1xf32, #tpu.memory_space<vmem>>, %arg8: memref<2x512xf32, #tpu.memory_space<vmem>>, %arg9: memref<2x18x18x64xf32, #tpu.memory_space<vmem>>, %arg10: memref<2x18x18x32xf32, #tpu.memory_space<vmem>>) attributes {dimension_semantics = [#tpu.dimension_semantics<arbitrary>], iteration_bounds = array<i64: 1>, scalar_prefetch = 0 : i64, scratch_operands = 2 : i64, tpu.core_type = #tpu.core_type<tc>, window_params = [{pipeline_mode = #tpu.pipeline_mode<synchronous>, transform_indices = @transform_0, window_bounds = array<i64: 2, 16, 16, 64>}, {pipeline_mode = #tpu.pipeline_mode<synchronous>, transform_indices = @transform_1, window_bounds = array<i64: 4, 128, 32>}, {pipeline_mode = #tpu.pipeline_mode<synchronous>, transform_indices = @transform_2, window_bounds = array<i64: 64, 32>}, {pipeline_mode = #tpu.pipeline_mode<synchronous>, transform_indices = @transform_3, window_bounds = array<i64: 1, 32>}, {pipeline_mode = #tpu.pipeline_mode<synchronous>, transform_indices = @transform_4, window_bounds = array<i64: 2, 128, 2>}, {pipeline_mode = #tpu.pipeline_mode<synchronous>, transform_indices = @transform_5, window_bounds = array<i64: 32, 2>}, {pipeline_mode = #tpu.pipeline_mode<synchronous>, transform_indices = @transform_6, window_bounds = array<i64: 2, 1>}, {pipeline_mode = #tpu.pipeline_mode<synchronous>, transform_indices = @transform_7, window_bounds = array<i64: 2, 512>}]} {
    %c0 = arith.constant 0 : index
    %c0_0 = arith.constant 0 : index
    %c0_1 = arith.constant 0 : index
    %c0_2 = arith.constant 0 : index
    %0 = vector.load %arg1[%c0, %c0_0, %c0_1, %c0_2] : memref<2x16x16x64xf32, #tpu.memory_space<vmem>>, vector<2x16x16x64xf32>
    %c0_3 = arith.constant 0 : index
    %c1 = arith.constant 1 : index
    %c1_4 = arith.constant 1 : index
    %c0_5 = arith.constant 0 : index
    %1 = vector.load %arg9[%c0_3, %c1, %c1_4, %c0_5] : memref<2x18x18x64xf32, #tpu.memory_space<vmem>>, vector<2x16x16x64xf32>
    tpu.vector_store %arg9[%c0_3, %c1, %c1_4, %c0_5], %0 {strides = array<i32>} : memref<2x18x18x64xf32, #tpu.memory_space<vmem>>, vector<2x16x16x64xf32>,
    %2 = vector.extract_strided_slice %0 {offsets = [0, 0, 1, 0], sizes = [2, 16, 1, 64], strides = [1, 1, 1, 1]} : vector<2x16x16x64xf32> to vector<2x16x1x64xf32>
    %c0_6 = arith.constant 0 : index
    %c1_7 = arith.constant 1 : index
    %c0_8 = arith.constant 0 : index
    %c0_9 = arith.constant 0 : index
    %3 = vector.load %arg9[%c0_6, %c1_7, %c0_8, %c0_9] : memref<2x18x18x64xf32, #tpu.memory_space<vmem>>, vector<2x16x1x64xf32>
    tpu.vector_store %arg9[%c0_6, %c1_7, %c0_8, %c0_9], %2 {strides = array<i32>} : memref<2x18x18x64xf32, #tpu.memory_space<vmem>>, vector<2x16x1x64xf32>,
    %4 = vector.extract_strided_slice %0 {offsets = [0, 0, 14, 0], sizes = [2, 16, 1, 64], strides = [1, 1, 1, 1]} : vector<2x16x16x64xf32> to vector<2x16x1x64xf32>
    %c0_10 = arith.constant 0 : index
    %c1_11 = arith.constant 1 : index
    %c17 = arith.constant 17 : index
    %c0_12 = arith.constant 0 : index
    %5 = vector.load %arg9[%c0_10, %c1_11, %c17, %c0_12] : memref<2x18x18x64xf32, #tpu.memory_space<vmem>>, vector<2x16x1x64xf32>
    tpu.vector_store %arg9[%c0_10, %c1_11, %c17, %c0_12], %4 {strides = array<i32>} : memref<2x18x18x64xf32, #tpu.memory_space<vmem>>, vector<2x16x1x64xf32>,
    %c0_13 = arith.constant 0 : index
    %c2 = arith.constant 2 : index
    %c0_14 = arith.constant 0 : index
    %c0_15 = arith.constant 0 : index
    %6 = vector.load %arg9[%c0_13, %c2, %c0_14, %c0_15] : memref<2x18x18x64xf32, #tpu.memory_space<vmem>>, vector<2x1x18x64xf32>
    %c0_16 = arith.constant 0 : index
    %c0_17 = arith.constant 0 : index
    %c0_18 = arith.constant 0 : index
    %c0_19 = arith.constant 0 : index
    %7 = vector.load %arg9[%c0_16, %c0_17, %c0_18, %c0_19] : memref<2x18x18x64xf32, #tpu.memory_space<vmem>>, vector<2x1x18x64xf32>
    tpu.vector_store %arg9[%c0_16, %c0_17, %c0_18, %c0_19], %6 {strides = array<i32>} : memref<2x18x18x64xf32, #tpu.memory_space<vmem>>, vector<2x1x18x64xf32>,
    %c0_20 = arith.constant 0 : index
    %c15 = arith.constant 15 : index
    %c0_21 = arith.constant 0 : index
    %c0_22 = arith.constant 0 : index
    %8 = vector.load %arg9[%c0_20, %c15, %c0_21, %c0_22] : memref<2x18x18x64xf32, #tpu.memory_space<vmem>>, vector<2x1x18x64xf32>
    %c0_23 = arith.constant 0 : index
    %c17_24 = arith.constant 17 : index
    %c0_25 = arith.constant 0 : index
    %c0_26 = arith.constant 0 : index
    %9 = vector.load %arg9[%c0_23, %c17_24, %c0_25, %c0_26] : memref<2x18x18x64xf32, #tpu.memory_space<vmem>>, vector<2x1x18x64xf32>
    tpu.vector_store %arg9[%c0_23, %c17_24, %c0_25, %c0_26], %8 {strides = array<i32>} : memref<2x18x18x64xf32, #tpu.memory_space<vmem>>, vector<2x1x18x64xf32>,
    %cst = arith.constant 0.000000e+00 : f32
    %10 = vector.broadcast %cst : f32 to vector<512x32xf32>
    %c0_27 = arith.constant 0 : index
    %c0_28 = arith.constant 0 : index
    %c0_29 = arith.constant 0 : index
    %c0_30 = arith.constant 0 : index
    %11 = vector.load %arg9[%c0_27, %c0_28, %c0_29, %c0_30] : memref<2x18x18x64xf32, #tpu.memory_space<vmem>>, vector<2x16x16x64xf32>
    %c0_31 = arith.constant 0 : index
    %c0_32 = arith.constant 0 : index
    %c1_33 = arith.constant 1 : index
    %c0_34 = arith.constant 0 : index
    %12 = vector.load %arg9[%c0_31, %c0_32, %c1_33, %c0_34] : memref<2x18x18x64xf32, #tpu.memory_space<vmem>>, vector<2x16x16x64xf32>
    %13 = tpu.concatenate %11, %12 in 3 : vector<2x16x16x64xf32>, vector<2x16x16x64xf32> -> vector<2x16x16x128xf32>
    %14 = vector.shape_cast %13 : vector<2x16x16x128xf32> to vector<512x128xf32>
    %15 = arith.truncf %14 : vector<512x128xf32> to vector<512x128xbf16>
    %c0_35 = arith.constant 0 : index
    %c0_36 = arith.constant 0 : index
    %c0_37 = arith.constant 0 : index
    %16 = vector.load %arg2[%c0_35, %c0_36, %c0_37] : memref<4x128x32xbf16, #tpu.memory_space<vmem>>, vector<1x128x32xbf16>
    %17 = vector.shape_cast %16 : vector<1x128x32xbf16> to vector<128x32xbf16>
    %cst_38 = arith.constant dense<0.000000e+00> : vector<512x32xf32>
    %18 = tpu.matmul %15, %17, %cst_38 {dimension_numbers = #tpu.dot_dimension_numbers<[1], [0], [0], [1], [0, 0, 1, 1], [], []>} : vector<512x128xbf16>, vector<128x32xbf16>, vector<512x32xf32> -> vector<512x32xf32>
    %19 = arith.addf %10, %18 : vector<512x32xf32>
    %c0_39 = arith.constant 0 : index
    %c0_40 = arith.constant 0 : index
    %c2_41 = arith.constant 2 : index
    %c0_42 = arith.constant 0 : index
    %20 = vector.load %arg9[%c0_39, %c0_40, %c2_41, %c0_42] : memref<2x18x18x64xf32, #tpu.memory_space<vmem>>, vector<2x16x16x64xf32>
    %c0_43 = arith.constant 0 : index
    %c1_44 = arith.constant 1 : index
    %c0_45 = arith.constant 0 : index
    %c0_46 = arith.constant 0 : index
    %21 = vector.load %arg9[%c0_43, %c1_44, %c0_45, %c0_46] : memref<2x18x18x64xf32, #tpu.memory_space<vmem>>, vector<2x16x16x64xf32>
    %22 = tpu.concatenate %20, %21 in 3 : vector<2x16x16x64xf32>, vector<2x16x16x64xf32> -> vector<2x16x16x128xf32>
    %23 = vector.shape_cast %22 : vector<2x16x16x128xf32> to vector<512x128xf32>
    %24 = arith.truncf %23 : vector<512x128xf32> to vector<512x128xbf16>
    %c1_47 = arith.constant 1 : index
    %c0_48 = arith.constant 0 : index
    %c0_49 = arith.constant 0 : index
    %25 = vector.load %arg2[%c1_47, %c0_48, %c0_49] : memref<4x128x32xbf16, #tpu.memory_space<vmem>>, vector<1x128x32xbf16>
    %26 = vector.shape_cast %25 : vector<1x128x32xbf16> to vector<128x32xbf16>
    %cst_50 = arith.constant dense<0.000000e+00> : vector<512x32xf32>
    %27 = tpu.matmul %24, %26, %cst_50 {dimension_numbers = #tpu.dot_dimension_numbers<[1], [0], [0], [1], [0, 0, 1, 1], [], []>} : vector<512x128xbf16>, vector<128x32xbf16>, vector<512x32xf32> -> vector<512x32xf32>
    %28 = arith.addf %19, %27 : vector<512x32xf32>
    %c0_51 = arith.constant 0 : index
    %c1_52 = arith.constant 1 : index
    %c1_53 = arith.constant 1 : index
    %c0_54 = arith.constant 0 : index
    %29 = vector.load %arg9[%c0_51, %c1_52, %c1_53, %c0_54] : memref<2x18x18x64xf32, #tpu.memory_space<vmem>>, vector<2x16x16x64xf32>
    %c0_55 = arith.constant 0 : index
    %c1_56 = arith.constant 1 : index
    %c2_57 = arith.constant 2 : index
    %c0_58 = arith.constant 0 : index
    %30 = vector.load %arg9[%c0_55, %c1_56, %c2_57, %c0_58] : memref<2x18x18x64xf32, #tpu.memory_space<vmem>>, vector<2x16x16x64xf32>
    %31 = tpu.concatenate %29, %30 in 3 : vector<2x16x16x64xf32>, vector<2x16x16x64xf32> -> vector<2x16x16x128xf32>
    %32 = vector.shape_cast %31 : vector<2x16x16x128xf32> to vector<512x128xf32>
    %33 = arith.truncf %32 : vector<512x128xf32> to vector<512x128xbf16>
    %c2_59 = arith.constant 2 : index
    %c0_60 = arith.constant 0 : index
    %c0_61 = arith.constant 0 : index
    %34 = vector.load %arg2[%c2_59, %c0_60, %c0_61] : memref<4x128x32xbf16, #tpu.memory_space<vmem>>, vector<1x128x32xbf16>
    %35 = vector.shape_cast %34 : vector<1x128x32xbf16> to vector<128x32xbf16>
    %cst_62 = arith.constant dense<0.000000e+00> : vector<512x32xf32>
    %36 = tpu.matmul %33, %35, %cst_62 {dimension_numbers = #tpu.dot_dimension_numbers<[1], [0], [0], [1], [0, 0, 1, 1], [], []>} : vector<512x128xbf16>, vector<128x32xbf16>, vector<512x32xf32> -> vector<512x32xf32>
    %37 = arith.addf %28, %36 : vector<512x32xf32>
    %c0_63 = arith.constant 0 : index
    %c2_64 = arith.constant 2 : index
    %c0_65 = arith.constant 0 : index
    %c0_66 = arith.constant 0 : index
    %38 = vector.load %arg9[%c0_63, %c2_64, %c0_65, %c0_66] : memref<2x18x18x64xf32, #tpu.memory_space<vmem>>, vector<2x16x16x64xf32>
    %c0_67 = arith.constant 0 : index
    %c2_68 = arith.constant 2 : index
    %c1_69 = arith.constant 1 : index
    %c0_70 = arith.constant 0 : index
    %39 = vector.load %arg9[%c0_67, %c2_68, %c1_69, %c0_70] : memref<2x18x18x64xf32, #tpu.memory_space<vmem>>, vector<2x16x16x64xf32>
    %40 = tpu.concatenate %38, %39 in 3 : vector<2x16x16x64xf32>, vector<2x16x16x64xf32> -> vector<2x16x16x128xf32>
    %41 = vector.shape_cast %40 : vector<2x16x16x128xf32> to vector<512x128xf32>
    %42 = arith.truncf %41 : vector<512x128xf32> to vector<512x128xbf16>
    %c3 = arith.constant 3 : index
    %c0_71 = arith.constant 0 : index
    %c0_72 = arith.constant 0 : index
    %43 = vector.load %arg2[%c3, %c0_71, %c0_72] : memref<4x128x32xbf16, #tpu.memory_space<vmem>>, vector<1x128x32xbf16>
    %44 = vector.shape_cast %43 : vector<1x128x32xbf16> to vector<128x32xbf16>
    %cst_73 = arith.constant dense<0.000000e+00> : vector<512x32xf32>
    %45 = tpu.matmul %42, %44, %cst_73 {dimension_numbers = #tpu.dot_dimension_numbers<[1], [0], [0], [1], [0, 0, 1, 1], [], []>} : vector<512x128xbf16>, vector<128x32xbf16>, vector<512x32xf32> -> vector<512x32xf32>
    %46 = arith.addf %37, %45 : vector<512x32xf32>
    %c0_74 = arith.constant 0 : index
    %c2_75 = arith.constant 2 : index
    %c2_76 = arith.constant 2 : index
    %c0_77 = arith.constant 0 : index
    %47 = vector.load %arg9[%c0_74, %c2_75, %c2_76, %c0_77] : memref<2x18x18x64xf32, #tpu.memory_space<vmem>>, vector<2x16x16x64xf32>
    %48 = vector.shape_cast %47 : vector<2x16x16x64xf32> to vector<512x64xf32>
    %49 = arith.truncf %48 : vector<512x64xf32> to vector<512x64xbf16>
    %c0_78 = arith.constant 0 : index
    %c0_79 = arith.constant 0 : index
    %50 = vector.load %arg3[%c0_78, %c0_79] : memref<64x32xbf16, #tpu.memory_space<vmem>>, vector<64x32xbf16>
    %cst_80 = arith.constant dense<0.000000e+00> : vector<512x32xf32>
    %51 = tpu.matmul %49, %50, %cst_80 {dimension_numbers = #tpu.dot_dimension_numbers<[1], [0], [0], [1], [0, 0, 1, 1], [], []>} : vector<512x64xbf16>, vector<64x32xbf16>, vector<512x32xf32> -> vector<512x32xf32>
    %52 = arith.addf %46, %51 : vector<512x32xf32>
    %c0_81 = arith.constant 0 : index
    %c0_82 = arith.constant 0 : index
    %53 = vector.load %arg4[%c0_81, %c0_82] : memref<1x32xf32, #tpu.memory_space<vmem>>, vector<1x32xf32>
    %54 = vector.broadcast %53 : vector<1x32xf32> to vector<512x32xf32>
    %55 = arith.addf %52, %54 : vector<512x32xf32>
    %cst_83 = arith.constant 0.000000e+00 : f32
    %56 = vector.broadcast %cst_83 : f32 to vector<512x32xf32>
    %57 = arith.maximumf %55, %56 : vector<512x32xf32>
    %58 = vector.shape_cast %57 : vector<512x32xf32> to vector<2x16x16x32xf32>
    %c0_84 = arith.constant 0 : index
    %c1_85 = arith.constant 1 : index
    %c1_86 = arith.constant 1 : index
    %c0_87 = arith.constant 0 : index
    %59 = vector.load %arg10[%c0_84, %c1_85, %c1_86, %c0_87] : memref<2x18x18x32xf32, #tpu.memory_space<vmem>>, vector<2x16x16x32xf32>
    tpu.vector_store %arg10[%c0_84, %c1_85, %c1_86, %c0_87], %58 {strides = array<i32>} : memref<2x18x18x32xf32, #tpu.memory_space<vmem>>, vector<2x16x16x32xf32>,
    %60 = vector.extract_strided_slice %58 {offsets = [0, 0, 1, 0], sizes = [2, 16, 1, 32], strides = [1, 1, 1, 1]} : vector<2x16x16x32xf32> to vector<2x16x1x32xf32>
    %c0_88 = arith.constant 0 : index
    %c1_89 = arith.constant 1 : index
    %c0_90 = arith.constant 0 : index
    %c0_91 = arith.constant 0 : index
    %61 = vector.load %arg10[%c0_88, %c1_89, %c0_90, %c0_91] : memref<2x18x18x32xf32, #tpu.memory_space<vmem>>, vector<2x16x1x32xf32>
    tpu.vector_store %arg10[%c0_88, %c1_89, %c0_90, %c0_91], %60 {strides = array<i32>} : memref<2x18x18x32xf32, #tpu.memory_space<vmem>>, vector<2x16x1x32xf32>,
    %62 = vector.extract_strided_slice %58 {offsets = [0, 0, 14, 0], sizes = [2, 16, 1, 32], strides = [1, 1, 1, 1]} : vector<2x16x16x32xf32> to vector<2x16x1x32xf32>
    %c0_92 = arith.constant 0 : index
    %c1_93 = arith.constant 1 : index
    %c17_94 = arith.constant 17 : index
    %c0_95 = arith.constant 0 : index
    %63 = vector.load %arg10[%c0_92, %c1_93, %c17_94, %c0_95] : memref<2x18x18x32xf32, #tpu.memory_space<vmem>>, vector<2x16x1x32xf32>
    tpu.vector_store %arg10[%c0_92, %c1_93, %c17_94, %c0_95], %62 {strides = array<i32>} : memref<2x18x18x32xf32, #tpu.memory_space<vmem>>, vector<2x16x1x32xf32>,
    %c0_96 = arith.constant 0 : index
    %c2_97 = arith.constant 2 : index
    %c0_98 = arith.constant 0 : index
    %c0_99 = arith.constant 0 : index
    %64 = vector.load %arg10[%c0_96, %c2_97, %c0_98, %c0_99] : memref<2x18x18x32xf32, #tpu.memory_space<vmem>>, vector<2x1x18x32xf32>
    %c0_100 = arith.constant 0 : index
    %c0_101 = arith.constant 0 : index
    %c0_102 = arith.constant 0 : index
    %c0_103 = arith.constant 0 : index
    %65 = vector.load %arg10[%c0_100, %c0_101, %c0_102, %c0_103] : memref<2x18x18x32xf32, #tpu.memory_space<vmem>>, vector<2x1x18x32xf32>
    tpu.vector_store %arg10[%c0_100, %c0_101, %c0_102, %c0_103], %64 {strides = array<i32>} : memref<2x18x18x32xf32, #tpu.memory_space<vmem>>, vector<2x1x18x32xf32>,
    %c0_104 = arith.constant 0 : index
    %c15_105 = arith.constant 15 : index
    %c0_106 = arith.constant 0 : index
    %c0_107 = arith.constant 0 : index
    %66 = vector.load %arg10[%c0_104, %c15_105, %c0_106, %c0_107] : memref<2x18x18x32xf32, #tpu.memory_space<vmem>>, vector<2x1x18x32xf32>
    %c0_108 = arith.constant 0 : index
    %c17_109 = arith.constant 17 : index
    %c0_110 = arith.constant 0 : index
    %c0_111 = arith.constant 0 : index
    %67 = vector.load %arg10[%c0_108, %c17_109, %c0_110, %c0_111] : memref<2x18x18x32xf32, #tpu.memory_space<vmem>>, vector<2x1x18x32xf32>
    tpu.vector_store %arg10[%c0_108, %c17_109, %c0_110, %c0_111], %66 {strides = array<i32>} : memref<2x18x18x32xf32, #tpu.memory_space<vmem>>, vector<2x1x18x32xf32>,
    %cst_112 = arith.constant 0.000000e+00 : f32
    %68 = vector.broadcast %cst_112 : f32 to vector<2x512xf32>
    %c0_113 = arith.constant 0 : index
    %c0_114 = arith.constant 0 : index
    %c0_115 = arith.constant 0 : index
    %c0_116 = arith.constant 0 : index
    %69 = vector.load %arg10[%c0_113, %c0_114, %c0_115, %c0_116] : memref<2x18x18x32xf32, #tpu.memory_space<vmem>>, vector<2x16x16x32xf32>
    %c0_117 = arith.constant 0 : index
    %c0_118 = arith.constant 0 : index
    %c1_119 = arith.constant 1 : index
    %c0_120 = arith.constant 0 : index
    %70 = vector.load %arg10[%c0_117, %c0_118, %c1_119, %c0_120] : memref<2x18x18x32xf32, #tpu.memory_space<vmem>>, vector<2x16x16x32xf32>
    %c0_121 = arith.constant 0 : index
    %c0_122 = arith.constant 0 : index
    %c2_123 = arith.constant 2 : index
    %c0_124 = arith.constant 0 : index
    %71 = vector.load %arg10[%c0_121, %c0_122, %c2_123, %c0_124] : memref<2x18x18x32xf32, #tpu.memory_space<vmem>>, vector<2x16x16x32xf32>
    %c0_125 = arith.constant 0 : index
    %c1_126 = arith.constant 1 : index
    %c0_127 = arith.constant 0 : index
    %c0_128 = arith.constant 0 : index
    %72 = vector.load %arg10[%c0_125, %c1_126, %c0_127, %c0_128] : memref<2x18x18x32xf32, #tpu.memory_space<vmem>>, vector<2x16x16x32xf32>
    %73 = tpu.concatenate %69, %70, %71, %72 in 3 : vector<2x16x16x32xf32>, vector<2x16x16x32xf32>, vector<2x16x16x32xf32>, vector<2x16x16x32xf32> -> vector<2x16x16x128xf32>
    %74 = vector.shape_cast %73 : vector<2x16x16x128xf32> to vector<512x128xf32>
    %75 = arith.truncf %74 : vector<512x128xf32> to vector<512x128xbf16>
    %c0_129 = arith.constant 0 : index
    %c0_130 = arith.constant 0 : index
    %c0_131 = arith.constant 0 : index
    %76 = vector.load %arg5[%c0_129, %c0_130, %c0_131] : memref<2x128x2xbf16, #tpu.memory_space<vmem>>, vector<1x128x2xbf16>
    %77 = vector.shape_cast %76 : vector<1x128x2xbf16> to vector<128x2xbf16>
    %cst_132 = arith.constant dense<0.000000e+00> : vector<2x512xf32>
    %78 = tpu.matmul %77, %75, %cst_132 {dimension_numbers = #tpu.dot_dimension_numbers<[0], [1], [1], [0], [0, 1, 1, 0], [], []>} : vector<128x2xbf16>, vector<512x128xbf16>, vector<2x512xf32> -> vector<2x512xf32>
    %79 = arith.addf %68, %78 : vector<2x512xf32>
    %c0_133 = arith.constant 0 : index
    %c1_134 = arith.constant 1 : index
    %c1_135 = arith.constant 1 : index
    %c0_136 = arith.constant 0 : index
    %80 = vector.load %arg10[%c0_133, %c1_134, %c1_135, %c0_136] : memref<2x18x18x32xf32, #tpu.memory_space<vmem>>, vector<2x16x16x32xf32>
    %c0_137 = arith.constant 0 : index
    %c1_138 = arith.constant 1 : index
    %c2_139 = arith.constant 2 : index
    %c0_140 = arith.constant 0 : index
    %81 = vector.load %arg10[%c0_137, %c1_138, %c2_139, %c0_140] : memref<2x18x18x32xf32, #tpu.memory_space<vmem>>, vector<2x16x16x32xf32>
    %c0_141 = arith.constant 0 : index
    %c2_142 = arith.constant 2 : index
    %c0_143 = arith.constant 0 : index
    %c0_144 = arith.constant 0 : index
    %82 = vector.load %arg10[%c0_141, %c2_142, %c0_143, %c0_144] : memref<2x18x18x32xf32, #tpu.memory_space<vmem>>, vector<2x16x16x32xf32>
    %c0_145 = arith.constant 0 : index
    %c2_146 = arith.constant 2 : index
    %c1_147 = arith.constant 1 : index
    %c0_148 = arith.constant 0 : index
    %83 = vector.load %arg10[%c0_145, %c2_146, %c1_147, %c0_148] : memref<2x18x18x32xf32, #tpu.memory_space<vmem>>, vector<2x16x16x32xf32>
    %84 = tpu.concatenate %80, %81, %82, %83 in 3 : vector<2x16x16x32xf32>, vector<2x16x16x32xf32>, vector<2x16x16x32xf32>, vector<2x16x16x32xf32> -> vector<2x16x16x128xf32>
    %85 = vector.shape_cast %84 : vector<2x16x16x128xf32> to vector<512x128xf32>
    %86 = arith.truncf %85 : vector<512x128xf32> to vector<512x128xbf16>
    %c1_149 = arith.constant 1 : index
    %c0_150 = arith.constant 0 : index
    %c0_151 = arith.constant 0 : index
    %87 = vector.load %arg5[%c1_149, %c0_150, %c0_151] : memref<2x128x2xbf16, #tpu.memory_space<vmem>>, vector<1x128x2xbf16>
    %88 = vector.shape_cast %87 : vector<1x128x2xbf16> to vector<128x2xbf16>
    %cst_152 = arith.constant dense<0.000000e+00> : vector<2x512xf32>
    %89 = tpu.matmul %88, %86, %cst_152 {dimension_numbers = #tpu.dot_dimension_numbers<[0], [1], [1], [0], [0, 1, 1, 0], [], []>} : vector<128x2xbf16>, vector<512x128xbf16>, vector<2x512xf32> -> vector<2x512xf32>
    %90 = arith.addf %79, %89 : vector<2x512xf32>
    %c0_153 = arith.constant 0 : index
    %c2_154 = arith.constant 2 : index
    %c2_155 = arith.constant 2 : index
    %c0_156 = arith.constant 0 : index
    %91 = vector.load %arg10[%c0_153, %c2_154, %c2_155, %c0_156] : memref<2x18x18x32xf32, #tpu.memory_space<vmem>>, vector<2x16x16x32xf32>
    %92 = vector.shape_cast %91 : vector<2x16x16x32xf32> to vector<512x32xf32>
    %93 = arith.truncf %92 : vector<512x32xf32> to vector<512x32xbf16>
    %c0_157 = arith.constant 0 : index
    %c0_158 = arith.constant 0 : index
    %94 = vector.load %arg6[%c0_157, %c0_158] : memref<32x2xbf16, #tpu.memory_space<vmem>>, vector<32x2xbf16>
    %cst_159 = arith.constant dense<0.000000e+00> : vector<2x512xf32>
    %95 = tpu.matmul %94, %93, %cst_159 {dimension_numbers = #tpu.dot_dimension_numbers<[0], [1], [1], [0], [0, 1, 1, 0], [], []>} : vector<32x2xbf16>, vector<512x32xbf16>, vector<2x512xf32> -> vector<2x512xf32>
    %96 = arith.addf %90, %95 : vector<2x512xf32>
    %c0_160 = arith.constant 0 : index
    %c0_161 = arith.constant 0 : index
    %97 = vector.load %arg7[%c0_160, %c0_161] : memref<2x1xf32, #tpu.memory_space<vmem>>, vector<2x1xf32>
    %98 = vector.broadcast %97 : vector<2x1xf32> to vector<2x512xf32>
    %99 = arith.addf %96, %98 : vector<2x512xf32>
    %c0_162 = arith.constant 0 : index
    %c0_163 = arith.constant 0 : index
    %100 = vector.load %arg8[%c0_162, %c0_163] : memref<2x512xf32, #tpu.memory_space<vmem>>, vector<2x512xf32>
    tpu.vector_store %arg8[%c0_162, %c0_163], %99 {strides = array<i32>} : memref<2x512xf32, #tpu.memory_space<vmem>>, vector<2x512xf32>,
    return
  }
  func.func @transform_0(%arg0: i32) -> (i32, i32, i32, i32) {
    %c0_i32 = arith.constant 0 : i32
    %c0_i32_0 = arith.constant 0 : i32
    %c0_i32_1 = arith.constant 0 : i32
    %c0_i32_2 = arith.constant 0 : i32
    %c0_i32_3 = arith.constant 0 : i32
    return %c0_i32, %c0_i32_0, %c0_i32_1, %c0_i32_2 : i32, i32, i32, i32
  }
  func.func @transform_1(%arg0: i32) -> (i32, i32, i32) {
    %c0_i32 = arith.constant 0 : i32
    %c0_i32_0 = arith.constant 0 : i32
    %c0_i32_1 = arith.constant 0 : i32
    %c0_i32_2 = arith.constant 0 : i32
    return %c0_i32, %c0_i32_0, %c0_i32_1 : i32, i32, i32
  }
  func.func @transform_2(%arg0: i32) -> (i32, i32) {
    %c0_i32 = arith.constant 0 : i32
    %c0_i32_0 = arith.constant 0 : i32
    %c0_i32_1 = arith.constant 0 : i32
    return %c0_i32, %c0_i32_0 : i32, i32
  }
  func.func @transform_3(%arg0: i32) -> (i32, i32) {
    %c0_i32 = arith.constant 0 : i32
    %c0_i32_0 = arith.constant 0 : i32
    %c0_i32_1 = arith.constant 0 : i32
    return %c0_i32, %c0_i32_0 : i32, i32
  }
  func.func @transform_4(%arg0: i32) -> (i32, i32, i32) {
    %c0_i32 = arith.constant 0 : i32
    %c0_i32_0 = arith.constant 0 : i32
    %c0_i32_1 = arith.constant 0 : i32
    %c0_i32_2 = arith.constant 0 : i32
    return %c0_i32, %c0_i32_0, %c0_i32_1 : i32, i32, i32
  }
  func.func @transform_5(%arg0: i32) -> (i32, i32) {
    %c0_i32 = arith.constant 0 : i32
    %c0_i32_0 = arith.constant 0 : i32
    %c0_i32_1 = arith.constant 0 : i32
    return %c0_i32, %c0_i32_0 : i32, i32
  }
  func.func @transform_6(%arg0: i32) -> (i32, i32) {
    %c0_i32 = arith.constant 0 : i32
    %c0_i32_0 = arith.constant 0 : i32
    %c0_i32_1 = arith.constant 0 : i32
    return %c0_i32, %c0_i32_0 : i32, i32
  }
  func.func @transform_7(%arg0: i32) -> (i32, i32) {
    %c0_i32 = arith.constant 0 : i32
    %c0_i32_0 = arith.constant 0 : i32
    %c0_i32_1 = arith.constant 0 : i32
    return %c0_i32, %c0_i32_0 : i32, i32
  }
}

</mosaic_0001>

<llo_original>
// kernel: flow_predictor_forward.1
$region0: #{flow_predictor_forward.1}
  #allocation0 [shape = 'u32[]', space=smem, size = 0x4, offset = 0x4, fixed_abs, tag = 'smem constant byte address 0x4 - core index']
  #allocation1 [shape = 'u32[144,128]{1,0:T(1,128)}', space=vmem, size = 0x12000, scoped, tag = 'internal scratch']
  #allocation2 [shape = 'f32[2,18,18,64]{3,2,1,0:T(8,128)}', space=vmem, size = 0x6c000, scoped, tag = 'scratch operand']
  #allocation3 [shape = 'f32[2,18,18,32]{3,2,1,0:T(8,128)}', space=vmem, size = 0x6c000, scoped, tag = 'scratch operand']
  %s0 = inlined_call_operand.vmem [shape: f32[2,16,16,64], index: 0, kind: input, shape index: {}]
  %s1 = inlined_call_operand.vmem [shape: bf16[4,128,32], index: 1, kind: input, shape index: {}]
  %s2 = inlined_call_operand.vmem [shape: bf16[64,32], index: 2, kind: input, shape index: {}]
  %s3 = inlined_call_operand.vmem [shape: f32[1,32], index: 3, kind: input, shape index: {}]
  %s4 = inlined_call_operand.vmem [shape: bf16[2,128,2], index: 4, kind: input, shape index: {}]
  %s5 = inlined_call_operand.vmem [shape: bf16[32,2], index: 5, kind: input, shape index: {}]
  %s6 = inlined_call_operand.vmem [shape: f32[2,1], index: 6, kind: input, shape index: {}]
  %s7 = inlined_call_operand.vmem [shape: f32[2,512], index: 7, kind: output, shape index: {}]
  %s8 = sld [smem:[#allocation0]]
  $region38: #{flow_predictor_forward.1} parent=0
    _
  %s10 = ssub.s32 1, %s8
  %s11 = scalar_select 0, %s10, %s8
  // Predicated region
  $region2: #{flow_predictor_forward.1} parent=0 // pred_check
    _
  $region3: #{flow_predictor_forward.1} parent=0 // pred_check_branch
    %13 = sbr.rel (0) target = $region5
  $region4: #{flow_predictor_forward.1} parent=0 // pred_region
    _
  $region5: #{flow_predictor_forward.1} parent=0 // pred_fallthru
    _
  // Predicated region
  $region6: #{flow_predictor_forward.1} parent=0 // pred_check
    _
  $region7: #{flow_predictor_forward.1} parent=0 // pred_check_branch
    %15 = sbr.rel (0) target = $region9
  $region8: #{flow_predictor_forward.1} parent=0 // pred_region
    _
  $region9: #{flow_predictor_forward.1} parent=0 // pred_fallthru
    _
  // Predicated region
  $region10: #{flow_predictor_forward.1} parent=0 // pred_check
    _
  $region11: #{flow_predictor_forward.1} parent=0 // pred_check_branch
    %17 = sbr.rel (0) target = $region13
  $region12: #{flow_predictor_forward.1} parent=0 // pred_region
    _
  $region13: #{flow_predictor_forward.1} parent=0 // pred_fallthru
    _
  // Predicated region
  $region14: #{flow_predictor_forward.1} parent=0 // pred_check
    _
  $region15: #{flow_predictor_forward.1} parent=0 // pred_check_branch
    %19 = sbr.rel (0) target = $region17
  $region16: #{flow_predictor_forward.1} parent=0 // pred_region
    _
  $region17: #{flow_predictor_forward.1} parent=0 // pred_fallthru
    _
  // Predicated region
  $region18: #{flow_predictor_forward.1} parent=0 // pred_check
    _
  $region19: #{flow_predictor_forward.1} parent=0 // pred_check_branch
    %21 = sbr.rel (0) target = $region21
  $region20: #{flow_predictor_forward.1} parent=0 // pred_region
    _
  $region21: #{flow_predictor_forward.1} parent=0 // pred_fallthru
    _
  // Predicated region
  $region22: #{flow_predictor_forward.1} parent=0 // pred_check
    _
  $region23: #{flow_predictor_forward.1} parent=0 // pred_check_branch
    %23 = sbr.rel (0) target = $region25
  $region24: #{flow_predictor_forward.1} parent=0 // pred_region
    _
  $region25: #{flow_predictor_forward.1} parent=0 // pred_fallthru
    _
  // Predicated region
  $region26: #{flow_predictor_forward.1} parent=0 // pred_check
    _
  $region27: #{flow_predictor_forward.1} parent=0 // pred_check_branch
    %25 = sbr.rel (0) target = $region29
  $region28: #{flow_predictor_forward.1} parent=0 // pred_region
    _
  $region29: #{flow_predictor_forward.1} parent=0 // pred_fallthru
    _
  %v27 = vld [vmem:[%s0] sm:$0xff]
  %v28 = vld [vmem:[%s0 + $0x8] sm:$0xff]
  %v29 = vld [vmem:[%s0 + $0x10] sm:$0xff]
  %v30 = vld [vmem:[%s0 + $0x18] sm:$0xff]
  %v31 = vld [vmem:[%s0 + $0x20] sm:$0xff]
  %v32 = vld [vmem:[%s0 + $0x28] sm:$0xff]
  %v33 = vld [vmem:[%s0 + $0x30] sm:$0xff]
  %v34 = vld [vmem:[%s0 + $0x38] sm:$0xff]
  %v35 = vld [vmem:[%s0 + $0x40] sm:$0xff]
  %v36 = vld [vmem:[%s0 + $0x48] sm:$0xff]
  %v37 = vld [vmem:[%s0 + $0x50] sm:$0xff]
  %v38 = vld [vmem:[%s0 + $0x58] sm:$0xff]
  %v39 = vld [vmem:[%s0 + $0x60] sm:$0xff]
  %v40 = vld [vmem:[%s0 + $0x68] sm:$0xff]
  %v41 = vld [vmem:[%s0 + $0x70] sm:$0xff]
  %v42 = vld [vmem:[%s0 + $0x78] sm:$0xff]
  %v43 = vld [vmem:[%s0 + $0x80] sm:$0xff]
  %v44 = vld [vmem:[%s0 + $0x88] sm:$0xff]
  %v45 = vld [vmem:[%s0 + $0x90] sm:$0xff]
  %v46 = vld [vmem:[%s0 + $0x98] sm:$0xff]
  %v47 = vld [vmem:[%s0 + $0xa0] sm:$0xff]
  %v48 = vld [vmem:[%s0 + $0xa8] sm:$0xff]
  %v49 = vld [vmem:[%s0 + $0xb0] sm:$0xff]
  %v50 = vld [vmem:[%s0 + $0xb8] sm:$0xff]
  %v51 = vld [vmem:[%s0 + $0xc0] sm:$0xff]
  %v52 = vld [vmem:[%s0 + $0xc8] sm:$0xff]
  %v53 = vld [vmem:[%s0 + $0xd0] sm:$0xff]
  %v54 = vld [vmem:[%s0 + $0xd8] sm:$0xff]
  %v55 = vld [vmem:[%s0 + $0xe0] sm:$0xff]
  %v56 = vld [vmem:[%s0 + $0xe8] sm:$0xff]
  %v57 = vld [vmem:[%s0 + $0xf0] sm:$0xff]
  %v58 = vld [vmem:[%s0 + $0xf8] sm:$0xff]
  %v59 = vld [vmem:[%s0 + $0x100] sm:$0xff]
  %v60 = vld [vmem:[%s0 + $0x108] sm:$0xff]
  %v61 = vld [vmem:[%s0 + $0x110] sm:$0xff]
  %v62 = vld [vmem:[%s0 + $0x118] sm:$0xff]
  %v63 = vld [vmem:[%s0 + $0x120] sm:$0xff]
  %v64 = vld [vmem:[%s0 + $0x128] sm:$0xff]
  %v65 = vld [vmem:[%s0 + $0x130] sm:$0xff]
  %v66 = vld [vmem:[%s0 + $0x138] sm:$0xff]
  %v67 = vld [vmem:[%s0 + $0x140] sm:$0xff]
  %v68 = vld [vmem:[%s0 + $0x148] sm:$0xff]
  %v69 = vld [vmem:[%s0 + $0x150] sm:$0xff]
  %v70 = vld [vmem:[%s0 + $0x158] sm:$0xff]
  %v71 = vld [vmem:[%s0 + $0x160] sm:$0xff]
  %v72 = vld [vmem:[%s0 + $0x168] sm:$0xff]
  %v73 = vld [vmem:[%s0 + $0x170] sm:$0xff]
  %v74 = vld [vmem:[%s0 + $0x178] sm:$0xff]
  %v75 = vld [vmem:[%s0 + $0x180] sm:$0xff]
  %v76 = vld [vmem:[%s0 + $0x188] sm:$0xff]
  %v77 = vld [vmem:[%s0 + $0x190] sm:$0xff]
  %v78 = vld [vmem:[%s0 + $0x198] sm:$0xff]
  %v79 = vld [vmem:[%s0 + $0x1a0] sm:$0xff]
  %v80 = vld [vmem:[%s0 + $0x1a8] sm:$0xff]
  %v81 = vld [vmem:[%s0 + $0x1b0] sm:$0xff]
  %v82 = vld [vmem:[%s0 + $0x1b8] sm:$0xff]
  %v83 = vld [vmem:[%s0 + $0x1c0] sm:$0xff]
  %v84 = vld [vmem:[%s0 + $0x1c8] sm:$0xff]
  %v85 = vld [vmem:[%s0 + $0x1d0] sm:$0xff]
  %v86 = vld [vmem:[%s0 + $0x1d8] sm:$0xff]
  %v87 = vld [vmem:[%s0 + $0x1e0] sm:$0xff]
  %v88 = vld [vmem:[%s0 + $0x1e8] sm:$0xff]
  %v89 = vld [vmem:[%s0 + $0x1f0] sm:$0xff]
  %v90 = vld [vmem:[%s0 + $0x1f8] sm:$0xff]
  %s91 = scalar_lea.vmem [#allocation2], 24
  %vm92 = vcmask 523264
  %93 = vst.msk [vmem:[%s91 + $0x1] sm:$0xff] %vm92, %v27
  %94 = vst.msk [vmem:[%s91 + $0x9] sm:$0xff] %vm92, %v28
  %95 = vst.msk [vmem:[%s91 + $0x19] sm:$0xff] %vm92, %v29
  %96 = vst.msk [vmem:[%s91 + $0x21] sm:$0xff] %vm92, %v30
  %97 = vst.msk [vmem:[%s91 + $0x31] sm:$0xff] %vm92, %v31
  %98 = vst.msk [vmem:[%s91 + $0x39] sm:$0xff] %vm92, %v32
  %99 = vst.msk [vmem:[%s91 + $0x49] sm:$0xff] %vm92, %v33
  %100 = vst.msk [vmem:[%s91 + $0x51] sm:$0xff] %vm92, %v34
  %101 = vst.msk [vmem:[%s91 + $0x61] sm:$0xff] %vm92, %v35
  %102 = vst.msk [vmem:[%s91 + $0x69] sm:$0xff] %vm92, %v36
  %103 = vst.msk [vmem:[%s91 + $0x79] sm:$0xff] %vm92, %v37
  %104 = vst.msk [vmem:[%s91 + $0x81] sm:$0xff] %vm92, %v38
  %105 = vst.msk [vmem:[%s91 + $0x91] sm:$0xff] %vm92, %v39
  %106 = vst.msk [vmem:[%s91 + $0x99] sm:$0xff] %vm92, %v40
  %107 = vst.msk [vmem:[%s91 + $0xa9] sm:$0xff] %vm92, %v41
  %108 = vst.msk [vmem:[%s91 + $0xb1] sm:$0xff] %vm92, %v42
  %109 = vst.msk [vmem:[%s91 + $0xc1] sm:$0xff] %vm92, %v43
  %110 = vst.msk [vmem:[%s91 + $0xc9] sm:$0xff] %vm92, %v44
  %111 = vst.msk [vmem:[%s91 + $0xd9] sm:$0xff] %vm92, %v45
  %112 = vst.msk [vmem:[%s91 + $0xe1] sm:$0xff] %vm92, %v46
  %113 = vst.msk [vmem:[%s91 + $0xf1] sm:$0xff] %vm92, %v47
  %114 = vst.msk [vmem:[%s91 + $0xf9] sm:$0xff] %vm92, %v48
  %115 = vst.msk [vmem:[%s91 + $0x109] sm:$0xff] %vm92, %v49
  %116 = vst.msk [vmem:[%s91 + $0x111] sm:$0xff] %vm92, %v50
  %117 = vst.msk [vmem:[%s91 + $0x121] sm:$0xff] %vm92, %v51
  %118 = vst.msk [vmem:[%s91 + $0x129] sm:$0xff] %vm92, %v52
  %119 = vst.msk [vmem:[%s91 + $0x139] sm:$0xff] %vm92, %v53
  %120 = vst.msk [vmem:[%s91 + $0x141] sm:$0xff] %vm92, %v54
  %121 = vst.msk [vmem:[%s91 + $0x151] sm:$0xff] %vm92, %v55
  %122 = vst.msk [vmem:[%s91 + $0x159] sm:$0xff] %vm92, %v56
  %123 = vst.msk [vmem:[%s91 + $0x169] sm:$0xff] %vm92, %v57
  %124 = vst.msk [vmem:[%s91 + $0x171] sm:$0xff] %vm92, %v58
  %125 = vst.msk [vmem:[%s91 + $0x1b1] sm:$0xff] %vm92, %v59
  %126 = vst.msk [vmem:[%s91 + $0x1b9] sm:$0xff] %vm92, %v60
  %127 = vst.msk [vmem:[%s91 + $0x1c9] sm:$0xff] %vm92, %v61
  %128 = vst.msk [vmem:[%s91 + $0x1d1] sm:$0xff] %vm92, %v62
  %129 = vst.msk [vmem:[%s91 + $0x1e1] sm:$0xff] %vm92, %v63
  %130 = vst.msk [vmem:[%s91 + $0x1e9] sm:$0xff] %vm92, %v64
  %131 = vst.msk [vmem:[%s91 + $0x1f9] sm:$0xff] %vm92, %v65
  %132 = vst.msk [vmem:[%s91 + $0x201] sm:$0xff] %vm92, %v66
  %133 = vst.msk [vmem:[%s91 + $0x211] sm:$0xff] %vm92, %v67
  %134 = vst.msk [vmem:[%s91 + $0x219] sm:$0xff] %vm92, %v68
  %135 = vst.msk [vmem:[%s91 + $0x229] sm:$0xff] %vm92, %v69
  %136 = vst.msk [vmem:[%s91 + $0x231] sm:$0xff] %vm92, %v70
  %137 = vst.msk [vmem:[%s91 + $0x241] sm:$0xff] %vm92, %v71
  %138 = vst.msk [vmem:[%s91 + $0x249] sm:$0xff] %vm92, %v72
  %139 = vst.msk [vmem:[%s91 + $0x259] sm:$0xff] %vm92, %v73
  %140 = vst.msk [vmem:[%s91 + $0x261] sm:$0xff] %vm92, %v74
  %141 = vst.msk [vmem:[%s91 + $0x271] sm:$0xff] %vm92, %v75
  %142 = vst.msk [vmem:[%s91 + $0x279] sm:$0xff] %vm92, %v76
  %143 = vst.msk [vmem:[%s91 + $0x289] sm:$0xff] %vm92, %v77
  %144 = vst.msk [vmem:[%s91 + $0x291] sm:$0xff] %vm92, %v78
  %145 = vst.msk [vmem:[%s91 + $0x2a1] sm:$0xff] %vm92, %v79
  %146 = vst.msk [vmem:[%s91 + $0x2a9] sm:$0xff] %vm92, %v80
  %147 = vst.msk [vmem:[%s91 + $0x2b9] sm:$0xff] %vm92, %v81
  %148 = vst.msk [vmem:[%s91 + $0x2c1] sm:$0xff] %vm92, %v82
  %149 = vst.msk [vmem:[%s91 + $0x2d1] sm:$0xff] %vm92, %v83
  %150 = vst.msk [vmem:[%s91 + $0x2d9] sm:$0xff] %vm92, %v84
  %151 = vst.msk [vmem:[%s91 + $0x2e9] sm:$0xff] %vm92, %v85
  %152 = vst.msk [vmem:[%s91 + $0x2f1] sm:$0xff] %vm92, %v86
  %153 = vst.msk [vmem:[%s91 + $0x301] sm:$0xff] %vm92, %v87
  %154 = vst.msk [vmem:[%s91 + $0x309] sm:$0xff] %vm92, %v88
  %155 = vst.msk [vmem:[%s91 + $0x319] sm:$0xff] %vm92, %v89
  %156 = vst.msk [vmem:[%s91 + $0x321] sm:$0xff] %vm92, %v90
  %vm157 = vcmask 517121
  %158 = vst.msk [vmem:[%s91 - $0x1] sm:$0x2] %vm157, %v27
  %159 = vst.msk [vmem:[%s91 + $0x17] sm:$0x2] %vm157, %v29
  %160 = vst.msk [vmem:[%s91 + $0x2f] sm:$0x2] %vm157, %v31
  %161 = vst.msk [vmem:[%s91 + $0x47] sm:$0x2] %vm157, %v33
  %162 = vst.msk [vmem:[%s91 + $0x5f] sm:$0x2] %vm157, %v35
  %163 = vst.msk [vmem:[%s91 + $0x77] sm:$0x2] %vm157, %v37
  %164 = vst.msk [vmem:[%s91 + $0x8f] sm:$0x2] %vm157, %v39
  %165 = vst.msk [vmem:[%s91 + $0xa7] sm:$0x2] %vm157, %v41
  %166 = vst.msk [vmem:[%s91 + $0xbf] sm:$0x2] %vm157, %v43
  %167 = vst.msk [vmem:[%s91 + $0xd7] sm:$0x2] %vm157, %v45
  %168 = vst.msk [vmem:[%s91 + $0xef] sm:$0x2] %vm157, %v47
  %169 = vst.msk [vmem:[%s91 + $0x107] sm:$0x2] %vm157, %v49
  %170 = vst.msk [vmem:[%s91 + $0x11f] sm:$0x2] %vm157, %v51
  %171 = vst.msk [vmem:[%s91 + $0x137] sm:$0x2] %vm157, %v53
  %172 = vst.msk [vmem:[%s91 + $0x14f] sm:$0x2] %vm157, %v55
  %173 = vst.msk [vmem:[%s91 + $0x167] sm:$0x2] %vm157, %v57
  %174 = vst.msk [vmem:[%s91 + $0x1af] sm:$0x2] %vm157, %v59
  %175 = vst.msk [vmem:[%s91 + $0x1c7] sm:$0x2] %vm157, %v61
  %176 = vst.msk [vmem:[%s91 + $0x1df] sm:$0x2] %vm157, %v63
  %177 = vst.msk [vmem:[%s91 + $0x1f7] sm:$0x2] %vm157, %v65
  %178 = vst.msk [vmem:[%s91 + $0x20f] sm:$0x2] %vm157, %v67
  %179 = vst.msk [vmem:[%s91 + $0x227] sm:$0x2] %vm157, %v69
  %180 = vst.msk [vmem:[%s91 + $0x23f] sm:$0x2] %vm157, %v71
  %181 = vst.msk [vmem:[%s91 + $0x257] sm:$0x2] %vm157, %v73
  %182 = vst.msk [vmem:[%s91 + $0x26f] sm:$0x2] %vm157, %v75
  %183 = vst.msk [vmem:[%s91 + $0x287] sm:$0x2] %vm157, %v77
  %184 = vst.msk [vmem:[%s91 + $0x29f] sm:$0x2] %vm157, %v79
  %185 = vst.msk [vmem:[%s91 + $0x2b7] sm:$0x2] %vm157, %v81
  %186 = vst.msk [vmem:[%s91 + $0x2cf] sm:$0x2] %vm157, %v83
  %187 = vst.msk [vmem:[%s91 + $0x2e7] sm:$0x2] %vm157, %v85
  %188 = vst.msk [vmem:[%s91 + $0x2ff] sm:$0x2] %vm157, %v87
  %189 = vst.msk [vmem:[%s91 + $0x317] sm:$0x2] %vm157, %v89
  %vm190 = vcmask 522246
  %191 = vst.msk [vmem:[%s91 + $0xb] sm:$0x40] %vm190, %v28
  %192 = vst.msk [vmem:[%s91 + $0x23] sm:$0x40] %vm190, %v30
  %193 = vst.msk [vmem:[%s91 + $0x3b] sm:$0x40] %vm190, %v32
  %194 = vst.msk [vmem:[%s91 + $0x53] sm:$0x40] %vm190, %v34
  %195 = vst.msk [vmem:[%s91 + $0x6b] sm:$0x40] %vm190, %v36
  %196 = vst.msk [vmem:[%s91 + $0x83] sm:$0x40] %vm190, %v38
  %197 = vst.msk [vmem:[%s91 + $0x9b] sm:$0x40] %vm190, %v40
  %198 = vst.msk [vmem:[%s91 + $0xb3] sm:$0x40] %vm190, %v42
  %199 = vst.msk [vmem:[%s91 + $0xcb] sm:$0x40] %vm190, %v44
  %200 = vst.msk [vmem:[%s91 + $0xe3] sm:$0x40] %vm190, %v46
  %201 = vst.msk [vmem:[%s91 + $0xfb] sm:$0x40] %vm190, %v48
  %202 = vst.msk [vmem:[%s91 + $0x113] sm:$0x40] %vm190, %v50
  %203 = vst.msk [vmem:[%s91 + $0x12b] sm:$0x40] %vm190, %v52
  %204 = vst.msk [vmem:[%s91 + $0x143] sm:$0x40] %vm190, %v54
  %205 = vst.msk [vmem:[%s91 + $0x15b] sm:$0x40] %vm190, %v56
  %206 = vst.msk [vmem:[%s91 + $0x173] sm:$0x40] %vm190, %v58
  %207 = vst.msk [vmem:[%s91 + $0x1bb] sm:$0x40] %vm190, %v60
  %208 = vst.msk [vmem:[%s91 + $0x1d3] sm:$0x40] %vm190, %v62
  %209 = vst.msk [vmem:[%s91 + $0x1eb] sm:$0x40] %vm190, %v64
  %210 = vst.msk [vmem:[%s91 + $0x203] sm:$0x40] %vm190, %v66
  %211 = vst.msk [vmem:[%s91 + $0x21b] sm:$0x40] %vm190, %v68
  %212 = vst.msk [vmem:[%s91 + $0x233] sm:$0x40] %vm190, %v70
  %213 = vst.msk [vmem:[%s91 + $0x24b] sm:$0x40] %vm190, %v72
  %214 = vst.msk [vmem:[%s91 + $0x263] sm:$0x40] %vm190, %v74
  %215 = vst.msk [vmem:[%s91 + $0x27b] sm:$0x40] %vm190, %v76
  %216 = vst.msk [vmem:[%s91 + $0x293] sm:$0x40] %vm190, %v78
  %217 = vst.msk [vmem:[%s91 + $0x2ab] sm:$0x40] %vm190, %v80
  %218 = vst.msk [vmem:[%s91 + $0x2c3] sm:$0x40] %vm190, %v82
  %219 = vst.msk [vmem:[%s91 + $0x2db] sm:$0x40] %vm190, %v84
  %220 = vst.msk [vmem:[%s91 + $0x2f3] sm:$0x40] %vm190, %v86
  %221 = vst.msk [vmem:[%s91 + $0x30b] sm:$0x40] %vm190, %v88
  %222 = vst.msk [vmem:[%s91 + $0x323] sm:$0x40] %vm190, %v90
  %s223 = scalar_lea.vmem [#allocation2], 48
  %v224 = vld [vmem:[%s223] sm:$0xff]
  %v225 = vld [vmem:[%s223 + $0x8] sm:$0xff]
  %v226 = vld [vmem:[%s223 + $0x10] sm:$0x3]
  %v227 = vld [vmem:[%s223 + $0x1b0] sm:$0xff]
  %v228 = vld [vmem:[%s223 + $0x1b8] sm:$0xff]
  %v229 = vld [vmem:[%s223 + $0x1c0] sm:$0x3]
  %230 = vst.msk [vmem:[#allocation2] sm:$0xff] %vm92, %v224
  %231 = vst.msk [vmem:[#allocation2 + $0x8] sm:$0xff] %vm92, %v225
  %vm232 = vcmask 517120
  %233 = vst.msk [vmem:[#allocation2 + $0x10] sm:$0x3] %vm232, %v226
  %234 = vst.msk [vmem:[#allocation2 + $0x1b0] sm:$0xff] %vm92, %v227
  %235 = vst.msk [vmem:[#allocation2 + $0x1b8] sm:$0xff] %vm92, %v228
  %236 = vst.msk [vmem:[#allocation2 + $0x1c0] sm:$0x3] %vm232, %v229
  %s237 = scalar_lea.vmem [#allocation2], 360
  %v238 = vld [vmem:[%s237] sm:$0xff]
  %v239 = vld [vmem:[%s237 + $0x8] sm:$0xff]
  %v240 = vld [vmem:[%s237 + $0x10] sm:$0x3]
  %v241 = vld [vmem:[%s237 + $0x1b0] sm:$0xff]
  %v242 = vld [vmem:[%s237 + $0x1b8] sm:$0xff]
  %v243 = vld [vmem:[%s237 + $0x1c0] sm:$0x3]
  %s244 = scalar_lea.vmem [#allocation2], 408
  %245 = vst.msk [vmem:[%s244] sm:$0xff] %vm92, %v238
  %246 = vst.msk [vmem:[%s244 + $0x8] sm:$0xff] %vm92, %v239
  %247 = vst.msk [vmem:[%s244 + $0x10] sm:$0x3] %vm232, %v240
  %248 = vst.msk [vmem:[%s244 + $0x1b0] sm:$0xff] %vm92, %v241
  %249 = vst.msk [vmem:[%s244 + $0x1b8] sm:$0xff] %vm92, %v242
  %250 = vst.msk [vmem:[%s244 + $0x1c0] sm:$0x3] %vm232, %v243
  %v251 = vld [vmem:[#allocation2] sm:$0xff]
  %v252 = vld [vmem:[#allocation2 + $0x8] sm:$0xff]
  %v253 = vld [vmem:[#allocation2 + $0x18] sm:$0xff]
  %v254 = vld [vmem:[#allocation2 + $0x20] sm:$0xff]
  %v255 = vld [vmem:[#allocation2 + $0x30] sm:$0xff]
  %v256 = vld [vmem:[#allocation2 + $0x38] sm:$0xff]
  %v257 = vld [vmem:[#allocation2 + $0x48] sm:$0xff]
  %v258 = vld [vmem:[#allocation2 + $0x50] sm:$0xff]
  %v259 = vld [vmem:[#allocation2 + $0x60] sm:$0xff]
  %v260 = vld [vmem:[#allocation2 + $0x68] sm:$0xff]
  %v261 = vld [vmem:[#allocation2 + $0x78] sm:$0xff]
  %v262 = vld [vmem:[#allocation2 + $0x80] sm:$0xff]
  %v263 = vld [vmem:[#allocation2 + $0x90] sm:$0xff]
  %v264 = vld [vmem:[#allocation2 + $0x98] sm:$0xff]
  %v265 = vld [vmem:[#allocation2 + $0xa8] sm:$0xff]
  %v266 = vld [vmem:[#allocation2 + $0xb0] sm:$0xff]
  %v267 = vld [vmem:[#allocation2 + $0xc0] sm:$0xff]
  %v268 = vld [vmem:[#allocation2 + $0xc8] sm:$0xff]
  %v269 = vld [vmem:[#allocation2 + $0xd8] sm:$0xff]
  %v270 = vld [vmem:[#allocation2 + $0xe0] sm:$0xff]
  %v271 = vld [vmem:[#allocation2 + $0xf0] sm:$0xff]
  %v272 = vld [vmem:[#allocation2 + $0xf8] sm:$0xff]
  %v273 = vld [vmem:[#allocation2 + $0x108] sm:$0xff]
  %v274 = vld [vmem:[#allocation2 + $0x110] sm:$0xff]
  %v275 = vld [vmem:[#allocation2 + $0x120] sm:$0xff]
  %v276 = vld [vmem:[#allocation2 + $0x128] sm:$0xff]
  %v277 = vld [vmem:[#allocation2 + $0x138] sm:$0xff]
  %v278 = vld [vmem:[#allocation2 + $0x140] sm:$0xff]
  %v279 = vld [vmem:[#allocation2 + $0x150] sm:$0xff]
  %v280 = vld [vmem:[#allocation2 + $0x158] sm:$0xff]
  %v281 = vld [vmem:[#allocation2 + $0x168] sm:$0xff]
  %v282 = vld [vmem:[#allocation2 + $0x170] sm:$0xff]
  %v283 = vld [vmem:[#allocation2 + $0x1b0] sm:$0xff]
  %v284 = vld [vmem:[#allocation2 + $0x1b8] sm:$0xff]
  %v285 = vld [vmem:[#allocation2 + $0x1c8] sm:$0xff]
  %v286 = vld [vmem:[#allocation2 + $0x1d0] sm:$0xff]
  %v287 = vld [vmem:[#allocation2 + $0x1e0] sm:$0xff]
  %v288 = vld [vmem:[#allocation2 + $0x1e8] sm:$0xff]
  %v289 = vld [vmem:[#allocation2 + $0x1f8] sm:$0xff]
  %v290 = vld [vmem:[#allocation2 + $0x200] sm:$0xff]
  %v291 = vld [vmem:[#allocation2 + $0x210] sm:$0xff]
  %v292 = vld [vmem:[#allocation2 + $0x218] sm:$0xff]
  %v293 = vld [vmem:[#allocation2 + $0x228] sm:$0xff]
  %v294 = vld [vmem:[#allocation2 + $0x230] sm:$0xff]
  %v295 = vld [vmem:[#allocation2 + $0x240] sm:$0xff]
  %v296 = vld [vmem:[#allocation2 + $0x248] sm:$0xff]
  %v297 = vld [vmem:[#allocation2 + $0x258] sm:$0xff]
  %v298 = vld [vmem:[#allocation2 + $0x260] sm:$0xff]
  %v299 = vld [vmem:[#allocation2 + $0x270] sm:$0xff]
  %v300 = vld [vmem:[#allocation2 + $0x278] sm:$0xff]
  %v301 = vld [vmem:[#allocation2 + $0x288] sm:$0xff]
  %v302 = vld [vmem:[#allocation2 + $0x290] sm:$0xff]
  %v303 = vld [vmem:[#allocation2 + $0x2a0] sm:$0xff]
  %v304 = vld [vmem:[#allocation2 + $0x2a8] sm:$0xff]
  %v305 = vld [vmem:[#allocation2 + $0x2b8] sm:$0xff]
  %v306 = vld [vmem:[#allocation2 + $0x2c0] sm:$0xff]
  %v307 = vld [vmem:[#allocation2 + $0x2d0] sm:$0xff]
  %v308 = vld [vmem:[#allocation2 + $0x2d8] sm:$0xff]
  %v309 = vld [vmem:[#allocation2 + $0x2e8] sm:$0xff]
  %v310 = vld [vmem:[#allocation2 + $0x2f0] sm:$0xff]
  %v311 = vld [vmem:[#allocation2 + $0x300] sm:$0xff]
  %v312 = vld [vmem:[#allocation2 + $0x308] sm:$0xff]
  %v313 = vld [vmem:[#allocation2 + $0x318] sm:$0xff]
  %v314 = vld [vmem:[#allocation2 + $0x320] sm:$0xff]
  %v315 = vld [vmem:[#allocation2 + $0x1] sm:$0xff]
  %v316 = vld [vmem:[#allocation2 + $0x9] sm:$0xff]
  %v317 = vld [vmem:[#allocation2 + $0x19] sm:$0xff]
  %v318 = vld [vmem:[#allocation2 + $0x21] sm:$0xff]
  %v319 = vld [vmem:[#allocation2 + $0x31] sm:$0xff]
  %v320 = vld [vmem:[#allocation2 + $0x39] sm:$0xff]
  %v321 = vld [vmem:[#allocation2 + $0x49] sm:$0xff]
  %v322 = vld [vmem:[#allocation2 + $0x51] sm:$0xff]
  %v323 = vld [vmem:[#allocation2 + $0x61] sm:$0xff]
  %v324 = vld [vmem:[#allocation2 + $0x69] sm:$0xff]
  %v325 = vld [vmem:[#allocation2 + $0x79] sm:$0xff]
  %v326 = vld [vmem:[#allocation2 + $0x81] sm:$0xff]
  %v327 = vld [vmem:[#allocation2 + $0x91] sm:$0xff]
  %v328 = vld [vmem:[#allocation2 + $0x99] sm:$0xff]
  %v329 = vld [vmem:[#allocation2 + $0xa9] sm:$0xff]
  %v330 = vld [vmem:[#allocation2 + $0xb1] sm:$0xff]
  %v331 = vld [vmem:[#allocation2 + $0xc1] sm:$0xff]
  %v332 = vld [vmem:[#allocation2 + $0xc9] sm:$0xff]
  %v333 = vld [vmem:[#allocation2 + $0xd9] sm:$0xff]
  %v334 = vld [vmem:[#allocation2 + $0xe1] sm:$0xff]
  %v335 = vld [vmem:[#allocation2 + $0xf1] sm:$0xff]
  %v336 = vld [vmem:[#allocation2 + $0xf9] sm:$0xff]
  %v337 = vld [vmem:[#allocation2 + $0x109] sm:$0xff]
  %v338 = vld [vmem:[#allocation2 + $0x111] sm:$0xff]
  %v339 = vld [vmem:[#allocation2 + $0x121] sm:$0xff]
  %v340 = vld [vmem:[#allocation2 + $0x129] sm:$0xff]
  %v341 = vld [vmem:[#allocation2 + $0x139] sm:$0xff]
  %v342 = vld [vmem:[#allocation2 + $0x141] sm:$0xff]
  %v343 = vld [vmem:[#allocation2 + $0x151] sm:$0xff]
  %v344 = vld [vmem:[#allocation2 + $0x159] sm:$0xff]
  %v345 = vld [vmem:[#allocation2 + $0x169] sm:$0xff]
  %v346 = vld [vmem:[#allocation2 + $0x171] sm:$0xff]
  %v347 = vld [vmem:[#allocation2 + $0x1b1] sm:$0xff]
  %v348 = vld [vmem:[#allocation2 + $0x1b9] sm:$0xff]
  %v349 = vld [vmem:[#allocation2 + $0x1c9] sm:$0xff]
  %v350 = vld [vmem:[#allocation2 + $0x1d1] sm:$0xff]
  %v351 = vld [vmem:[#allocation2 + $0x1e1] sm:$0xff]
  %v352 = vld [vmem:[#allocation2 + $0x1e9] sm:$0xff]
  %v353 = vld [vmem:[#allocation2 + $0x1f9] sm:$0xff]
  %v354 = vld [vmem:[#allocation2 + $0x201] sm:$0xff]
  %v355 = vld [vmem:[#allocation2 + $0x211] sm:$0xff]
  %v356 = vld [vmem:[#allocation2 + $0x219] sm:$0xff]
  %v357 = vld [vmem:[#allocation2 + $0x229] sm:$0xff]
  %v358 = vld [vmem:[#allocation2 + $0x231] sm:$0xff]
  %v359 = vld [vmem:[#allocation2 + $0x241] sm:$0xff]
  %v360 = vld [vmem:[#allocation2 + $0x249] sm:$0xff]
  %v361 = vld [vmem:[#allocation2 + $0x259] sm:$0xff]
  %v362 = vld [vmem:[#allocation2 + $0x261] sm:$0xff]
  %v363 = vld [vmem:[#allocation2 + $0x271] sm:$0xff]
  %v364 = vld [vmem:[#allocation2 + $0x279] sm:$0xff]
  %v365 = vld [vmem:[#allocation2 + $0x289] sm:$0xff]
  %v366 = vld [vmem:[#allocation2 + $0x291] sm:$0xff]
  %v367 = vld [vmem:[#allocation2 + $0x2a1] sm:$0xff]
  %v368 = vld [vmem:[#allocation2 + $0x2a9] sm:$0xff]
  %v369 = vld [vmem:[#allocation2 + $0x2b9] sm:$0xff]
  %v370 = vld [vmem:[#allocation2 + $0x2c1] sm:$0xff]
  %v371 = vld [vmem:[#allocation2 + $0x2d1] sm:$0xff]
  %v372 = vld [vmem:[#allocation2 + $0x2d9] sm:$0xff]
  %v373 = vld [vmem:[#allocation2 + $0x2e9] sm:$0xff]
  %v374 = vld [vmem:[#allocation2 + $0x2f1] sm:$0xff]
  %v375 = vld [vmem:[#allocation2 + $0x301] sm:$0xff]
  %v376 = vld [vmem:[#allocation2 + $0x309] sm:$0xff]
  %v377 = vld [vmem:[#allocation2 + $0x319] sm:$0xff]
  %v378 = vld [vmem:[#allocation2 + $0x321] sm:$0xff]
  %443 = vrot.lane.b32.xlu0 %v315, 64
  %v444 = vpop.permute.xlu0 %443
  %445 = vrot.lane.b32.xlu0 %v316, 64
  %v446 = vpop.permute.xlu0 %445
  %447 = vrot.lane.b32.xlu0 %v317, 64
  %v448 = vpop.permute.xlu0 %447
  %449 = vrot.lane.b32.xlu0 %v318, 64
  %v450 = vpop.permute.xlu0 %449
  %451 = vrot.lane.b32.xlu0 %v319, 64
  %v452 = vpop.permute.xlu0 %451
  %453 = vrot.lane.b32.xlu0 %v320, 64
  %v454 = vpop.permute.xlu0 %453
  %455 = vrot.lane.b32.xlu0 %v321, 64
  %v456 = vpop.permute.xlu0 %455
  %457 = vrot.lane.b32.xlu0 %v322, 64
  %v458 = vpop.permute.xlu0 %457
  %459 = vrot.lane.b32.xlu0 %v323, 64
  %v460 = vpop.permute.xlu0 %459
  %461 = vrot.lane.b32.xlu0 %v324, 64
  %v462 = vpop.permute.xlu0 %461
  %463 = vrot.lane.b32.xlu0 %v325, 64
  %v464 = vpop.permute.xlu0 %463
  %465 = vrot.lane.b32.xlu0 %v326, 64
  %v466 = vpop.permute.xlu0 %465
  %467 = vrot.lane.b32.xlu0 %v327, 64
  %v468 = vpop.permute.xlu0 %467
  %469 = vrot.lane.b32.xlu0 %v328, 64
  %v470 = vpop.permute.xlu0 %469
  %471 = vrot.lane.b32.xlu0 %v329, 64
  %v472 = vpop.permute.xlu0 %471
  %473 = vrot.lane.b32.xlu0 %v330, 64
  %v474 = vpop.permute.xlu0 %473
  %475 = vrot.lane.b32.xlu0 %v331, 64
  %v476 = vpop.permute.xlu0 %475
  %477 = vrot.lane.b32.xlu0 %v332, 64
  %v478 = vpop.permute.xlu0 %477
  %479 = vrot.lane.b32.xlu0 %v333, 64
  %v480 = vpop.permute.xlu0 %479
  %481 = vrot.lane.b32.xlu0 %v334, 64
  %v482 = vpop.permute.xlu0 %481
  %483 = vrot.lane.b32.xlu0 %v335, 64
  %v484 = vpop.permute.xlu0 %483
  %485 = vrot.lane.b32.xlu0 %v336, 64
  %v486 = vpop.permute.xlu0 %485
  %487 = vrot.lane.b32.xlu0 %v337, 64
  %v488 = vpop.permute.xlu0 %487
  %489 = vrot.lane.b32.xlu0 %v338, 64
  %v490 = vpop.permute.xlu0 %489
  %491 = vrot.lane.b32.xlu0 %v339, 64
  %v492 = vpop.permute.xlu0 %491
  %493 = vrot.lane.b32.xlu0 %v340, 64
  %v494 = vpop.permute.xlu0 %493
  %495 = vrot.lane.b32.xlu0 %v341, 64
  %v496 = vpop.permute.xlu0 %495
  %497 = vrot.lane.b32.xlu0 %v342, 64
  %v498 = vpop.permute.xlu0 %497
  %499 = vrot.lane.b32.xlu0 %v343, 64
  %v500 = vpop.permute.xlu0 %499
  %501 = vrot.lane.b32.xlu0 %v344, 64
  %v502 = vpop.permute.xlu0 %501
  %503 = vrot.lane.b32.xlu0 %v345, 64
  %v504 = vpop.permute.xlu0 %503
  %505 = vrot.lane.b32.xlu0 %v346, 64
  %v506 = vpop.permute.xlu0 %505
  %507 = vrot.lane.b32.xlu0 %v347, 64
  %v508 = vpop.permute.xlu0 %507
  %509 = vrot.lane.b32.xlu0 %v348, 64
  %v510 = vpop.permute.xlu0 %509
  %511 = vrot.lane.b32.xlu0 %v349, 64
  %v512 = vpop.permute.xlu0 %511
  %513 = vrot.lane.b32.xlu0 %v350, 64
  %v514 = vpop.permute.xlu0 %513
  %515 = vrot.lane.b32.xlu0 %v351, 64
  %v516 = vpop.permute.xlu0 %515
  %517 = vrot.lane.b32.xlu0 %v352, 64
  %v518 = vpop.permute.xlu0 %517
  %519 = vrot.lane.b32.xlu0 %v353, 64
  %v520 = vpop.permute.xlu0 %519
  %521 = vrot.lane.b32.xlu0 %v354, 64
  %v522 = vpop.permute.xlu0 %521
  %523 = vrot.lane.b32.xlu0 %v355, 64
  %v524 = vpop.permute.xlu0 %523
  %525 = vrot.lane.b32.xlu0 %v356, 64
  %v526 = vpop.permute.xlu0 %525
  %527 = vrot.lane.b32.xlu0 %v357, 64
  %v528 = vpop.permute.xlu0 %527
  %529 = vrot.lane.b32.xlu0 %v358, 64
  %v530 = vpop.permute.xlu0 %529
  %531 = vrot.lane.b32.xlu0 %v359, 64
  %v532 = vpop.permute.xlu0 %531
  %533 = vrot.lane.b32.xlu0 %v360, 64
  %v534 = vpop.permute.xlu0 %533
  %535 = vrot.lane.b32.xlu0 %v361, 64
  %v536 = vpop.permute.xlu0 %535
  %537 = vrot.lane.b32.xlu0 %v362, 64
  %v538 = vpop.permute.xlu0 %537
  %539 = vrot.lane.b32.xlu0 %v363, 64
  %v540 = vpop.permute.xlu0 %539
  %541 = vrot.lane.b32.xlu0 %v364, 64
  %v542 = vpop.permute.xlu0 %541
  %543 = vrot.lane.b32.xlu0 %v365, 64
  %v544 = vpop.permute.xlu0 %543
  %545 = vrot.lane.b32.xlu0 %v366, 64
  %v546 = vpop.permute.xlu0 %545
  %547 = vrot.lane.b32.xlu0 %v367, 64
  %v548 = vpop.permute.xlu0 %547
  %549 = vrot.lane.b32.xlu0 %v368, 64
  %v550 = vpop.permute.xlu0 %549
  %551 = vrot.lane.b32.xlu0 %v369, 64
  %v552 = vpop.permute.xlu0 %551
  %553 = vrot.lane.b32.xlu0 %v370, 64
  %v554 = vpop.permute.xlu0 %553
  %555 = vrot.lane.b32.xlu0 %v371, 64
  %v556 = vpop.permute.xlu0 %555
  %557 = vrot.lane.b32.xlu0 %v372, 64
  %v558 = vpop.permute.xlu0 %557
  %559 = vrot.lane.b32.xlu0 %v373, 64
  %v560 = vpop.permute.xlu0 %559
  %561 = vrot.lane.b32.xlu0 %v374, 64
  %v562 = vpop.permute.xlu0 %561
  %563 = vrot.lane.b32.xlu0 %v375, 64
  %v564 = vpop.permute.xlu0 %563
  %565 = vrot.lane.b32.xlu0 %v376, 64
  %v566 = vpop.permute.xlu0 %565
  %567 = vrot.lane.b32.xlu0 %v377, 64
  %v568 = vpop.permute.xlu0 %567
  %569 = vrot.lane.b32.xlu0 %v378, 64
  %v570 = vpop.permute.xlu0 %569
  %v635 = vsel %vm92, %v251, %v444
  %v636 = vsel %vm92, %v252, %v446
  %v637 = vsel %vm92, %v253, %v448
  %v638 = vsel %vm92, %v254, %v450
  %v639 = vsel %vm92, %v255, %v452
  %v640 = vsel %vm92, %v256, %v454
  %v641 = vsel %vm92, %v257, %v456
  %v642 = vsel %vm92, %v258, %v458
  %v643 = vsel %vm92, %v259, %v460
  %v644 = vsel %vm92, %v260, %v462
  %v645 = vsel %vm92, %v261, %v464
  %v646 = vsel %vm92, %v262, %v466
  %v647 = vsel %vm92, %v263, %v468
  %v648 = vsel %vm92, %v264, %v470
  %v649 = vsel %vm92, %v265, %v472
  %v650 = vsel %vm92, %v266, %v474
  %v651 = vsel %vm92, %v267, %v476
  %v652 = vsel %vm92, %v268, %v478
  %v653 = vsel %vm92, %v269, %v480
  %v654 = vsel %vm92, %v270, %v482
  %v655 = vsel %vm92, %v271, %v484
  %v656 = vsel %vm92, %v272, %v486
  %v657 = vsel %vm92, %v273, %v488
  %v658 = vsel %vm92, %v274, %v490
  %v659 = vsel %vm92, %v275, %v492
  %v660 = vsel %vm92, %v276, %v494
  %v661 = vsel %vm92, %v277, %v496
  %v662 = vsel %vm92, %v278, %v498
  %v663 = vsel %vm92, %v279, %v500
  %v664 = vsel %vm92, %v280, %v502
  %v665 = vsel %vm92, %v281, %v504
  %v666 = vsel %vm92, %v282, %v506
  %v667 = vsel %vm92, %v283, %v508
  %v668 = vsel %vm92, %v284, %v510
  %v669 = vsel %vm92, %v285, %v512
  %v670 = vsel %vm92, %v286, %v514
  %v671 = vsel %vm92, %v287, %v516
  %v672 = vsel %vm92, %v288, %v518
  %v673 = vsel %vm92, %v289, %v520
  %v674 = vsel %vm92, %v290, %v522
  %v675 = vsel %vm92, %v291, %v524
  %v676 = vsel %vm92, %v292, %v526
  %v677 = vsel %vm92, %v293, %v528
  %v678 = vsel %vm92, %v294, %v530
  %v679 = vsel %vm92, %v295, %v532
  %v680 = vsel %vm92, %v296, %v534
  %v681 = vsel %vm92, %v297, %v536
  %v682 = vsel %vm92, %v298, %v538
  %v683 = vsel %vm92, %v299, %v540
  %v684 = vsel %vm92, %v300, %v542
  %v685 = vsel %vm92, %v301, %v544
  %v686 = vsel %vm92, %v302, %v546
  %v687 = vsel %vm92, %v303, %v548
  %v688 = vsel %vm92, %v304, %v550
  %v689 = vsel %vm92, %v305, %v552
  %v690 = vsel %vm92, %v306, %v554
  %v691 = vsel %vm92, %v307, %v556
  %v692 = vsel %vm92, %v308, %v558
  %v693 = vsel %vm92, %v309, %v560
  %v694 = vsel %vm92, %v310, %v562
  %v695 = vsel %vm92, %v311, %v564
  %v696 = vsel %vm92, %v312, %v566
  %v697 = vsel %vm92, %v313, %v568
  %v698 = vsel %vm92, %v314, %v570
  %v699 = vpack.c.bf16 %v636, %v635
  %v700 = vpack.c.bf16 %v638, %v637
  %v701 = vpack.c.bf16 %v640, %v639
  %v702 = vpack.c.bf16 %v642, %v641
  %v703 = vpack.c.bf16 %v644, %v643
  %v704 = vpack.c.bf16 %v646, %v645
  %v705 = vpack.c.bf16 %v648, %v647
  %v706 = vpack.c.bf16 %v650, %v649
  %v707 = vpack.c.bf16 %v652, %v651
  %v708 = vpack.c.bf16 %v654, %v653
  %v709 = vpack.c.bf16 %v656, %v655
  %v710 = vpack.c.bf16 %v658, %v657
  %v711 = vpack.c.bf16 %v660, %v659
  %v712 = vpack.c.bf16 %v662, %v661
  %v713 = vpack.c.bf16 %v664, %v663
  %v714 = vpack.c.bf16 %v666, %v665
  %v715 = vpack.c.bf16 %v668, %v667
  %v716 = vpack.c.bf16 %v670, %v669
  %v717 = vpack.c.bf16 %v672, %v671
  %v718 = vpack.c.bf16 %v674, %v673
  %v719 = vpack.c.bf16 %v676, %v675
  %v720 = vpack.c.bf16 %v678, %v677
  %v721 = vpack.c.bf16 %v680, %v679
  %v722 = vpack.c.bf16 %v682, %v681
  %v723 = vpack.c.bf16 %v684, %v683
  %v724 = vpack.c.bf16 %v686, %v685
  %v725 = vpack.c.bf16 %v688, %v687
  %v726 = vpack.c.bf16 %v690, %v689
  %v727 = vpack.c.bf16 %v692, %v691
  %v728 = vpack.c.bf16 %v694, %v693
  %v729 = vpack.c.bf16 %v696, %v695
  %v730 = vpack.c.bf16 %v698, %v697
  %v731 = vld [vmem:[%s1] sm:$0xf]
  %v732 = vld [vmem:[%s1 + $0x4] sm:$0xf]
  %v733 = vld [vmem:[%s1 + $0x8] sm:$0xf]
  %v734 = vld [vmem:[%s1 + $0xc] sm:$0xf]
  %v735 = vld [vmem:[%s1 + $0x10] sm:$0xf]
  %v736 = vld [vmem:[%s1 + $0x14] sm:$0xf]
  %v737 = vld [vmem:[%s1 + $0x18] sm:$0xf]
  %v738 = vld [vmem:[%s1 + $0x1c] sm:$0xf]
  %v739 = vld [vmem:[%s1 + $0x20] sm:$0xf]
  %v740 = vld [vmem:[%s1 + $0x24] sm:$0xf]
  %v741 = vld [vmem:[%s1 + $0x28] sm:$0xf]
  %v742 = vld [vmem:[%s1 + $0x2c] sm:$0xf]
  %v743 = vld [vmem:[%s1 + $0x30] sm:$0xf]
  %v744 = vld [vmem:[%s1 + $0x34] sm:$0xf]
  %v745 = vld [vmem:[%s1 + $0x38] sm:$0xf]
  %v746 = vld [vmem:[%s1 + $0x3c] sm:$0xf]
  %v747 = vld [vmem:[#allocation2 + $0x2] sm:$0xff]
  %v748 = vld [vmem:[#allocation2 + $0xa] sm:$0xff]
  %v749 = vld [vmem:[#allocation2 + $0x1a] sm:$0xff]
  %v750 = vld [vmem:[#allocation2 + $0x22] sm:$0xff]
  %v751 = vld [vmem:[#allocation2 + $0x32] sm:$0xff]
  %v752 = vld [vmem:[#allocation2 + $0x3a] sm:$0xff]
  %v753 = vld [vmem:[#allocation2 + $0x4a] sm:$0xff]
  %v754 = vld [vmem:[#allocation2 + $0x52] sm:$0xff]
  %v755 = vld [vmem:[#allocation2 + $0x62] sm:$0xff]
  %v756 = vld [vmem:[#allocation2 + $0x6a] sm:$0xff]
  %v757 = vld [vmem:[#allocation2 + $0x7a] sm:$0xff]
  %v758 = vld [vmem:[#allocation2 + $0x82] sm:$0xff]
  %v759 = vld [vmem:[#allocation2 + $0x92] sm:$0xff]
  %v760 = vld [vmem:[#allocation2 + $0x9a] sm:$0xff]
  %v761 = vld [vmem:[#allocation2 + $0xaa] sm:$0xff]
  %v762 = vld [vmem:[#allocation2 + $0xb2] sm:$0xff]
  %v763 = vld [vmem:[#allocation2 + $0xc2] sm:$0xff]
  %v764 = vld [vmem:[#allocation2 + $0xca] sm:$0xff]
  %v765 = vld [vmem:[#allocation2 + $0xda] sm:$0xff]
  %v766 = vld [vmem:[#allocation2 + $0xe2] sm:$0xff]
  %v767 = vld [vmem:[#allocation2 + $0xf2] sm:$0xff]
  %v768 = vld [vmem:[#allocation2 + $0xfa] sm:$0xff]
  %v769 = vld [vmem:[#allocation2 + $0x10a] sm:$0xff]
  %v770 = vld [vmem:[#allocation2 + $0x112] sm:$0xff]
  %v771 = vld [vmem:[#allocation2 + $0x122] sm:$0xff]
  %v772 = vld [vmem:[#allocation2 + $0x12a] sm:$0xff]
  %v773 = vld [vmem:[#allocation2 + $0x13a] sm:$0xff]
  %v774 = vld [vmem:[#allocation2 + $0x142] sm:$0xff]
  %v775 = vld [vmem:[#allocation2 + $0x152] sm:$0xff]
  %v776 = vld [vmem:[#allocation2 + $0x15a] sm:$0xff]
  %v777 = vld [vmem:[#allocation2 + $0x16a] sm:$0xff]
  %v778 = vld [vmem:[#allocation2 + $0x172] sm:$0xff]
  %v779 = vld [vmem:[#allocation2 + $0x1b2] sm:$0xff]
  %v780 = vld [vmem:[#allocation2 + $0x1ba] sm:$0xff]
  %v781 = vld [vmem:[#allocation2 + $0x1ca] sm:$0xff]
  %v782 = vld [vmem:[#allocation2 + $0x1d2] sm:$0xff]
  %v783 = vld [vmem:[#allocation2 + $0x1e2] sm:$0xff]
  %v784 = vld [vmem:[#allocation2 + $0x1ea] sm:$0xff]
  %v785 = vld [vmem:[#allocation2 + $0x1fa] sm:$0xff]
  %v786 = vld [vmem:[#allocation2 + $0x202] sm:$0xff]
  %v787 = vld [vmem:[#allocation2 + $0x212] sm:$0xff]
  %v788 = vld [vmem:[#allocation2 + $0x21a] sm:$0xff]
  %v789 = vld [vmem:[#allocation2 + $0x22a] sm:$0xff]
  %v790 = vld [vmem:[#allocation2 + $0x232] sm:$0xff]
  %v791 = vld [vmem:[#allocation2 + $0x242] sm:$0xff]
  %v792 = vld [vmem:[#allocation2 + $0x24a] sm:$0xff]
  %v793 = vld [vmem:[#allocation2 + $0x25a] sm:$0xff]
  %v794 = vld [vmem:[#allocation2 + $0x262] sm:$0xff]
  %v795 = vld [vmem:[#allocation2 + $0x272] sm:$0xff]
  %v796 = vld [vmem:[#allocation2 + $0x27a] sm:$0xff]
  %v797 = vld [vmem:[#allocation2 + $0x28a] sm:$0xff]
  %v798 = vld [vmem:[#allocation2 + $0x292] sm:$0xff]
  %v799 = vld [vmem:[#allocation2 + $0x2a2] sm:$0xff]
  %v800 = vld [vmem:[#allocation2 + $0x2aa] sm:$0xff]
  %v801 = vld [vmem:[#allocation2 + $0x2ba] sm:$0xff]
  %v802 = vld [vmem:[#allocation2 + $0x2c2] sm:$0xff]
  %v803 = vld [vmem:[#allocation2 + $0x2d2] sm:$0xff]
  %v804 = vld [vmem:[#allocation2 + $0x2da] sm:$0xff]
  %v805 = vld [vmem:[#allocation2 + $0x2ea] sm:$0xff]
  %v806 = vld [vmem:[#allocation2 + $0x2f2] sm:$0xff]
  %v807 = vld [vmem:[#allocation2 + $0x302] sm:$0xff]
  %v808 = vld [vmem:[#allocation2 + $0x30a] sm:$0xff]
  %v809 = vld [vmem:[#allocation2 + $0x31a] sm:$0xff]
  %v810 = vld [vmem:[#allocation2 + $0x322] sm:$0xff]
  %v811 = vld [vmem:[%s91] sm:$0xff]
  %v812 = vld [vmem:[%s91 + $0x8] sm:$0xff]
  %v813 = vld [vmem:[%s91 + $0x18] sm:$0xff]
  %v814 = vld [vmem:[%s91 + $0x20] sm:$0xff]
  %v815 = vld [vmem:[%s91 + $0x30] sm:$0xff]
  %v816 = vld [vmem:[%s91 + $0x38] sm:$0xff]
  %v817 = vld [vmem:[%s91 + $0x48] sm:$0xff]
  %v818 = vld [vmem:[%s91 + $0x50] sm:$0xff]
  %v819 = vld [vmem:[%s91 + $0x60] sm:$0xff]
  %v820 = vld [vmem:[%s91 + $0x68] sm:$0xff]
  %v821 = vld [vmem:[%s91 + $0x78] sm:$0xff]
  %v822 = vld [vmem:[%s91 + $0x80] sm:$0xff]
  %v823 = vld [vmem:[%s91 + $0x90] sm:$0xff]
  %v824 = vld [vmem:[%s91 + $0x98] sm:$0xff]
  %v825 = vld [vmem:[%s91 + $0xa8] sm:$0xff]
  %v826 = vld [vmem:[%s91 + $0xb0] sm:$0xff]
  %v827 = vld [vmem:[%s91 + $0xc0] sm:$0xff]
  %v828 = vld [vmem:[%s91 + $0xc8] sm:$0xff]
  %v829 = vld [vmem:[%s91 + $0xd8] sm:$0xff]
  %v830 = vld [vmem:[%s91 + $0xe0] sm:$0xff]
  %v831 = vld [vmem:[%s91 + $0xf0] sm:$0xff]
  %v832 = vld [vmem:[%s91 + $0xf8] sm:$0xff]
  %v833 = vld [vmem:[%s91 + $0x108] sm:$0xff]
  %v834 = vld [vmem:[%s91 + $0x110] sm:$0xff]
  %v835 = vld [vmem:[%s91 + $0x120] sm:$0xff]
  %v836 = vld [vmem:[%s91 + $0x128] sm:$0xff]
  %v837 = vld [vmem:[%s91 + $0x138] sm:$0xff]
  %v838 = vld [vmem:[%s91 + $0x140] sm:$0xff]
  %v839 = vld [vmem:[%s91 + $0x150] sm:$0xff]
  %v840 = vld [vmem:[%s91 + $0x158] sm:$0xff]
  %v841 = vld [vmem:[%s91 + $0x168] sm:$0xff]
  %v842 = vld [vmem:[%s91 + $0x170] sm:$0xff]
  %v843 = vld [vmem:[%s91 + $0x1b0] sm:$0xff]
  %v844 = vld [vmem:[%s91 + $0x1b8] sm:$0xff]
  %v845 = vld [vmem:[%s91 + $0x1c8] sm:$0xff]
  %v846 = vld [vmem:[%s91 + $0x1d0] sm:$0xff]
  %v847 = vld [vmem:[%s91 + $0x1e0] sm:$0xff]
  %v848 = vld [vmem:[%s91 + $0x1e8] sm:$0xff]
  %v849 = vld [vmem:[%s91 + $0x1f8] sm:$0xff]
  %v850 = vld [vmem:[%s91 + $0x200] sm:$0xff]
  %v851 = vld [vmem:[%s91 + $0x210] sm:$0xff]
  %v852 = vld [vmem:[%s91 + $0x218] sm:$0xff]
  %v853 = vld [vmem:[%s91 + $0x228] sm:$0xff]
  %v854 = vld [vmem:[%s91 + $0x230] sm:$0xff]
  %v855 = vld [vmem:[%s91 + $0x240] sm:$0xff]
  %v856 = vld [vmem:[%s91 + $0x248] sm:$0xff]
  %v857 = vld [vmem:[%s91 + $0x258] sm:$0xff]
  %v858 = vld [vmem:[%s91 + $0x260] sm:$0xff]
  %v859 = vld [vmem:[%s91 + $0x270] sm:$0xff]
  %v860 = vld [vmem:[%s91 + $0x278] sm:$0xff]
  %v861 = vld [vmem:[%s91 + $0x288] sm:$0xff]
  %v862 = vld [vmem:[%s91 + $0x290] sm:$0xff]
  %v863 = vld [vmem:[%s91 + $0x2a0] sm:$0xff]
  %v864 = vld [vmem:[%s91 + $0x2a8] sm:$0xff]
  %v865 = vld [vmem:[%s91 + $0x2b8] sm:$0xff]
  %v866 = vld [vmem:[%s91 + $0x2c0] sm:$0xff]
  %v867 = vld [vmem:[%s91 + $0x2d0] sm:$0xff]
  %v868 = vld [vmem:[%s91 + $0x2d8] sm:$0xff]
  %v869 = vld [vmem:[%s91 + $0x2e8] sm:$0xff]
  %v870 = vld [vmem:[%s91 + $0x2f0] sm:$0xff]
  %v871 = vld [vmem:[%s91 + $0x300] sm:$0xff]
  %v872 = vld [vmem:[%s91 + $0x308] sm:$0xff]
  %v873 = vld [vmem:[%s91 + $0x318] sm:$0xff]
  %v874 = vld [vmem:[%s91 + $0x320] sm:$0xff]
  %939 = vrot.lane.b32.xlu0 %v811, 64
  %v940 = vpop.permute.xlu0 %939
  %941 = vrot.lane.b32.xlu0 %v812, 64
  %v942 = vpop.permute.xlu0 %941
  %943 = vrot.lane.b32.xlu0 %v813, 64
  %v944 = vpop.permute.xlu0 %943
  %945 = vrot.lane.b32.xlu0 %v814, 64
  %v946 = vpop.permute.xlu0 %945
  %947 = vrot.lane.b32.xlu0 %v815, 64
  %v948 = vpop.permute.xlu0 %947
  %949 = vrot.lane.b32.xlu0 %v816, 64
  %v950 = vpop.permute.xlu0 %949
  %951 = vrot.lane.b32.xlu0 %v817, 64
  %v952 = vpop.permute.xlu0 %951
  %953 = vrot.lane.b32.xlu0 %v818, 64
  %v954 = vpop.permute.xlu0 %953
  %955 = vrot.lane.b32.xlu0 %v819, 64
  %v956 = vpop.permute.xlu0 %955
  %957 = vrot.lane.b32.xlu0 %v820, 64
  %v958 = vpop.permute.xlu0 %957
  %959 = vrot.lane.b32.xlu0 %v821, 64
  %v960 = vpop.permute.xlu0 %959
  %961 = vrot.lane.b32.xlu0 %v822, 64
  %v962 = vpop.permute.xlu0 %961
  %963 = vrot.lane.b32.xlu0 %v823, 64
  %v964 = vpop.permute.xlu0 %963
  %965 = vrot.lane.b32.xlu0 %v824, 64
  %v966 = vpop.permute.xlu0 %965
  %967 = vrot.lane.b32.xlu0 %v825, 64
  %v968 = vpop.permute.xlu0 %967
  %969 = vrot.lane.b32.xlu0 %v826, 64
  %v970 = vpop.permute.xlu0 %969
  %971 = vrot.lane.b32.xlu0 %v827, 64
  %v972 = vpop.permute.xlu0 %971
  %973 = vrot.lane.b32.xlu0 %v828, 64
  %v974 = vpop.permute.xlu0 %973
  %975 = vrot.lane.b32.xlu0 %v829, 64
  %v976 = vpop.permute.xlu0 %975
  %977 = vrot.lane.b32.xlu0 %v830, 64
  %v978 = vpop.permute.xlu0 %977
  %979 = vrot.lane.b32.xlu0 %v831, 64
  %v980 = vpop.permute.xlu0 %979
  %981 = vrot.lane.b32.xlu0 %v832, 64
  %v982 = vpop.permute.xlu0 %981
  %983 = vrot.lane.b32.xlu0 %v833, 64
  %v984 = vpop.permute.xlu0 %983
  %985 = vrot.lane.b32.xlu0 %v834, 64
  %v986 = vpop.permute.xlu0 %985
  %987 = vrot.lane.b32.xlu0 %v835, 64
  %v988 = vpop.permute.xlu0 %987
  %989 = vrot.lane.b32.xlu0 %v836, 64
  %v990 = vpop.permute.xlu0 %989
  %991 = vrot.lane.b32.xlu0 %v837, 64
  %v992 = vpop.permute.xlu0 %991
  %993 = vrot.lane.b32.xlu0 %v838, 64
  %v994 = vpop.permute.xlu0 %993
  %995 = vrot.lane.b32.xlu0 %v839, 64
  %v996 = vpop.permute.xlu0 %995
  %997 = vrot.lane.b32.xlu0 %v840, 64
  %v998 = vpop.permute.xlu0 %997
  %999 = vrot.lane.b32.xlu0 %v841, 64
  %v1000 = vpop.permute.xlu0 %999
  %1001 = vrot.lane.b32.xlu0 %v842, 64
  %v1002 = vpop.permute.xlu0 %1001
  %1003 = vrot.lane.b32.xlu0 %v843, 64
  %v1004 = vpop.permute.xlu0 %1003
  %1005 = vrot.lane.b32.xlu0 %v844, 64
  %v1006 = vpop.permute.xlu0 %1005
  %1007 = vrot.lane.b32.xlu0 %v845, 64
  %v1008 = vpop.permute.xlu0 %1007
  %1009 = vrot.lane.b32.xlu0 %v846, 64
  %v1010 = vpop.permute.xlu0 %1009
  %1011 = vrot.lane.b32.xlu0 %v847, 64
  %v1012 = vpop.permute.xlu0 %1011
  %1013 = vrot.lane.b32.xlu0 %v848, 64
  %v1014 = vpop.permute.xlu0 %1013
  %1015 = vrot.lane.b32.xlu0 %v849, 64
  %v1016 = vpop.permute.xlu0 %1015
  %1017 = vrot.lane.b32.xlu0 %v850, 64
  %v1018 = vpop.permute.xlu0 %1017
  %1019 = vrot.lane.b32.xlu0 %v851, 64
  %v1020 = vpop.permute.xlu0 %1019
  %1021 = vrot.lane.b32.xlu0 %v852, 64
  %v1022 = vpop.permute.xlu0 %1021
  %1023 = vrot.lane.b32.xlu0 %v853, 64
  %v1024 = vpop.permute.xlu0 %1023
  %1025 = vrot.lane.b32.xlu0 %v854, 64
  %v1026 = vpop.permute.xlu0 %1025
  %1027 = vrot.lane.b32.xlu0 %v855, 64
  %v1028 = vpop.permute.xlu0 %1027
  %1029 = vrot.lane.b32.xlu0 %v856, 64
  %v1030 = vpop.permute.xlu0 %1029
  %1031 = vrot.lane.b32.xlu0 %v857, 64
  %v1032 = vpop.permute.xlu0 %1031
  %1033 = vrot.lane.b32.xlu0 %v858, 64
  %v1034 = vpop.permute.xlu0 %1033
  %1035 = vrot.lane.b32.xlu0 %v859, 64
  %v1036 = vpop.permute.xlu0 %1035
  %1037 = vrot.lane.b32.xlu0 %v860, 64
  %v1038 = vpop.permute.xlu0 %1037
  %1039 = vrot.lane.b32.xlu0 %v861, 64
  %v1040 = vpop.permute.xlu0 %1039
  %1041 = vrot.lane.b32.xlu0 %v862, 64
  %v1042 = vpop.permute.xlu0 %1041
  %1043 = vrot.lane.b32.xlu0 %v863, 64
  %v1044 = vpop.permute.xlu0 %1043
  %1045 = vrot.lane.b32.xlu0 %v864, 64
  %v1046 = vpop.permute.xlu0 %1045
  %1047 = vrot.lane.b32.xlu0 %v865, 64
  %v1048 = vpop.permute.xlu0 %1047
  %1049 = vrot.lane.b32.xlu0 %v866, 64
  %v1050 = vpop.permute.xlu0 %1049
  %1051 = vrot.lane.b32.xlu0 %v867, 64
  %v1052 = vpop.permute.xlu0 %1051
  %1053 = vrot.lane.b32.xlu0 %v868, 64
  %v1054 = vpop.permute.xlu0 %1053
  %1055 = vrot.lane.b32.xlu0 %v869, 64
  %v1056 = vpop.permute.xlu0 %1055
  %1057 = vrot.lane.b32.xlu0 %v870, 64
  %v1058 = vpop.permute.xlu0 %1057
  %1059 = vrot.lane.b32.xlu0 %v871, 64
  %v1060 = vpop.permute.xlu0 %1059
  %1061 = vrot.lane.b32.xlu0 %v872, 64
  %v1062 = vpop.permute.xlu0 %1061
  %1063 = vrot.lane.b32.xlu0 %v873, 64
  %v1064 = vpop.permute.xlu0 %1063
  %1065 = vrot.lane.b32.xlu0 %v874, 64
  %v1066 = vpop.permute.xlu0 %1065
  %v1131 = vsel %vm92, %v747, %v940
  %v1132 = vsel %vm92, %v748, %v942
  %v1133 = vsel %vm92, %v749, %v944
  %v1134 = vsel %vm92, %v750, %v946
  %v1135 = vsel %vm92, %v751, %v948
  %v1136 = vsel %vm92, %v752, %v950
  %v1137 = vsel %vm92, %v753, %v952
  %v1138 = vsel %vm92, %v754, %v954
  %v1139 = vsel %vm92, %v755, %v956
  %v1140 = vsel %vm92, %v756, %v958
  %v1141 = vsel %vm92, %v757, %v960
  %v1142 = vsel %vm92, %v758, %v962
  %v1143 = vsel %vm92, %v759, %v964
  %v1144 = vsel %vm92, %v760, %v966
  %v1145 = vsel %vm92, %v761, %v968
  %v1146 = vsel %vm92, %v762, %v970
  %v1147 = vsel %vm92, %v763, %v972
  %v1148 = vsel %vm92, %v764, %v974
  %v1149 = vsel %vm92, %v765, %v976
  %v1150 = vsel %vm92, %v766, %v978
  %v1151 = vsel %vm92, %v767, %v980
  %v1152 = vsel %vm92, %v768, %v982
  %v1153 = vsel %vm92, %v769, %v984
  %v1154 = vsel %vm92, %v770, %v986
  %v1155 = vsel %vm92, %v771, %v988
  %v1156 = vsel %vm92, %v772, %v990
  %v1157 = vsel %vm92, %v773, %v992
  %v1158 = vsel %vm92, %v774, %v994
  %v1159 = vsel %vm92, %v775, %v996
  %v1160 = vsel %vm92, %v776, %v998
  %v1161 = vsel %vm92, %v777, %v1000
  %v1162 = vsel %vm92, %v778, %v1002
  %v1163 = vsel %vm92, %v779, %v1004
  %v1164 = vsel %vm92, %v780, %v1006
  %v1165 = vsel %vm92, %v781, %v1008
  %v1166 = vsel %vm92, %v782, %v1010
  %v1167 = vsel %vm92, %v783, %v1012
  %v1168 = vsel %vm92, %v784, %v1014
  %v1169 = vsel %vm92, %v785, %v1016
  %v1170 = vsel %vm92, %v786, %v1018
  %v1171 = vsel %vm92, %v787, %v1020
  %v1172 = vsel %vm92, %v788, %v1022
  %v1173 = vsel %vm92, %v789, %v1024
  %v1174 = vsel %vm92, %v790, %v1026
  %v1175 = vsel %vm92, %v791, %v1028
  %v1176 = vsel %vm92, %v792, %v1030
  %v1177 = vsel %vm92, %v793, %v1032
  %v1178 = vsel %vm92, %v794, %v1034
  %v1179 = vsel %vm92, %v795, %v1036
  %v1180 = vsel %vm92, %v796, %v1038
  %v1181 = vsel %vm92, %v797, %v1040
  %v1182 = vsel %vm92, %v798, %v1042
  %v1183 = vsel %vm92, %v799, %v1044
  %v1184 = vsel %vm92, %v800, %v1046
  %v1185 = vsel %vm92, %v801, %v1048
  %v1186 = vsel %vm92, %v802, %v1050
  %v1187 = vsel %vm92, %v803, %v1052
  %v1188 = vsel %vm92, %v804, %v1054
  %v1189 = vsel %vm92, %v805, %v1056
  %v1190 = vsel %vm92, %v806, %v1058
  %v1191 = vsel %vm92, %v807, %v1060
  %v1192 = vsel %vm92, %v808, %v1062
  %v1193 = vsel %vm92, %v809, %v1064
  %v1194 = vsel %vm92, %v810, %v1066
  %v1195 = vpack.c.bf16 %v1132, %v1131
  %v1196 = vpack.c.bf16 %v1134, %v1133
  %v1197 = vpack.c.bf16 %v1136, %v1135
  %v1198 = vpack.c.bf16 %v1138, %v1137
  %v1199 = vpack.c.bf16 %v1140, %v1139
  %v1200 = vpack.c.bf16 %v1142, %v1141
  %v1201 = vpack.c.bf16 %v1144, %v1143
  %v1202 = vpack.c.bf16 %v1146, %v1145
  %v1203 = vpack.c.bf16 %v1148, %v1147
  %v1204 = vpack.c.bf16 %v1150, %v1149
  %v1205 = vpack.c.bf16 %v1152, %v1151
  %v1206 = vpack.c.bf16 %v1154, %v1153
  %v1207 = vpack.c.bf16 %v1156, %v1155
  %v1208 = vpack.c.bf16 %v1158, %v1157
  %v1209 = vpack.c.bf16 %v1160, %v1159
  %v1210 = vpack.c.bf16 %v1162, %v1161
  %v1211 = vpack.c.bf16 %v1164, %v1163
  %v1212 = vpack.c.bf16 %v1166, %v1165
  %v1213 = vpack.c.bf16 %v1168, %v1167
  %v1214 = vpack.c.bf16 %v1170, %v1169
  %v1215 = vpack.c.bf16 %v1172, %v1171
  %v1216 = vpack.c.bf16 %v1174, %v1173
  %v1217 = vpack.c.bf16 %v1176, %v1175
  %v1218 = vpack.c.bf16 %v1178, %v1177
  %v1219 = vpack.c.bf16 %v1180, %v1179
  %v1220 = vpack.c.bf16 %v1182, %v1181
  %v1221 = vpack.c.bf16 %v1184, %v1183
  %v1222 = vpack.c.bf16 %v1186, %v1185
  %v1223 = vpack.c.bf16 %v1188, %v1187
  %v1224 = vpack.c.bf16 %v1190, %v1189
  %v1225 = vpack.c.bf16 %v1192, %v1191
  %v1226 = vpack.c.bf16 %v1194, %v1193
  %s1227 = scalar_lea.vmem %s1, 64
  %v1228 = vld [vmem:[%s1227] sm:$0xf]
  %v1229 = vld [vmem:[%s1227 + $0x4] sm:$0xf]
  %v1230 = vld [vmem:[%s1227 + $0x8] sm:$0xf]
  %v1231 = vld [vmem:[%s1227 + $0xc] sm:$0xf]
  %v1232 = vld [vmem:[%s1227 + $0x10] sm:$0xf]
  %v1233 = vld [vmem:[%s1227 + $0x14] sm:$0xf]
  %v1234 = vld [vmem:[%s1227 + $0x18] sm:$0xf]
  %v1235 = vld [vmem:[%s1227 + $0x1c] sm:$0xf]
  %v1236 = vld [vmem:[%s1227 + $0x20] sm:$0xf]
  %v1237 = vld [vmem:[%s1227 + $0x24] sm:$0xf]
  %v1238 = vld [vmem:[%s1227 + $0x28] sm:$0xf]
  %v1239 = vld [vmem:[%s1227 + $0x2c] sm:$0xf]
  %v1240 = vld [vmem:[%s1227 + $0x30] sm:$0xf]
  %v1241 = vld [vmem:[%s1227 + $0x34] sm:$0xf]
  %v1242 = vld [vmem:[%s1227 + $0x38] sm:$0xf]
  %v1243 = vld [vmem:[%s1227 + $0x3c] sm:$0xf]
  %v1260 = vunpack.c.l.b16 %v1228
  %v1261 = vunpack.c.l.b16 %v1229
  %v1262 = vunpack.c.l.b16 %v1230
  %v1263 = vunpack.c.l.b16 %v1231
  %v1264 = vunpack.c.l.b16 %v1232
  %v1265 = vunpack.c.l.b16 %v1233
  %v1266 = vunpack.c.l.b16 %v1234
  %v1267 = vunpack.c.l.b16 %v1235
  %v1268 = vunpack.c.l.b16 %v1236
  %v1269 = vunpack.c.l.b16 %v1237
  %v1270 = vunpack.c.l.b16 %v1238
  %v1271 = vunpack.c.l.b16 %v1239
  %v1272 = vunpack.c.l.b16 %v1240
  %v1273 = vunpack.c.l.b16 %v1241
  %v1274 = vunpack.c.l.b16 %v1242
  %v1275 = vunpack.c.l.b16 %v1243
  %v1276 = vpack.c.b16 %v1261, %v1260
  %v1277 = vpack.c.b16 %v1263, %v1262
  %v1278 = vpack.c.b16 %v1265, %v1264
  %v1279 = vpack.c.b16 %v1267, %v1266
  %v1280 = vpack.c.b16 %v1269, %v1268
  %v1281 = vpack.c.b16 %v1271, %v1270
  %v1282 = vpack.c.b16 %v1273, %v1272
  %v1283 = vpack.c.b16 %v1275, %v1274
  %1292 = vmatprep.subr.bf16.mxu0 0
  %1293 = vmatpush1.bf16.msra.mxu0 %v1276
  %1294 = vmatprep.subr.bf16.mxu0 0
  %1295 = vmatpush1.bf16.msra.mxu0 %v1277
  %1296 = vmatprep.subr.bf16.mxu0 0
  %1297 = vmatpush1.bf16.msra.mxu0 %v1278
  %1298 = vmatprep.subr.bf16.mxu0 0
  %1299 = vmatpush1.bf16.msra.mxu0 %v1279
  %1300 = vmatprep.subr.bf16.mxu0 0
  %1301 = vmatpush1.bf16.msra.mxu0 %v1280
  %1302 = vmatprep.subr.bf16.mxu0 0
  %1303 = vmatpush1.bf16.msra.mxu0 %v1281
  %1304 = vmatprep.subr.bf16.mxu0 0
  %1305 = vmatpush1.bf16.msra.mxu0 %v1282
  %1306 = vmatprep.subr.bf16.mxu0 0
  %1307 = vmatpush1.bf16.msra.mxu0 %v1283
  %1308 = vmatprep.subr.bf16.mxu0 0
  %1309 = vmatpush1.bf16.msra.mxu0 0
  %1310 = vmatprep.subr.bf16.mxu0 0
  %1311 = vmatpush1.bf16.msra.mxu0 0
  %1312 = vmatprep.subr.bf16.mxu0 0
  %1313 = vmatpush1.bf16.msra.mxu0 0
  %1314 = vmatprep.subr.bf16.mxu0 0
  %1315 = vmatpush1.bf16.msra.mxu0 0
  %1316 = vmatprep.subr.bf16.mxu0 0
  %1317 = vmatpush1.bf16.msra.mxu0 0
  %1318 = vmatprep.subr.bf16.mxu0 0
  %1319 = vmatpush1.bf16.msra.mxu0 0
  %1320 = vmatprep.subr.bf16.mxu0 0
  %1321 = vmatpush1.bf16.msra.mxu0 0
  %1322 = vmatprep.subr.bf16.mxu0 0
  %1323 = vmatpush1.bf16.msra.mxu0 0
  %1324 = vmatprep.mubr.bf16.mxu0 0
  %1325 = vmatmul.mubr.bf16.gmra.mrb[0].mxu0 %v1195
  %v1326 = vpop.f32.mrb[0].mxu0
  %v1327 = vadd.f32 0.0, %v1326
  %v1328 = vpop.f32.mrb[0].mxu0
  %v1329 = vpop.f32.mrb[0].mxu0
  %v1330 = vadd.f32 0.0, %v1329
  %v1331 = vpop.f32.mrb[0].mxu0
  %1332 = vmatprep.mubr.bf16.mxu0 0
  %1333 = vmatmul.mubr.bf16.gmra.mrb[0].mxu0 %v1196
  %v1334 = vpop.f32.mrb[0].mxu0
  %v1335 = vadd.f32 0.0, %v1334
  %v1336 = vpop.f32.mrb[0].mxu0
  %v1337 = vpop.f32.mrb[0].mxu0
  %v1338 = vadd.f32 0.0, %v1337
  %v1339 = vpop.f32.mrb[0].mxu0
  %1340 = vmatprep.mubr.bf16.mxu0 0
  %1341 = vmatmul.mubr.bf16.gmra.mrb[0].mxu0 %v1197
  %v1342 = vpop.f32.mrb[0].mxu0
  %v1343 = vadd.f32 0.0, %v1342
  %v1344 = vpop.f32.mrb[0].mxu0
  %v1345 = vpop.f32.mrb[0].mxu0
  %v1346 = vadd.f32 0.0, %v1345
  %v1347 = vpop.f32.mrb[0].mxu0
  %1348 = vmatprep.mubr.bf16.mxu0 0
  %1349 = vmatmul.mubr.bf16.gmra.mrb[0].mxu0 %v1198
  %v1350 = vpop.f32.mrb[0].mxu0
  %v1351 = vadd.f32 0.0, %v1350
  %v1352 = vpop.f32.mrb[0].mxu0
  %v1353 = vpop.f32.mrb[0].mxu0
  %v1354 = vadd.f32 0.0, %v1353
  %v1355 = vpop.f32.mrb[0].mxu0
  %1356 = vmatprep.mubr.bf16.mxu0 0
  %1357 = vmatmul.mubr.bf16.gmra.mrb[0].mxu0 %v1199
  %v1358 = vpop.f32.mrb[0].mxu0
  %v1359 = vadd.f32 0.0, %v1358
  %v1360 = vpop.f32.mrb[0].mxu0
  %v1361 = vpop.f32.mrb[0].mxu0
  %v1362 = vadd.f32 0.0, %v1361
  %v1363 = vpop.f32.mrb[0].mxu0
  %1364 = vmatprep.mubr.bf16.mxu0 0
  %1365 = vmatmul.mubr.bf16.gmra.mrb[0].mxu0 %v1200
  %v1366 = vpop.f32.mrb[0].mxu0
  %v1367 = vadd.f32 0.0, %v1366
  %v1368 = vpop.f32.mrb[0].mxu0
  %v1369 = vpop.f32.mrb[0].mxu0
  %v1370 = vadd.f32 0.0, %v1369
  %v1371 = vpop.f32.mrb[0].mxu0
  %1372 = vmatprep.mubr.bf16.mxu0 0
  %1373 = vmatmul.mubr.bf16.gmra.mrb[0].mxu0 %v1201
  %v1374 = vpop.f32.mrb[0].mxu0
  %v1375 = vadd.f32 0.0, %v1374
  %v1376 = vpop.f32.mrb[0].mxu0
  %v1377 = vpop.f32.mrb[0].mxu0
  %v1378 = vadd.f32 0.0, %v1377
  %v1379 = vpop.f32.mrb[0].mxu0
  %1380 = vmatprep.mubr.bf16.mxu0 0
  %1381 = vmatmul.mubr.bf16.gmra.mrb[0].mxu0 %v1202
  %v1382 = vpop.f32.mrb[0].mxu0
  %v1383 = vadd.f32 0.0, %v1382
  %v1384 = vpop.f32.mrb[0].mxu0
  %v1385 = vpop.f32.mrb[0].mxu0
  %v1386 = vadd.f32 0.0, %v1385
  %v1387 = vpop.f32.mrb[0].mxu0
  %1388 = vmatprep.mubr.bf16.mxu0 0
  %1389 = vmatmul.mubr.bf16.gmra.mrb[0].mxu0 %v1203
  %v1390 = vpop.f32.mrb[0].mxu0
  %v1391 = vadd.f32 0.0, %v1390
  %v1392 = vpop.f32.mrb[0].mxu0
  %v1393 = vpop.f32.mrb[0].mxu0
  %v1394 = vadd.f32 0.0, %v1393
  %v1395 = vpop.f32.mrb[0].mxu0
  %1396 = vmatprep.mubr.bf16.mxu0 0
  %1397 = vmatmul.mubr.bf16.gmra.mrb[0].mxu0 %v1204
  %v1398 = vpop.f32.mrb[0].mxu0
  %v1399 = vadd.f32 0.0, %v1398
  %v1400 = vpop.f32.mrb[0].mxu0
  %v1401 = vpop.f32.mrb[0].mxu0
  %v1402 = vadd.f32 0.0, %v1401
  %v1403 = vpop.f32.mrb[0].mxu0
  %1404 = vmatprep.mubr.bf16.mxu0 0
  %1405 = vmatmul.mubr.bf16.gmra.mrb[0].mxu0 %v1205
  %v1406 = vpop.f32.mrb[0].mxu0
  %v1407 = vadd.f32 0.0, %v1406
  %v1408 = vpop.f32.mrb[0].mxu0
  %v1409 = vpop.f32.mrb[0].mxu0
  %v1410 = vadd.f32 0.0, %v1409
  %v1411 = vpop.f32.mrb[0].mxu0
  %1412 = vmatprep.mubr.bf16.mxu0 0
  %1413 = vmatmul.mubr.bf16.gmra.mrb[0].mxu0 %v1206
  %v1414 = vpop.f32.mrb[0].mxu0
  %v1415 = vadd.f32 0.0, %v1414
  %v1416 = vpop.f32.mrb[0].mxu0
  %v1417 = vpop.f32.mrb[0].mxu0
  %v1418 = vadd.f32 0.0, %v1417
  %v1419 = vpop.f32.mrb[0].mxu0
  %1420 = vmatprep.mubr.bf16.mxu0 0
  %1421 = vmatmul.mubr.bf16.gmra.mrb[0].mxu0 %v1207
  %v1422 = vpop.f32.mrb[0].mxu0
  %v1423 = vadd.f32 0.0, %v1422
  %v1424 = vpop.f32.mrb[0].mxu0
  %v1425 = vpop.f32.mrb[0].mxu0
  %v1426 = vadd.f32 0.0, %v1425
  %v1427 = vpop.f32.mrb[0].mxu0
  %1428 = vmatprep.mubr.bf16.mxu0 0
  %1429 = vmatmul.mubr.bf16.gmra.mrb[0].mxu0 %v1208
  %v1430 = vpop.f32.mrb[0].mxu0
  %v1431 = vadd.f32 0.0, %v1430
  %v1432 = vpop.f32.mrb[0].mxu0
  %v1433 = vpop.f32.mrb[0].mxu0
  %v1434 = vadd.f32 0.0, %v1433
  %v1435 = vpop.f32.mrb[0].mxu0
  %1436 = vmatprep.mubr.bf16.mxu0 0
  %1437 = vmatmul.mubr.bf16.gmra.mrb[0].mxu0 %v1209
  %v1438 = vpop.f32.mrb[0].mxu0
  %v1439 = vadd.f32 0.0, %v1438
  %v1440 = vpop.f32.mrb[0].mxu0
  %v1441 = vpop.f32.mrb[0].mxu0
  %v1442 = vadd.f32 0.0, %v1441
  %v1443 = vpop.f32.mrb[0].mxu0
  %1444 = vmatprep.mubr.bf16.mxu0 0
  %1445 = vmatmul.mubr.bf16.gmra.mrb[0].mxu0 %v1210
  %v1446 = vpop.f32.mrb[0].mxu0
  %v1447 = vadd.f32 0.0, %v1446
  %v1448 = vpop.f32.mrb[0].mxu0
  %v1449 = vpop.f32.mrb[0].mxu0
  %v1450 = vadd.f32 0.0, %v1449
  %v1451 = vpop.f32.mrb[0].mxu0
  %1452 = vmatprep.mubr.bf16.mxu0 0
  %1453 = vmatmul.mubr.bf16.gmra.mrb[0].mxu0 %v1211
  %v1454 = vpop.f32.mrb[0].mxu0
  %v1455 = vadd.f32 0.0, %v1454
  %v1456 = vpop.f32.mrb[0].mxu0
  %v1457 = vpop.f32.mrb[0].mxu0
  %v1458 = vadd.f32 0.0, %v1457
  %v1459 = vpop.f32.mrb[0].mxu0
  %1460 = vmatprep.mubr.bf16.mxu0 0
  %1461 = vmatmul.mubr.bf16.gmra.mrb[0].mxu0 %v1212
  %v1462 = vpop.f32.mrb[0].mxu0
  %v1463 = vadd.f32 0.0, %v1462
  %v1464 = vpop.f32.mrb[0].mxu0
  %v1465 = vpop.f32.mrb[0].mxu0
  %v1466 = vadd.f32 0.0, %v1465
  %v1467 = vpop.f32.mrb[0].mxu0
  %1468 = vmatprep.mubr.bf16.mxu0 0
  %1469 = vmatmul.mubr.bf16.gmra.mrb[0].mxu0 %v1213
  %v1470 = vpop.f32.mrb[0].mxu0
  %v1471 = vadd.f32 0.0, %v1470
  %v1472 = vpop.f32.mrb[0].mxu0
  %v1473 = vpop.f32.mrb[0].mxu0
  %v1474 = vadd.f32 0.0, %v1473
  %v1475 = vpop.f32.mrb[0].mxu0
  %1476 = vmatprep.mubr.bf16.mxu0 0
  %1477 = vmatmul.mubr.bf16.gmra.mrb[0].mxu0 %v1214
  %v1478 = vpop.f32.mrb[0].mxu0
  %v1479 = vadd.f32 0.0, %v1478
  %v1480 = vpop.f32.mrb[0].mxu0
  %v1481 = vpop.f32.mrb[0].mxu0
  %v1482 = vadd.f32 0.0, %v1481
  %v1483 = vpop.f32.mrb[0].mxu0
  %1484 = vmatprep.mubr.bf16.mxu0 0
  %1485 = vmatmul.mubr.bf16.gmra.mrb[0].mxu0 %v1215
  %v1486 = vpop.f32.mrb[0].mxu0
  %v1487 = vadd.f32 0.0, %v1486
  %v1488 = vpop.f32.mrb[0].mxu0
  %v1489 = vpop.f32.mrb[0].mxu0
  %v1490 = vadd.f32 0.0, %v1489
  %v1491 = vpop.f32.mrb[0].mxu0
  %1492 = vmatprep.mubr.bf16.mxu0 0
  %1493 = vmatmul.mubr.bf16.gmra.mrb[0].mxu0 %v1216
  %v1494 = vpop.f32.mrb[0].mxu0
  %v1495 = vadd.f32 0.0, %v1494
  %v1496 = vpop.f32.mrb[0].mxu0
  %v1497 = vpop.f32.mrb[0].mxu0
  %v1498 = vadd.f32 0.0, %v1497
  %v1499 = vpop.f32.mrb[0].mxu0
  %1500 = vmatprep.mubr.bf16.mxu0 0
  %1501 = vmatmul.mubr.bf16.gmra.mrb[0].mxu0 %v1217
  %v1502 = vpop.f32.mrb[0].mxu0
  %v1503 = vadd.f32 0.0, %v1502
  %v1504 = vpop.f32.mrb[0].mxu0
  %v1505 = vpop.f32.mrb[0].mxu0
  %v1506 = vadd.f32 0.0, %v1505
  %v1507 = vpop.f32.mrb[0].mxu0
  %1508 = vmatprep.mubr.bf16.mxu0 0
  %1509 = vmatmul.mubr.bf16.gmra.mrb[0].mxu0 %v1218
  %v1510 = vpop.f32.mrb[0].mxu0
  %v1511 = vadd.f32 0.0, %v1510
  %v1512 = vpop.f32.mrb[0].mxu0
  %v1513 = vpop.f32.mrb[0].mxu0
  %v1514 = vadd.f32 0.0, %v1513
  %v1515 = vpop.f32.mrb[0].mxu0
  %1516 = vmatprep.mubr.bf16.mxu0 0
  %1517 = vmatmul.mubr.bf16.gmra.mrb[0].mxu0 %v1219
  %v1518 = vpop.f32.mrb[0].mxu0
  %v1519 = vadd.f32 0.0, %v1518
  %v1520 = vpop.f32.mrb[0].mxu0
  %v1521 = vpop.f32.mrb[0].mxu0
  %v1522 = vadd.f32 0.0, %v1521
  %v1523 = vpop.f32.mrb[0].mxu0
  %1524 = vmatprep.mubr.bf16.mxu0 0
  %1525 = vmatmul.mubr.bf16.gmra.mrb[0].mxu0 %v1220
  %v1526 = vpop.f32.mrb[0].mxu0
  %v1527 = vadd.f32 0.0, %v1526
  %v1528 = vpop.f32.mrb[0].mxu0
  %v1529 = vpop.f32.mrb[0].mxu0
  %v1530 = vadd.f32 0.0, %v1529
  %v1531 = vpop.f32.mrb[0].mxu0
  %1532 = vmatprep.mubr.bf16.mxu0 0
  %1533 = vmatmul.mubr.bf16.gmra.mrb[0].mxu0 %v1221
  %v1534 = vpop.f32.mrb[0].mxu0
  %v1535 = vadd.f32 0.0, %v1534
  %v1536 = vpop.f32.mrb[0].mxu0
  %v1537 = vpop.f32.mrb[0].mxu0
  %v1538 = vadd.f32 0.0, %v1537
  %v1539 = vpop.f32.mrb[0].mxu0
  %1540 = vmatprep.mubr.bf16.mxu0 0
  %1541 = vmatmul.mubr.bf16.gmra.mrb[0].mxu0 %v1222
  %v1542 = vpop.f32.mrb[0].mxu0
  %v1543 = vadd.f32 0.0, %v1542
  %v1544 = vpop.f32.mrb[0].mxu0
  %v1545 = vpop.f32.mrb[0].mxu0
  %v1546 = vadd.f32 0.0, %v1545
  %v1547 = vpop.f32.mrb[0].mxu0
  %1548 = vmatprep.mubr.bf16.mxu0 0
  %1549 = vmatmul.mubr.bf16.gmra.mrb[0].mxu0 %v1223
  %v1550 = vpop.f32.mrb[0].mxu0
  %v1551 = vadd.f32 0.0, %v1550
  %v1552 = vpop.f32.mrb[0].mxu0
  %v1553 = vpop.f32.mrb[0].mxu0
  %v1554 = vadd.f32 0.0, %v1553
  %v1555 = vpop.f32.mrb[0].mxu0
  %1556 = vmatprep.mubr.bf16.mxu0 0
  %1557 = vmatmul.mubr.bf16.gmra.mrb[0].mxu0 %v1224
  %v1558 = vpop.f32.mrb[0].mxu0
  %v1559 = vadd.f32 0.0, %v1558
  %v1560 = vpop.f32.mrb[0].mxu0
  %v1561 = vpop.f32.mrb[0].mxu0
  %v1562 = vadd.f32 0.0, %v1561
  %v1563 = vpop.f32.mrb[0].mxu0
  %1564 = vmatprep.mubr.bf16.mxu0 0
  %1565 = vmatmul.mubr.bf16.gmra.mrb[0].mxu0 %v1225
  %v1566 = vpop.f32.mrb[0].mxu0
  %v1567 = vadd.f32 0.0, %v1566
  %v1568 = vpop.f32.mrb[0].mxu0
  %v1569 = vpop.f32.mrb[0].mxu0
  %v1570 = vadd.f32 0.0, %v1569
  %v1571 = vpop.f32.mrb[0].mxu0
  %1572 = vmatprep.mubr.bf16.mxu0 0
  %1573 = vmatmul.mubr.bf16.gmra.mrb[0].mxu0 %v1226
  %v1574 = vpop.f32.mrb[0].mxu0
  %v1575 = vadd.f32 0.0, %v1574
  %v1576 = vpop.f32.mrb[0].mxu0
  %v1577 = vpop.f32.mrb[0].mxu0
  %v1578 = vadd.f32 0.0, %v1577
  %v1579 = vpop.f32.mrb[0].mxu0
  %1580 = vdwg.mxu0
  %v1597 = vunpack.c.l.b16 %v731
  %v1598 = vunpack.c.l.b16 %v732
  %v1599 = vunpack.c.l.b16 %v733
  %v1600 = vunpack.c.l.b16 %v734
  %v1601 = vunpack.c.l.b16 %v735
  %v1602 = vunpack.c.l.b16 %v736
  %v1603 = vunpack.c.l.b16 %v737
  %v1604 = vunpack.c.l.b16 %v738
  %v1605 = vunpack.c.l.b16 %v739
  %v1606 = vunpack.c.l.b16 %v740
  %v1607 = vunpack.c.l.b16 %v741
  %v1608 = vunpack.c.l.b16 %v742
  %v1609 = vunpack.c.l.b16 %v743
  %v1610 = vunpack.c.l.b16 %v744
  %v1611 = vunpack.c.l.b16 %v745
  %v1612 = vunpack.c.l.b16 %v746
  %v1613 = vpack.c.b16 %v1598, %v1597
  %v1614 = vpack.c.b16 %v1600, %v1599
  %v1615 = vpack.c.b16 %v1602, %v1601
  %v1616 = vpack.c.b16 %v1604, %v1603
  %v1617 = vpack.c.b16 %v1606, %v1605
  %v1618 = vpack.c.b16 %v1608, %v1607
  %v1619 = vpack.c.b16 %v1610, %v1609
  %v1620 = vpack.c.b16 %v1612, %v1611
  %1629 = vmatprep.subr.bf16.mxu0 0
  %1630 = vmatpush1.bf16.msra.mxu0 %v1613
  %1631 = vmatprep.subr.bf16.mxu0 0
  %1632 = vmatpush1.bf16.msra.mxu0 %v1614
  %1633 = vmatprep.subr.bf16.mxu0 0
  %1634 = vmatpush1.bf16.msra.mxu0 %v1615
  %1635 = vmatprep.subr.bf16.mxu0 0
  %1636 = vmatpush1.bf16.msra.mxu0 %v1616
  %1637 = vmatprep.subr.bf16.mxu0 0
  %1638 = vmatpush1.bf16.msra.mxu0 %v1617
  %1639 = vmatprep.subr.bf16.mxu0 0
  %1640 = vmatpush1.bf16.msra.mxu0 %v1618
  %1641 = vmatprep.subr.bf16.mxu0 0
  %1642 = vmatpush1.bf16.msra.mxu0 %v1619
  %1643 = vmatprep.subr.bf16.mxu0 0
  %1644 = vmatpush1.bf16.msra.mxu0 %v1620
  %1645 = vmatprep.subr.bf16.mxu0 0
  %1646 = vmatpush1.bf16.msra.mxu0 0
  %1647 = vmatprep.subr.bf16.mxu0 0
  %1648 = vmatpush1.bf16.msra.mxu0 0
  %1649 = vmatprep.subr.bf16.mxu0 0
  %1650 = vmatpush1.bf16.msra.mxu0 0
  %1651 = vmatprep.subr.bf16.mxu0 0
  %1652 = vmatpush1.bf16.msra.mxu0 0
  %1653 = vmatprep.subr.bf16.mxu0 0
  %1654 = vmatpush1.bf16.msra.mxu0 0
  %1655 = vmatprep.subr.bf16.mxu0 0
  %1656 = vmatpush1.bf16.msra.mxu0 0
  %1657 = vmatprep.subr.bf16.mxu0 0
  %1658 = vmatpush1.bf16.msra.mxu0 0
  %1659 = vmatprep.subr.bf16.mxu0 0
  %1660 = vmatpush1.bf16.msra.mxu0 0
  %1661 = vmatprep.mubr.bf16.mxu0 0
  %1662 = vmatmul.mubr.bf16.gmra.mrb[0].mxu0 %v699
  %v1663 = vpop.f32.mrb[0].mxu0
  %v1664 = vadd.f32 %v1327, %v1663
  %v1665 = vpop.f32.mrb[0].mxu0
  %v1666 = vpop.f32.mrb[0].mxu0
  %v1667 = vadd.f32 %v1330, %v1666
  %v1668 = vpop.f32.mrb[0].mxu0
  %1669 = vmatprep.mubr.bf16.mxu0 0
  %1670 = vmatmul.mubr.bf16.gmra.mrb[0].mxu0 %v700
  %v1671 = vpop.f32.mrb[0].mxu0
  %v1672 = vadd.f32 %v1335, %v1671
  %v1673 = vpop.f32.mrb[0].mxu0
  %v1674 = vpop.f32.mrb[0].mxu0
  %v1675 = vadd.f32 %v1338, %v1674
  %v1676 = vpop.f32.mrb[0].mxu0
  %1677 = vmatprep.mubr.bf16.mxu0 0
  %1678 = vmatmul.mubr.bf16.gmra.mrb[0].mxu0 %v701
  %v1679 = vpop.f32.mrb[0].mxu0
  %v1680 = vadd.f32 %v1343, %v1679
  %v1681 = vpop.f32.mrb[0].mxu0
  %v1682 = vpop.f32.mrb[0].mxu0
  %v1683 = vadd.f32 %v1346, %v1682
  %v1684 = vpop.f32.mrb[0].mxu0
  %1685 = vmatprep.mubr.bf16.mxu0 0
  %1686 = vmatmul.mubr.bf16.gmra.mrb[0].mxu0 %v702
  %v1687 = vpop.f32.mrb[0].mxu0
  %v1688 = vadd.f32 %v1351, %v1687
  %v1689 = vpop.f32.mrb[0].mxu0
  %v1690 = vpop.f32.mrb[0].mxu0
  %v1691 = vadd.f32 %v1354, %v1690
  %v1692 = vpop.f32.mrb[0].mxu0
  %1693 = vmatprep.mubr.bf16.mxu0 0
  %1694 = vmatmul.mubr.bf16.gmra.mrb[0].mxu0 %v703
  %v1695 = vpop.f32.mrb[0].mxu0
  %v1696 = vadd.f32 %v1359, %v1695
  %v1697 = vpop.f32.mrb[0].mxu0
  %v1698 = vpop.f32.mrb[0].mxu0
  %v1699 = vadd.f32 %v1362, %v1698
  %v1700 = vpop.f32.mrb[0].mxu0
  %1701 = vmatprep.mubr.bf16.mxu0 0
  %1702 = vmatmul.mubr.bf16.gmra.mrb[0].mxu0 %v704
  %v1703 = vpop.f32.mrb[0].mxu0
  %v1704 = vadd.f32 %v1367, %v1703
  %v1705 = vpop.f32.mrb[0].mxu0
  %v1706 = vpop.f32.mrb[0].mxu0
  %v1707 = vadd.f32 %v1370, %v1706
  %v1708 = vpop.f32.mrb[0].mxu0
  %1709 = vmatprep.mubr.bf16.mxu0 0
  %1710 = vmatmul.mubr.bf16.gmra.mrb[0].mxu0 %v705
  %v1711 = vpop.f32.mrb[0].mxu0
  %v1712 = vadd.f32 %v1375, %v1711
  %v1713 = vpop.f32.mrb[0].mxu0
  %v1714 = vpop.f32.mrb[0].mxu0
  %v1715 = vadd.f32 %v1378, %v1714
  %v1716 = vpop.f32.mrb[0].mxu0
  %1717 = vmatprep.mubr.bf16.mxu0 0
  %1718 = vmatmul.mubr.bf16.gmra.mrb[0].mxu0 %v706
  %v1719 = vpop.f32.mrb[0].mxu0
  %v1720 = vadd.f32 %v1383, %v1719
  %v1721 = vpop.f32.mrb[0].mxu0
  %v1722 = vpop.f32.mrb[0].mxu0
  %v1723 = vadd.f32 %v1386, %v1722
  %v1724 = vpop.f32.mrb[0].mxu0
  %1725 = vmatprep.mubr.bf16.mxu0 0
  %1726 = vmatmul.mubr.bf16.gmra.mrb[0].mxu0 %v707
  %v1727 = vpop.f32.mrb[0].mxu0
  %v1728 = vadd.f32 %v1391, %v1727
  %v1729 = vpop.f32.mrb[0].mxu0
  %v1730 = vpop.f32.mrb[0].mxu0
  %v1731 = vadd.f32 %v1394, %v1730
  %v1732 = vpop.f32.mrb[0].mxu0
  %1733 = vmatprep.mubr.bf16.mxu0 0
  %1734 = vmatmul.mubr.bf16.gmra.mrb[0].mxu0 %v708
  %v1735 = vpop.f32.mrb[0].mxu0
  %v1736 = vadd.f32 %v1399, %v1735
  %v1737 = vpop.f32.mrb[0].mxu0
  %v1738 = vpop.f32.mrb[0].mxu0
  %v1739 = vadd.f32 %v1402, %v1738
  %v1740 = vpop.f32.mrb[0].mxu0
  %1741 = vmatprep.mubr.bf16.mxu0 0
  %1742 = vmatmul.mubr.bf16.gmra.mrb[0].mxu0 %v709
  %v1743 = vpop.f32.mrb[0].mxu0
  %v1744 = vadd.f32 %v1407, %v1743
  %v1745 = vpop.f32.mrb[0].mxu0
  %v1746 = vpop.f32.mrb[0].mxu0
  %v1747 = vadd.f32 %v1410, %v1746
  %v1748 = vpop.f32.mrb[0].mxu0
  %1749 = vmatprep.mubr.bf16.mxu0 0
  %1750 = vmatmul.mubr.bf16.gmra.mrb[0].mxu0 %v710
  %v1751 = vpop.f32.mrb[0].mxu0
  %v1752 = vadd.f32 %v1415, %v1751
  %v1753 = vpop.f32.mrb[0].mxu0
  %v1754 = vpop.f32.mrb[0].mxu0
  %v1755 = vadd.f32 %v1418, %v1754
  %v1756 = vpop.f32.mrb[0].mxu0
  %1757 = vmatprep.mubr.bf16.mxu0 0
  %1758 = vmatmul.mubr.bf16.gmra.mrb[0].mxu0 %v711
  %v1759 = vpop.f32.mrb[0].mxu0
  %v1760 = vadd.f32 %v1423, %v1759
  %v1761 = vpop.f32.mrb[0].mxu0
  %v1762 = vpop.f32.mrb[0].mxu0
  %v1763 = vadd.f32 %v1426, %v1762
  %v1764 = vpop.f32.mrb[0].mxu0
  %1765 = vmatprep.mubr.bf16.mxu0 0
  %1766 = vmatmul.mubr.bf16.gmra.mrb[0].mxu0 %v712
  %v1767 = vpop.f32.mrb[0].mxu0
  %v1768 = vadd.f32 %v1431, %v1767
  %v1769 = vpop.f32.mrb[0].mxu0
  %v1770 = vpop.f32.mrb[0].mxu0
  %v1771 = vadd.f32 %v1434, %v1770
  %v1772 = vpop.f32.mrb[0].mxu0
  %1773 = vmatprep.mubr.bf16.mxu0 0
  %1774 = vmatmul.mubr.bf16.gmra.mrb[0].mxu0 %v713
  %v1775 = vpop.f32.mrb[0].mxu0
  %v1776 = vadd.f32 %v1439, %v1775
  %v1777 = vpop.f32.mrb[0].mxu0
  %v1778 = vpop.f32.mrb[0].mxu0
  %v1779 = vadd.f32 %v1442, %v1778
  %v1780 = vpop.f32.mrb[0].mxu0
  %1781 = vmatprep.mubr.bf16.mxu0 0
  %1782 = vmatmul.mubr.bf16.gmra.mrb[0].mxu0 %v714
  %v1783 = vpop.f32.mrb[0].mxu0
  %v1784 = vadd.f32 %v1447, %v1783
  %v1785 = vpop.f32.mrb[0].mxu0
  %v1786 = vpop.f32.mrb[0].mxu0
  %v1787 = vadd.f32 %v1450, %v1786
  %v1788 = vpop.f32.mrb[0].mxu0
  %1789 = vmatprep.mubr.bf16.mxu0 0
  %1790 = vmatmul.mubr.bf16.gmra.mrb[0].mxu0 %v715
  %v1791 = vpop.f32.mrb[0].mxu0
  %v1792 = vadd.f32 %v1455, %v1791
  %v1793 = vpop.f32.mrb[0].mxu0
  %v1794 = vpop.f32.mrb[0].mxu0
  %v1795 = vadd.f32 %v1458, %v1794
  %v1796 = vpop.f32.mrb[0].mxu0
  %1797 = vmatprep.mubr.bf16.mxu0 0
  %1798 = vmatmul.mubr.bf16.gmra.mrb[0].mxu0 %v716
  %v1799 = vpop.f32.mrb[0].mxu0
  %v1800 = vadd.f32 %v1463, %v1799
  %v1801 = vpop.f32.mrb[0].mxu0
  %v1802 = vpop.f32.mrb[0].mxu0
  %v1803 = vadd.f32 %v1466, %v1802
  %v1804 = vpop.f32.mrb[0].mxu0
  %1805 = vmatprep.mubr.bf16.mxu0 0
  %1806 = vmatmul.mubr.bf16.gmra.mrb[0].mxu0 %v717
  %v1807 = vpop.f32.mrb[0].mxu0
  %v1808 = vadd.f32 %v1471, %v1807
  %v1809 = vpop.f32.mrb[0].mxu0
  %v1810 = vpop.f32.mrb[0].mxu0
  %v1811 = vadd.f32 %v1474, %v1810
  %v1812 = vpop.f32.mrb[0].mxu0
  %1813 = vmatprep.mubr.bf16.mxu0 0
  %1814 = vmatmul.mubr.bf16.gmra.mrb[0].mxu0 %v718
  %v1815 = vpop.f32.mrb[0].mxu0
  %v1816 = vadd.f32 %v1479, %v1815
  %v1817 = vpop.f32.mrb[0].mxu0
  %v1818 = vpop.f32.mrb[0].mxu0
  %v1819 = vadd.f32 %v1482, %v1818
  %v1820 = vpop.f32.mrb[0].mxu0
  %1821 = vmatprep.mubr.bf16.mxu0 0
  %1822 = vmatmul.mubr.bf16.gmra.mrb[0].mxu0 %v719
  %v1823 = vpop.f32.mrb[0].mxu0
  %v1824 = vadd.f32 %v1487, %v1823
  %v1825 = vpop.f32.mrb[0].mxu0
  %v1826 = vpop.f32.mrb[0].mxu0
  %v1827 = vadd.f32 %v1490, %v1826
  %v1828 = vpop.f32.mrb[0].mxu0
  %1829 = vmatprep.mubr.bf16.mxu0 0
  %1830 = vmatmul.mubr.bf16.gmra.mrb[0].mxu0 %v720
  %v1831 = vpop.f32.mrb[0].mxu0
  %v1832 = vadd.f32 %v1495, %v1831
  %v1833 = vpop.f32.mrb[0].mxu0
  %v1834 = vpop.f32.mrb[0].mxu0
  %v1835 = vadd.f32 %v1498, %v1834
  %v1836 = vpop.f32.mrb[0].mxu0
  %1837 = vmatprep.mubr.bf16.mxu0 0
  %1838 = vmatmul.mubr.bf16.gmra.mrb[0].mxu0 %v721
  %v1839 = vpop.f32.mrb[0].mxu0
  %v1840 = vadd.f32 %v1503, %v1839
  %v1841 = vpop.f32.mrb[0].mxu0
  %v1842 = vpop.f32.mrb[0].mxu0
  %v1843 = vadd.f32 %v1506, %v1842
  %v1844 = vpop.f32.mrb[0].mxu0
  %1845 = vmatprep.mubr.bf16.mxu0 0
  %1846 = vmatmul.mubr.bf16.gmra.mrb[0].mxu0 %v722
  %v1847 = vpop.f32.mrb[0].mxu0
  %v1848 = vadd.f32 %v1511, %v1847
  %v1849 = vpop.f32.mrb[0].mxu0
  %v1850 = vpop.f32.mrb[0].mxu0
  %v1851 = vadd.f32 %v1514, %v1850
  %v1852 = vpop.f32.mrb[0].mxu0
  %1853 = vmatprep.mubr.bf16.mxu0 0
  %1854 = vmatmul.mubr.bf16.gmra.mrb[0].mxu0 %v723
  %v1855 = vpop.f32.mrb[0].mxu0
  %v1856 = vadd.f32 %v1519, %v1855
  %v1857 = vpop.f32.mrb[0].mxu0
  %v1858 = vpop.f32.mrb[0].mxu0
  %v1859 = vadd.f32 %v1522, %v1858
  %v1860 = vpop.f32.mrb[0].mxu0
  %1861 = vmatprep.mubr.bf16.mxu0 0
  %1862 = vmatmul.mubr.bf16.gmra.mrb[0].mxu0 %v724
  %v1863 = vpop.f32.mrb[0].mxu0
  %v1864 = vadd.f32 %v1527, %v1863
  %v1865 = vpop.f32.mrb[0].mxu0
  %v1866 = vpop.f32.mrb[0].mxu0
  %v1867 = vadd.f32 %v1530, %v1866
  %v1868 = vpop.f32.mrb[0].mxu0
  %1869 = vmatprep.mubr.bf16.mxu0 0
  %1870 = vmatmul.mubr.bf16.gmra.mrb[0].mxu0 %v725
  %v1871 = vpop.f32.mrb[0].mxu0
  %v1872 = vadd.f32 %v1535, %v1871
  %v1873 = vpop.f32.mrb[0].mxu0
  %v1874 = vpop.f32.mrb[0].mxu0
  %v1875 = vadd.f32 %v1538, %v1874
  %v1876 = vpop.f32.mrb[0].mxu0
  %1877 = vmatprep.mubr.bf16.mxu0 0
  %1878 = vmatmul.mubr.bf16.gmra.mrb[0].mxu0 %v726
  %v1879 = vpop.f32.mrb[0].mxu0
  %v1880 = vadd.f32 %v1543, %v1879
  %v1881 = vpop.f32.mrb[0].mxu0
  %v1882 = vpop.f32.mrb[0].mxu0
  %v1883 = vadd.f32 %v1546, %v1882
  %v1884 = vpop.f32.mrb[0].mxu0
  %1885 = vmatprep.mubr.bf16.mxu0 0
  %1886 = vmatmul.mubr.bf16.gmra.mrb[0].mxu0 %v727
  %v1887 = vpop.f32.mrb[0].mxu0
  %v1888 = vadd.f32 %v1551, %v1887
  %v1889 = vpop.f32.mrb[0].mxu0
  %v1890 = vpop.f32.mrb[0].mxu0
  %v1891 = vadd.f32 %v1554, %v1890
  %v1892 = vpop.f32.mrb[0].mxu0
  %1893 = vmatprep.mubr.bf16.mxu0 0
  %1894 = vmatmul.mubr.bf16.gmra.mrb[0].mxu0 %v728
  %v1895 = vpop.f32.mrb[0].mxu0
  %v1896 = vadd.f32 %v1559, %v1895
  %v1897 = vpop.f32.mrb[0].mxu0
  %v1898 = vpop.f32.mrb[0].mxu0
  %v1899 = vadd.f32 %v1562, %v1898
  %v1900 = vpop.f32.mrb[0].mxu0
  %1901 = vmatprep.mubr.bf16.mxu0 0
  %1902 = vmatmul.mubr.bf16.gmra.mrb[0].mxu0 %v729
  %v1903 = vpop.f32.mrb[0].mxu0
  %v1904 = vadd.f32 %v1567, %v1903
  %v1905 = vpop.f32.mrb[0].mxu0
  %v1906 = vpop.f32.mrb[0].mxu0
  %v1907 = vadd.f32 %v1570, %v1906
  %v1908 = vpop.f32.mrb[0].mxu0
  %1909 = vmatprep.mubr.bf16.mxu0 0
  %1910 = vmatmul.mubr.bf16.gmra.mrb[0].mxu0 %v730
  %v1911 = vpop.f32.mrb[0].mxu0
  %v1912 = vadd.f32 %v1575, %v1911
  %v1913 = vpop.f32.mrb[0].mxu0
  %v1914 = vpop.f32.mrb[0].mxu0
  %v1915 = vadd.f32 %v1578, %v1914
  %v1916 = vpop.f32.mrb[0].mxu0
  %1917 = vdwg.mxu0
  %v1918 = vld [vmem:[%s91 + $0x1] sm:$0xff]
  %v1919 = vld [vmem:[%s91 + $0x9] sm:$0xff]
  %v1920 = vld [vmem:[%s91 + $0x19] sm:$0xff]
  %v1921 = vld [vmem:[%s91 + $0x21] sm:$0xff]
  %v1922 = vld [vmem:[%s91 + $0x31] sm:$0xff]
  %v1923 = vld [vmem:[%s91 + $0x39] sm:$0xff]
  %v1924 = vld [vmem:[%s91 + $0x49] sm:$0xff]
  %v1925 = vld [vmem:[%s91 + $0x51] sm:$0xff]
  %v1926 = vld [vmem:[%s91 + $0x61] sm:$0xff]
  %v1927 = vld [vmem:[%s91 + $0x69] sm:$0xff]
  %v1928 = vld [vmem:[%s91 + $0x79] sm:$0xff]
  %v1929 = vld [vmem:[%s91 + $0x81] sm:$0xff]
  %v1930 = vld [vmem:[%s91 + $0x91] sm:$0xff]
  %v1931 = vld [vmem:[%s91 + $0x99] sm:$0xff]
  %v1932 = vld [vmem:[%s91 + $0xa9] sm:$0xff]
  %v1933 = vld [vmem:[%s91 + $0xb1] sm:$0xff]
  %v1934 = vld [vmem:[%s91 + $0xc1] sm:$0xff]
  %v1935 = vld [vmem:[%s91 + $0xc9] sm:$0xff]
  %v1936 = vld [vmem:[%s91 + $0xd9] sm:$0xff]
  %v1937 = vld [vmem:[%s91 + $0xe1] sm:$0xff]
  %v1938 = vld [vmem:[%s91 + $0xf1] sm:$0xff]
  %v1939 = vld [vmem:[%s91 + $0xf9] sm:$0xff]
  %v1940 = vld [vmem:[%s91 + $0x109] sm:$0xff]
  %v1941 = vld [vmem:[%s91 + $0x111] sm:$0xff]
  %v1942 = vld [vmem:[%s91 + $0x121] sm:$0xff]
  %v1943 = vld [vmem:[%s91 + $0x129] sm:$0xff]
  %v1944 = vld [vmem:[%s91 + $0x139] sm:$0xff]
  %v1945 = vld [vmem:[%s91 + $0x141] sm:$0xff]
  %v1946 = vld [vmem:[%s91 + $0x151] sm:$0xff]
  %v1947 = vld [vmem:[%s91 + $0x159] sm:$0xff]
  %v1948 = vld [vmem:[%s91 + $0x169] sm:$0xff]
  %v1949 = vld [vmem:[%s91 + $0x171] sm:$0xff]
  %v1950 = vld [vmem:[%s91 + $0x1b1] sm:$0xff]
  %v1951 = vld [vmem:[%s91 + $0x1b9] sm:$0xff]
  %v1952 = vld [vmem:[%s91 + $0x1c9] sm:$0xff]
  %v1953 = vld [vmem:[%s91 + $0x1d1] sm:$0xff]
  %v1954 = vld [vmem:[%s91 + $0x1e1] sm:$0xff]
  %v1955 = vld [vmem:[%s91 + $0x1e9] sm:$0xff]
  %v1956 = vld [vmem:[%s91 + $0x1f9] sm:$0xff]
  %v1957 = vld [vmem:[%s91 + $0x201] sm:$0xff]
  %v1958 = vld [vmem:[%s91 + $0x211] sm:$0xff]
  %v1959 = vld [vmem:[%s91 + $0x219] sm:$0xff]
  %v1960 = vld [vmem:[%s91 + $0x229] sm:$0xff]
  %v1961 = vld [vmem:[%s91 + $0x231] sm:$0xff]
  %v1962 = vld [vmem:[%s91 + $0x241] sm:$0xff]
  %v1963 = vld [vmem:[%s91 + $0x249] sm:$0xff]
  %v1964 = vld [vmem:[%s91 + $0x259] sm:$0xff]
  %v1965 = vld [vmem:[%s91 + $0x261] sm:$0xff]
  %v1966 = vld [vmem:[%s91 + $0x271] sm:$0xff]
  %v1967 = vld [vmem:[%s91 + $0x279] sm:$0xff]
  %v1968 = vld [vmem:[%s91 + $0x289] sm:$0xff]
  %v1969 = vld [vmem:[%s91 + $0x291] sm:$0xff]
  %v1970 = vld [vmem:[%s91 + $0x2a1] sm:$0xff]
  %v1971 = vld [vmem:[%s91 + $0x2a9] sm:$0xff]
  %v1972 = vld [vmem:[%s91 + $0x2b9] sm:$0xff]
  %v1973 = vld [vmem:[%s91 + $0x2c1] sm:$0xff]
  %v1974 = vld [vmem:[%s91 + $0x2d1] sm:$0xff]
  %v1975 = vld [vmem:[%s91 + $0x2d9] sm:$0xff]
  %v1976 = vld [vmem:[%s91 + $0x2e9] sm:$0xff]
  %v1977 = vld [vmem:[%s91 + $0x2f1] sm:$0xff]
  %v1978 = vld [vmem:[%s91 + $0x301] sm:$0xff]
  %v1979 = vld [vmem:[%s91 + $0x309] sm:$0xff]
  %v1980 = vld [vmem:[%s91 + $0x319] sm:$0xff]
  %v1981 = vld [vmem:[%s91 + $0x321] sm:$0xff]
  %v1982 = vld [vmem:[%s91 + $0x2] sm:$0xff]
  %v1983 = vld [vmem:[%s91 + $0xa] sm:$0xff]
  %v1984 = vld [vmem:[%s91 + $0x1a] sm:$0xff]
  %v1985 = vld [vmem:[%s91 + $0x22] sm:$0xff]
  %v1986 = vld [vmem:[%s91 + $0x32] sm:$0xff]
  %v1987 = vld [vmem:[%s91 + $0x3a] sm:$0xff]
  %v1988 = vld [vmem:[%s91 + $0x4a] sm:$0xff]
  %v1989 = vld [vmem:[%s91 + $0x52] sm:$0xff]
  %v1990 = vld [vmem:[%s91 + $0x62] sm:$0xff]
  %v1991 = vld [vmem:[%s91 + $0x6a] sm:$0xff]
  %v1992 = vld [vmem:[%s91 + $0x7a] sm:$0xff]
  %v1993 = vld [vmem:[%s91 + $0x82] sm:$0xff]
  %v1994 = vld [vmem:[%s91 + $0x92] sm:$0xff]
  %v1995 = vld [vmem:[%s91 + $0x9a] sm:$0xff]
  %v1996 = vld [vmem:[%s91 + $0xaa] sm:$0xff]
  %v1997 = vld [vmem:[%s91 + $0xb2] sm:$0xff]
  %v1998 = vld [vmem:[%s91 + $0xc2] sm:$0xff]
  %v1999 = vld [vmem:[%s91 + $0xca] sm:$0xff]
  %v2000 = vld [vmem:[%s91 + $0xda] sm:$0xff]
  %v2001 = vld [vmem:[%s91 + $0xe2] sm:$0xff]
  %v2002 = vld [vmem:[%s91 + $0xf2] sm:$0xff]
  %v2003 = vld [vmem:[%s91 + $0xfa] sm:$0xff]
  %v2004 = vld [vmem:[%s91 + $0x10a] sm:$0xff]
  %v2005 = vld [vmem:[%s91 + $0x112] sm:$0xff]
  %v2006 = vld [vmem:[%s91 + $0x122] sm:$0xff]
  %v2007 = vld [vmem:[%s91 + $0x12a] sm:$0xff]
  %v2008 = vld [vmem:[%s91 + $0x13a] sm:$0xff]
  %v2009 = vld [vmem:[%s91 + $0x142] sm:$0xff]
  %v2010 = vld [vmem:[%s91 + $0x152] sm:$0xff]
  %v2011 = vld [vmem:[%s91 + $0x15a] sm:$0xff]
  %v2012 = vld [vmem:[%s91 + $0x16a] sm:$0xff]
  %v2013 = vld [vmem:[%s91 + $0x172] sm:$0xff]
  %v2014 = vld [vmem:[%s91 + $0x1b2] sm:$0xff]
  %v2015 = vld [vmem:[%s91 + $0x1ba] sm:$0xff]
  %v2016 = vld [vmem:[%s91 + $0x1ca] sm:$0xff]
  %v2017 = vld [vmem:[%s91 + $0x1d2] sm:$0xff]
  %v2018 = vld [vmem:[%s91 + $0x1e2] sm:$0xff]
  %v2019 = vld [vmem:[%s91 + $0x1ea] sm:$0xff]
  %v2020 = vld [vmem:[%s91 + $0x1fa] sm:$0xff]
  %v2021 = vld [vmem:[%s91 + $0x202] sm:$0xff]
  %v2022 = vld [vmem:[%s91 + $0x212] sm:$0xff]
  %v2023 = vld [vmem:[%s91 + $0x21a] sm:$0xff]
  %v2024 = vld [vmem:[%s91 + $0x22a] sm:$0xff]
  %v2025 = vld [vmem:[%s91 + $0x232] sm:$0xff]
  %v2026 = vld [vmem:[%s91 + $0x242] sm:$0xff]
  %v2027 = vld [vmem:[%s91 + $0x24a] sm:$0xff]
  %v2028 = vld [vmem:[%s91 + $0x25a] sm:$0xff]
  %v2029 = vld [vmem:[%s91 + $0x262] sm:$0xff]
  %v2030 = vld [vmem:[%s91 + $0x272] sm:$0xff]
  %v2031 = vld [vmem:[%s91 + $0x27a] sm:$0xff]
  %v2032 = vld [vmem:[%s91 + $0x28a] sm:$0xff]
  %v2033 = vld [vmem:[%s91 + $0x292] sm:$0xff]
  %v2034 = vld [vmem:[%s91 + $0x2a2] sm:$0xff]
  %v2035 = vld [vmem:[%s91 + $0x2aa] sm:$0xff]
  %v2036 = vld [vmem:[%s91 + $0x2ba] sm:$0xff]
  %v2037 = vld [vmem:[%s91 + $0x2c2] sm:$0xff]
  %v2038 = vld [vmem:[%s91 + $0x2d2] sm:$0xff]
  %v2039 = vld [vmem:[%s91 + $0x2da] sm:$0xff]
  %v2040 = vld [vmem:[%s91 + $0x2ea] sm:$0xff]
  %v2041 = vld [vmem:[%s91 + $0x2f2] sm:$0xff]
  %v2042 = vld [vmem:[%s91 + $0x302] sm:$0xff]
  %v2043 = vld [vmem:[%s91 + $0x30a] sm:$0xff]
  %v2044 = vld [vmem:[%s91 + $0x31a] sm:$0xff]
  %v2045 = vld [vmem:[%s91 + $0x322] sm:$0xff]
  %2110 = vrot.lane.b32.xlu0 %v1982, 64
  %v2111 = vpop.permute.xlu0 %2110
  %2112 = vrot.lane.b32.xlu0 %v1983, 64
  %v2113 = vpop.permute.xlu0 %2112
  %2114 = vrot.lane.b32.xlu0 %v1984, 64
  %v2115 = vpop.permute.xlu0 %2114
  %2116 = vrot.lane.b32.xlu0 %v1985, 64
  %v2117 = vpop.permute.xlu0 %2116
  %2118 = vrot.lane.b32.xlu0 %v1986, 64
  %v2119 = vpop.permute.xlu0 %2118
  %2120 = vrot.lane.b32.xlu0 %v1987, 64
  %v2121 = vpop.permute.xlu0 %2120
  %2122 = vrot.lane.b32.xlu0 %v1988, 64
  %v2123 = vpop.permute.xlu0 %2122
  %2124 = vrot.lane.b32.xlu0 %v1989, 64
  %v2125 = vpop.permute.xlu0 %2124
  %2126 = vrot.lane.b32.xlu0 %v1990, 64
  %v2127 = vpop.permute.xlu0 %2126
  %2128 = vrot.lane.b32.xlu0 %v1991, 64
  %v2129 = vpop.permute.xlu0 %2128
  %2130 = vrot.lane.b32.xlu0 %v1992, 64
  %v2131 = vpop.permute.xlu0 %2130
  %2132 = vrot.lane.b32.xlu0 %v1993, 64
  %v2133 = vpop.permute.xlu0 %2132
  %2134 = vrot.lane.b32.xlu0 %v1994, 64
  %v2135 = vpop.permute.xlu0 %2134
  %2136 = vrot.lane.b32.xlu0 %v1995, 64
  %v2137 = vpop.permute.xlu0 %2136
  %2138 = vrot.lane.b32.xlu0 %v1996, 64
  %v2139 = vpop.permute.xlu0 %2138
  %2140 = vrot.lane.b32.xlu0 %v1997, 64
  %v2141 = vpop.permute.xlu0 %2140
  %2142 = vrot.lane.b32.xlu0 %v1998, 64
  %v2143 = vpop.permute.xlu0 %2142
  %2144 = vrot.lane.b32.xlu0 %v1999, 64
  %v2145 = vpop.permute.xlu0 %2144
  %2146 = vrot.lane.b32.xlu0 %v2000, 64
  %v2147 = vpop.permute.xlu0 %2146
  %2148 = vrot.lane.b32.xlu0 %v2001, 64
  %v2149 = vpop.permute.xlu0 %2148
  %2150 = vrot.lane.b32.xlu0 %v2002, 64
  %v2151 = vpop.permute.xlu0 %2150
  %2152 = vrot.lane.b32.xlu0 %v2003, 64
  %v2153 = vpop.permute.xlu0 %2152
  %2154 = vrot.lane.b32.xlu0 %v2004, 64
  %v2155 = vpop.permute.xlu0 %2154
  %2156 = vrot.lane.b32.xlu0 %v2005, 64
  %v2157 = vpop.permute.xlu0 %2156
  %2158 = vrot.lane.b32.xlu0 %v2006, 64
  %v2159 = vpop.permute.xlu0 %2158
  %2160 = vrot.lane.b32.xlu0 %v2007, 64
  %v2161 = vpop.permute.xlu0 %2160
  %2162 = vrot.lane.b32.xlu0 %v2008, 64
  %v2163 = vpop.permute.xlu0 %2162
  %2164 = vrot.lane.b32.xlu0 %v2009, 64
  %v2165 = vpop.permute.xlu0 %2164
  %2166 = vrot.lane.b32.xlu0 %v2010, 64
  %v2167 = vpop.permute.xlu0 %2166
  %2168 = vrot.lane.b32.xlu0 %v2011, 64
  %v2169 = vpop.permute.xlu0 %2168
  %2170 = vrot.lane.b32.xlu0 %v2012, 64
  %v2171 = vpop.permute.xlu0 %2170
  %2172 = vrot.lane.b32.xlu0 %v2013, 64
  %v2173 = vpop.permute.xlu0 %2172
  %2174 = vrot.lane.b32.xlu0 %v2014, 64
  %v2175 = vpop.permute.xlu0 %2174
  %2176 = vrot.lane.b32.xlu0 %v2015, 64
  %v2177 = vpop.permute.xlu0 %2176
  %2178 = vrot.lane.b32.xlu0 %v2016, 64
  %v2179 = vpop.permute.xlu0 %2178
  %2180 = vrot.lane.b32.xlu0 %v2017, 64
  %v2181 = vpop.permute.xlu0 %2180
  %2182 = vrot.lane.b32.xlu0 %v2018, 64
  %v2183 = vpop.permute.xlu0 %2182
  %2184 = vrot.lane.b32.xlu0 %v2019, 64
  %v2185 = vpop.permute.xlu0 %2184
  %2186 = vrot.lane.b32.xlu0 %v2020, 64
  %v2187 = vpop.permute.xlu0 %2186
  %2188 = vrot.lane.b32.xlu0 %v2021, 64
  %v2189 = vpop.permute.xlu0 %2188
  %2190 = vrot.lane.b32.xlu0 %v2022, 64
  %v2191 = vpop.permute.xlu0 %2190
  %2192 = vrot.lane.b32.xlu0 %v2023, 64
  %v2193 = vpop.permute.xlu0 %2192
  %2194 = vrot.lane.b32.xlu0 %v2024, 64
  %v2195 = vpop.permute.xlu0 %2194
  %2196 = vrot.lane.b32.xlu0 %v2025, 64
  %v2197 = vpop.permute.xlu0 %2196
  %2198 = vrot.lane.b32.xlu0 %v2026, 64
  %v2199 = vpop.permute.xlu0 %2198
  %2200 = vrot.lane.b32.xlu0 %v2027, 64
  %v2201 = vpop.permute.xlu0 %2200
  %2202 = vrot.lane.b32.xlu0 %v2028, 64
  %v2203 = vpop.permute.xlu0 %2202
  %2204 = vrot.lane.b32.xlu0 %v2029, 64
  %v2205 = vpop.permute.xlu0 %2204
  %2206 = vrot.lane.b32.xlu0 %v2030, 64
  %v2207 = vpop.permute.xlu0 %2206
  %2208 = vrot.lane.b32.xlu0 %v2031, 64
  %v2209 = vpop.permute.xlu0 %2208
  %2210 = vrot.lane.b32.xlu0 %v2032, 64
  %v2211 = vpop.permute.xlu0 %2210
  %2212 = vrot.lane.b32.xlu0 %v2033, 64
  %v2213 = vpop.permute.xlu0 %2212
  %2214 = vrot.lane.b32.xlu0 %v2034, 64
  %v2215 = vpop.permute.xlu0 %2214
  %2216 = vrot.lane.b32.xlu0 %v2035, 64
  %v2217 = vpop.permute.xlu0 %2216
  %2218 = vrot.lane.b32.xlu0 %v2036, 64
  %v2219 = vpop.permute.xlu0 %2218
  %2220 = vrot.lane.b32.xlu0 %v2037, 64
  %v2221 = vpop.permute.xlu0 %2220
  %2222 = vrot.lane.b32.xlu0 %v2038, 64
  %v2223 = vpop.permute.xlu0 %2222
  %2224 = vrot.lane.b32.xlu0 %v2039, 64
  %v2225 = vpop.permute.xlu0 %2224
  %2226 = vrot.lane.b32.xlu0 %v2040, 64
  %v2227 = vpop.permute.xlu0 %2226
  %2228 = vrot.lane.b32.xlu0 %v2041, 64
  %v2229 = vpop.permute.xlu0 %2228
  %2230 = vrot.lane.b32.xlu0 %v2042, 64
  %v2231 = vpop.permute.xlu0 %2230
  %2232 = vrot.lane.b32.xlu0 %v2043, 64
  %v2233 = vpop.permute.xlu0 %2232
  %2234 = vrot.lane.b32.xlu0 %v2044, 64
  %v2235 = vpop.permute.xlu0 %2234
  %2236 = vrot.lane.b32.xlu0 %v2045, 64
  %v2237 = vpop.permute.xlu0 %2236
  %v2302 = vsel %vm92, %v1918, %v2111
  %v2303 = vsel %vm92, %v1919, %v2113
  %v2304 = vsel %vm92, %v1920, %v2115
  %v2305 = vsel %vm92, %v1921, %v2117
  %v2306 = vsel %vm92, %v1922, %v2119
  %v2307 = vsel %vm92, %v1923, %v2121
  %v2308 = vsel %vm92, %v1924, %v2123
  %v2309 = vsel %vm92, %v1925, %v2125
  %v2310 = vsel %vm92, %v1926, %v2127
  %v2311 = vsel %vm92, %v1927, %v2129
  %v2312 = vsel %vm92, %v1928, %v2131
  %v2313 = vsel %vm92, %v1929, %v2133
  %v2314 = vsel %vm92, %v1930, %v2135
  %v2315 = vsel %vm92, %v1931, %v2137
  %v2316 = vsel %vm92, %v1932, %v2139
  %v2317 = vsel %vm92, %v1933, %v2141
  %v2318 = vsel %vm92, %v1934, %v2143
  %v2319 = vsel %vm92, %v1935, %v2145
  %v2320 = vsel %vm92, %v1936, %v2147
  %v2321 = vsel %vm92, %v1937, %v2149
  %v2322 = vsel %vm92, %v1938, %v2151
  %v2323 = vsel %vm92, %v1939, %v2153
  %v2324 = vsel %vm92, %v1940, %v2155
  %v2325 = vsel %vm92, %v1941, %v2157
  %v2326 = vsel %vm92, %v1942, %v2159
  %v2327 = vsel %vm92, %v1943, %v2161
  %v2328 = vsel %vm92, %v1944, %v2163
  %v2329 = vsel %vm92, %v1945, %v2165
  %v2330 = vsel %vm92, %v1946, %v2167
  %v2331 = vsel %vm92, %v1947, %v2169
  %v2332 = vsel %vm92, %v1948, %v2171
  %v2333 = vsel %vm92, %v1949, %v2173
  %v2334 = vsel %vm92, %v1950, %v2175
  %v2335 = vsel %vm92, %v1951, %v2177
  %v2336 = vsel %vm92, %v1952, %v2179
  %v2337 = vsel %vm92, %v1953, %v2181
  %v2338 = vsel %vm92, %v1954, %v2183
  %v2339 = vsel %vm92, %v1955, %v2185
  %v2340 = vsel %vm92, %v1956, %v2187
  %v2341 = vsel %vm92, %v1957, %v2189
  %v2342 = vsel %vm92, %v1958, %v2191
  %v2343 = vsel %vm92, %v1959, %v2193
  %v2344 = vsel %vm92, %v1960, %v2195
  %v2345 = vsel %vm92, %v1961, %v2197
  %v2346 = vsel %vm92, %v1962, %v2199
  %v2347 = vsel %vm92, %v1963, %v2201
  %v2348 = vsel %vm92, %v1964, %v2203
  %v2349 = vsel %vm92, %v1965, %v2205
  %v2350 = vsel %vm92, %v1966, %v2207
  %v2351 = vsel %vm92, %v1967, %v2209
  %v2352 = vsel %vm92, %v1968, %v2211
  %v2353 = vsel %vm92, %v1969, %v2213
  %v2354 = vsel %vm92, %v1970, %v2215
  %v2355 = vsel %vm92, %v1971, %v2217
  %v2356 = vsel %vm92, %v1972, %v2219
  %v2357 = vsel %vm92, %v1973, %v2221
  %v2358 = vsel %vm92, %v1974, %v2223
  %v2359 = vsel %vm92, %v1975, %v2225
  %v2360 = vsel %vm92, %v1976, %v2227
  %v2361 = vsel %vm92, %v1977, %v2229
  %v2362 = vsel %vm92, %v1978, %v2231
  %v2363 = vsel %vm92, %v1979, %v2233
  %v2364 = vsel %vm92, %v1980, %v2235
  %v2365 = vsel %vm92, %v1981, %v2237
  %v2366 = vpack.c.bf16 %v2303, %v2302
  %v2367 = vpack.c.bf16 %v2305, %v2304
  %v2368 = vpack.c.bf16 %v2307, %v2306
  %v2369 = vpack.c.bf16 %v2309, %v2308
  %v2370 = vpack.c.bf16 %v2311, %v2310
  %v2371 = vpack.c.bf16 %v2313, %v2312
  %v2372 = vpack.c.bf16 %v2315, %v2314
  %v2373 = vpack.c.bf16 %v2317, %v2316
  %v2374 = vpack.c.bf16 %v2319, %v2318
  %v2375 = vpack.c.bf16 %v2321, %v2320
  %v2376 = vpack.c.bf16 %v2323, %v2322
  %v2377 = vpack.c.bf16 %v2325, %v2324
  %v2378 = vpack.c.bf16 %v2327, %v2326
  %v2379 = vpack.c.bf16 %v2329, %v2328
  %v2380 = vpack.c.bf16 %v2331, %v2330
  %v2381 = vpack.c.bf16 %v2333, %v2332
  %v2382 = vpack.c.bf16 %v2335, %v2334
  %v2383 = vpack.c.bf16 %v2337, %v2336
  %v2384 = vpack.c.bf16 %v2339, %v2338
  %v2385 = vpack.c.bf16 %v2341, %v2340
  %v2386 = vpack.c.bf16 %v2343, %v2342
  %v2387 = vpack.c.bf16 %v2345, %v2344
  %v2388 = vpack.c.bf16 %v2347, %v2346
  %v2389 = vpack.c.bf16 %v2349, %v2348
  %v2390 = vpack.c.bf16 %v2351, %v2350
  %v2391 = vpack.c.bf16 %v2353, %v2352
  %v2392 = vpack.c.bf16 %v2355, %v2354
  %v2393 = vpack.c.bf16 %v2357, %v2356
  %v2394 = vpack.c.bf16 %v2359, %v2358
  %v2395 = vpack.c.bf16 %v2361, %v2360
  %v2396 = vpack.c.bf16 %v2363, %v2362
  %v2397 = vpack.c.bf16 %v2365, %v2364
  %s2398 = scalar_lea.vmem %s1, 128
  %v2399 = vld [vmem:[%s2398] sm:$0xf]
  %v2400 = vld [vmem:[%s2398 + $0x4] sm:$0xf]
  %v2401 = vld [vmem:[%s2398 + $0x8] sm:$0xf]
  %v2402 = vld [vmem:[%s2398 + $0xc] sm:$0xf]
  %v2403 = vld [vmem:[%s2398 + $0x10] sm:$0xf]
  %v2404 = vld [vmem:[%s2398 + $0x14] sm:$0xf]
  %v2405 = vld [vmem:[%s2398 + $0x18] sm:$0xf]
  %v2406 = vld [vmem:[%s2398 + $0x1c] sm:$0xf]
  %v2407 = vld [vmem:[%s2398 + $0x20] sm:$0xf]
  %v2408 = vld [vmem:[%s2398 + $0x24] sm:$0xf]
  %v2409 = vld [vmem:[%s2398 + $0x28] sm:$0xf]
  %v2410 = vld [vmem:[%s2398 + $0x2c] sm:$0xf]
  %v2411 = vld [vmem:[%s2398 + $0x30] sm:$0xf]
  %v2412 = vld [vmem:[%s2398 + $0x34] sm:$0xf]
  %v2413 = vld [vmem:[%s2398 + $0x38] sm:$0xf]
  %v2414 = vld [vmem:[%s2398 + $0x3c] sm:$0xf]
  %v2431 = vunpack.c.l.b16 %v2399
  %v2432 = vunpack.c.l.b16 %v2400
  %v2433 = vunpack.c.l.b16 %v2401
  %v2434 = vunpack.c.l.b16 %v2402
  %v2435 = vunpack.c.l.b16 %v2403
  %v2436 = vunpack.c.l.b16 %v2404
  %v2437 = vunpack.c.l.b16 %v2405
  %v2438 = vunpack.c.l.b16 %v2406
  %v2439 = vunpack.c.l.b16 %v2407
  %v2440 = vunpack.c.l.b16 %v2408
  %v2441 = vunpack.c.l.b16 %v2409
  %v2442 = vunpack.c.l.b16 %v2410
  %v2443 = vunpack.c.l.b16 %v2411
  %v2444 = vunpack.c.l.b16 %v2412
  %v2445 = vunpack.c.l.b16 %v2413
  %v2446 = vunpack.c.l.b16 %v2414
  %v2447 = vpack.c.b16 %v2432, %v2431
  %v2448 = vpack.c.b16 %v2434, %v2433
  %v2449 = vpack.c.b16 %v2436, %v2435
  %v2450 = vpack.c.b16 %v2438, %v2437
  %v2451 = vpack.c.b16 %v2440, %v2439
  %v2452 = vpack.c.b16 %v2442, %v2441
  %v2453 = vpack.c.b16 %v2444, %v2443
  %v2454 = vpack.c.b16 %v2446, %v2445
  %2463 = vmatprep.subr.bf16.mxu0 0
  %2464 = vmatpush1.bf16.msra.mxu0 %v2447
  %2465 = vmatprep.subr.bf16.mxu0 0
  %2466 = vmatpush1.bf16.msra.mxu0 %v2448
  %2467 = vmatprep.subr.bf16.mxu0 0
  %2468 = vmatpush1.bf16.msra.mxu0 %v2449
  %2469 = vmatprep.subr.bf16.mxu0 0
  %2470 = vmatpush1.bf16.msra.mxu0 %v2450
  %2471 = vmatprep.subr.bf16.mxu0 0
  %2472 = vmatpush1.bf16.msra.mxu0 %v2451
  %2473 = vmatprep.subr.bf16.mxu0 0
  %2474 = vmatpush1.bf16.msra.mxu0 %v2452
  %2475 = vmatprep.subr.bf16.mxu0 0
  %2476 = vmatpush1.bf16.msra.mxu0 %v2453
  %2477 = vmatprep.subr.bf16.mxu0 0
  %2478 = vmatpush1.bf16.msra.mxu0 %v2454
  %2479 = vmatprep.subr.bf16.mxu0 0
  %2480 = vmatpush1.bf16.msra.mxu0 0
  %2481 = vmatprep.subr.bf16.mxu0 0
  %2482 = vmatpush1.bf16.msra.mxu0 0
  %2483 = vmatprep.subr.bf16.mxu0 0
  %2484 = vmatpush1.bf16.msra.mxu0 0
  %2485 = vmatprep.subr.bf16.mxu0 0
  %2486 = vmatpush1.bf16.msra.mxu0 0
  %2487 = vmatprep.subr.bf16.mxu0 0
  %2488 = vmatpush1.bf16.msra.mxu0 0
  %2489 = vmatprep.subr.bf16.mxu0 0
  %2490 = vmatpush1.bf16.msra.mxu0 0
  %2491 = vmatprep.subr.bf16.mxu0 0
  %2492 = vmatpush1.bf16.msra.mxu0 0
  %2493 = vmatprep.subr.bf16.mxu0 0
  %2494 = vmatpush1.bf16.msra.mxu0 0
  %2495 = vmatprep.mubr.bf16.mxu0 0
  %2496 = vmatmul.mubr.bf16.gmra.mrb[0].mxu0 %v2366
  %v2497 = vpop.f32.mrb[0].mxu0
  %v2498 = vadd.f32 0.0, %v2497
  %v2499 = vpop.f32.mrb[0].mxu0
  %v2500 = vpop.f32.mrb[0].mxu0
  %v2501 = vadd.f32 0.0, %v2500
  %v2502 = vpop.f32.mrb[0].mxu0
  %2503 = vmatprep.mubr.bf16.mxu0 0
  %2504 = vmatmul.mubr.bf16.gmra.mrb[0].mxu0 %v2367
  %v2505 = vpop.f32.mrb[0].mxu0
  %v2506 = vadd.f32 0.0, %v2505
  %v2507 = vpop.f32.mrb[0].mxu0
  %v2508 = vpop.f32.mrb[0].mxu0
  %v2509 = vadd.f32 0.0, %v2508
  %v2510 = vpop.f32.mrb[0].mxu0
  %2511 = vmatprep.mubr.bf16.mxu0 0
  %2512 = vmatmul.mubr.bf16.gmra.mrb[0].mxu0 %v2368
  %v2513 = vpop.f32.mrb[0].mxu0
  %v2514 = vadd.f32 0.0, %v2513
  %v2515 = vpop.f32.mrb[0].mxu0
  %v2516 = vpop.f32.mrb[0].mxu0
  %v2517 = vadd.f32 0.0, %v2516
  %v2518 = vpop.f32.mrb[0].mxu0
  %2519 = vmatprep.mubr.bf16.mxu0 0
  %2520 = vmatmul.mubr.bf16.gmra.mrb[0].mxu0 %v2369
  %v2521 = vpop.f32.mrb[0].mxu0
  %v2522 = vadd.f32 0.0, %v2521
  %v2523 = vpop.f32.mrb[0].mxu0
  %v2524 = vpop.f32.mrb[0].mxu0
  %v2525 = vadd.f32 0.0, %v2524
  %v2526 = vpop.f32.mrb[0].mxu0
  %2527 = vmatprep.mubr.bf16.mxu0 0
  %2528 = vmatmul.mubr.bf16.gmra.mrb[0].mxu0 %v2370
  %v2529 = vpop.f32.mrb[0].mxu0
  %v2530 = vadd.f32 0.0, %v2529
  %v2531 = vpop.f32.mrb[0].mxu0
  %v2532 = vpop.f32.mrb[0].mxu0
  %v2533 = vadd.f32 0.0, %v2532
  %v2534 = vpop.f32.mrb[0].mxu0
  %2535 = vmatprep.mubr.bf16.mxu0 0
  %2536 = vmatmul.mubr.bf16.gmra.mrb[0].mxu0 %v2371
  %v2537 = vpop.f32.mrb[0].mxu0
  %v2538 = vadd.f32 0.0, %v2537
  %v2539 = vpop.f32.mrb[0].mxu0
  %v2540 = vpop.f32.mrb[0].mxu0
  %v2541 = vadd.f32 0.0, %v2540
  %v2542 = vpop.f32.mrb[0].mxu0
  %2543 = vmatprep.mubr.bf16.mxu0 0
  %2544 = vmatmul.mubr.bf16.gmra.mrb[0].mxu0 %v2372
  %v2545 = vpop.f32.mrb[0].mxu0
  %v2546 = vadd.f32 0.0, %v2545
  %v2547 = vpop.f32.mrb[0].mxu0
  %v2548 = vpop.f32.mrb[0].mxu0
  %v2549 = vadd.f32 0.0, %v2548
  %v2550 = vpop.f32.mrb[0].mxu0
  %2551 = vmatprep.mubr.bf16.mxu0 0
  %2552 = vmatmul.mubr.bf16.gmra.mrb[0].mxu0 %v2373
  %v2553 = vpop.f32.mrb[0].mxu0
  %v2554 = vadd.f32 0.0, %v2553
  %v2555 = vpop.f32.mrb[0].mxu0
  %v2556 = vpop.f32.mrb[0].mxu0
  %v2557 = vadd.f32 0.0, %v2556
  %v2558 = vpop.f32.mrb[0].mxu0
  %2559 = vmatprep.mubr.bf16.mxu0 0
  %2560 = vmatmul.mubr.bf16.gmra.mrb[0].mxu0 %v2374
  %v2561 = vpop.f32.mrb[0].mxu0
  %v2562 = vadd.f32 0.0, %v2561
  %v2563 = vpop.f32.mrb[0].mxu0
  %v2564 = vpop.f32.mrb[0].mxu0
  %v2565 = vadd.f32 0.0, %v2564
  %v2566 = vpop.f32.mrb[0].mxu0
  %2567 = vmatprep.mubr.bf16.mxu0 0
  %2568 = vmatmul.mubr.bf16.gmra.mrb[0].mxu0 %v2375
  %v2569 = vpop.f32.mrb[0].mxu0
  %v2570 = vadd.f32 0.0, %v2569
  %v2571 = vpop.f32.mrb[0].mxu0
  %v2572 = vpop.f32.mrb[0].mxu0
  %v2573 = vadd.f32 0.0, %v2572
  %v2574 = vpop.f32.mrb[0].mxu0
  %2575 = vmatprep.mubr.bf16.mxu0 0
  %2576 = vmatmul.mubr.bf16.gmra.mrb[0].mxu0 %v2376
  %v2577 = vpop.f32.mrb[0].mxu0
  %v2578 = vadd.f32 0.0, %v2577
  %v2579 = vpop.f32.mrb[0].mxu0
  %v2580 = vpop.f32.mrb[0].mxu0
  %v2581 = vadd.f32 0.0, %v2580
  %v2582 = vpop.f32.mrb[0].mxu0
  %2583 = vmatprep.mubr.bf16.mxu0 0
  %2584 = vmatmul.mubr.bf16.gmra.mrb[0].mxu0 %v2377
  %v2585 = vpop.f32.mrb[0].mxu0
  %v2586 = vadd.f32 0.0, %v2585
  %v2587 = vpop.f32.mrb[0].mxu0
  %v2588 = vpop.f32.mrb[0].mxu0
  %v2589 = vadd.f32 0.0, %v2588
  %v2590 = vpop.f32.mrb[0].mxu0
  %2591 = vmatprep.mubr.bf16.mxu0 0
  %2592 = vmatmul.mubr.bf16.gmra.mrb[0].mxu0 %v2378
  %v2593 = vpop.f32.mrb[0].mxu0
  %v2594 = vadd.f32 0.0, %v2593
  %v2595 = vpop.f32.mrb[0].mxu0
  %v2596 = vpop.f32.mrb[0].mxu0
  %v2597 = vadd.f32 0.0, %v2596
  %v2598 = vpop.f32.mrb[0].mxu0
  %2599 = vmatprep.mubr.bf16.mxu0 0
  %2600 = vmatmul.mubr.bf16.gmra.mrb[0].mxu0 %v2379
  %v2601 = vpop.f32.mrb[0].mxu0
  %v2602 = vadd.f32 0.0, %v2601
  %v2603 = vpop.f32.mrb[0].mxu0
  %v2604 = vpop.f32.mrb[0].mxu0
  %v2605 = vadd.f32 0.0, %v2604
  %v2606 = vpop.f32.mrb[0].mxu0
  %2607 = vmatprep.mubr.bf16.mxu0 0
  %2608 = vmatmul.mubr.bf16.gmra.mrb[0].mxu0 %v2380
  %v2609 = vpop.f32.mrb[0].mxu0
  %v2610 = vadd.f32 0.0, %v2609
  %v2611 = vpop.f32.mrb[0].mxu0
  %v2612 = vpop.f32.mrb[0].mxu0
  %v2613 = vadd.f32 0.0, %v2612
  %v2614 = vpop.f32.mrb[0].mxu0
  %2615 = vmatprep.mubr.bf16.mxu0 0
  %2616 = vmatmul.mubr.bf16.gmra.mrb[0].mxu0 %v2381
  %v2617 = vpop.f32.mrb[0].mxu0
  %v2618 = vadd.f32 0.0, %v2617
  %v2619 = vpop.f32.mrb[0].mxu0
  %v2620 = vpop.f32.mrb[0].mxu0
  %v2621 = vadd.f32 0.0, %v2620
  %v2622 = vpop.f32.mrb[0].mxu0
  %2623 = vmatprep.mubr.bf16.mxu0 0
  %2624 = vmatmul.mubr.bf16.gmra.mrb[0].mxu0 %v2382
  %v2625 = vpop.f32.mrb[0].mxu0
  %v2626 = vadd.f32 0.0, %v2625
  %v2627 = vpop.f32.mrb[0].mxu0
  %v2628 = vpop.f32.mrb[0].mxu0
  %v2629 = vadd.f32 0.0, %v2628
  %v2630 = vpop.f32.mrb[0].mxu0
  %2631 = vmatprep.mubr.bf16.mxu0 0
  %2632 = vmatmul.mubr.bf16.gmra.mrb[0].mxu0 %v2383
  %v2633 = vpop.f32.mrb[0].mxu0
  %v2634 = vadd.f32 0.0, %v2633
  %v2635 = vpop.f32.mrb[0].mxu0
  %v2636 = vpop.f32.mrb[0].mxu0
  %v2637 = vadd.f32 0.0, %v2636
  %v2638 = vpop.f32.mrb[0].mxu0
  %2639 = vmatprep.mubr.bf16.mxu0 0
  %2640 = vmatmul.mubr.bf16.gmra.mrb[0].mxu0 %v2384
  %v2641 = vpop.f32.mrb[0].mxu0
  %v2642 = vadd.f32 0.0, %v2641
  %v2643 = vpop.f32.mrb[0].mxu0
  %v2644 = vpop.f32.mrb[0].mxu0
  %v2645 = vadd.f32 0.0, %v2644
  %v2646 = vpop.f32.mrb[0].mxu0
  %2647 = vmatprep.mubr.bf16.mxu0 0
  %2648 = vmatmul.mubr.bf16.gmra.mrb[0].mxu0 %v2385
  %v2649 = vpop.f32.mrb[0].mxu0
  %v2650 = vadd.f32 0.0, %v2649
  %v2651 = vpop.f32.mrb[0].mxu0
  %v2652 = vpop.f32.mrb[0].mxu0
  %v2653 = vadd.f32 0.0, %v2652
  %v2654 = vpop.f32.mrb[0].mxu0
  %2655 = vmatprep.mubr.bf16.mxu0 0
  %2656 = vmatmul.mubr.bf16.gmra.mrb[0].mxu0 %v2386
  %v2657 = vpop.f32.mrb[0].mxu0
  %v2658 = vadd.f32 0.0, %v2657
  %v2659 = vpop.f32.mrb[0].mxu0
  %v2660 = vpop.f32.mrb[0].mxu0
  %v2661 = vadd.f32 0.0, %v2660
  %v2662 = vpop.f32.mrb[0].mxu0
  %2663 = vmatprep.mubr.bf16.mxu0 0
  %2664 = vmatmul.mubr.bf16.gmra.mrb[0].mxu0 %v2387
  %v2665 = vpop.f32.mrb[0].mxu0
  %v2666 = vadd.f32 0.0, %v2665
  %v2667 = vpop.f32.mrb[0].mxu0
  %v2668 = vpop.f32.mrb[0].mxu0
  %v2669 = vadd.f32 0.0, %v2668
  %v2670 = vpop.f32.mrb[0].mxu0
  %2671 = vmatprep.mubr.bf16.mxu0 0
  %2672 = vmatmul.mubr.bf16.gmra.mrb[0].mxu0 %v2388
  %v2673 = vpop.f32.mrb[0].mxu0
  %v2674 = vadd.f32 0.0, %v2673
  %v2675 = vpop.f32.mrb[0].mxu0
  %v2676 = vpop.f32.mrb[0].mxu0
  %v2677 = vadd.f32 0.0, %v2676
  %v2678 = vpop.f32.mrb[0].mxu0
  %2679 = vmatprep.mubr.bf16.mxu0 0
  %2680 = vmatmul.mubr.bf16.gmra.mrb[0].mxu0 %v2389
  %v2681 = vpop.f32.mrb[0].mxu0
  %v2682 = vadd.f32 0.0, %v2681
  %v2683 = vpop.f32.mrb[0].mxu0
  %v2684 = vpop.f32.mrb[0].mxu0
  %v2685 = vadd.f32 0.0, %v2684
  %v2686 = vpop.f32.mrb[0].mxu0
  %2687 = vmatprep.mubr.bf16.mxu0 0
  %2688 = vmatmul.mubr.bf16.gmra.mrb[0].mxu0 %v2390
  %v2689 = vpop.f32.mrb[0].mxu0
  %v2690 = vadd.f32 0.0, %v2689
  %v2691 = vpop.f32.mrb[0].mxu0
  %v2692 = vpop.f32.mrb[0].mxu0
  %v2693 = vadd.f32 0.0, %v2692
  %v2694 = vpop.f32.mrb[0].mxu0
  %2695 = vmatprep.mubr.bf16.mxu0 0
  %2696 = vmatmul.mubr.bf16.gmra.mrb[0].mxu0 %v2391
  %v2697 = vpop.f32.mrb[0].mxu0
  %v2698 = vadd.f32 0.0, %v2697
  %v2699 = vpop.f32.mrb[0].mxu0
  %v2700 = vpop.f32.mrb[0].mxu0
  %v2701 = vadd.f32 0.0, %v2700
  %v2702 = vpop.f32.mrb[0].mxu0
  %2703 = vmatprep.mubr.bf16.mxu0 0
  %2704 = vmatmul.mubr.bf16.gmra.mrb[0].mxu0 %v2392
  %v2705 = vpop.f32.mrb[0].mxu0
  %v2706 = vadd.f32 0.0, %v2705
  %v2707 = vpop.f32.mrb[0].mxu0
  %v2708 = vpop.f32.mrb[0].mxu0
  %v2709 = vadd.f32 0.0, %v2708
  %v2710 = vpop.f32.mrb[0].mxu0
  %2711 = vmatprep.mubr.bf16.mxu0 0
  %2712 = vmatmul.mubr.bf16.gmra.mrb[0].mxu0 %v2393
  %v2713 = vpop.f32.mrb[0].mxu0
  %v2714 = vadd.f32 0.0, %v2713
  %v2715 = vpop.f32.mrb[0].mxu0
  %v2716 = vpop.f32.mrb[0].mxu0
  %v2717 = vadd.f32 0.0, %v2716
  %v2718 = vpop.f32.mrb[0].mxu0
  %2719 = vmatprep.mubr.bf16.mxu0 0
  %2720 = vmatmul.mubr.bf16.gmra.mrb[0].mxu0 %v2394
  %v2721 = vpop.f32.mrb[0].mxu0
  %v2722 = vadd.f32 0.0, %v2721
  %v2723 = vpop.f32.mrb[0].mxu0
  %v2724 = vpop.f32.mrb[0].mxu0
  %v2725 = vadd.f32 0.0, %v2724
  %v2726 = vpop.f32.mrb[0].mxu0
  %2727 = vmatprep.mubr.bf16.mxu0 0
  %2728 = vmatmul.mubr.bf16.gmra.mrb[0].mxu0 %v2395
  %v2729 = vpop.f32.mrb[0].mxu0
  %v2730 = vadd.f32 0.0, %v2729
  %v2731 = vpop.f32.mrb[0].mxu0
  %v2732 = vpop.f32.mrb[0].mxu0
  %v2733 = vadd.f32 0.0, %v2732
  %v2734 = vpop.f32.mrb[0].mxu0
  %2735 = vmatprep.mubr.bf16.mxu0 0
  %2736 = vmatmul.mubr.bf16.gmra.mrb[0].mxu0 %v2396
  %v2737 = vpop.f32.mrb[0].mxu0
  %v2738 = vadd.f32 0.0, %v2737
  %v2739 = vpop.f32.mrb[0].mxu0
  %v2740 = vpop.f32.mrb[0].mxu0
  %v2741 = vadd.f32 0.0, %v2740
  %v2742 = vpop.f32.mrb[0].mxu0
  %2743 = vmatprep.mubr.bf16.mxu0 0
  %2744 = vmatmul.mubr.bf16.gmra.mrb[0].mxu0 %v2397
  %v2745 = vpop.f32.mrb[0].mxu0
  %v2746 = vadd.f32 0.0, %v2745
  %v2747 = vpop.f32.mrb[0].mxu0
  %v2748 = vpop.f32.mrb[0].mxu0
  %v2749 = vadd.f32 0.0, %v2748
  %v2750 = vpop.f32.mrb[0].mxu0
  %2751 = vdwg.mxu0
  %v2752 = vadd.f32 %v1664, %v2498
  %v2753 = vadd.f32 %v1667, %v2501
  %v2754 = vadd.f32 %v1672, %v2506
  %v2755 = vadd.f32 %v1675, %v2509
  %v2756 = vadd.f32 %v1680, %v2514
  %v2757 = vadd.f32 %v1683, %v2517
  %v2758 = vadd.f32 %v1688, %v2522
  %v2759 = vadd.f32 %v1691, %v2525
  %v2760 = vadd.f32 %v1696, %v2530
  %v2761 = vadd.f32 %v1699, %v2533
  %v2762 = vadd.f32 %v1704, %v2538
  %v2763 = vadd.f32 %v1707, %v2541
  %v2764 = vadd.f32 %v1712, %v2546
  %v2765 = vadd.f32 %v1715, %v2549
  %v2766 = vadd.f32 %v1720, %v2554
  %v2767 = vadd.f32 %v1723, %v2557
  %v2768 = vadd.f32 %v1728, %v2562
  %v2769 = vadd.f32 %v1731, %v2565
  %v2770 = vadd.f32 %v1736, %v2570
  %v2771 = vadd.f32 %v1739, %v2573
  %v2772 = vadd.f32 %v1744, %v2578
  %v2773 = vadd.f32 %v1747, %v2581
  %v2774 = vadd.f32 %v1752, %v2586
  %v2775 = vadd.f32 %v1755, %v2589
  %v2776 = vadd.f32 %v1760, %v2594
  %v2777 = vadd.f32 %v1763, %v2597
  %v2778 = vadd.f32 %v1768, %v2602
  %v2779 = vadd.f32 %v1771, %v2605
  %v2780 = vadd.f32 %v1776, %v2610
  %v2781 = vadd.f32 %v1779, %v2613
  %v2782 = vadd.f32 %v1784, %v2618
  %v2783 = vadd.f32 %v1787, %v2621
  %v2784 = vadd.f32 %v1792, %v2626
  %v2785 = vadd.f32 %v1795, %v2629
  %v2786 = vadd.f32 %v1800, %v2634
  %v2787 = vadd.f32 %v1803, %v2637
  %v2788 = vadd.f32 %v1808, %v2642
  %v2789 = vadd.f32 %v1811, %v2645
  %v2790 = vadd.f32 %v1816, %v2650
  %v2791 = vadd.f32 %v1819, %v2653
  %v2792 = vadd.f32 %v1824, %v2658
  %v2793 = vadd.f32 %v1827, %v2661
  %v2794 = vadd.f32 %v1832, %v2666
  %v2795 = vadd.f32 %v1835, %v2669
  %v2796 = vadd.f32 %v1840, %v2674
  %v2797 = vadd.f32 %v1843, %v2677
  %v2798 = vadd.f32 %v1848, %v2682
  %v2799 = vadd.f32 %v1851, %v2685
  %v2800 = vadd.f32 %v1856, %v2690
  %v2801 = vadd.f32 %v1859, %v2693
  %v2802 = vadd.f32 %v1864, %v2698
  %v2803 = vadd.f32 %v1867, %v2701
  %v2804 = vadd.f32 %v1872, %v2706
  %v2805 = vadd.f32 %v1875, %v2709
  %v2806 = vadd.f32 %v1880, %v2714
  %v2807 = vadd.f32 %v1883, %v2717
  %v2808 = vadd.f32 %v1888, %v2722
  %v2809 = vadd.f32 %v1891, %v2725
  %v2810 = vadd.f32 %v1896, %v2730
  %v2811 = vadd.f32 %v1899, %v2733
  %v2812 = vadd.f32 %v1904, %v2738
  %v2813 = vadd.f32 %v1907, %v2741
  %v2814 = vadd.f32 %v1912, %v2746
  %v2815 = vadd.f32 %v1915, %v2749
  %v2816 = vld [vmem:[%s223] sm:$0xff]
  %v2817 = vld [vmem:[%s223 + $0x8] sm:$0xff]
  %v2818 = vld [vmem:[%s223 + $0x18] sm:$0xff]
  %v2819 = vld [vmem:[%s223 + $0x20] sm:$0xff]
  %v2820 = vld [vmem:[%s223 + $0x30] sm:$0xff]
  %v2821 = vld [vmem:[%s223 + $0x38] sm:$0xff]
  %v2822 = vld [vmem:[%s223 + $0x48] sm:$0xff]
  %v2823 = vld [vmem:[%s223 + $0x50] sm:$0xff]
  %v2824 = vld [vmem:[%s223 + $0x60] sm:$0xff]
  %v2825 = vld [vmem:[%s223 + $0x68] sm:$0xff]
  %v2826 = vld [vmem:[%s223 + $0x78] sm:$0xff]
  %v2827 = vld [vmem:[%s223 + $0x80] sm:$0xff]
  %v2828 = vld [vmem:[%s223 + $0x90] sm:$0xff]
  %v2829 = vld [vmem:[%s223 + $0x98] sm:$0xff]
  %v2830 = vld [vmem:[%s223 + $0xa8] sm:$0xff]
  %v2831 = vld [vmem:[%s223 + $0xb0] sm:$0xff]
  %v2832 = vld [vmem:[%s223 + $0xc0] sm:$0xff]
  %v2833 = vld [vmem:[%s223 + $0xc8] sm:$0xff]
  %v2834 = vld [vmem:[%s223 + $0xd8] sm:$0xff]
  %v2835 = vld [vmem:[%s223 + $0xe0] sm:$0xff]
  %v2836 = vld [vmem:[%s223 + $0xf0] sm:$0xff]
  %v2837 = vld [vmem:[%s223 + $0xf8] sm:$0xff]
  %v2838 = vld [vmem:[%s223 + $0x108] sm:$0xff]
  %v2839 = vld [vmem:[%s223 + $0x110] sm:$0xff]
  %v2840 = vld [vmem:[%s223 + $0x120] sm:$0xff]
  %v2841 = vld [vmem:[%s223 + $0x128] sm:$0xff]
  %v2842 = vld [vmem:[%s223 + $0x138] sm:$0xff]
  %v2843 = vld [vmem:[%s223 + $0x140] sm:$0xff]
  %v2844 = vld [vmem:[%s223 + $0x150] sm:$0xff]
  %v2845 = vld [vmem:[%s223 + $0x158] sm:$0xff]
  %v2846 = vld [vmem:[%s223 + $0x168] sm:$0xff]
  %v2847 = vld [vmem:[%s223 + $0x170] sm:$0xff]
  %v2848 = vld [vmem:[%s223 + $0x1b0] sm:$0xff]
  %v2849 = vld [vmem:[%s223 + $0x1b8] sm:$0xff]
  %v2850 = vld [vmem:[%s223 + $0x1c8] sm:$0xff]
  %v2851 = vld [vmem:[%s223 + $0x1d0] sm:$0xff]
  %v2852 = vld [vmem:[%s223 + $0x1e0] sm:$0xff]
  %v2853 = vld [vmem:[%s223 + $0x1e8] sm:$0xff]
  %v2854 = vld [vmem:[%s223 + $0x1f8] sm:$0xff]
  %v2855 = vld [vmem:[%s223 + $0x200] sm:$0xff]
  %v2856 = vld [vmem:[%s223 + $0x210] sm:$0xff]
  %v2857 = vld [vmem:[%s223 + $0x218] sm:$0xff]
  %v2858 = vld [vmem:[%s223 + $0x228] sm:$0xff]
  %v2859 = vld [vmem:[%s223 + $0x230] sm:$0xff]
  %v2860 = vld [vmem:[%s223 + $0x240] sm:$0xff]
  %v2861 = vld [vmem:[%s223 + $0x248] sm:$0xff]
  %v2862 = vld [vmem:[%s223 + $0x258] sm:$0xff]
  %v2863 = vld [vmem:[%s223 + $0x260] sm:$0xff]
  %v2864 = vld [vmem:[%s223 + $0x270] sm:$0xff]
  %v2865 = vld [vmem:[%s223 + $0x278] sm:$0xff]
  %v2866 = vld [vmem:[%s223 + $0x288] sm:$0xff]
  %v2867 = vld [vmem:[%s223 + $0x290] sm:$0xff]
  %v2868 = vld [vmem:[%s223 + $0x2a0] sm:$0xff]
  %v2869 = vld [vmem:[%s223 + $0x2a8] sm:$0xff]
  %v2870 = vld [vmem:[%s223 + $0x2b8] sm:$0xff]
  %v2871 = vld [vmem:[%s223 + $0x2c0] sm:$0xff]
  %v2872 = vld [vmem:[%s223 + $0x2d0] sm:$0xff]
  %v2873 = vld [vmem:[%s223 + $0x2d8] sm:$0xff]
  %v2874 = vld [vmem:[%s223 + $0x2e8] sm:$0xff]
  %v2875 = vld [vmem:[%s223 + $0x2f0] sm:$0xff]
  %v2876 = vld [vmem:[%s223 + $0x300] sm:$0xff]
  %v2877 = vld [vmem:[%s223 + $0x308] sm:$0xff]
  %v2878 = vld [vmem:[%s223 + $0x318] sm:$0xff]
  %v2879 = vld [vmem:[%s223 + $0x320] sm:$0xff]
  %v2880 = vld [vmem:[%s223 + $0x1] sm:$0xff]
  %v2881 = vld [vmem:[%s223 + $0x9] sm:$0xff]
  %v2882 = vld [vmem:[%s223 + $0x19] sm:$0xff]
  %v2883 = vld [vmem:[%s223 + $0x21] sm:$0xff]
  %v2884 = vld [vmem:[%s223 + $0x31] sm:$0xff]
  %v2885 = vld [vmem:[%s223 + $0x39] sm:$0xff]
  %v2886 = vld [vmem:[%s223 + $0x49] sm:$0xff]
  %v2887 = vld [vmem:[%s223 + $0x51] sm:$0xff]
  %v2888 = vld [vmem:[%s223 + $0x61] sm:$0xff]
  %v2889 = vld [vmem:[%s223 + $0x69] sm:$0xff]
  %v2890 = vld [vmem:[%s223 + $0x79] sm:$0xff]
  %v2891 = vld [vmem:[%s223 + $0x81] sm:$0xff]
  %v2892 = vld [vmem:[%s223 + $0x91] sm:$0xff]
  %v2893 = vld [vmem:[%s223 + $0x99] sm:$0xff]
  %v2894 = vld [vmem:[%s223 + $0xa9] sm:$0xff]
  %v2895 = vld [vmem:[%s223 + $0xb1] sm:$0xff]
  %v2896 = vld [vmem:[%s223 + $0xc1] sm:$0xff]
  %v2897 = vld [vmem:[%s223 + $0xc9] sm:$0xff]
  %v2898 = vld [vmem:[%s223 + $0xd9] sm:$0xff]
  %v2899 = vld [vmem:[%s223 + $0xe1] sm:$0xff]
  %v2900 = vld [vmem:[%s223 + $0xf1] sm:$0xff]
  %v2901 = vld [vmem:[%s223 + $0xf9] sm:$0xff]
  %v2902 = vld [vmem:[%s223 + $0x109] sm:$0xff]
  %v2903 = vld [vmem:[%s223 + $0x111] sm:$0xff]
  %v2904 = vld [vmem:[%s223 + $0x121] sm:$0xff]
  %v2905 = vld [vmem:[%s223 + $0x129] sm:$0xff]
  %v2906 = vld [vmem:[%s223 + $0x139] sm:$0xff]
  %v2907 = vld [vmem:[%s223 + $0x141] sm:$0xff]
  %v2908 = vld [vmem:[%s223 + $0x151] sm:$0xff]
  %v2909 = vld [vmem:[%s223 + $0x159] sm:$0xff]
  %v2910 = vld [vmem:[%s223 + $0x169] sm:$0xff]
  %v2911 = vld [vmem:[%s223 + $0x171] sm:$0xff]
  %v2912 = vld [vmem:[%s223 + $0x1b1] sm:$0xff]
  %v2913 = vld [vmem:[%s223 + $0x1b9] sm:$0xff]
  %v2914 = vld [vmem:[%s223 + $0x1c9] sm:$0xff]
  %v2915 = vld [vmem:[%s223 + $0x1d1] sm:$0xff]
  %v2916 = vld [vmem:[%s223 + $0x1e1] sm:$0xff]
  %v2917 = vld [vmem:[%s223 + $0x1e9] sm:$0xff]
  %v2918 = vld [vmem:[%s223 + $0x1f9] sm:$0xff]
  %v2919 = vld [vmem:[%s223 + $0x201] sm:$0xff]
  %v2920 = vld [vmem:[%s223 + $0x211] sm:$0xff]
  %v2921 = vld [vmem:[%s223 + $0x219] sm:$0xff]
  %v2922 = vld [vmem:[%s223 + $0x229] sm:$0xff]
  %v2923 = vld [vmem:[%s223 + $0x231] sm:$0xff]
  %v2924 = vld [vmem:[%s223 + $0x241] sm:$0xff]
  %v2925 = vld [vmem:[%s223 + $0x249] sm:$0xff]
  %v2926 = vld [vmem:[%s223 + $0x259] sm:$0xff]
  %v2927 = vld [vmem:[%s223 + $0x261] sm:$0xff]
  %v2928 = vld [vmem:[%s223 + $0x271] sm:$0xff]
  %v2929 = vld [vmem:[%s223 + $0x279] sm:$0xff]
  %v2930 = vld [vmem:[%s223 + $0x289] sm:$0xff]
  %v2931 = vld [vmem:[%s223 + $0x291] sm:$0xff]
  %v2932 = vld [vmem:[%s223 + $0x2a1] sm:$0xff]
  %v2933 = vld [vmem:[%s223 + $0x2a9] sm:$0xff]
  %v2934 = vld [vmem:[%s223 + $0x2b9] sm:$0xff]
  %v2935 = vld [vmem:[%s223 + $0x2c1] sm:$0xff]
  %v2936 = vld [vmem:[%s223 + $0x2d1] sm:$0xff]
  %v2937 = vld [vmem:[%s223 + $0x2d9] sm:$0xff]
  %v2938 = vld [vmem:[%s223 + $0x2e9] sm:$0xff]
  %v2939 = vld [vmem:[%s223 + $0x2f1] sm:$0xff]
  %v2940 = vld [vmem:[%s223 + $0x301] sm:$0xff]
  %v2941 = vld [vmem:[%s223 + $0x309] sm:$0xff]
  %v2942 = vld [vmem:[%s223 + $0x319] sm:$0xff]
  %v2943 = vld [vmem:[%s223 + $0x321] sm:$0xff]
  %3008 = vrot.lane.b32.xlu0 %v2880, 64
  %v3009 = vpop.permute.xlu0 %3008
  %3010 = vrot.lane.b32.xlu0 %v2881, 64
  %v3011 = vpop.permute.xlu0 %3010
  %3012 = vrot.lane.b32.xlu0 %v2882, 64
  %v3013 = vpop.permute.xlu0 %3012
  %3014 = vrot.lane.b32.xlu0 %v2883, 64
  %v3015 = vpop.permute.xlu0 %3014
  %3016 = vrot.lane.b32.xlu0 %v2884, 64
  %v3017 = vpop.permute.xlu0 %3016
  %3018 = vrot.lane.b32.xlu0 %v2885, 64
  %v3019 = vpop.permute.xlu0 %3018
  %3020 = vrot.lane.b32.xlu0 %v2886, 64
  %v3021 = vpop.permute.xlu0 %3020
  %3022 = vrot.lane.b32.xlu0 %v2887, 64
  %v3023 = vpop.permute.xlu0 %3022
  %3024 = vrot.lane.b32.xlu0 %v2888, 64
  %v3025 = vpop.permute.xlu0 %3024
  %3026 = vrot.lane.b32.xlu0 %v2889, 64
  %v3027 = vpop.permute.xlu0 %3026
  %3028 = vrot.lane.b32.xlu0 %v2890, 64
  %v3029 = vpop.permute.xlu0 %3028
  %3030 = vrot.lane.b32.xlu0 %v2891, 64
  %v3031 = vpop.permute.xlu0 %3030
  %3032 = vrot.lane.b32.xlu0 %v2892, 64
  %v3033 = vpop.permute.xlu0 %3032
  %3034 = vrot.lane.b32.xlu0 %v2893, 64
  %v3035 = vpop.permute.xlu0 %3034
  %3036 = vrot.lane.b32.xlu0 %v2894, 64
  %v3037 = vpop.permute.xlu0 %3036
  %3038 = vrot.lane.b32.xlu0 %v2895, 64
  %v3039 = vpop.permute.xlu0 %3038
  %3040 = vrot.lane.b32.xlu0 %v2896, 64
  %v3041 = vpop.permute.xlu0 %3040
  %3042 = vrot.lane.b32.xlu0 %v2897, 64
  %v3043 = vpop.permute.xlu0 %3042
  %3044 = vrot.lane.b32.xlu0 %v2898, 64
  %v3045 = vpop.permute.xlu0 %3044
  %3046 = vrot.lane.b32.xlu0 %v2899, 64
  %v3047 = vpop.permute.xlu0 %3046
  %3048 = vrot.lane.b32.xlu0 %v2900, 64
  %v3049 = vpop.permute.xlu0 %3048
  %3050 = vrot.lane.b32.xlu0 %v2901, 64
  %v3051 = vpop.permute.xlu0 %3050
  %3052 = vrot.lane.b32.xlu0 %v2902, 64
  %v3053 = vpop.permute.xlu0 %3052
  %3054 = vrot.lane.b32.xlu0 %v2903, 64
  %v3055 = vpop.permute.xlu0 %3054
  %3056 = vrot.lane.b32.xlu0 %v2904, 64
  %v3057 = vpop.permute.xlu0 %3056
  %3058 = vrot.lane.b32.xlu0 %v2905, 64
  %v3059 = vpop.permute.xlu0 %3058
  %3060 = vrot.lane.b32.xlu0 %v2906, 64
  %v3061 = vpop.permute.xlu0 %3060
  %3062 = vrot.lane.b32.xlu0 %v2907, 64
  %v3063 = vpop.permute.xlu0 %3062
  %3064 = vrot.lane.b32.xlu0 %v2908, 64
  %v3065 = vpop.permute.xlu0 %3064
  %3066 = vrot.lane.b32.xlu0 %v2909, 64
  %v3067 = vpop.permute.xlu0 %3066
  %3068 = vrot.lane.b32.xlu0 %v2910, 64
  %v3069 = vpop.permute.xlu0 %3068
  %3070 = vrot.lane.b32.xlu0 %v2911, 64
  %v3071 = vpop.permute.xlu0 %3070
  %3072 = vrot.lane.b32.xlu0 %v2912, 64
  %v3073 = vpop.permute.xlu0 %3072
  %3074 = vrot.lane.b32.xlu0 %v2913, 64
  %v3075 = vpop.permute.xlu0 %3074
  %3076 = vrot.lane.b32.xlu0 %v2914, 64
  %v3077 = vpop.permute.xlu0 %3076
  %3078 = vrot.lane.b32.xlu0 %v2915, 64
  %v3079 = vpop.permute.xlu0 %3078
  %3080 = vrot.lane.b32.xlu0 %v2916, 64
  %v3081 = vpop.permute.xlu0 %3080
  %3082 = vrot.lane.b32.xlu0 %v2917, 64
  %v3083 = vpop.permute.xlu0 %3082
  %3084 = vrot.lane.b32.xlu0 %v2918, 64
  %v3085 = vpop.permute.xlu0 %3084
  %3086 = vrot.lane.b32.xlu0 %v2919, 64
  %v3087 = vpop.permute.xlu0 %3086
  %3088 = vrot.lane.b32.xlu0 %v2920, 64
  %v3089 = vpop.permute.xlu0 %3088
  %3090 = vrot.lane.b32.xlu0 %v2921, 64
  %v3091 = vpop.permute.xlu0 %3090
  %3092 = vrot.lane.b32.xlu0 %v2922, 64
  %v3093 = vpop.permute.xlu0 %3092
  %3094 = vrot.lane.b32.xlu0 %v2923, 64
  %v3095 = vpop.permute.xlu0 %3094
  %3096 = vrot.lane.b32.xlu0 %v2924, 64
  %v3097 = vpop.permute.xlu0 %3096
  %3098 = vrot.lane.b32.xlu0 %v2925, 64
  %v3099 = vpop.permute.xlu0 %3098
  %3100 = vrot.lane.b32.xlu0 %v2926, 64
  %v3101 = vpop.permute.xlu0 %3100
  %3102 = vrot.lane.b32.xlu0 %v2927, 64
  %v3103 = vpop.permute.xlu0 %3102
  %3104 = vrot.lane.b32.xlu0 %v2928, 64
  %v3105 = vpop.permute.xlu0 %3104
  %3106 = vrot.lane.b32.xlu0 %v2929, 64
  %v3107 = vpop.permute.xlu0 %3106
  %3108 = vrot.lane.b32.xlu0 %v2930, 64
  %v3109 = vpop.permute.xlu0 %3108
  %3110 = vrot.lane.b32.xlu0 %v2931, 64
  %v3111 = vpop.permute.xlu0 %3110
  %3112 = vrot.lane.b32.xlu0 %v2932, 64
  %v3113 = vpop.permute.xlu0 %3112
  %3114 = vrot.lane.b32.xlu0 %v2933, 64
  %v3115 = vpop.permute.xlu0 %3114
  %3116 = vrot.lane.b32.xlu0 %v2934, 64
  %v3117 = vpop.permute.xlu0 %3116
  %3118 = vrot.lane.b32.xlu0 %v2935, 64
  %v3119 = vpop.permute.xlu0 %3118
  %3120 = vrot.lane.b32.xlu0 %v2936, 64
  %v3121 = vpop.permute.xlu0 %3120
  %3122 = vrot.lane.b32.xlu0 %v2937, 64
  %v3123 = vpop.permute.xlu0 %3122
  %3124 = vrot.lane.b32.xlu0 %v2938, 64
  %v3125 = vpop.permute.xlu0 %3124
  %3126 = vrot.lane.b32.xlu0 %v2939, 64
  %v3127 = vpop.permute.xlu0 %3126
  %3128 = vrot.lane.b32.xlu0 %v2940, 64
  %v3129 = vpop.permute.xlu0 %3128
  %3130 = vrot.lane.b32.xlu0 %v2941, 64
  %v3131 = vpop.permute.xlu0 %3130
  %3132 = vrot.lane.b32.xlu0 %v2942, 64
  %v3133 = vpop.permute.xlu0 %3132
  %3134 = vrot.lane.b32.xlu0 %v2943, 64
  %v3135 = vpop.permute.xlu0 %3134
  %v3200 = vsel %vm92, %v2816, %v3009
  %v3201 = vsel %vm92, %v2817, %v3011
  %v3202 = vsel %vm92, %v2818, %v3013
  %v3203 = vsel %vm92, %v2819, %v3015
  %v3204 = vsel %vm92, %v2820, %v3017
  %v3205 = vsel %vm92, %v2821, %v3019
  %v3206 = vsel %vm92, %v2822, %v3021
  %v3207 = vsel %vm92, %v2823, %v3023
  %v3208 = vsel %vm92, %v2824, %v3025
  %v3209 = vsel %vm92, %v2825, %v3027
  %v3210 = vsel %vm92, %v2826, %v3029
  %v3211 = vsel %vm92, %v2827, %v3031
  %v3212 = vsel %vm92, %v2828, %v3033
  %v3213 = vsel %vm92, %v2829, %v3035
  %v3214 = vsel %vm92, %v2830, %v3037
  %v3215 = vsel %vm92, %v2831, %v3039
  %v3216 = vsel %vm92, %v2832, %v3041
  %v3217 = vsel %vm92, %v2833, %v3043
  %v3218 = vsel %vm92, %v2834, %v3045
  %v3219 = vsel %vm92, %v2835, %v3047
  %v3220 = vsel %vm92, %v2836, %v3049
  %v3221 = vsel %vm92, %v2837, %v3051
  %v3222 = vsel %vm92, %v2838, %v3053
  %v3223 = vsel %vm92, %v2839, %v3055
  %v3224 = vsel %vm92, %v2840, %v3057
  %v3225 = vsel %vm92, %v2841, %v3059
  %v3226 = vsel %vm92, %v2842, %v3061
  %v3227 = vsel %vm92, %v2843, %v3063
  %v3228 = vsel %vm92, %v2844, %v3065
  %v3229 = vsel %vm92, %v2845, %v3067
  %v3230 = vsel %vm92, %v2846, %v3069
  %v3231 = vsel %vm92, %v2847, %v3071
  %v3232 = vsel %vm92, %v2848, %v3073
  %v3233 = vsel %vm92, %v2849, %v3075
  %v3234 = vsel %vm92, %v2850, %v3077
  %v3235 = vsel %vm92, %v2851, %v3079
  %v3236 = vsel %vm92, %v2852, %v3081
  %v3237 = vsel %vm92, %v2853, %v3083
  %v3238 = vsel %vm92, %v2854, %v3085
  %v3239 = vsel %vm92, %v2855, %v3087
  %v3240 = vsel %vm92, %v2856, %v3089
  %v3241 = vsel %vm92, %v2857, %v3091
  %v3242 = vsel %vm92, %v2858, %v3093
  %v3243 = vsel %vm92, %v2859, %v3095
  %v3244 = vsel %vm92, %v2860, %v3097
  %v3245 = vsel %vm92, %v2861, %v3099
  %v3246 = vsel %vm92, %v2862, %v3101
  %v3247 = vsel %vm92, %v2863, %v3103
  %v3248 = vsel %vm92, %v2864, %v3105
  %v3249 = vsel %vm92, %v2865, %v3107
  %v3250 = vsel %vm92, %v2866, %v3109
  %v3251 = vsel %vm92, %v2867, %v3111
  %v3252 = vsel %vm92, %v2868, %v3113
  %v3253 = vsel %vm92, %v2869, %v3115
  %v3254 = vsel %vm92, %v2870, %v3117
  %v3255 = vsel %vm92, %v2871, %v3119
  %v3256 = vsel %vm92, %v2872, %v3121
  %v3257 = vsel %vm92, %v2873, %v3123
  %v3258 = vsel %vm92, %v2874, %v3125
  %v3259 = vsel %vm92, %v2875, %v3127
  %v3260 = vsel %vm92, %v2876, %v3129
  %v3261 = vsel %vm92, %v2877, %v3131
  %v3262 = vsel %vm92, %v2878, %v3133
  %v3263 = vsel %vm92, %v2879, %v3135
  %v3264 = vpack.c.bf16 %v3201, %v3200
  %v3265 = vpack.c.bf16 %v3203, %v3202
  %v3266 = vpack.c.bf16 %v3205, %v3204
  %v3267 = vpack.c.bf16 %v3207, %v3206
  %v3268 = vpack.c.bf16 %v3209, %v3208
  %v3269 = vpack.c.bf16 %v3211, %v3210
  %v3270 = vpack.c.bf16 %v3213, %v3212
  %v3271 = vpack.c.bf16 %v3215, %v3214
  %v3272 = vpack.c.bf16 %v3217, %v3216
  %v3273 = vpack.c.bf16 %v3219, %v3218
  %v3274 = vpack.c.bf16 %v3221, %v3220
  %v3275 = vpack.c.bf16 %v3223, %v3222
  %v3276 = vpack.c.bf16 %v3225, %v3224
  %v3277 = vpack.c.bf16 %v3227, %v3226
  %v3278 = vpack.c.bf16 %v3229, %v3228
  %v3279 = vpack.c.bf16 %v3231, %v3230
  %v3280 = vpack.c.bf16 %v3233, %v3232
  %v3281 = vpack.c.bf16 %v3235, %v3234
  %v3282 = vpack.c.bf16 %v3237, %v3236
  %v3283 = vpack.c.bf16 %v3239, %v3238
  %v3284 = vpack.c.bf16 %v3241, %v3240
  %v3285 = vpack.c.bf16 %v3243, %v3242
  %v3286 = vpack.c.bf16 %v3245, %v3244
  %v3287 = vpack.c.bf16 %v3247, %v3246
  %v3288 = vpack.c.bf16 %v3249, %v3248
  %v3289 = vpack.c.bf16 %v3251, %v3250
  %v3290 = vpack.c.bf16 %v3253, %v3252
  %v3291 = vpack.c.bf16 %v3255, %v3254
  %v3292 = vpack.c.bf16 %v3257, %v3256
  %v3293 = vpack.c.bf16 %v3259, %v3258
  %v3294 = vpack.c.bf16 %v3261, %v3260
  %v3295 = vpack.c.bf16 %v3263, %v3262
  %s3296 = scalar_lea.vmem %s1, 192
  %v3297 = vld [vmem:[%s3296] sm:$0xf]
  %v3298 = vld [vmem:[%s3296 + $0x4] sm:$0xf]
  %v3299 = vld [vmem:[%s3296 + $0x8] sm:$0xf]
  %v3300 = vld [vmem:[%s3296 + $0xc] sm:$0xf]
  %v3301 = vld [vmem:[%s3296 + $0x10] sm:$0xf]
  %v3302 = vld [vmem:[%s3296 + $0x14] sm:$0xf]
  %v3303 = vld [vmem:[%s3296 + $0x18] sm:$0xf]
  %v3304 = vld [vmem:[%s3296 + $0x1c] sm:$0xf]
  %v3305 = vld [vmem:[%s3296 + $0x20] sm:$0xf]
  %v3306 = vld [vmem:[%s3296 + $0x24] sm:$0xf]
  %v3307 = vld [vmem:[%s3296 + $0x28] sm:$0xf]
  %v3308 = vld [vmem:[%s3296 + $0x2c] sm:$0xf]
  %v3309 = vld [vmem:[%s3296 + $0x30] sm:$0xf]
  %v3310 = vld [vmem:[%s3296 + $0x34] sm:$0xf]
  %v3311 = vld [vmem:[%s3296 + $0x38] sm:$0xf]
  %v3312 = vld [vmem:[%s3296 + $0x3c] sm:$0xf]
  %v3329 = vunpack.c.l.b16 %v3297
  %v3330 = vunpack.c.l.b16 %v3298
  %v3331 = vunpack.c.l.b16 %v3299
  %v3332 = vunpack.c.l.b16 %v3300
  %v3333 = vunpack.c.l.b16 %v3301
  %v3334 = vunpack.c.l.b16 %v3302
  %v3335 = vunpack.c.l.b16 %v3303
  %v3336 = vunpack.c.l.b16 %v3304
  %v3337 = vunpack.c.l.b16 %v3305
  %v3338 = vunpack.c.l.b16 %v3306
  %v3339 = vunpack.c.l.b16 %v3307
  %v3340 = vunpack.c.l.b16 %v3308
  %v3341 = vunpack.c.l.b16 %v3309
  %v3342 = vunpack.c.l.b16 %v3310
  %v3343 = vunpack.c.l.b16 %v3311
  %v3344 = vunpack.c.l.b16 %v3312
  %v3345 = vpack.c.b16 %v3330, %v3329
  %v3346 = vpack.c.b16 %v3332, %v3331
  %v3347 = vpack.c.b16 %v3334, %v3333
  %v3348 = vpack.c.b16 %v3336, %v3335
  %v3349 = vpack.c.b16 %v3338, %v3337
  %v3350 = vpack.c.b16 %v3340, %v3339
  %v3351 = vpack.c.b16 %v3342, %v3341
  %v3352 = vpack.c.b16 %v3344, %v3343
  %3361 = vmatprep.subr.bf16.mxu0 0
  %3362 = vmatpush1.bf16.msra.mxu0 %v3345
  %3363 = vmatprep.subr.bf16.mxu0 0
  %3364 = vmatpush1.bf16.msra.mxu0 %v3346
  %3365 = vmatprep.subr.bf16.mxu0 0
  %3366 = vmatpush1.bf16.msra.mxu0 %v3347
  %3367 = vmatprep.subr.bf16.mxu0 0
  %3368 = vmatpush1.bf16.msra.mxu0 %v3348
  %3369 = vmatprep.subr.bf16.mxu0 0
  %3370 = vmatpush1.bf16.msra.mxu0 %v3349
  %3371 = vmatprep.subr.bf16.mxu0 0
  %3372 = vmatpush1.bf16.msra.mxu0 %v3350
  %3373 = vmatprep.subr.bf16.mxu0 0
  %3374 = vmatpush1.bf16.msra.mxu0 %v3351
  %3375 = vmatprep.subr.bf16.mxu0 0
  %3376 = vmatpush1.bf16.msra.mxu0 %v3352
  %3377 = vmatprep.subr.bf16.mxu0 0
  %3378 = vmatpush1.bf16.msra.mxu0 0
  %3379 = vmatprep.subr.bf16.mxu0 0
  %3380 = vmatpush1.bf16.msra.mxu0 0
  %3381 = vmatprep.subr.bf16.mxu0 0
  %3382 = vmatpush1.bf16.msra.mxu0 0
  %3383 = vmatprep.subr.bf16.mxu0 0
  %3384 = vmatpush1.bf16.msra.mxu0 0
  %3385 = vmatprep.subr.bf16.mxu0 0
  %3386 = vmatpush1.bf16.msra.mxu0 0
  %3387 = vmatprep.subr.bf16.mxu0 0
  %3388 = vmatpush1.bf16.msra.mxu0 0
  %3389 = vmatprep.subr.bf16.mxu0 0
  %3390 = vmatpush1.bf16.msra.mxu0 0
  %3391 = vmatprep.subr.bf16.mxu0 0
  %3392 = vmatpush1.bf16.msra.mxu0 0
  %3393 = vmatprep.mubr.bf16.mxu0 0
  %3394 = vmatmul.mubr.bf16.gmra.mrb[0].mxu0 %v3264
  %v3395 = vpop.f32.mrb[0].mxu0
  %v3396 = vadd.f32 0.0, %v3395
  %v3397 = vpop.f32.mrb[0].mxu0
  %v3398 = vpop.f32.mrb[0].mxu0
  %v3399 = vadd.f32 0.0, %v3398
  %v3400 = vpop.f32.mrb[0].mxu0
  %3401 = vmatprep.mubr.bf16.mxu0 0
  %3402 = vmatmul.mubr.bf16.gmra.mrb[0].mxu0 %v3265
  %v3403 = vpop.f32.mrb[0].mxu0
  %v3404 = vadd.f32 0.0, %v3403
  %v3405 = vpop.f32.mrb[0].mxu0
  %v3406 = vpop.f32.mrb[0].mxu0
  %v3407 = vadd.f32 0.0, %v3406
  %v3408 = vpop.f32.mrb[0].mxu0
  %3409 = vmatprep.mubr.bf16.mxu0 0
  %3410 = vmatmul.mubr.bf16.gmra.mrb[0].mxu0 %v3266
  %v3411 = vpop.f32.mrb[0].mxu0
  %v3412 = vadd.f32 0.0, %v3411
  %v3413 = vpop.f32.mrb[0].mxu0
  %v3414 = vpop.f32.mrb[0].mxu0
  %v3415 = vadd.f32 0.0, %v3414
  %v3416 = vpop.f32.mrb[0].mxu0
  %3417 = vmatprep.mubr.bf16.mxu0 0
  %3418 = vmatmul.mubr.bf16.gmra.mrb[0].mxu0 %v3267
  %v3419 = vpop.f32.mrb[0].mxu0
  %v3420 = vadd.f32 0.0, %v3419
  %v3421 = vpop.f32.mrb[0].mxu0
  %v3422 = vpop.f32.mrb[0].mxu0
  %v3423 = vadd.f32 0.0, %v3422
  %v3424 = vpop.f32.mrb[0].mxu0
  %3425 = vmatprep.mubr.bf16.mxu0 0
  %3426 = vmatmul.mubr.bf16.gmra.mrb[0].mxu0 %v3268
  %v3427 = vpop.f32.mrb[0].mxu0
  %v3428 = vadd.f32 0.0, %v3427
  %v3429 = vpop.f32.mrb[0].mxu0
  %v3430 = vpop.f32.mrb[0].mxu0
  %v3431 = vadd.f32 0.0, %v3430
  %v3432 = vpop.f32.mrb[0].mxu0
  %3433 = vmatprep.mubr.bf16.mxu0 0
  %3434 = vmatmul.mubr.bf16.gmra.mrb[0].mxu0 %v3269
  %v3435 = vpop.f32.mrb[0].mxu0
  %v3436 = vadd.f32 0.0, %v3435
  %v3437 = vpop.f32.mrb[0].mxu0
  %v3438 = vpop.f32.mrb[0].mxu0
  %v3439 = vadd.f32 0.0, %v3438
  %v3440 = vpop.f32.mrb[0].mxu0
  %3441 = vmatprep.mubr.bf16.mxu0 0
  %3442 = vmatmul.mubr.bf16.gmra.mrb[0].mxu0 %v3270
  %v3443 = vpop.f32.mrb[0].mxu0
  %v3444 = vadd.f32 0.0, %v3443
  %v3445 = vpop.f32.mrb[0].mxu0
  %v3446 = vpop.f32.mrb[0].mxu0
  %v3447 = vadd.f32 0.0, %v3446
  %v3448 = vpop.f32.mrb[0].mxu0
  %3449 = vmatprep.mubr.bf16.mxu0 0
  %3450 = vmatmul.mubr.bf16.gmra.mrb[0].mxu0 %v3271
  %v3451 = vpop.f32.mrb[0].mxu0
  %v3452 = vadd.f32 0.0, %v3451
  %v3453 = vpop.f32.mrb[0].mxu0
  %v3454 = vpop.f32.mrb[0].mxu0
  %v3455 = vadd.f32 0.0, %v3454
  %v3456 = vpop.f32.mrb[0].mxu0
  %3457 = vmatprep.mubr.bf16.mxu0 0
  %3458 = vmatmul.mubr.bf16.gmra.mrb[0].mxu0 %v3272
  %v3459 = vpop.f32.mrb[0].mxu0
  %v3460 = vadd.f32 0.0, %v3459
  %v3461 = vpop.f32.mrb[0].mxu0
  %v3462 = vpop.f32.mrb[0].mxu0
  %v3463 = vadd.f32 0.0, %v3462
  %v3464 = vpop.f32.mrb[0].mxu0
  %3465 = vmatprep.mubr.bf16.mxu0 0
  %3466 = vmatmul.mubr.bf16.gmra.mrb[0].mxu0 %v3273
  %v3467 = vpop.f32.mrb[0].mxu0
  %v3468 = vadd.f32 0.0, %v3467
  %v3469 = vpop.f32.mrb[0].mxu0
  %v3470 = vpop.f32.mrb[0].mxu0
  %v3471 = vadd.f32 0.0, %v3470
  %v3472 = vpop.f32.mrb[0].mxu0
  %3473 = vmatprep.mubr.bf16.mxu0 0
  %3474 = vmatmul.mubr.bf16.gmra.mrb[0].mxu0 %v3274
  %v3475 = vpop.f32.mrb[0].mxu0
  %v3476 = vadd.f32 0.0, %v3475
  %v3477 = vpop.f32.mrb[0].mxu0
  %v3478 = vpop.f32.mrb[0].mxu0
  %v3479 = vadd.f32 0.0, %v3478
  %v3480 = vpop.f32.mrb[0].mxu0
  %3481 = vmatprep.mubr.bf16.mxu0 0
  %3482 = vmatmul.mubr.bf16.gmra.mrb[0].mxu0 %v3275
  %v3483 = vpop.f32.mrb[0].mxu0
  %v3484 = vadd.f32 0.0, %v3483
  %v3485 = vpop.f32.mrb[0].mxu0
  %v3486 = vpop.f32.mrb[0].mxu0
  %v3487 = vadd.f32 0.0, %v3486
  %v3488 = vpop.f32.mrb[0].mxu0
  %3489 = vmatprep.mubr.bf16.mxu0 0
  %3490 = vmatmul.mubr.bf16.gmra.mrb[0].mxu0 %v3276
  %v3491 = vpop.f32.mrb[0].mxu0
  %v3492 = vadd.f32 0.0, %v3491
  %v3493 = vpop.f32.mrb[0].mxu0
  %v3494 = vpop.f32.mrb[0].mxu0
  %v3495 = vadd.f32 0.0, %v3494
  %v3496 = vpop.f32.mrb[0].mxu0
  %3497 = vmatprep.mubr.bf16.mxu0 0
  %3498 = vmatmul.mubr.bf16.gmra.mrb[0].mxu0 %v3277
  %v3499 = vpop.f32.mrb[0].mxu0
  %v3500 = vadd.f32 0.0, %v3499
  %v3501 = vpop.f32.mrb[0].mxu0
  %v3502 = vpop.f32.mrb[0].mxu0
  %v3503 = vadd.f32 0.0, %v3502
  %v3504 = vpop.f32.mrb[0].mxu0
  %3505 = vmatprep.mubr.bf16.mxu0 0
  %3506 = vmatmul.mubr.bf16.gmra.mrb[0].mxu0 %v3278
  %v3507 = vpop.f32.mrb[0].mxu0
  %v3508 = vadd.f32 0.0, %v3507
  %v3509 = vpop.f32.mrb[0].mxu0
  %v3510 = vpop.f32.mrb[0].mxu0
  %v3511 = vadd.f32 0.0, %v3510
  %v3512 = vpop.f32.mrb[0].mxu0
  %3513 = vmatprep.mubr.bf16.mxu0 0
  %3514 = vmatmul.mubr.bf16.gmra.mrb[0].mxu0 %v3279
  %v3515 = vpop.f32.mrb[0].mxu0
  %v3516 = vadd.f32 0.0, %v3515
  %v3517 = vpop.f32.mrb[0].mxu0
  %v3518 = vpop.f32.mrb[0].mxu0
  %v3519 = vadd.f32 0.0, %v3518
  %v3520 = vpop.f32.mrb[0].mxu0
  %3521 = vmatprep.mubr.bf16.mxu0 0
  %3522 = vmatmul.mubr.bf16.gmra.mrb[0].mxu0 %v3280
  %v3523 = vpop.f32.mrb[0].mxu0
  %v3524 = vadd.f32 0.0, %v3523
  %v3525 = vpop.f32.mrb[0].mxu0
  %v3526 = vpop.f32.mrb[0].mxu0
  %v3527 = vadd.f32 0.0, %v3526
  %v3528 = vpop.f32.mrb[0].mxu0
  %3529 = vmatprep.mubr.bf16.mxu0 0
  %3530 = vmatmul.mubr.bf16.gmra.mrb[0].mxu0 %v3281
  %v3531 = vpop.f32.mrb[0].mxu0
  %v3532 = vadd.f32 0.0, %v3531
  %v3533 = vpop.f32.mrb[0].mxu0
  %v3534 = vpop.f32.mrb[0].mxu0
  %v3535 = vadd.f32 0.0, %v3534
  %v3536 = vpop.f32.mrb[0].mxu0
  %3537 = vmatprep.mubr.bf16.mxu0 0
  %3538 = vmatmul.mubr.bf16.gmra.mrb[0].mxu0 %v3282
  %v3539 = vpop.f32.mrb[0].mxu0
  %v3540 = vadd.f32 0.0, %v3539
  %v3541 = vpop.f32.mrb[0].mxu0
  %v3542 = vpop.f32.mrb[0].mxu0
  %v3543 = vadd.f32 0.0, %v3542
  %v3544 = vpop.f32.mrb[0].mxu0
  %3545 = vmatprep.mubr.bf16.mxu0 0
  %3546 = vmatmul.mubr.bf16.gmra.mrb[0].mxu0 %v3283
  %v3547 = vpop.f32.mrb[0].mxu0
  %v3548 = vadd.f32 0.0, %v3547
  %v3549 = vpop.f32.mrb[0].mxu0
  %v3550 = vpop.f32.mrb[0].mxu0
  %v3551 = vadd.f32 0.0, %v3550
  %v3552 = vpop.f32.mrb[0].mxu0
  %3553 = vmatprep.mubr.bf16.mxu0 0
  %3554 = vmatmul.mubr.bf16.gmra.mrb[0].mxu0 %v3284
  %v3555 = vpop.f32.mrb[0].mxu0
  %v3556 = vadd.f32 0.0, %v3555
  %v3557 = vpop.f32.mrb[0].mxu0
  %v3558 = vpop.f32.mrb[0].mxu0
  %v3559 = vadd.f32 0.0, %v3558
  %v3560 = vpop.f32.mrb[0].mxu0
  %3561 = vmatprep.mubr.bf16.mxu0 0
  %3562 = vmatmul.mubr.bf16.gmra.mrb[0].mxu0 %v3285
  %v3563 = vpop.f32.mrb[0].mxu0
  %v3564 = vadd.f32 0.0, %v3563
  %v3565 = vpop.f32.mrb[0].mxu0
  %v3566 = vpop.f32.mrb[0].mxu0
  %v3567 = vadd.f32 0.0, %v3566
  %v3568 = vpop.f32.mrb[0].mxu0
  %3569 = vmatprep.mubr.bf16.mxu0 0
  %3570 = vmatmul.mubr.bf16.gmra.mrb[0].mxu0 %v3286
  %v3571 = vpop.f32.mrb[0].mxu0
  %v3572 = vadd.f32 0.0, %v3571
  %v3573 = vpop.f32.mrb[0].mxu0
  %v3574 = vpop.f32.mrb[0].mxu0
  %v3575 = vadd.f32 0.0, %v3574
  %v3576 = vpop.f32.mrb[0].mxu0
  %3577 = vmatprep.mubr.bf16.mxu0 0
  %3578 = vmatmul.mubr.bf16.gmra.mrb[0].mxu0 %v3287
  %v3579 = vpop.f32.mrb[0].mxu0
  %v3580 = vadd.f32 0.0, %v3579
  %v3581 = vpop.f32.mrb[0].mxu0
  %v3582 = vpop.f32.mrb[0].mxu0
  %v3583 = vadd.f32 0.0, %v3582
  %v3584 = vpop.f32.mrb[0].mxu0
  %3585 = vmatprep.mubr.bf16.mxu0 0
  %3586 = vmatmul.mubr.bf16.gmra.mrb[0].mxu0 %v3288
  %v3587 = vpop.f32.mrb[0].mxu0
  %v3588 = vadd.f32 0.0, %v3587
  %v3589 = vpop.f32.mrb[0].mxu0
  %v3590 = vpop.f32.mrb[0].mxu0
  %v3591 = vadd.f32 0.0, %v3590
  %v3592 = vpop.f32.mrb[0].mxu0
  %3593 = vmatprep.mubr.bf16.mxu0 0
  %3594 = vmatmul.mubr.bf16.gmra.mrb[0].mxu0 %v3289
  %v3595 = vpop.f32.mrb[0].mxu0
  %v3596 = vadd.f32 0.0, %v3595
  %v3597 = vpop.f32.mrb[0].mxu0
  %v3598 = vpop.f32.mrb[0].mxu0
  %v3599 = vadd.f32 0.0, %v3598
  %v3600 = vpop.f32.mrb[0].mxu0
  %3601 = vmatprep.mubr.bf16.mxu0 0
  %3602 = vmatmul.mubr.bf16.gmra.mrb[0].mxu0 %v3290
  %v3603 = vpop.f32.mrb[0].mxu0
  %v3604 = vadd.f32 0.0, %v3603
  %v3605 = vpop.f32.mrb[0].mxu0
  %v3606 = vpop.f32.mrb[0].mxu0
  %v3607 = vadd.f32 0.0, %v3606
  %v3608 = vpop.f32.mrb[0].mxu0
  %3609 = vmatprep.mubr.bf16.mxu0 0
  %3610 = vmatmul.mubr.bf16.gmra.mrb[0].mxu0 %v3291
  %v3611 = vpop.f32.mrb[0].mxu0
  %v3612 = vadd.f32 0.0, %v3611
  %v3613 = vpop.f32.mrb[0].mxu0
  %v3614 = vpop.f32.mrb[0].mxu0
  %v3615 = vadd.f32 0.0, %v3614
  %v3616 = vpop.f32.mrb[0].mxu0
  %3617 = vmatprep.mubr.bf16.mxu0 0
  %3618 = vmatmul.mubr.bf16.gmra.mrb[0].mxu0 %v3292
  %v3619 = vpop.f32.mrb[0].mxu0
  %v3620 = vadd.f32 0.0, %v3619
  %v3621 = vpop.f32.mrb[0].mxu0
  %v3622 = vpop.f32.mrb[0].mxu0
  %v3623 = vadd.f32 0.0, %v3622
  %v3624 = vpop.f32.mrb[0].mxu0
  %3625 = vmatprep.mubr.bf16.mxu0 0
  %3626 = vmatmul.mubr.bf16.gmra.mrb[0].mxu0 %v3293
  %v3627 = vpop.f32.mrb[0].mxu0
  %v3628 = vadd.f32 0.0, %v3627
  %v3629 = vpop.f32.mrb[0].mxu0
  %v3630 = vpop.f32.mrb[0].mxu0
  %v3631 = vadd.f32 0.0, %v3630
  %v3632 = vpop.f32.mrb[0].mxu0
  %3633 = vmatprep.mubr.bf16.mxu0 0
  %3634 = vmatmul.mubr.bf16.gmra.mrb[0].mxu0 %v3294
  %v3635 = vpop.f32.mrb[0].mxu0
  %v3636 = vadd.f32 0.0, %v3635
  %v3637 = vpop.f32.mrb[0].mxu0
  %v3638 = vpop.f32.mrb[0].mxu0
  %v3639 = vadd.f32 0.0, %v3638
  %v3640 = vpop.f32.mrb[0].mxu0
  %3641 = vmatprep.mubr.bf16.mxu0 0
  %3642 = vmatmul.mubr.bf16.gmra.mrb[0].mxu0 %v3295
  %v3643 = vpop.f32.mrb[0].mxu0
  %v3644 = vadd.f32 0.0, %v3643
  %v3645 = vpop.f32.mrb[0].mxu0
  %v3646 = vpop.f32.mrb[0].mxu0
  %v3647 = vadd.f32 0.0, %v3646
  %v3648 = vpop.f32.mrb[0].mxu0
  %3649 = vdwg.mxu0
  %v3650 = vadd.f32 %v2752, %v3396
  %v3651 = vadd.f32 %v2753, %v3399
  %v3652 = vadd.f32 %v2754, %v3404
  %v3653 = vadd.f32 %v2755, %v3407
  %v3654 = vadd.f32 %v2756, %v3412
  %v3655 = vadd.f32 %v2757, %v3415
  %v3656 = vadd.f32 %v2758, %v3420
  %v3657 = vadd.f32 %v2759, %v3423
  %v3658 = vadd.f32 %v2760, %v3428
  %v3659 = vadd.f32 %v2761, %v3431
  %v3660 = vadd.f32 %v2762, %v3436
  %v3661 = vadd.f32 %v2763, %v3439
  %v3662 = vadd.f32 %v2764, %v3444
  %v3663 = vadd.f32 %v2765, %v3447
  %v3664 = vadd.f32 %v2766, %v3452
  %v3665 = vadd.f32 %v2767, %v3455
  %v3666 = vadd.f32 %v2768, %v3460
  %v3667 = vadd.f32 %v2769, %v3463
  %v3668 = vadd.f32 %v2770, %v3468
  %v3669 = vadd.f32 %v2771, %v3471
  %v3670 = vadd.f32 %v2772, %v3476
  %v3671 = vadd.f32 %v2773, %v3479
  %v3672 = vadd.f32 %v2774, %v3484
  %v3673 = vadd.f32 %v2775, %v3487
  %v3674 = vadd.f32 %v2776, %v3492
  %v3675 = vadd.f32 %v2777, %v3495
  %v3676 = vadd.f32 %v2778, %v3500
  %v3677 = vadd.f32 %v2779, %v3503
  %v3678 = vadd.f32 %v2780, %v3508
  %v3679 = vadd.f32 %v2781, %v3511
  %v3680 = vadd.f32 %v2782, %v3516
  %v3681 = vadd.f32 %v2783, %v3519
  %v3682 = vadd.f32 %v2784, %v3524
  %v3683 = vadd.f32 %v2785, %v3527
  %v3684 = vadd.f32 %v2786, %v3532
  %v3685 = vadd.f32 %v2787, %v3535
  %v3686 = vadd.f32 %v2788, %v3540
  %v3687 = vadd.f32 %v2789, %v3543
  %v3688 = vadd.f32 %v2790, %v3548
  %v3689 = vadd.f32 %v2791, %v3551
  %v3690 = vadd.f32 %v2792, %v3556
  %v3691 = vadd.f32 %v2793, %v3559
  %v3692 = vadd.f32 %v2794, %v3564
  %v3693 = vadd.f32 %v2795, %v3567
  %v3694 = vadd.f32 %v2796, %v3572
  %v3695 = vadd.f32 %v2797, %v3575
  %v3696 = vadd.f32 %v2798, %v3580
  %v3697 = vadd.f32 %v2799, %v3583
  %v3698 = vadd.f32 %v2800, %v3588
  %v3699 = vadd.f32 %v2801, %v3591
  %v3700 = vadd.f32 %v2802, %v3596
  %v3701 = vadd.f32 %v2803, %v3599
  %v3702 = vadd.f32 %v2804, %v3604
  %v3703 = vadd.f32 %v2805, %v3607
  %v3704 = vadd.f32 %v2806, %v3612
  %v3705 = vadd.f32 %v2807, %v3615
  %v3706 = vadd.f32 %v2808, %v3620
  %v3707 = vadd.f32 %v2809, %v3623
  %v3708 = vadd.f32 %v2810, %v3628
  %v3709 = vadd.f32 %v2811, %v3631
  %v3710 = vadd.f32 %v2812, %v3636
  %v3711 = vadd.f32 %v2813, %v3639
  %v3712 = vadd.f32 %v2814, %v3644
  %v3713 = vadd.f32 %v2815, %v3647
  %v3714 = vld [vmem:[%s223 + $0x2] sm:$0xff]
  %v3715 = vld [vmem:[%s223 + $0xa] sm:$0xff]
  %v3716 = vld [vmem:[%s223 + $0x1a] sm:$0xff]
  %v3717 = vld [vmem:[%s223 + $0x22] sm:$0xff]
  %v3718 = vld [vmem:[%s223 + $0x32] sm:$0xff]
  %v3719 = vld [vmem:[%s223 + $0x3a] sm:$0xff]
  %v3720 = vld [vmem:[%s223 + $0x4a] sm:$0xff]
  %v3721 = vld [vmem:[%s223 + $0x52] sm:$0xff]
  %v3722 = vld [vmem:[%s223 + $0x62] sm:$0xff]
  %v3723 = vld [vmem:[%s223 + $0x6a] sm:$0xff]
  %v3724 = vld [vmem:[%s223 + $0x7a] sm:$0xff]
  %v3725 = vld [vmem:[%s223 + $0x82] sm:$0xff]
  %v3726 = vld [vmem:[%s223 + $0x92] sm:$0xff]
  %v3727 = vld [vmem:[%s223 + $0x9a] sm:$0xff]
  %v3728 = vld [vmem:[%s223 + $0xaa] sm:$0xff]
  %v3729 = vld [vmem:[%s223 + $0xb2] sm:$0xff]
  %v3730 = vld [vmem:[%s223 + $0xc2] sm:$0xff]
  %v3731 = vld [vmem:[%s223 + $0xca] sm:$0xff]
  %v3732 = vld [vmem:[%s223 + $0xda] sm:$0xff]
  %v3733 = vld [vmem:[%s223 + $0xe2] sm:$0xff]
  %v3734 = vld [vmem:[%s223 + $0xf2] sm:$0xff]
  %v3735 = vld [vmem:[%s223 + $0xfa] sm:$0xff]
  %v3736 = vld [vmem:[%s223 + $0x10a] sm:$0xff]
  %v3737 = vld [vmem:[%s223 + $0x112] sm:$0xff]
  %v3738 = vld [vmem:[%s223 + $0x122] sm:$0xff]
  %v3739 = vld [vmem:[%s223 + $0x12a] sm:$0xff]
  %v3740 = vld [vmem:[%s223 + $0x13a] sm:$0xff]
  %v3741 = vld [vmem:[%s223 + $0x142] sm:$0xff]
  %v3742 = vld [vmem:[%s223 + $0x152] sm:$0xff]
  %v3743 = vld [vmem:[%s223 + $0x15a] sm:$0xff]
  %v3744 = vld [vmem:[%s223 + $0x16a] sm:$0xff]
  %v3745 = vld [vmem:[%s223 + $0x172] sm:$0xff]
  %v3746 = vld [vmem:[%s223 + $0x1b2] sm:$0xff]
  %v3747 = vld [vmem:[%s223 + $0x1ba] sm:$0xff]
  %v3748 = vld [vmem:[%s223 + $0x1ca] sm:$0xff]
  %v3749 = vld [vmem:[%s223 + $0x1d2] sm:$0xff]
  %v3750 = vld [vmem:[%s223 + $0x1e2] sm:$0xff]
  %v3751 = vld [vmem:[%s223 + $0x1ea] sm:$0xff]
  %v3752 = vld [vmem:[%s223 + $0x1fa] sm:$0xff]
  %v3753 = vld [vmem:[%s223 + $0x202] sm:$0xff]
  %v3754 = vld [vmem:[%s223 + $0x212] sm:$0xff]
  %v3755 = vld [vmem:[%s223 + $0x21a] sm:$0xff]
  %v3756 = vld [vmem:[%s223 + $0x22a] sm:$0xff]
  %v3757 = vld [vmem:[%s223 + $0x232] sm:$0xff]
  %v3758 = vld [vmem:[%s223 + $0x242] sm:$0xff]
  %v3759 = vld [vmem:[%s223 + $0x24a] sm:$0xff]
  %v3760 = vld [vmem:[%s223 + $0x25a] sm:$0xff]
  %v3761 = vld [vmem:[%s223 + $0x262] sm:$0xff]
  %v3762 = vld [vmem:[%s223 + $0x272] sm:$0xff]
  %v3763 = vld [vmem:[%s223 + $0x27a] sm:$0xff]
  %v3764 = vld [vmem:[%s223 + $0x28a] sm:$0xff]
  %v3765 = vld [vmem:[%s223 + $0x292] sm:$0xff]
  %v3766 = vld [vmem:[%s223 + $0x2a2] sm:$0xff]
  %v3767 = vld [vmem:[%s223 + $0x2aa] sm:$0xff]
  %v3768 = vld [vmem:[%s223 + $0x2ba] sm:$0xff]
  %v3769 = vld [vmem:[%s223 + $0x2c2] sm:$0xff]
  %v3770 = vld [vmem:[%s223 + $0x2d2] sm:$0xff]
  %v3771 = vld [vmem:[%s223 + $0x2da] sm:$0xff]
  %v3772 = vld [vmem:[%s223 + $0x2ea] sm:$0xff]
  %v3773 = vld [vmem:[%s223 + $0x2f2] sm:$0xff]
  %v3774 = vld [vmem:[%s223 + $0x302] sm:$0xff]
  %v3775 = vld [vmem:[%s223 + $0x30a] sm:$0xff]
  %v3776 = vld [vmem:[%s223 + $0x31a] sm:$0xff]
  %v3777 = vld [vmem:[%s223 + $0x322] sm:$0xff]
  %v3778 = vpack.c.bf16 %v3715, %v3714
  %v3779 = vpack.c.bf16 %v3717, %v3716
  %v3780 = vpack.c.bf16 %v3719, %v3718
  %v3781 = vpack.c.bf16 %v3721, %v3720
  %v3782 = vpack.c.bf16 %v3723, %v3722
  %v3783 = vpack.c.bf16 %v3725, %v3724
  %v3784 = vpack.c.bf16 %v3727, %v3726
  %v3785 = vpack.c.bf16 %v3729, %v3728
  %v3786 = vpack.c.bf16 %v3731, %v3730
  %v3787 = vpack.c.bf16 %v3733, %v3732
  %v3788 = vpack.c.bf16 %v3735, %v3734
  %v3789 = vpack.c.bf16 %v3737, %v3736
  %v3790 = vpack.c.bf16 %v3739, %v3738
  %v3791 = vpack.c.bf16 %v3741, %v3740
  %v3792 = vpack.c.bf16 %v3743, %v3742
  %v3793 = vpack.c.bf16 %v3745, %v3744
  %v3794 = vpack.c.bf16 %v3747, %v3746
  %v3795 = vpack.c.bf16 %v3749, %v3748
  %v3796 = vpack.c.bf16 %v3751, %v3750
  %v3797 = vpack.c.bf16 %v3753, %v3752
  %v3798 = vpack.c.bf16 %v3755, %v3754
  %v3799 = vpack.c.bf16 %v3757, %v3756
  %v3800 = vpack.c.bf16 %v3759, %v3758
  %v3801 = vpack.c.bf16 %v3761, %v3760
  %v3802 = vpack.c.bf16 %v3763, %v3762
  %v3803 = vpack.c.bf16 %v3765, %v3764
  %v3804 = vpack.c.bf16 %v3767, %v3766
  %v3805 = vpack.c.bf16 %v3769, %v3768
  %v3806 = vpack.c.bf16 %v3771, %v3770
  %v3807 = vpack.c.bf16 %v3773, %v3772
  %v3808 = vpack.c.bf16 %v3775, %v3774
  %v3809 = vpack.c.bf16 %v3777, %v3776
  %v3810 = vld [vmem:[%s2] sm:$0xf]
  %v3811 = vld [vmem:[%s2 + $0x4] sm:$0xf]
  %v3812 = vld [vmem:[%s2 + $0x8] sm:$0xf]
  %v3813 = vld [vmem:[%s2 + $0xc] sm:$0xf]
  %v3814 = vld [vmem:[%s2 + $0x10] sm:$0xf]
  %v3815 = vld [vmem:[%s2 + $0x14] sm:$0xf]
  %v3816 = vld [vmem:[%s2 + $0x18] sm:$0xf]
  %v3817 = vld [vmem:[%s2 + $0x1c] sm:$0xf]
  %v3826 = vunpack.c.l.b16 %v3810
  %v3827 = vunpack.c.l.b16 %v3811
  %v3828 = vunpack.c.l.b16 %v3812
  %v3829 = vunpack.c.l.b16 %v3813
  %v3830 = vunpack.c.l.b16 %v3814
  %v3831 = vunpack.c.l.b16 %v3815
  %v3832 = vunpack.c.l.b16 %v3816
  %v3833 = vunpack.c.l.b16 %v3817
  %v3834 = vpack.c.b16 %v3827, %v3826
  %v3835 = vpack.c.b16 %v3829, %v3828
  %v3836 = vpack.c.b16 %v3831, %v3830
  %v3837 = vpack.c.b16 %v3833, %v3832
  %v3843 = vsel %vm92, %v3778, 0
  %v3846 = vsel %vm92, %v3779, 0
  %v3849 = vsel %vm92, %v3780, 0
  %v3852 = vsel %vm92, %v3781, 0
  %v3855 = vsel %vm92, %v3782, 0
  %v3858 = vsel %vm92, %v3783, 0
  %v3861 = vsel %vm92, %v3784, 0
  %v3864 = vsel %vm92, %v3785, 0
  %v3867 = vsel %vm92, %v3786, 0
  %v3870 = vsel %vm92, %v3787, 0
  %v3873 = vsel %vm92, %v3788, 0
  %v3876 = vsel %vm92, %v3789, 0
  %v3879 = vsel %vm92, %v3790, 0
  %v3882 = vsel %vm92, %v3791, 0
  %v3885 = vsel %vm92, %v3792, 0
  %v3888 = vsel %vm92, %v3793, 0
  %v3891 = vsel %vm92, %v3794, 0
  %v3894 = vsel %vm92, %v3795, 0
  %v3897 = vsel %vm92, %v3796, 0
  %v3900 = vsel %vm92, %v3797, 0
  %v3903 = vsel %vm92, %v3798, 0
  %v3906 = vsel %vm92, %v3799, 0
  %v3909 = vsel %vm92, %v3800, 0
  %v3912 = vsel %vm92, %v3801, 0
  %v3915 = vsel %vm92, %v3802, 0
  %v3918 = vsel %vm92, %v3803, 0
  %v3921 = vsel %vm92, %v3804, 0
  %v3924 = vsel %vm92, %v3805, 0
  %v3927 = vsel %vm92, %v3806, 0
  %v3930 = vsel %vm92, %v3807, 0
  %v3933 = vsel %vm92, %v3808, 0
  %v3936 = vsel %vm92, %v3809, 0
  %3938 = vmatprep.subr.bf16.mxu0 0
  %3939 = vmatpush1.bf16.msra.mxu0 %v3834
  %3940 = vmatprep.subr.bf16.mxu0 0
  %3941 = vmatpush1.bf16.msra.mxu0 %v3835
  %3942 = vmatprep.subr.bf16.mxu0 0
  %3943 = vmatpush1.bf16.msra.mxu0 %v3836
  %3944 = vmatprep.subr.bf16.mxu0 0
  %3945 = vmatpush1.bf16.msra.mxu0 %v3837
  %3946 = vmatprep.subr.bf16.mxu0 0
  %3947 = vmatpush1.bf16.msra.mxu0 0
  %3948 = vmatprep.subr.bf16.mxu0 0
  %3949 = vmatpush1.bf16.msra.mxu0 0
  %3950 = vmatprep.subr.bf16.mxu0 0
  %3951 = vmatpush1.bf16.msra.mxu0 0
  %3952 = vmatprep.subr.bf16.mxu0 0
  %3953 = vmatpush1.bf16.msra.mxu0 0
  %3954 = vmatprep.subr.bf16.mxu0 0
  %3955 = vmatpush1.bf16.msra.mxu0 0
  %3956 = vmatprep.subr.bf16.mxu0 0
  %3957 = vmatpush1.bf16.msra.mxu0 0
  %3958 = vmatprep.subr.bf16.mxu0 0
  %3959 = vmatpush1.bf16.msra.mxu0 0
  %3960 = vmatprep.subr.bf16.mxu0 0
  %3961 = vmatpush1.bf16.msra.mxu0 0
  %3962 = vmatprep.subr.bf16.mxu0 0
  %3963 = vmatpush1.bf16.msra.mxu0 0
  %3964 = vmatprep.subr.bf16.mxu0 0
  %3965 = vmatpush1.bf16.msra.mxu0 0
  %3966 = vmatprep.subr.bf16.mxu0 0
  %3967 = vmatpush1.bf16.msra.mxu0 0
  %3968 = vmatprep.subr.bf16.mxu0 0
  %3969 = vmatpush1.bf16.msra.mxu0 0
  %3970 = vmatprep.mubr.bf16.mxu0 0
  %3971 = vmatmul.mubr.bf16.gmra.mrb[0].mxu0 %v3843
  %v3972 = vpop.f32.mrb[0].mxu0
  %v3973 = vadd.f32 0.0, %v3972
  %v3974 = vpop.f32.mrb[0].mxu0
  %v3975 = vpop.f32.mrb[0].mxu0
  %v3976 = vadd.f32 0.0, %v3975
  %v3977 = vpop.f32.mrb[0].mxu0
  %3978 = vmatprep.mubr.bf16.mxu0 0
  %3979 = vmatmul.mubr.bf16.gmra.mrb[0].mxu0 %v3846
  %v3980 = vpop.f32.mrb[0].mxu0
  %v3981 = vadd.f32 0.0, %v3980
  %v3982 = vpop.f32.mrb[0].mxu0
  %v3983 = vpop.f32.mrb[0].mxu0
  %v3984 = vadd.f32 0.0, %v3983
  %v3985 = vpop.f32.mrb[0].mxu0
  %3986 = vmatprep.mubr.bf16.mxu0 0
  %3987 = vmatmul.mubr.bf16.gmra.mrb[0].mxu0 %v3849
  %v3988 = vpop.f32.mrb[0].mxu0
  %v3989 = vadd.f32 0.0, %v3988
  %v3990 = vpop.f32.mrb[0].mxu0
  %v3991 = vpop.f32.mrb[0].mxu0
  %v3992 = vadd.f32 0.0, %v3991
  %v3993 = vpop.f32.mrb[0].mxu0
  %3994 = vmatprep.mubr.bf16.mxu0 0
  %3995 = vmatmul.mubr.bf16.gmra.mrb[0].mxu0 %v3852
  %v3996 = vpop.f32.mrb[0].mxu0
  %v3997 = vadd.f32 0.0, %v3996
  %v3998 = vpop.f32.mrb[0].mxu0
  %v3999 = vpop.f32.mrb[0].mxu0
  %v4000 = vadd.f32 0.0, %v3999
  %v4001 = vpop.f32.mrb[0].mxu0
  %4002 = vmatprep.mubr.bf16.mxu0 0
  %4003 = vmatmul.mubr.bf16.gmra.mrb[0].mxu0 %v3855
  %v4004 = vpop.f32.mrb[0].mxu0
  %v4005 = vadd.f32 0.0, %v4004
  %v4006 = vpop.f32.mrb[0].mxu0
  %v4007 = vpop.f32.mrb[0].mxu0
  %v4008 = vadd.f32 0.0, %v4007
  %v4009 = vpop.f32.mrb[0].mxu0
  %4010 = vmatprep.mubr.bf16.mxu0 0
  %4011 = vmatmul.mubr.bf16.gmra.mrb[0].mxu0 %v3858
  %v4012 = vpop.f32.mrb[0].mxu0
  %v4013 = vadd.f32 0.0, %v4012
  %v4014 = vpop.f32.mrb[0].mxu0
  %v4015 = vpop.f32.mrb[0].mxu0
  %v4016 = vadd.f32 0.0, %v4015
  %v4017 = vpop.f32.mrb[0].mxu0
  %4018 = vmatprep.mubr.bf16.mxu0 0
  %4019 = vmatmul.mubr.bf16.gmra.mrb[0].mxu0 %v3861
  %v4020 = vpop.f32.mrb[0].mxu0
  %v4021 = vadd.f32 0.0, %v4020
  %v4022 = vpop.f32.mrb[0].mxu0
  %v4023 = vpop.f32.mrb[0].mxu0
  %v4024 = vadd.f32 0.0, %v4023
  %v4025 = vpop.f32.mrb[0].mxu0
  %4026 = vmatprep.mubr.bf16.mxu0 0
  %4027 = vmatmul.mubr.bf16.gmra.mrb[0].mxu0 %v3864
  %v4028 = vpop.f32.mrb[0].mxu0
  %v4029 = vadd.f32 0.0, %v4028
  %v4030 = vpop.f32.mrb[0].mxu0
  %v4031 = vpop.f32.mrb[0].mxu0
  %v4032 = vadd.f32 0.0, %v4031
  %v4033 = vpop.f32.mrb[0].mxu0
  %4034 = vmatprep.mubr.bf16.mxu0 0
  %4035 = vmatmul.mubr.bf16.gmra.mrb[0].mxu0 %v3867
  %v4036 = vpop.f32.mrb[0].mxu0
  %v4037 = vadd.f32 0.0, %v4036
  %v4038 = vpop.f32.mrb[0].mxu0
  %v4039 = vpop.f32.mrb[0].mxu0
  %v4040 = vadd.f32 0.0, %v4039
  %v4041 = vpop.f32.mrb[0].mxu0
  %4042 = vmatprep.mubr.bf16.mxu0 0
  %4043 = vmatmul.mubr.bf16.gmra.mrb[0].mxu0 %v3870
  %v4044 = vpop.f32.mrb[0].mxu0
  %v4045 = vadd.f32 0.0, %v4044
  %v4046 = vpop.f32.mrb[0].mxu0
  %v4047 = vpop.f32.mrb[0].mxu0
  %v4048 = vadd.f32 0.0, %v4047
  %v4049 = vpop.f32.mrb[0].mxu0
  %4050 = vmatprep.mubr.bf16.mxu0 0
  %4051 = vmatmul.mubr.bf16.gmra.mrb[0].mxu0 %v3873
  %v4052 = vpop.f32.mrb[0].mxu0
  %v4053 = vadd.f32 0.0, %v4052
  %v4054 = vpop.f32.mrb[0].mxu0
  %v4055 = vpop.f32.mrb[0].mxu0
  %v4056 = vadd.f32 0.0, %v4055
  %v4057 = vpop.f32.mrb[0].mxu0
  %4058 = vmatprep.mubr.bf16.mxu0 0
  %4059 = vmatmul.mubr.bf16.gmra.mrb[0].mxu0 %v3876
  %v4060 = vpop.f32.mrb[0].mxu0
  %v4061 = vadd.f32 0.0, %v4060
  %v4062 = vpop.f32.mrb[0].mxu0
  %v4063 = vpop.f32.mrb[0].mxu0
  %v4064 = vadd.f32 0.0, %v4063
  %v4065 = vpop.f32.mrb[0].mxu0
  %4066 = vmatprep.mubr.bf16.mxu0 0
  %4067 = vmatmul.mubr.bf16.gmra.mrb[0].mxu0 %v3879
  %v4068 = vpop.f32.mrb[0].mxu0
  %v4069 = vadd.f32 0.0, %v4068
  %v4070 = vpop.f32.mrb[0].mxu0
  %v4071 = vpop.f32.mrb[0].mxu0
  %v4072 = vadd.f32 0.0, %v4071
  %v4073 = vpop.f32.mrb[0].mxu0
  %4074 = vmatprep.mubr.bf16.mxu0 0
  %4075 = vmatmul.mubr.bf16.gmra.mrb[0].mxu0 %v3882
  %v4076 = vpop.f32.mrb[0].mxu0
  %v4077 = vadd.f32 0.0, %v4076
  %v4078 = vpop.f32.mrb[0].mxu0
  %v4079 = vpop.f32.mrb[0].mxu0
  %v4080 = vadd.f32 0.0, %v4079
  %v4081 = vpop.f32.mrb[0].mxu0
  %4082 = vmatprep.mubr.bf16.mxu0 0
  %4083 = vmatmul.mubr.bf16.gmra.mrb[0].mxu0 %v3885
  %v4084 = vpop.f32.mrb[0].mxu0
  %v4085 = vadd.f32 0.0, %v4084
  %v4086 = vpop.f32.mrb[0].mxu0
  %v4087 = vpop.f32.mrb[0].mxu0
  %v4088 = vadd.f32 0.0, %v4087
  %v4089 = vpop.f32.mrb[0].mxu0
  %4090 = vmatprep.mubr.bf16.mxu0 0
  %4091 = vmatmul.mubr.bf16.gmra.mrb[0].mxu0 %v3888
  %v4092 = vpop.f32.mrb[0].mxu0
  %v4093 = vadd.f32 0.0, %v4092
  %v4094 = vpop.f32.mrb[0].mxu0
  %v4095 = vpop.f32.mrb[0].mxu0
  %v4096 = vadd.f32 0.0, %v4095
  %v4097 = vpop.f32.mrb[0].mxu0
  %4098 = vmatprep.mubr.bf16.mxu0 0
  %4099 = vmatmul.mubr.bf16.gmra.mrb[0].mxu0 %v3891
  %v4100 = vpop.f32.mrb[0].mxu0
  %v4101 = vadd.f32 0.0, %v4100
  %v4102 = vpop.f32.mrb[0].mxu0
  %v4103 = vpop.f32.mrb[0].mxu0
  %v4104 = vadd.f32 0.0, %v4103
  %v4105 = vpop.f32.mrb[0].mxu0
  %4106 = vmatprep.mubr.bf16.mxu0 0
  %4107 = vmatmul.mubr.bf16.gmra.mrb[0].mxu0 %v3894
  %v4108 = vpop.f32.mrb[0].mxu0
  %v4109 = vadd.f32 0.0, %v4108
  %v4110 = vpop.f32.mrb[0].mxu0
  %v4111 = vpop.f32.mrb[0].mxu0
  %v4112 = vadd.f32 0.0, %v4111
  %v4113 = vpop.f32.mrb[0].mxu0
  %4114 = vmatprep.mubr.bf16.mxu0 0
  %4115 = vmatmul.mubr.bf16.gmra.mrb[0].mxu0 %v3897
  %v4116 = vpop.f32.mrb[0].mxu0
  %v4117 = vadd.f32 0.0, %v4116
  %v4118 = vpop.f32.mrb[0].mxu0
  %v4119 = vpop.f32.mrb[0].mxu0
  %v4120 = vadd.f32 0.0, %v4119
  %v4121 = vpop.f32.mrb[0].mxu0
  %4122 = vmatprep.mubr.bf16.mxu0 0
  %4123 = vmatmul.mubr.bf16.gmra.mrb[0].mxu0 %v3900
  %v4124 = vpop.f32.mrb[0].mxu0
  %v4125 = vadd.f32 0.0, %v4124
  %v4126 = vpop.f32.mrb[0].mxu0
  %v4127 = vpop.f32.mrb[0].mxu0
  %v4128 = vadd.f32 0.0, %v4127
  %v4129 = vpop.f32.mrb[0].mxu0
  %4130 = vmatprep.mubr.bf16.mxu0 0
  %4131 = vmatmul.mubr.bf16.gmra.mrb[0].mxu0 %v3903
  %v4132 = vpop.f32.mrb[0].mxu0
  %v4133 = vadd.f32 0.0, %v4132
  %v4134 = vpop.f32.mrb[0].mxu0
  %v4135 = vpop.f32.mrb[0].mxu0
  %v4136 = vadd.f32 0.0, %v4135
  %v4137 = vpop.f32.mrb[0].mxu0
  %4138 = vmatprep.mubr.bf16.mxu0 0
  %4139 = vmatmul.mubr.bf16.gmra.mrb[0].mxu0 %v3906
  %v4140 = vpop.f32.mrb[0].mxu0
  %v4141 = vadd.f32 0.0, %v4140
  %v4142 = vpop.f32.mrb[0].mxu0
  %v4143 = vpop.f32.mrb[0].mxu0
  %v4144 = vadd.f32 0.0, %v4143
  %v4145 = vpop.f32.mrb[0].mxu0
  %4146 = vmatprep.mubr.bf16.mxu0 0
  %4147 = vmatmul.mubr.bf16.gmra.mrb[0].mxu0 %v3909
  %v4148 = vpop.f32.mrb[0].mxu0
  %v4149 = vadd.f32 0.0, %v4148
  %v4150 = vpop.f32.mrb[0].mxu0
  %v4151 = vpop.f32.mrb[0].mxu0
  %v4152 = vadd.f32 0.0, %v4151
  %v4153 = vpop.f32.mrb[0].mxu0
  %4154 = vmatprep.mubr.bf16.mxu0 0
  %4155 = vmatmul.mubr.bf16.gmra.mrb[0].mxu0 %v3912
  %v4156 = vpop.f32.mrb[0].mxu0
  %v4157 = vadd.f32 0.0, %v4156
  %v4158 = vpop.f32.mrb[0].mxu0
  %v4159 = vpop.f32.mrb[0].mxu0
  %v4160 = vadd.f32 0.0, %v4159
  %v4161 = vpop.f32.mrb[0].mxu0
  %4162 = vmatprep.mubr.bf16.mxu0 0
  %4163 = vmatmul.mubr.bf16.gmra.mrb[0].mxu0 %v3915
  %v4164 = vpop.f32.mrb[0].mxu0
  %v4165 = vadd.f32 0.0, %v4164
  %v4166 = vpop.f32.mrb[0].mxu0
  %v4167 = vpop.f32.mrb[0].mxu0
  %v4168 = vadd.f32 0.0, %v4167
  %v4169 = vpop.f32.mrb[0].mxu0
  %4170 = vmatprep.mubr.bf16.mxu0 0
  %4171 = vmatmul.mubr.bf16.gmra.mrb[0].mxu0 %v3918
  %v4172 = vpop.f32.mrb[0].mxu0
  %v4173 = vadd.f32 0.0, %v4172
  %v4174 = vpop.f32.mrb[0].mxu0
  %v4175 = vpop.f32.mrb[0].mxu0
  %v4176 = vadd.f32 0.0, %v4175
  %v4177 = vpop.f32.mrb[0].mxu0
  %4178 = vmatprep.mubr.bf16.mxu0 0
  %4179 = vmatmul.mubr.bf16.gmra.mrb[0].mxu0 %v3921
  %v4180 = vpop.f32.mrb[0].mxu0
  %v4181 = vadd.f32 0.0, %v4180
  %v4182 = vpop.f32.mrb[0].mxu0
  %v4183 = vpop.f32.mrb[0].mxu0
  %v4184 = vadd.f32 0.0, %v4183
  %v4185 = vpop.f32.mrb[0].mxu0
  %4186 = vmatprep.mubr.bf16.mxu0 0
  %4187 = vmatmul.mubr.bf16.gmra.mrb[0].mxu0 %v3924
  %v4188 = vpop.f32.mrb[0].mxu0
  %v4189 = vadd.f32 0.0, %v4188
  %v4190 = vpop.f32.mrb[0].mxu0
  %v4191 = vpop.f32.mrb[0].mxu0
  %v4192 = vadd.f32 0.0, %v4191
  %v4193 = vpop.f32.mrb[0].mxu0
  %4194 = vmatprep.mubr.bf16.mxu0 0
  %4195 = vmatmul.mubr.bf16.gmra.mrb[0].mxu0 %v3927
  %v4196 = vpop.f32.mrb[0].mxu0
  %v4197 = vadd.f32 0.0, %v4196
  %v4198 = vpop.f32.mrb[0].mxu0
  %v4199 = vpop.f32.mrb[0].mxu0
  %v4200 = vadd.f32 0.0, %v4199
  %v4201 = vpop.f32.mrb[0].mxu0
  %4202 = vmatprep.mubr.bf16.mxu0 0
  %4203 = vmatmul.mubr.bf16.gmra.mrb[0].mxu0 %v3930
  %v4204 = vpop.f32.mrb[0].mxu0
  %v4205 = vadd.f32 0.0, %v4204
  %v4206 = vpop.f32.mrb[0].mxu0
  %v4207 = vpop.f32.mrb[0].mxu0
  %v4208 = vadd.f32 0.0, %v4207
  %v4209 = vpop.f32.mrb[0].mxu0
  %4210 = vmatprep.mubr.bf16.mxu0 0
  %4211 = vmatmul.mubr.bf16.gmra.mrb[0].mxu0 %v3933
  %v4212 = vpop.f32.mrb[0].mxu0
  %v4213 = vadd.f32 0.0, %v4212
  %v4214 = vpop.f32.mrb[0].mxu0
  %v4215 = vpop.f32.mrb[0].mxu0
  %v4216 = vadd.f32 0.0, %v4215
  %v4217 = vpop.f32.mrb[0].mxu0
  %4218 = vmatprep.mubr.bf16.mxu0 0
  %4219 = vmatmul.mubr.bf16.gmra.mrb[0].mxu0 %v3936
  %v4220 = vpop.f32.mrb[0].mxu0
  %v4221 = vadd.f32 0.0, %v4220
  %v4222 = vpop.f32.mrb[0].mxu0
  %v4223 = vpop.f32.mrb[0].mxu0
  %v4224 = vadd.f32 0.0, %v4223
  %v4225 = vpop.f32.mrb[0].mxu0
  %4226 = vdwg.mxu0
  %v4227 = vadd.f32 %v3650, %v3973
  %v4228 = vadd.f32 %v3651, %v3976
  %v4229 = vadd.f32 %v3652, %v3981
  %v4230 = vadd.f32 %v3653, %v3984
  %v4231 = vadd.f32 %v3654, %v3989
  %v4232 = vadd.f32 %v3655, %v3992
  %v4233 = vadd.f32 %v3656, %v3997
  %v4234 = vadd.f32 %v3657, %v4000
  %v4235 = vadd.f32 %v3658, %v4005
  %v4236 = vadd.f32 %v3659, %v4008
  %v4237 = vadd.f32 %v3660, %v4013
  %v4238 = vadd.f32 %v3661, %v4016
  %v4239 = vadd.f32 %v3662, %v4021
  %v4240 = vadd.f32 %v3663, %v4024
  %v4241 = vadd.f32 %v3664, %v4029
  %v4242 = vadd.f32 %v3665, %v4032
  %v4243 = vadd.f32 %v3666, %v4037
  %v4244 = vadd.f32 %v3667, %v4040
  %v4245 = vadd.f32 %v3668, %v4045
  %v4246 = vadd.f32 %v3669, %v4048
  %v4247 = vadd.f32 %v3670, %v4053
  %v4248 = vadd.f32 %v3671, %v4056
  %v4249 = vadd.f32 %v3672, %v4061
  %v4250 = vadd.f32 %v3673, %v4064
  %v4251 = vadd.f32 %v3674, %v4069
  %v4252 = vadd.f32 %v3675, %v4072
  %v4253 = vadd.f32 %v3676, %v4077
  %v4254 = vadd.f32 %v3677, %v4080
  %v4255 = vadd.f32 %v3678, %v4085
  %v4256 = vadd.f32 %v3679, %v4088
  %v4257 = vadd.f32 %v3680, %v4093
  %v4258 = vadd.f32 %v3681, %v4096
  %v4259 = vadd.f32 %v3682, %v4101
  %v4260 = vadd.f32 %v3683, %v4104
  %v4261 = vadd.f32 %v3684, %v4109
  %v4262 = vadd.f32 %v3685, %v4112
  %v4263 = vadd.f32 %v3686, %v4117
  %v4264 = vadd.f32 %v3687, %v4120
  %v4265 = vadd.f32 %v3688, %v4125
  %v4266 = vadd.f32 %v3689, %v4128
  %v4267 = vadd.f32 %v3690, %v4133
  %v4268 = vadd.f32 %v3691, %v4136
  %v4269 = vadd.f32 %v3692, %v4141
  %v4270 = vadd.f32 %v3693, %v4144
  %v4271 = vadd.f32 %v3694, %v4149
  %v4272 = vadd.f32 %v3695, %v4152
  %v4273 = vadd.f32 %v3696, %v4157
  %v4274 = vadd.f32 %v3697, %v4160
  %v4275 = vadd.f32 %v3698, %v4165
  %v4276 = vadd.f32 %v3699, %v4168
  %v4277 = vadd.f32 %v3700, %v4173
  %v4278 = vadd.f32 %v3701, %v4176
  %v4279 = vadd.f32 %v3702, %v4181
  %v4280 = vadd.f32 %v3703, %v4184
  %v4281 = vadd.f32 %v3704, %v4189
  %v4282 = vadd.f32 %v3705, %v4192
  %v4283 = vadd.f32 %v3706, %v4197
  %v4284 = vadd.f32 %v3707, %v4200
  %v4285 = vadd.f32 %v3708, %v4205
  %v4286 = vadd.f32 %v3709, %v4208
  %v4287 = vadd.f32 %v3710, %v4213
  %v4288 = vadd.f32 %v3711, %v4216
  %v4289 = vadd.f32 %v3712, %v4221
  %v4290 = vadd.f32 %v3713, %v4224
  %v4291 = vld [vmem:[%s3] sm:$0x1]
  %v4293 = vlaneseq
  %v4294 = vshrl.u32 %v4293, 7
  %v4295 = vsub.s32 0, %v4294
  %v4296 = vrot.slane %v4291, %v4295
  %v4298 = vadd.f32 %v4227, %v4296
  %v4299 = vadd.f32 %v4228, %v4296
  %v4300 = vadd.f32 %v4229, %v4296
  %v4301 = vadd.f32 %v4230, %v4296
  %v4302 = vadd.f32 %v4231, %v4296
  %v4303 = vadd.f32 %v4232, %v4296
  %v4304 = vadd.f32 %v4233, %v4296
  %v4305 = vadd.f32 %v4234, %v4296
  %v4306 = vadd.f32 %v4235, %v4296
  %v4307 = vadd.f32 %v4236, %v4296
  %v4308 = vadd.f32 %v4237, %v4296
  %v4309 = vadd.f32 %v4238, %v4296
  %v4310 = vadd.f32 %v4239, %v4296
  %v4311 = vadd.f32 %v4240, %v4296
  %v4312 = vadd.f32 %v4241, %v4296
  %v4313 = vadd.f32 %v4242, %v4296
  %v4314 = vadd.f32 %v4243, %v4296
  %v4315 = vadd.f32 %v4244, %v4296
  %v4316 = vadd.f32 %v4245, %v4296
  %v4317 = vadd.f32 %v4246, %v4296
  %v4318 = vadd.f32 %v4247, %v4296
  %v4319 = vadd.f32 %v4248, %v4296
  %v4320 = vadd.f32 %v4249, %v4296
  %v4321 = vadd.f32 %v4250, %v4296
  %v4322 = vadd.f32 %v4251, %v4296
  %v4323 = vadd.f32 %v4252, %v4296
  %v4324 = vadd.f32 %v4253, %v4296
  %v4325 = vadd.f32 %v4254, %v4296
  %v4326 = vadd.f32 %v4255, %v4296
  %v4327 = vadd.f32 %v4256, %v4296
  %v4328 = vadd.f32 %v4257, %v4296
  %v4329 = vadd.f32 %v4258, %v4296
  %v4330 = vadd.f32 %v4259, %v4296
  %v4331 = vadd.f32 %v4260, %v4296
  %v4332 = vadd.f32 %v4261, %v4296
  %v4333 = vadd.f32 %v4262, %v4296
  %v4334 = vadd.f32 %v4263, %v4296
  %v4335 = vadd.f32 %v4264, %v4296
  %v4336 = vadd.f32 %v4265, %v4296
  %v4337 = vadd.f32 %v4266, %v4296
  %v4338 = vadd.f32 %v4267, %v4296
  %v4339 = vadd.f32 %v4268, %v4296
  %v4340 = vadd.f32 %v4269, %v4296
  %v4341 = vadd.f32 %v4270, %v4296
  %v4342 = vadd.f32 %v4271, %v4296
  %v4343 = vadd.f32 %v4272, %v4296
  %v4344 = vadd.f32 %v4273, %v4296
  %v4345 = vadd.f32 %v4274, %v4296
  %v4346 = vadd.f32 %v4275, %v4296
  %v4347 = vadd.f32 %v4276, %v4296
  %v4348 = vadd.f32 %v4277, %v4296
  %v4349 = vadd.f32 %v4278, %v4296
  %v4350 = vadd.f32 %v4279, %v4296
  %v4351 = vadd.f32 %v4280, %v4296
  %v4352 = vadd.f32 %v4281, %v4296
  %v4353 = vadd.f32 %v4282, %v4296
  %v4354 = vadd.f32 %v4283, %v4296
  %v4355 = vadd.f32 %v4284, %v4296
  %v4356 = vadd.f32 %v4285, %v4296
  %v4357 = vadd.f32 %v4286, %v4296
  %v4358 = vadd.f32 %v4287, %v4296
  %v4359 = vadd.f32 %v4288, %v4296
  %v4360 = vadd.f32 %v4289, %v4296
  %v4361 = vadd.f32 %v4290, %v4296
  %v4362 = vmax.f32 %v4298, 0.0
  %v4363 = vmax.f32 %v4299, 0.0
  %v4364 = vmax.f32 %v4300, 0.0
  %v4365 = vmax.f32 %v4301, 0.0
  %v4366 = vmax.f32 %v4302, 0.0
  %v4367 = vmax.f32 %v4303, 0.0
  %v4368 = vmax.f32 %v4304, 0.0
  %v4369 = vmax.f32 %v4305, 0.0
  %v4370 = vmax.f32 %v4306, 0.0
  %v4371 = vmax.f32 %v4307, 0.0
  %v4372 = vmax.f32 %v4308, 0.0
  %v4373 = vmax.f32 %v4309, 0.0
  %v4374 = vmax.f32 %v4310, 0.0
  %v4375 = vmax.f32 %v4311, 0.0
  %v4376 = vmax.f32 %v4312, 0.0
  %v4377 = vmax.f32 %v4313, 0.0
  %v4378 = vmax.f32 %v4314, 0.0
  %v4379 = vmax.f32 %v4315, 0.0
  %v4380 = vmax.f32 %v4316, 0.0
  %v4381 = vmax.f32 %v4317, 0.0
  %v4382 = vmax.f32 %v4318, 0.0
  %v4383 = vmax.f32 %v4319, 0.0
  %v4384 = vmax.f32 %v4320, 0.0
  %v4385 = vmax.f32 %v4321, 0.0
  %v4386 = vmax.f32 %v4322, 0.0
  %v4387 = vmax.f32 %v4323, 0.0
  %v4388 = vmax.f32 %v4324, 0.0
  %v4389 = vmax.f32 %v4325, 0.0
  %v4390 = vmax.f32 %v4326, 0.0
  %v4391 = vmax.f32 %v4327, 0.0
  %v4392 = vmax.f32 %v4328, 0.0
  %v4393 = vmax.f32 %v4329, 0.0
  %v4394 = vmax.f32 %v4330, 0.0
  %v4395 = vmax.f32 %v4331, 0.0
  %v4396 = vmax.f32 %v4332, 0.0
  %v4397 = vmax.f32 %v4333, 0.0
  %v4398 = vmax.f32 %v4334, 0.0
  %v4399 = vmax.f32 %v4335, 0.0
  %v4400 = vmax.f32 %v4336, 0.0
  %v4401 = vmax.f32 %v4337, 0.0
  %v4402 = vmax.f32 %v4338, 0.0
  %v4403 = vmax.f32 %v4339, 0.0
  %v4404 = vmax.f32 %v4340, 0.0
  %v4405 = vmax.f32 %v4341, 0.0
  %v4406 = vmax.f32 %v4342, 0.0
  %v4407 = vmax.f32 %v4343, 0.0
  %v4408 = vmax.f32 %v4344, 0.0
  %v4409 = vmax.f32 %v4345, 0.0
  %v4410 = vmax.f32 %v4346, 0.0
  %v4411 = vmax.f32 %v4347, 0.0
  %v4412 = vmax.f32 %v4348, 0.0
  %v4413 = vmax.f32 %v4349, 0.0
  %v4414 = vmax.f32 %v4350, 0.0
  %v4415 = vmax.f32 %v4351, 0.0
  %v4416 = vmax.f32 %v4352, 0.0
  %v4417 = vmax.f32 %v4353, 0.0
  %v4418 = vmax.f32 %v4354, 0.0
  %v4419 = vmax.f32 %v4355, 0.0
  %v4420 = vmax.f32 %v4356, 0.0
  %v4421 = vmax.f32 %v4357, 0.0
  %v4422 = vmax.f32 %v4358, 0.0
  %v4423 = vmax.f32 %v4359, 0.0
  %v4424 = vmax.f32 %v4360, 0.0
  %v4425 = vmax.f32 %v4361, 0.0
  %s4426 = scalar_lea.vmem [#allocation3], 24
  %vm4427 = vcmask 261120
  %4428 = vst.msk [vmem:[%s4426 + $0x1] sm:$0xff] %vm4427, %v4362
  %4429 = vst.msk [vmem:[%s4426 + $0x9] sm:$0xff] %vm4427, %v4363
  %4430 = vst.msk [vmem:[%s4426 + $0x19] sm:$0xff] %vm4427, %v4364
  %4431 = vst.msk [vmem:[%s4426 + $0x21] sm:$0xff] %vm4427, %v4365
  %4432 = vst.msk [vmem:[%s4426 + $0x31] sm:$0xff] %vm4427, %v4366
  %4433 = vst.msk [vmem:[%s4426 + $0x39] sm:$0xff] %vm4427, %v4367
  %4434 = vst.msk [vmem:[%s4426 + $0x49] sm:$0xff] %vm4427, %v4368
  %4435 = vst.msk [vmem:[%s4426 + $0x51] sm:$0xff] %vm4427, %v4369
  %4436 = vst.msk [vmem:[%s4426 + $0x61] sm:$0xff] %vm4427, %v4370
  %4437 = vst.msk [vmem:[%s4426 + $0x69] sm:$0xff] %vm4427, %v4371
  %4438 = vst.msk [vmem:[%s4426 + $0x79] sm:$0xff] %vm4427, %v4372
  %4439 = vst.msk [vmem:[%s4426 + $0x81] sm:$0xff] %vm4427, %v4373
  %4440 = vst.msk [vmem:[%s4426 + $0x91] sm:$0xff] %vm4427, %v4374
  %4441 = vst.msk [vmem:[%s4426 + $0x99] sm:$0xff] %vm4427, %v4375
  %4442 = vst.msk [vmem:[%s4426 + $0xa9] sm:$0xff] %vm4427, %v4376
  %4443 = vst.msk [vmem:[%s4426 + $0xb1] sm:$0xff] %vm4427, %v4377
  %4444 = vst.msk [vmem:[%s4426 + $0xc1] sm:$0xff] %vm4427, %v4378
  %4445 = vst.msk [vmem:[%s4426 + $0xc9] sm:$0xff] %vm4427, %v4379
  %4446 = vst.msk [vmem:[%s4426 + $0xd9] sm:$0xff] %vm4427, %v4380
  %4447 = vst.msk [vmem:[%s4426 + $0xe1] sm:$0xff] %vm4427, %v4381
  %4448 = vst.msk [vmem:[%s4426 + $0xf1] sm:$0xff] %vm4427, %v4382
  %4449 = vst.msk [vmem:[%s4426 + $0xf9] sm:$0xff] %vm4427, %v4383
  %4450 = vst.msk [vmem:[%s4426 + $0x109] sm:$0xff] %vm4427, %v4384
  %4451 = vst.msk [vmem:[%s4426 + $0x111] sm:$0xff] %vm4427, %v4385
  %4452 = vst.msk [vmem:[%s4426 + $0x121] sm:$0xff] %vm4427, %v4386
  %4453 = vst.msk [vmem:[%s4426 + $0x129] sm:$0xff] %vm4427, %v4387
  %4454 = vst.msk [vmem:[%s4426 + $0x139] sm:$0xff] %vm4427, %v4388
  %4455 = vst.msk [vmem:[%s4426 + $0x141] sm:$0xff] %vm4427, %v4389
  %4456 = vst.msk [vmem:[%s4426 + $0x151] sm:$0xff] %vm4427, %v4390
  %4457 = vst.msk [vmem:[%s4426 + $0x159] sm:$0xff] %vm4427, %v4391
  %4458 = vst.msk [vmem:[%s4426 + $0x169] sm:$0xff] %vm4427, %v4392
  %4459 = vst.msk [vmem:[%s4426 + $0x171] sm:$0xff] %vm4427, %v4393
  %4460 = vst.msk [vmem:[%s4426 + $0x1b1] sm:$0xff] %vm4427, %v4394
  %4461 = vst.msk [vmem:[%s4426 + $0x1b9] sm:$0xff] %vm4427, %v4395
  %4462 = vst.msk [vmem:[%s4426 + $0x1c9] sm:$0xff] %vm4427, %v4396
  %4463 = vst.msk [vmem:[%s4426 + $0x1d1] sm:$0xff] %vm4427, %v4397
  %4464 = vst.msk [vmem:[%s4426 + $0x1e1] sm:$0xff] %vm4427, %v4398
  %4465 = vst.msk [vmem:[%s4426 + $0x1e9] sm:$0xff] %vm4427, %v4399
  %4466 = vst.msk [vmem:[%s4426 + $0x1f9] sm:$0xff] %vm4427, %v4400
  %4467 = vst.msk [vmem:[%s4426 + $0x201] sm:$0xff] %vm4427, %v4401
  %4468 = vst.msk [vmem:[%s4426 + $0x211] sm:$0xff] %vm4427, %v4402
  %4469 = vst.msk [vmem:[%s4426 + $0x219] sm:$0xff] %vm4427, %v4403
  %4470 = vst.msk [vmem:[%s4426 + $0x229] sm:$0xff] %vm4427, %v4404
  %4471 = vst.msk [vmem:[%s4426 + $0x231] sm:$0xff] %vm4427, %v4405
  %4472 = vst.msk [vmem:[%s4426 + $0x241] sm:$0xff] %vm4427, %v4406
  %4473 = vst.msk [vmem:[%s4426 + $0x249] sm:$0xff] %vm4427, %v4407
  %4474 = vst.msk [vmem:[%s4426 + $0x259] sm:$0xff] %vm4427, %v4408
  %4475 = vst.msk [vmem:[%s4426 + $0x261] sm:$0xff] %vm4427, %v4409
  %4476 = vst.msk [vmem:[%s4426 + $0x271] sm:$0xff] %vm4427, %v4410
  %4477 = vst.msk [vmem:[%s4426 + $0x279] sm:$0xff] %vm4427, %v4411
  %4478 = vst.msk [vmem:[%s4426 + $0x289] sm:$0xff] %vm4427, %v4412
  %4479 = vst.msk [vmem:[%s4426 + $0x291] sm:$0xff] %vm4427, %v4413
  %4480 = vst.msk [vmem:[%s4426 + $0x2a1] sm:$0xff] %vm4427, %v4414
  %4481 = vst.msk [vmem:[%s4426 + $0x2a9] sm:$0xff] %vm4427, %v4415
  %4482 = vst.msk [vmem:[%s4426 + $0x2b9] sm:$0xff] %vm4427, %v4416
  %4483 = vst.msk [vmem:[%s4426 + $0x2c1] sm:$0xff] %vm4427, %v4417
  %4484 = vst.msk [vmem:[%s4426 + $0x2d1] sm:$0xff] %vm4427, %v4418
  %4485 = vst.msk [vmem:[%s4426 + $0x2d9] sm:$0xff] %vm4427, %v4419
  %4486 = vst.msk [vmem:[%s4426 + $0x2e9] sm:$0xff] %vm4427, %v4420
  %4487 = vst.msk [vmem:[%s4426 + $0x2f1] sm:$0xff] %vm4427, %v4421
  %4488 = vst.msk [vmem:[%s4426 + $0x301] sm:$0xff] %vm4427, %v4422
  %4489 = vst.msk [vmem:[%s4426 + $0x309] sm:$0xff] %vm4427, %v4423
  %4490 = vst.msk [vmem:[%s4426 + $0x319] sm:$0xff] %vm4427, %v4424
  %4491 = vst.msk [vmem:[%s4426 + $0x321] sm:$0xff] %vm4427, %v4425
  %vm4492 = vcmask 254977
  %4493 = vst.msk [vmem:[%s4426 - $0x1] sm:$0x2] %vm4492, %v4362
  %4494 = vst.msk [vmem:[%s4426 + $0x17] sm:$0x2] %vm4492, %v4364
  %4495 = vst.msk [vmem:[%s4426 + $0x2f] sm:$0x2] %vm4492, %v4366
  %4496 = vst.msk [vmem:[%s4426 + $0x47] sm:$0x2] %vm4492, %v4368
  %4497 = vst.msk [vmem:[%s4426 + $0x5f] sm:$0x2] %vm4492, %v4370
  %4498 = vst.msk [vmem:[%s4426 + $0x77] sm:$0x2] %vm4492, %v4372
  %4499 = vst.msk [vmem:[%s4426 + $0x8f] sm:$0x2] %vm4492, %v4374
  %4500 = vst.msk [vmem:[%s4426 + $0xa7] sm:$0x2] %vm4492, %v4376
  %4501 = vst.msk [vmem:[%s4426 + $0xbf] sm:$0x2] %vm4492, %v4378
  %4502 = vst.msk [vmem:[%s4426 + $0xd7] sm:$0x2] %vm4492, %v4380
  %4503 = vst.msk [vmem:[%s4426 + $0xef] sm:$0x2] %vm4492, %v4382
  %4504 = vst.msk [vmem:[%s4426 + $0x107] sm:$0x2] %vm4492, %v4384
  %4505 = vst.msk [vmem:[%s4426 + $0x11f] sm:$0x2] %vm4492, %v4386
  %4506 = vst.msk [vmem:[%s4426 + $0x137] sm:$0x2] %vm4492, %v4388
  %4507 = vst.msk [vmem:[%s4426 + $0x14f] sm:$0x2] %vm4492, %v4390
  %4508 = vst.msk [vmem:[%s4426 + $0x167] sm:$0x2] %vm4492, %v4392
  %4509 = vst.msk [vmem:[%s4426 + $0x1af] sm:$0x2] %vm4492, %v4394
  %4510 = vst.msk [vmem:[%s4426 + $0x1c7] sm:$0x2] %vm4492, %v4396
  %4511 = vst.msk [vmem:[%s4426 + $0x1df] sm:$0x2] %vm4492, %v4398
  %4512 = vst.msk [vmem:[%s4426 + $0x1f7] sm:$0x2] %vm4492, %v4400
  %4513 = vst.msk [vmem:[%s4426 + $0x20f] sm:$0x2] %vm4492, %v4402
  %4514 = vst.msk [vmem:[%s4426 + $0x227] sm:$0x2] %vm4492, %v4404
  %4515 = vst.msk [vmem:[%s4426 + $0x23f] sm:$0x2] %vm4492, %v4406
  %4516 = vst.msk [vmem:[%s4426 + $0x257] sm:$0x2] %vm4492, %v4408
  %4517 = vst.msk [vmem:[%s4426 + $0x26f] sm:$0x2] %vm4492, %v4410
  %4518 = vst.msk [vmem:[%s4426 + $0x287] sm:$0x2] %vm4492, %v4412
  %4519 = vst.msk [vmem:[%s4426 + $0x29f] sm:$0x2] %vm4492, %v4414
  %4520 = vst.msk [vmem:[%s4426 + $0x2b7] sm:$0x2] %vm4492, %v4416
  %4521 = vst.msk [vmem:[%s4426 + $0x2cf] sm:$0x2] %vm4492, %v4418
  %4522 = vst.msk [vmem:[%s4426 + $0x2e7] sm:$0x2] %vm4492, %v4420
  %4523 = vst.msk [vmem:[%s4426 + $0x2ff] sm:$0x2] %vm4492, %v4422
  %4524 = vst.msk [vmem:[%s4426 + $0x317] sm:$0x2] %vm4492, %v4424
  %vm4525 = vcmask 260102
  %4526 = vst.msk [vmem:[%s4426 + $0xb] sm:$0x40] %vm4525, %v4363
  %4527 = vst.msk [vmem:[%s4426 + $0x23] sm:$0x40] %vm4525, %v4365
  %4528 = vst.msk [vmem:[%s4426 + $0x3b] sm:$0x40] %vm4525, %v4367
  %4529 = vst.msk [vmem:[%s4426 + $0x53] sm:$0x40] %vm4525, %v4369
  %4530 = vst.msk [vmem:[%s4426 + $0x6b] sm:$0x40] %vm4525, %v4371
  %4531 = vst.msk [vmem:[%s4426 + $0x83] sm:$0x40] %vm4525, %v4373
  %4532 = vst.msk [vmem:[%s4426 + $0x9b] sm:$0x40] %vm4525, %v4375
  %4533 = vst.msk [vmem:[%s4426 + $0xb3] sm:$0x40] %vm4525, %v4377
  %4534 = vst.msk [vmem:[%s4426 + $0xcb] sm:$0x40] %vm4525, %v4379
  %4535 = vst.msk [vmem:[%s4426 + $0xe3] sm:$0x40] %vm4525, %v4381
  %4536 = vst.msk [vmem:[%s4426 + $0xfb] sm:$0x40] %vm4525, %v4383
  %4537 = vst.msk [vmem:[%s4426 + $0x113] sm:$0x40] %vm4525, %v4385
  %4538 = vst.msk [vmem:[%s4426 + $0x12b] sm:$0x40] %vm4525, %v4387
  %4539 = vst.msk [vmem:[%s4426 + $0x143] sm:$0x40] %vm4525, %v4389
  %4540 = vst.msk [vmem:[%s4426 + $0x15b] sm:$0x40] %vm4525, %v4391
  %4541 = vst.msk [vmem:[%s4426 + $0x173] sm:$0x40] %vm4525, %v4393
  %4542 = vst.msk [vmem:[%s4426 + $0x1bb] sm:$0x40] %vm4525, %v4395
  %4543 = vst.msk [vmem:[%s4426 + $0x1d3] sm:$0x40] %vm4525, %v4397
  %4544 = vst.msk [vmem:[%s4426 + $0x1eb] sm:$0x40] %vm4525, %v4399
  %4545 = vst.msk [vmem:[%s4426 + $0x203] sm:$0x40] %vm4525, %v4401
  %4546 = vst.msk [vmem:[%s4426 + $0x21b] sm:$0x40] %vm4525, %v4403
  %4547 = vst.msk [vmem:[%s4426 + $0x233] sm:$0x40] %vm4525, %v4405
  %4548 = vst.msk [vmem:[%s4426 + $0x24b] sm:$0x40] %vm4525, %v4407
  %4549 = vst.msk [vmem:[%s4426 + $0x263] sm:$0x40] %vm4525, %v4409
  %4550 = vst.msk [vmem:[%s4426 + $0x27b] sm:$0x40] %vm4525, %v4411
  %4551 = vst.msk [vmem:[%s4426 + $0x293] sm:$0x40] %vm4525, %v4413
  %4552 = vst.msk [vmem:[%s4426 + $0x2ab] sm:$0x40] %vm4525, %v4415
  %4553 = vst.msk [vmem:[%s4426 + $0x2c3] sm:$0x40] %vm4525, %v4417
  %4554 = vst.msk [vmem:[%s4426 + $0x2db] sm:$0x40] %vm4525, %v4419
  %4555 = vst.msk [vmem:[%s4426 + $0x2f3] sm:$0x40] %vm4525, %v4421
  %4556 = vst.msk [vmem:[%s4426 + $0x30b] sm:$0x40] %vm4525, %v4423
  %4557 = vst.msk [vmem:[%s4426 + $0x323] sm:$0x40] %vm4525, %v4425
  %s4558 = scalar_lea.vmem [#allocation3], 48
  %v4559 = vld [vmem:[%s4558] sm:$0xff]
  %v4560 = vld [vmem:[%s4558 + $0x8] sm:$0xff]
  %v4561 = vld [vmem:[%s4558 + $0x10] sm:$0x3]
  %v4562 = vld [vmem:[%s4558 + $0x1b0] sm:$0xff]
  %v4563 = vld [vmem:[%s4558 + $0x1b8] sm:$0xff]
  %v4564 = vld [vmem:[%s4558 + $0x1c0] sm:$0x3]
  %4565 = vst.msk [vmem:[#allocation3] sm:$0xff] %vm4427, %v4559
  %4566 = vst.msk [vmem:[#allocation3 + $0x8] sm:$0xff] %vm4427, %v4560
  %vm4567 = vcmask 254976
  %4568 = vst.msk [vmem:[#allocation3 + $0x10] sm:$0x3] %vm4567, %v4561
  %4569 = vst.msk [vmem:[#allocation3 + $0x1b0] sm:$0xff] %vm4427, %v4562
  %4570 = vst.msk [vmem:[#allocation3 + $0x1b8] sm:$0xff] %vm4427, %v4563
  %4571 = vst.msk [vmem:[#allocation3 + $0x1c0] sm:$0x3] %vm4567, %v4564
  %s4572 = scalar_lea.vmem [#allocation3], 360
  %v4573 = vld [vmem:[%s4572] sm:$0xff]
  %v4574 = vld [vmem:[%s4572 + $0x8] sm:$0xff]
  %v4575 = vld [vmem:[%s4572 + $0x10] sm:$0x3]
  %v4576 = vld [vmem:[%s4572 + $0x1b0] sm:$0xff]
  %v4577 = vld [vmem:[%s4572 + $0x1b8] sm:$0xff]
  %v4578 = vld [vmem:[%s4572 + $0x1c0] sm:$0x3]
  %s4579 = scalar_lea.vmem [#allocation3], 408
  %4580 = vst.msk [vmem:[%s4579] sm:$0xff] %vm4427, %v4573
  %4581 = vst.msk [vmem:[%s4579 + $0x8] sm:$0xff] %vm4427, %v4574
  %4582 = vst.msk [vmem:[%s4579 + $0x10] sm:$0x3] %vm4567, %v4575
  %4583 = vst.msk [vmem:[%s4579 + $0x1b0] sm:$0xff] %vm4427, %v4576
  %4584 = vst.msk [vmem:[%s4579 + $0x1b8] sm:$0xff] %vm4427, %v4577
  %4585 = vst.msk [vmem:[%s4579 + $0x1c0] sm:$0x3] %vm4567, %v4578
  %v4586 = vld [vmem:[#allocation3] sm:$0xff]
  %v4587 = vld [vmem:[#allocation3 + $0x8] sm:$0xff]
  %v4588 = vld [vmem:[#allocation3 + $0x18] sm:$0xff]
  %v4589 = vld [vmem:[#allocation3 + $0x20] sm:$0xff]
  %v4590 = vld [vmem:[#allocation3 + $0x30] sm:$0xff]
  %v4591 = vld [vmem:[#allocation3 + $0x38] sm:$0xff]
  %v4592 = vld [vmem:[#allocation3 + $0x48] sm:$0xff]
  %v4593 = vld [vmem:[#allocation3 + $0x50] sm:$0xff]
  %v4594 = vld [vmem:[#allocation3 + $0x60] sm:$0xff]
  %v4595 = vld [vmem:[#allocation3 + $0x68] sm:$0xff]
  %v4596 = vld [vmem:[#allocation3 + $0x78] sm:$0xff]
  %v4597 = vld [vmem:[#allocation3 + $0x80] sm:$0xff]
  %v4598 = vld [vmem:[#allocation3 + $0x90] sm:$0xff]
  %v4599 = vld [vmem:[#allocation3 + $0x98] sm:$0xff]
  %v4600 = vld [vmem:[#allocation3 + $0xa8] sm:$0xff]
  %v4601 = vld [vmem:[#allocation3 + $0xb0] sm:$0xff]
  %v4602 = vld [vmem:[#allocation3 + $0xc0] sm:$0xff]
  %v4603 = vld [vmem:[#allocation3 + $0xc8] sm:$0xff]
  %v4604 = vld [vmem:[#allocation3 + $0xd8] sm:$0xff]
  %v4605 = vld [vmem:[#allocation3 + $0xe0] sm:$0xff]
  %v4606 = vld [vmem:[#allocation3 + $0xf0] sm:$0xff]
  %v4607 = vld [vmem:[#allocation3 + $0xf8] sm:$0xff]
  %v4608 = vld [vmem:[#allocation3 + $0x108] sm:$0xff]
  %v4609 = vld [vmem:[#allocation3 + $0x110] sm:$0xff]
  %v4610 = vld [vmem:[#allocation3 + $0x120] sm:$0xff]
  %v4611 = vld [vmem:[#allocation3 + $0x128] sm:$0xff]
  %v4612 = vld [vmem:[#allocation3 + $0x138] sm:$0xff]
  %v4613 = vld [vmem:[#allocation3 + $0x140] sm:$0xff]
  %v4614 = vld [vmem:[#allocation3 + $0x150] sm:$0xff]
  %v4615 = vld [vmem:[#allocation3 + $0x158] sm:$0xff]
  %v4616 = vld [vmem:[#allocation3 + $0x168] sm:$0xff]
  %v4617 = vld [vmem:[#allocation3 + $0x170] sm:$0xff]
  %v4618 = vld [vmem:[#allocation3 + $0x1b0] sm:$0xff]
  %v4619 = vld [vmem:[#allocation3 + $0x1b8] sm:$0xff]
  %v4620 = vld [vmem:[#allocation3 + $0x1c8] sm:$0xff]
  %v4621 = vld [vmem:[#allocation3 + $0x1d0] sm:$0xff]
  %v4622 = vld [vmem:[#allocation3 + $0x1e0] sm:$0xff]
  %v4623 = vld [vmem:[#allocation3 + $0x1e8] sm:$0xff]
  %v4624 = vld [vmem:[#allocation3 + $0x1f8] sm:$0xff]
  %v4625 = vld [vmem:[#allocation3 + $0x200] sm:$0xff]
  %v4626 = vld [vmem:[#allocation3 + $0x210] sm:$0xff]
  %v4627 = vld [vmem:[#allocation3 + $0x218] sm:$0xff]
  %v4628 = vld [vmem:[#allocation3 + $0x228] sm:$0xff]
  %v4629 = vld [vmem:[#allocation3 + $0x230] sm:$0xff]
  %v4630 = vld [vmem:[#allocation3 + $0x240] sm:$0xff]
  %v4631 = vld [vmem:[#allocation3 + $0x248] sm:$0xff]
  %v4632 = vld [vmem:[#allocation3 + $0x258] sm:$0xff]
  %v4633 = vld [vmem:[#allocation3 + $0x260] sm:$0xff]
  %v4634 = vld [vmem:[#allocation3 + $0x270] sm:$0xff]
  %v4635 = vld [vmem:[#allocation3 + $0x278] sm:$0xff]
  %v4636 = vld [vmem:[#allocation3 + $0x288] sm:$0xff]
  %v4637 = vld [vmem:[#allocation3 + $0x290] sm:$0xff]
  %v4638 = vld [vmem:[#allocation3 + $0x2a0] sm:$0xff]
  %v4639 = vld [vmem:[#allocation3 + $0x2a8] sm:$0xff]
  %v4640 = vld [vmem:[#allocation3 + $0x2b8] sm:$0xff]
  %v4641 = vld [vmem:[#allocation3 + $0x2c0] sm:$0xff]
  %v4642 = vld [vmem:[#allocation3 + $0x2d0] sm:$0xff]
  %v4643 = vld [vmem:[#allocation3 + $0x2d8] sm:$0xff]
  %v4644 = vld [vmem:[#allocation3 + $0x2e8] sm:$0xff]
  %v4645 = vld [vmem:[#allocation3 + $0x2f0] sm:$0xff]
  %v4646 = vld [vmem:[#allocation3 + $0x300] sm:$0xff]
  %v4647 = vld [vmem:[#allocation3 + $0x308] sm:$0xff]
  %v4648 = vld [vmem:[#allocation3 + $0x318] sm:$0xff]
  %v4649 = vld [vmem:[#allocation3 + $0x320] sm:$0xff]
  %v4650 = vld [vmem:[#allocation3 + $0x1] sm:$0xff]
  %v4651 = vld [vmem:[#allocation3 + $0x9] sm:$0xff]
  %v4652 = vld [vmem:[#allocation3 + $0x19] sm:$0xff]
  %v4653 = vld [vmem:[#allocation3 + $0x21] sm:$0xff]
  %v4654 = vld [vmem:[#allocation3 + $0x31] sm:$0xff]
  %v4655 = vld [vmem:[#allocation3 + $0x39] sm:$0xff]
  %v4656 = vld [vmem:[#allocation3 + $0x49] sm:$0xff]
  %v4657 = vld [vmem:[#allocation3 + $0x51] sm:$0xff]
  %v4658 = vld [vmem:[#allocation3 + $0x61] sm:$0xff]
  %v4659 = vld [vmem:[#allocation3 + $0x69] sm:$0xff]
  %v4660 = vld [vmem:[#allocation3 + $0x79] sm:$0xff]
  %v4661 = vld [vmem:[#allocation3 + $0x81] sm:$0xff]
  %v4662 = vld [vmem:[#allocation3 + $0x91] sm:$0xff]
  %v4663 = vld [vmem:[#allocation3 + $0x99] sm:$0xff]
  %v4664 = vld [vmem:[#allocation3 + $0xa9] sm:$0xff]
  %v4665 = vld [vmem:[#allocation3 + $0xb1] sm:$0xff]
  %v4666 = vld [vmem:[#allocation3 + $0xc1] sm:$0xff]
  %v4667 = vld [vmem:[#allocation3 + $0xc9] sm:$0xff]
  %v4668 = vld [vmem:[#allocation3 + $0xd9] sm:$0xff]
  %v4669 = vld [vmem:[#allocation3 + $0xe1] sm:$0xff]
  %v4670 = vld [vmem:[#allocation3 + $0xf1] sm:$0xff]
  %v4671 = vld [vmem:[#allocation3 + $0xf9] sm:$0xff]
  %v4672 = vld [vmem:[#allocation3 + $0x109] sm:$0xff]
  %v4673 = vld [vmem:[#allocation3 + $0x111] sm:$0xff]
  %v4674 = vld [vmem:[#allocation3 + $0x121] sm:$0xff]
  %v4675 = vld [vmem:[#allocation3 + $0x129] sm:$0xff]
  %v4676 = vld [vmem:[#allocation3 + $0x139] sm:$0xff]
  %v4677 = vld [vmem:[#allocation3 + $0x141] sm:$0xff]
  %v4678 = vld [vmem:[#allocation3 + $0x151] sm:$0xff]
  %v4679 = vld [vmem:[#allocation3 + $0x159] sm:$0xff]
  %v4680 = vld [vmem:[#allocation3 + $0x169] sm:$0xff]
  %v4681 = vld [vmem:[#allocation3 + $0x171] sm:$0xff]
  %v4682 = vld [vmem:[#allocation3 + $0x1b1] sm:$0xff]
  %v4683 = vld [vmem:[#allocation3 + $0x1b9] sm:$0xff]
  %v4684 = vld [vmem:[#allocation3 + $0x1c9] sm:$0xff]
  %v4685 = vld [vmem:[#allocation3 + $0x1d1] sm:$0xff]
  %v4686 = vld [vmem:[#allocation3 + $0x1e1] sm:$0xff]
  %v4687 = vld [vmem:[#allocation3 + $0x1e9] sm:$0xff]
  %v4688 = vld [vmem:[#allocation3 + $0x1f9] sm:$0xff]
  %v4689 = vld [vmem:[#allocation3 + $0x201] sm:$0xff]
  %v4690 = vld [vmem:[#allocation3 + $0x211] sm:$0xff]
  %v4691 = vld [vmem:[#allocation3 + $0x219] sm:$0xff]
  %v4692 = vld [vmem:[#allocation3 + $0x229] sm:$0xff]
  %v4693 = vld [vmem:[#allocation3 + $0x231] sm:$0xff]
  %v4694 = vld [vmem:[#allocation3 + $0x241] sm:$0xff]
  %v4695 = vld [vmem:[#allocation3 + $0x249] sm:$0xff]
  %v4696 = vld [vmem:[#allocation3 + $0x259] sm:$0xff]
  %v4697 = vld [vmem:[#allocation3 + $0x261] sm:$0xff]
  %v4698 = vld [vmem:[#allocation3 + $0x271] sm:$0xff]
  %v4699 = vld [vmem:[#allocation3 + $0x279] sm:$0xff]
  %v4700 = vld [vmem:[#allocation3 + $0x289] sm:$0xff]
  %v4701 = vld [vmem:[#allocation3 + $0x291] sm:$0xff]
  %v4702 = vld [vmem:[#allocation3 + $0x2a1] sm:$0xff]
  %v4703 = vld [vmem:[#allocation3 + $0x2a9] sm:$0xff]
  %v4704 = vld [vmem:[#allocation3 + $0x2b9] sm:$0xff]
  %v4705 = vld [vmem:[#allocation3 + $0x2c1] sm:$0xff]
  %v4706 = vld [vmem:[#allocation3 + $0x2d1] sm:$0xff]
  %v4707 = vld [vmem:[#allocation3 + $0x2d9] sm:$0xff]
  %v4708 = vld [vmem:[#allocation3 + $0x2e9] sm:$0xff]
  %v4709 = vld [vmem:[#allocation3 + $0x2f1] sm:$0xff]
  %v4710 = vld [vmem:[#allocation3 + $0x301] sm:$0xff]
  %v4711 = vld [vmem:[#allocation3 + $0x309] sm:$0xff]
  %v4712 = vld [vmem:[#allocation3 + $0x319] sm:$0xff]
  %v4713 = vld [vmem:[#allocation3 + $0x321] sm:$0xff]
  %v4714 = vld [vmem:[#allocation3 + $0x2] sm:$0xff]
  %v4715 = vld [vmem:[#allocation3 + $0xa] sm:$0xff]
  %v4716 = vld [vmem:[#allocation3 + $0x1a] sm:$0xff]
  %v4717 = vld [vmem:[#allocation3 + $0x22] sm:$0xff]
  %v4718 = vld [vmem:[#allocation3 + $0x32] sm:$0xff]
  %v4719 = vld [vmem:[#allocation3 + $0x3a] sm:$0xff]
  %v4720 = vld [vmem:[#allocation3 + $0x4a] sm:$0xff]
  %v4721 = vld [vmem:[#allocation3 + $0x52] sm:$0xff]
  %v4722 = vld [vmem:[#allocation3 + $0x62] sm:$0xff]
  %v4723 = vld [vmem:[#allocation3 + $0x6a] sm:$0xff]
  %v4724 = vld [vmem:[#allocation3 + $0x7a] sm:$0xff]
  %v4725 = vld [vmem:[#allocation3 + $0x82] sm:$0xff]
  %v4726 = vld [vmem:[#allocation3 + $0x92] sm:$0xff]
  %v4727 = vld [vmem:[#allocation3 + $0x9a] sm:$0xff]
  %v4728 = vld [vmem:[#allocation3 + $0xaa] sm:$0xff]
  %v4729 = vld [vmem:[#allocation3 + $0xb2] sm:$0xff]
  %v4730 = vld [vmem:[#allocation3 + $0xc2] sm:$0xff]
  %v4731 = vld [vmem:[#allocation3 + $0xca] sm:$0xff]
  %v4732 = vld [vmem:[#allocation3 + $0xda] sm:$0xff]
  %v4733 = vld [vmem:[#allocation3 + $0xe2] sm:$0xff]
  %v4734 = vld [vmem:[#allocation3 + $0xf2] sm:$0xff]
  %v4735 = vld [vmem:[#allocation3 + $0xfa] sm:$0xff]
  %v4736 = vld [vmem:[#allocation3 + $0x10a] sm:$0xff]
  %v4737 = vld [vmem:[#allocation3 + $0x112] sm:$0xff]
  %v4738 = vld [vmem:[#allocation3 + $0x122] sm:$0xff]
  %v4739 = vld [vmem:[#allocation3 + $0x12a] sm:$0xff]
  %v4740 = vld [vmem:[#allocation3 + $0x13a] sm:$0xff]
  %v4741 = vld [vmem:[#allocation3 + $0x142] sm:$0xff]
  %v4742 = vld [vmem:[#allocation3 + $0x152] sm:$0xff]
  %v4743 = vld [vmem:[#allocation3 + $0x15a] sm:$0xff]
  %v4744 = vld [vmem:[#allocation3 + $0x16a] sm:$0xff]
  %v4745 = vld [vmem:[#allocation3 + $0x172] sm:$0xff]
  %v4746 = vld [vmem:[#allocation3 + $0x1b2] sm:$0xff]
  %v4747 = vld [vmem:[#allocation3 + $0x1ba] sm:$0xff]
  %v4748 = vld [vmem:[#allocation3 + $0x1ca] sm:$0xff]
  %v4749 = vld [vmem:[#allocation3 + $0x1d2] sm:$0xff]
  %v4750 = vld [vmem:[#allocation3 + $0x1e2] sm:$0xff]
  %v4751 = vld [vmem:[#allocation3 + $0x1ea] sm:$0xff]
  %v4752 = vld [vmem:[#allocation3 + $0x1fa] sm:$0xff]
  %v4753 = vld [vmem:[#allocation3 + $0x202] sm:$0xff]
  %v4754 = vld [vmem:[#allocation3 + $0x212] sm:$0xff]
  %v4755 = vld [vmem:[#allocation3 + $0x21a] sm:$0xff]
  %v4756 = vld [vmem:[#allocation3 + $0x22a] sm:$0xff]
  %v4757 = vld [vmem:[#allocation3 + $0x232] sm:$0xff]
  %v4758 = vld [vmem:[#allocation3 + $0x242] sm:$0xff]
  %v4759 = vld [vmem:[#allocation3 + $0x24a] sm:$0xff]
  %v4760 = vld [vmem:[#allocation3 + $0x25a] sm:$0xff]
  %v4761 = vld [vmem:[#allocation3 + $0x262] sm:$0xff]
  %v4762 = vld [vmem:[#allocation3 + $0x272] sm:$0xff]
  %v4763 = vld [vmem:[#allocation3 + $0x27a] sm:$0xff]
  %v4764 = vld [vmem:[#allocation3 + $0x28a] sm:$0xff]
  %v4765 = vld [vmem:[#allocation3 + $0x292] sm:$0xff]
  %v4766 = vld [vmem:[#allocation3 + $0x2a2] sm:$0xff]
  %v4767 = vld [vmem:[#allocation3 + $0x2aa] sm:$0xff]
  %v4768 = vld [vmem:[#allocation3 + $0x2ba] sm:$0xff]
  %v4769 = vld [vmem:[#allocation3 + $0x2c2] sm:$0xff]
  %v4770 = vld [vmem:[#allocation3 + $0x2d2] sm:$0xff]
  %v4771 = vld [vmem:[#allocation3 + $0x2da] sm:$0xff]
  %v4772 = vld [vmem:[#allocation3 + $0x2ea] sm:$0xff]
  %v4773 = vld [vmem:[#allocation3 + $0x2f2] sm:$0xff]
  %v4774 = vld [vmem:[#allocation3 + $0x302] sm:$0xff]
  %v4775 = vld [vmem:[#allocation3 + $0x30a] sm:$0xff]
  %v4776 = vld [vmem:[#allocation3 + $0x31a] sm:$0xff]
  %v4777 = vld [vmem:[#allocation3 + $0x322] sm:$0xff]
  %v4778 = vld [vmem:[%s4426] sm:$0xff]
  %v4779 = vld [vmem:[%s4426 + $0x8] sm:$0xff]
  %v4780 = vld [vmem:[%s4426 + $0x18] sm:$0xff]
  %v4781 = vld [vmem:[%s4426 + $0x20] sm:$0xff]
  %v4782 = vld [vmem:[%s4426 + $0x30] sm:$0xff]
  %v4783 = vld [vmem:[%s4426 + $0x38] sm:$0xff]
  %v4784 = vld [vmem:[%s4426 + $0x48] sm:$0xff]
  %v4785 = vld [vmem:[%s4426 + $0x50] sm:$0xff]
  %v4786 = vld [vmem:[%s4426 + $0x60] sm:$0xff]
  %v4787 = vld [vmem:[%s4426 + $0x68] sm:$0xff]
  %v4788 = vld [vmem:[%s4426 + $0x78] sm:$0xff]
  %v4789 = vld [vmem:[%s4426 + $0x80] sm:$0xff]
  %v4790 = vld [vmem:[%s4426 + $0x90] sm:$0xff]
  %v4791 = vld [vmem:[%s4426 + $0x98] sm:$0xff]
  %v4792 = vld [vmem:[%s4426 + $0xa8] sm:$0xff]
  %v4793 = vld [vmem:[%s4426 + $0xb0] sm:$0xff]
  %v4794 = vld [vmem:[%s4426 + $0xc0] sm:$0xff]
  %v4795 = vld [vmem:[%s4426 + $0xc8] sm:$0xff]
  %v4796 = vld [vmem:[%s4426 + $0xd8] sm:$0xff]
  %v4797 = vld [vmem:[%s4426 + $0xe0] sm:$0xff]
  %v4798 = vld [vmem:[%s4426 + $0xf0] sm:$0xff]
  %v4799 = vld [vmem:[%s4426 + $0xf8] sm:$0xff]
  %v4800 = vld [vmem:[%s4426 + $0x108] sm:$0xff]
  %v4801 = vld [vmem:[%s4426 + $0x110] sm:$0xff]
  %v4802 = vld [vmem:[%s4426 + $0x120] sm:$0xff]
  %v4803 = vld [vmem:[%s4426 + $0x128] sm:$0xff]
  %v4804 = vld [vmem:[%s4426 + $0x138] sm:$0xff]
  %v4805 = vld [vmem:[%s4426 + $0x140] sm:$0xff]
  %v4806 = vld [vmem:[%s4426 + $0x150] sm:$0xff]
  %v4807 = vld [vmem:[%s4426 + $0x158] sm:$0xff]
  %v4808 = vld [vmem:[%s4426 + $0x168] sm:$0xff]
  %v4809 = vld [vmem:[%s4426 + $0x170] sm:$0xff]
  %v4810 = vld [vmem:[%s4426 + $0x1b0] sm:$0xff]
  %v4811 = vld [vmem:[%s4426 + $0x1b8] sm:$0xff]
  %v4812 = vld [vmem:[%s4426 + $0x1c8] sm:$0xff]
  %v4813 = vld [vmem:[%s4426 + $0x1d0] sm:$0xff]
  %v4814 = vld [vmem:[%s4426 + $0x1e0] sm:$0xff]
  %v4815 = vld [vmem:[%s4426 + $0x1e8] sm:$0xff]
  %v4816 = vld [vmem:[%s4426 + $0x1f8] sm:$0xff]
  %v4817 = vld [vmem:[%s4426 + $0x200] sm:$0xff]
  %v4818 = vld [vmem:[%s4426 + $0x210] sm:$0xff]
  %v4819 = vld [vmem:[%s4426 + $0x218] sm:$0xff]
  %v4820 = vld [vmem:[%s4426 + $0x228] sm:$0xff]
  %v4821 = vld [vmem:[%s4426 + $0x230] sm:$0xff]
  %v4822 = vld [vmem:[%s4426 + $0x240] sm:$0xff]
  %v4823 = vld [vmem:[%s4426 + $0x248] sm:$0xff]
  %v4824 = vld [vmem:[%s4426 + $0x258] sm:$0xff]
  %v4825 = vld [vmem:[%s4426 + $0x260] sm:$0xff]
  %v4826 = vld [vmem:[%s4426 + $0x270] sm:$0xff]
  %v4827 = vld [vmem:[%s4426 + $0x278] sm:$0xff]
  %v4828 = vld [vmem:[%s4426 + $0x288] sm:$0xff]
  %v4829 = vld [vmem:[%s4426 + $0x290] sm:$0xff]
  %v4830 = vld [vmem:[%s4426 + $0x2a0] sm:$0xff]
  %v4831 = vld [vmem:[%s4426 + $0x2a8] sm:$0xff]
  %v4832 = vld [vmem:[%s4426 + $0x2b8] sm:$0xff]
  %v4833 = vld [vmem:[%s4426 + $0x2c0] sm:$0xff]
  %v4834 = vld [vmem:[%s4426 + $0x2d0] sm:$0xff]
  %v4835 = vld [vmem:[%s4426 + $0x2d8] sm:$0xff]
  %v4836 = vld [vmem:[%s4426 + $0x2e8] sm:$0xff]
  %v4837 = vld [vmem:[%s4426 + $0x2f0] sm:$0xff]
  %v4838 = vld [vmem:[%s4426 + $0x300] sm:$0xff]
  %v4839 = vld [vmem:[%s4426 + $0x308] sm:$0xff]
  %v4840 = vld [vmem:[%s4426 + $0x318] sm:$0xff]
  %v4841 = vld [vmem:[%s4426 + $0x320] sm:$0xff]
  %4906 = vrot.lane.b32.xlu0 %v4650, 32
  %v4907 = vpop.permute.xlu0 %4906
  %4908 = vrot.lane.b32.xlu0 %v4651, 32
  %v4909 = vpop.permute.xlu0 %4908
  %4910 = vrot.lane.b32.xlu0 %v4652, 32
  %v4911 = vpop.permute.xlu0 %4910
  %4912 = vrot.lane.b32.xlu0 %v4653, 32
  %v4913 = vpop.permute.xlu0 %4912
  %4914 = vrot.lane.b32.xlu0 %v4654, 32
  %v4915 = vpop.permute.xlu0 %4914
  %4916 = vrot.lane.b32.xlu0 %v4655, 32
  %v4917 = vpop.permute.xlu0 %4916
  %4918 = vrot.lane.b32.xlu0 %v4656, 32
  %v4919 = vpop.permute.xlu0 %4918
  %4920 = vrot.lane.b32.xlu0 %v4657, 32
  %v4921 = vpop.permute.xlu0 %4920
  %4922 = vrot.lane.b32.xlu0 %v4658, 32
  %v4923 = vpop.permute.xlu0 %4922
  %4924 = vrot.lane.b32.xlu0 %v4659, 32
  %v4925 = vpop.permute.xlu0 %4924
  %4926 = vrot.lane.b32.xlu0 %v4660, 32
  %v4927 = vpop.permute.xlu0 %4926
  %4928 = vrot.lane.b32.xlu0 %v4661, 32
  %v4929 = vpop.permute.xlu0 %4928
  %4930 = vrot.lane.b32.xlu0 %v4662, 32
  %v4931 = vpop.permute.xlu0 %4930
  %4932 = vrot.lane.b32.xlu0 %v4663, 32
  %v4933 = vpop.permute.xlu0 %4932
  %4934 = vrot.lane.b32.xlu0 %v4664, 32
  %v4935 = vpop.permute.xlu0 %4934
  %4936 = vrot.lane.b32.xlu0 %v4665, 32
  %v4937 = vpop.permute.xlu0 %4936
  %4938 = vrot.lane.b32.xlu0 %v4666, 32
  %v4939 = vpop.permute.xlu0 %4938
  %4940 = vrot.lane.b32.xlu0 %v4667, 32
  %v4941 = vpop.permute.xlu0 %4940
  %4942 = vrot.lane.b32.xlu0 %v4668, 32
  %v4943 = vpop.permute.xlu0 %4942
  %4944 = vrot.lane.b32.xlu0 %v4669, 32
  %v4945 = vpop.permute.xlu0 %4944
  %4946 = vrot.lane.b32.xlu0 %v4670, 32
  %v4947 = vpop.permute.xlu0 %4946
  %4948 = vrot.lane.b32.xlu0 %v4671, 32
  %v4949 = vpop.permute.xlu0 %4948
  %4950 = vrot.lane.b32.xlu0 %v4672, 32
  %v4951 = vpop.permute.xlu0 %4950
  %4952 = vrot.lane.b32.xlu0 %v4673, 32
  %v4953 = vpop.permute.xlu0 %4952
  %4954 = vrot.lane.b32.xlu0 %v4674, 32
  %v4955 = vpop.permute.xlu0 %4954
  %4956 = vrot.lane.b32.xlu0 %v4675, 32
  %v4957 = vpop.permute.xlu0 %4956
  %4958 = vrot.lane.b32.xlu0 %v4676, 32
  %v4959 = vpop.permute.xlu0 %4958
  %4960 = vrot.lane.b32.xlu0 %v4677, 32
  %v4961 = vpop.permute.xlu0 %4960
  %4962 = vrot.lane.b32.xlu0 %v4678, 32
  %v4963 = vpop.permute.xlu0 %4962
  %4964 = vrot.lane.b32.xlu0 %v4679, 32
  %v4965 = vpop.permute.xlu0 %4964
  %4966 = vrot.lane.b32.xlu0 %v4680, 32
  %v4967 = vpop.permute.xlu0 %4966
  %4968 = vrot.lane.b32.xlu0 %v4681, 32
  %v4969 = vpop.permute.xlu0 %4968
  %4970 = vrot.lane.b32.xlu0 %v4682, 32
  %v4971 = vpop.permute.xlu0 %4970
  %4972 = vrot.lane.b32.xlu0 %v4683, 32
  %v4973 = vpop.permute.xlu0 %4972
  %4974 = vrot.lane.b32.xlu0 %v4684, 32
  %v4975 = vpop.permute.xlu0 %4974
  %4976 = vrot.lane.b32.xlu0 %v4685, 32
  %v4977 = vpop.permute.xlu0 %4976
  %4978 = vrot.lane.b32.xlu0 %v4686, 32
  %v4979 = vpop.permute.xlu0 %4978
  %4980 = vrot.lane.b32.xlu0 %v4687, 32
  %v4981 = vpop.permute.xlu0 %4980
  %4982 = vrot.lane.b32.xlu0 %v4688, 32
  %v4983 = vpop.permute.xlu0 %4982
  %4984 = vrot.lane.b32.xlu0 %v4689, 32
  %v4985 = vpop.permute.xlu0 %4984
  %4986 = vrot.lane.b32.xlu0 %v4690, 32
  %v4987 = vpop.permute.xlu0 %4986
  %4988 = vrot.lane.b32.xlu0 %v4691, 32
  %v4989 = vpop.permute.xlu0 %4988
  %4990 = vrot.lane.b32.xlu0 %v4692, 32
  %v4991 = vpop.permute.xlu0 %4990
  %4992 = vrot.lane.b32.xlu0 %v4693, 32
  %v4993 = vpop.permute.xlu0 %4992
  %4994 = vrot.lane.b32.xlu0 %v4694, 32
  %v4995 = vpop.permute.xlu0 %4994
  %4996 = vrot.lane.b32.xlu0 %v4695, 32
  %v4997 = vpop.permute.xlu0 %4996
  %4998 = vrot.lane.b32.xlu0 %v4696, 32
  %v4999 = vpop.permute.xlu0 %4998
  %5000 = vrot.lane.b32.xlu0 %v4697, 32
  %v5001 = vpop.permute.xlu0 %5000
  %5002 = vrot.lane.b32.xlu0 %v4698, 32
  %v5003 = vpop.permute.xlu0 %5002
  %5004 = vrot.lane.b32.xlu0 %v4699, 32
  %v5005 = vpop.permute.xlu0 %5004
  %5006 = vrot.lane.b32.xlu0 %v4700, 32
  %v5007 = vpop.permute.xlu0 %5006
  %5008 = vrot.lane.b32.xlu0 %v4701, 32
  %v5009 = vpop.permute.xlu0 %5008
  %5010 = vrot.lane.b32.xlu0 %v4702, 32
  %v5011 = vpop.permute.xlu0 %5010
  %5012 = vrot.lane.b32.xlu0 %v4703, 32
  %v5013 = vpop.permute.xlu0 %5012
  %5014 = vrot.lane.b32.xlu0 %v4704, 32
  %v5015 = vpop.permute.xlu0 %5014
  %5016 = vrot.lane.b32.xlu0 %v4705, 32
  %v5017 = vpop.permute.xlu0 %5016
  %5018 = vrot.lane.b32.xlu0 %v4706, 32
  %v5019 = vpop.permute.xlu0 %5018
  %5020 = vrot.lane.b32.xlu0 %v4707, 32
  %v5021 = vpop.permute.xlu0 %5020
  %5022 = vrot.lane.b32.xlu0 %v4708, 32
  %v5023 = vpop.permute.xlu0 %5022
  %5024 = vrot.lane.b32.xlu0 %v4709, 32
  %v5025 = vpop.permute.xlu0 %5024
  %5026 = vrot.lane.b32.xlu0 %v4710, 32
  %v5027 = vpop.permute.xlu0 %5026
  %5028 = vrot.lane.b32.xlu0 %v4711, 32
  %v5029 = vpop.permute.xlu0 %5028
  %5030 = vrot.lane.b32.xlu0 %v4712, 32
  %v5031 = vpop.permute.xlu0 %5030
  %5032 = vrot.lane.b32.xlu0 %v4713, 32
  %v5033 = vpop.permute.xlu0 %5032
  %5162 = vrot.lane.b32.xlu0 %v4714, 64
  %v5163 = vpop.permute.xlu0 %5162
  %5164 = vrot.lane.b32.xlu0 %v4715, 64
  %v5165 = vpop.permute.xlu0 %5164
  %5166 = vrot.lane.b32.xlu0 %v4716, 64
  %v5167 = vpop.permute.xlu0 %5166
  %5168 = vrot.lane.b32.xlu0 %v4717, 64
  %v5169 = vpop.permute.xlu0 %5168
  %5170 = vrot.lane.b32.xlu0 %v4718, 64
  %v5171 = vpop.permute.xlu0 %5170
  %5172 = vrot.lane.b32.xlu0 %v4719, 64
  %v5173 = vpop.permute.xlu0 %5172
  %5174 = vrot.lane.b32.xlu0 %v4720, 64
  %v5175 = vpop.permute.xlu0 %5174
  %5176 = vrot.lane.b32.xlu0 %v4721, 64
  %v5177 = vpop.permute.xlu0 %5176
  %5178 = vrot.lane.b32.xlu0 %v4722, 64
  %v5179 = vpop.permute.xlu0 %5178
  %5180 = vrot.lane.b32.xlu0 %v4723, 64
  %v5181 = vpop.permute.xlu0 %5180
  %5182 = vrot.lane.b32.xlu0 %v4724, 64
  %v5183 = vpop.permute.xlu0 %5182
  %5184 = vrot.lane.b32.xlu0 %v4725, 64
  %v5185 = vpop.permute.xlu0 %5184
  %5186 = vrot.lane.b32.xlu0 %v4726, 64
  %v5187 = vpop.permute.xlu0 %5186
  %5188 = vrot.lane.b32.xlu0 %v4727, 64
  %v5189 = vpop.permute.xlu0 %5188
  %5190 = vrot.lane.b32.xlu0 %v4728, 64
  %v5191 = vpop.permute.xlu0 %5190
  %5192 = vrot.lane.b32.xlu0 %v4729, 64
  %v5193 = vpop.permute.xlu0 %5192
  %5194 = vrot.lane.b32.xlu0 %v4730, 64
  %v5195 = vpop.permute.xlu0 %5194
  %5196 = vrot.lane.b32.xlu0 %v4731, 64
  %v5197 = vpop.permute.xlu0 %5196
  %5198 = vrot.lane.b32.xlu0 %v4732, 64
  %v5199 = vpop.permute.xlu0 %5198
  %5200 = vrot.lane.b32.xlu0 %v4733, 64
  %v5201 = vpop.permute.xlu0 %5200
  %5202 = vrot.lane.b32.xlu0 %v4734, 64
  %v5203 = vpop.permute.xlu0 %5202
  %5204 = vrot.lane.b32.xlu0 %v4735, 64
  %v5205 = vpop.permute.xlu0 %5204
  %5206 = vrot.lane.b32.xlu0 %v4736, 64
  %v5207 = vpop.permute.xlu0 %5206
  %5208 = vrot.lane.b32.xlu0 %v4737, 64
  %v5209 = vpop.permute.xlu0 %5208
  %5210 = vrot.lane.b32.xlu0 %v4738, 64
  %v5211 = vpop.permute.xlu0 %5210
  %5212 = vrot.lane.b32.xlu0 %v4739, 64
  %v5213 = vpop.permute.xlu0 %5212
  %5214 = vrot.lane.b32.xlu0 %v4740, 64
  %v5215 = vpop.permute.xlu0 %5214
  %5216 = vrot.lane.b32.xlu0 %v4741, 64
  %v5217 = vpop.permute.xlu0 %5216
  %5218 = vrot.lane.b32.xlu0 %v4742, 64
  %v5219 = vpop.permute.xlu0 %5218
  %5220 = vrot.lane.b32.xlu0 %v4743, 64
  %v5221 = vpop.permute.xlu0 %5220
  %5222 = vrot.lane.b32.xlu0 %v4744, 64
  %v5223 = vpop.permute.xlu0 %5222
  %5224 = vrot.lane.b32.xlu0 %v4745, 64
  %v5225 = vpop.permute.xlu0 %5224
  %5226 = vrot.lane.b32.xlu0 %v4746, 64
  %v5227 = vpop.permute.xlu0 %5226
  %5228 = vrot.lane.b32.xlu0 %v4747, 64
  %v5229 = vpop.permute.xlu0 %5228
  %5230 = vrot.lane.b32.xlu0 %v4748, 64
  %v5231 = vpop.permute.xlu0 %5230
  %5232 = vrot.lane.b32.xlu0 %v4749, 64
  %v5233 = vpop.permute.xlu0 %5232
  %5234 = vrot.lane.b32.xlu0 %v4750, 64
  %v5235 = vpop.permute.xlu0 %5234
  %5236 = vrot.lane.b32.xlu0 %v4751, 64
  %v5237 = vpop.permute.xlu0 %5236
  %5238 = vrot.lane.b32.xlu0 %v4752, 64
  %v5239 = vpop.permute.xlu0 %5238
  %5240 = vrot.lane.b32.xlu0 %v4753, 64
  %v5241 = vpop.permute.xlu0 %5240
  %5242 = vrot.lane.b32.xlu0 %v4754, 64
  %v5243 = vpop.permute.xlu0 %5242
  %5244 = vrot.lane.b32.xlu0 %v4755, 64
  %v5245 = vpop.permute.xlu0 %5244
  %5246 = vrot.lane.b32.xlu0 %v4756, 64
  %v5247 = vpop.permute.xlu0 %5246
  %5248 = vrot.lane.b32.xlu0 %v4757, 64
  %v5249 = vpop.permute.xlu0 %5248
  %5250 = vrot.lane.b32.xlu0 %v4758, 64
  %v5251 = vpop.permute.xlu0 %5250
  %5252 = vrot.lane.b32.xlu0 %v4759, 64
  %v5253 = vpop.permute.xlu0 %5252
  %5254 = vrot.lane.b32.xlu0 %v4760, 64
  %v5255 = vpop.permute.xlu0 %5254
  %5256 = vrot.lane.b32.xlu0 %v4761, 64
  %v5257 = vpop.permute.xlu0 %5256
  %5258 = vrot.lane.b32.xlu0 %v4762, 64
  %v5259 = vpop.permute.xlu0 %5258
  %5260 = vrot.lane.b32.xlu0 %v4763, 64
  %v5261 = vpop.permute.xlu0 %5260
  %5262 = vrot.lane.b32.xlu0 %v4764, 64
  %v5263 = vpop.permute.xlu0 %5262
  %5264 = vrot.lane.b32.xlu0 %v4765, 64
  %v5265 = vpop.permute.xlu0 %5264
  %5266 = vrot.lane.b32.xlu0 %v4766, 64
  %v5267 = vpop.permute.xlu0 %5266
  %5268 = vrot.lane.b32.xlu0 %v4767, 64
  %v5269 = vpop.permute.xlu0 %5268
  %5270 = vrot.lane.b32.xlu0 %v4768, 64
  %v5271 = vpop.permute.xlu0 %5270
  %5272 = vrot.lane.b32.xlu0 %v4769, 64
  %v5273 = vpop.permute.xlu0 %5272
  %5274 = vrot.lane.b32.xlu0 %v4770, 64
  %v5275 = vpop.permute.xlu0 %5274
  %5276 = vrot.lane.b32.xlu0 %v4771, 64
  %v5277 = vpop.permute.xlu0 %5276
  %5278 = vrot.lane.b32.xlu0 %v4772, 64
  %v5279 = vpop.permute.xlu0 %5278
  %5280 = vrot.lane.b32.xlu0 %v4773, 64
  %v5281 = vpop.permute.xlu0 %5280
  %5282 = vrot.lane.b32.xlu0 %v4774, 64
  %v5283 = vpop.permute.xlu0 %5282
  %5284 = vrot.lane.b32.xlu0 %v4775, 64
  %v5285 = vpop.permute.xlu0 %5284
  %5286 = vrot.lane.b32.xlu0 %v4776, 64
  %v5287 = vpop.permute.xlu0 %5286
  %5288 = vrot.lane.b32.xlu0 %v4777, 64
  %v5289 = vpop.permute.xlu0 %5288
  %5418 = vrot.lane.b32.xlu0 %v4778, 96
  %v5419 = vpop.permute.xlu0 %5418
  %5420 = vrot.lane.b32.xlu0 %v4779, 96
  %v5421 = vpop.permute.xlu0 %5420
  %5422 = vrot.lane.b32.xlu0 %v4780, 96
  %v5423 = vpop.permute.xlu0 %5422
  %5424 = vrot.lane.b32.xlu0 %v4781, 96
  %v5425 = vpop.permute.xlu0 %5424
  %5426 = vrot.lane.b32.xlu0 %v4782, 96
  %v5427 = vpop.permute.xlu0 %5426
  %5428 = vrot.lane.b32.xlu0 %v4783, 96
  %v5429 = vpop.permute.xlu0 %5428
  %5430 = vrot.lane.b32.xlu0 %v4784, 96
  %v5431 = vpop.permute.xlu0 %5430
  %5432 = vrot.lane.b32.xlu0 %v4785, 96
  %v5433 = vpop.permute.xlu0 %5432
  %5434 = vrot.lane.b32.xlu0 %v4786, 96
  %v5435 = vpop.permute.xlu0 %5434
  %5436 = vrot.lane.b32.xlu0 %v4787, 96
  %v5437 = vpop.permute.xlu0 %5436
  %5438 = vrot.lane.b32.xlu0 %v4788, 96
  %v5439 = vpop.permute.xlu0 %5438
  %5440 = vrot.lane.b32.xlu0 %v4789, 96
  %v5441 = vpop.permute.xlu0 %5440
  %5442 = vrot.lane.b32.xlu0 %v4790, 96
  %v5443 = vpop.permute.xlu0 %5442
  %5444 = vrot.lane.b32.xlu0 %v4791, 96
  %v5445 = vpop.permute.xlu0 %5444
  %5446 = vrot.lane.b32.xlu0 %v4792, 96
  %v5447 = vpop.permute.xlu0 %5446
  %5448 = vrot.lane.b32.xlu0 %v4793, 96
  %v5449 = vpop.permute.xlu0 %5448
  %5450 = vrot.lane.b32.xlu0 %v4794, 96
  %v5451 = vpop.permute.xlu0 %5450
  %5452 = vrot.lane.b32.xlu0 %v4795, 96
  %v5453 = vpop.permute.xlu0 %5452
  %5454 = vrot.lane.b32.xlu0 %v4796, 96
  %v5455 = vpop.permute.xlu0 %5454
  %5456 = vrot.lane.b32.xlu0 %v4797, 96
  %v5457 = vpop.permute.xlu0 %5456
  %5458 = vrot.lane.b32.xlu0 %v4798, 96
  %v5459 = vpop.permute.xlu0 %5458
  %5460 = vrot.lane.b32.xlu0 %v4799, 96
  %v5461 = vpop.permute.xlu0 %5460
  %5462 = vrot.lane.b32.xlu0 %v4800, 96
  %v5463 = vpop.permute.xlu0 %5462
  %5464 = vrot.lane.b32.xlu0 %v4801, 96
  %v5465 = vpop.permute.xlu0 %5464
  %5466 = vrot.lane.b32.xlu0 %v4802, 96
  %v5467 = vpop.permute.xlu0 %5466
  %5468 = vrot.lane.b32.xlu0 %v4803, 96
  %v5469 = vpop.permute.xlu0 %5468
  %5470 = vrot.lane.b32.xlu0 %v4804, 96
  %v5471 = vpop.permute.xlu0 %5470
  %5472 = vrot.lane.b32.xlu0 %v4805, 96
  %v5473 = vpop.permute.xlu0 %5472
  %5474 = vrot.lane.b32.xlu0 %v4806, 96
  %v5475 = vpop.permute.xlu0 %5474
  %5476 = vrot.lane.b32.xlu0 %v4807, 96
  %v5477 = vpop.permute.xlu0 %5476
  %5478 = vrot.lane.b32.xlu0 %v4808, 96
  %v5479 = vpop.permute.xlu0 %5478
  %5480 = vrot.lane.b32.xlu0 %v4809, 96
  %v5481 = vpop.permute.xlu0 %5480
  %5482 = vrot.lane.b32.xlu0 %v4810, 96
  %v5483 = vpop.permute.xlu0 %5482
  %5484 = vrot.lane.b32.xlu0 %v4811, 96
  %v5485 = vpop.permute.xlu0 %5484
  %5486 = vrot.lane.b32.xlu0 %v4812, 96
  %v5487 = vpop.permute.xlu0 %5486
  %5488 = vrot.lane.b32.xlu0 %v4813, 96
  %v5489 = vpop.permute.xlu0 %5488
  %5490 = vrot.lane.b32.xlu0 %v4814, 96
  %v5491 = vpop.permute.xlu0 %5490
  %5492 = vrot.lane.b32.xlu0 %v4815, 96
  %v5493 = vpop.permute.xlu0 %5492
  %5494 = vrot.lane.b32.xlu0 %v4816, 96
  %v5495 = vpop.permute.xlu0 %5494
  %5496 = vrot.lane.b32.xlu0 %v4817, 96
  %v5497 = vpop.permute.xlu0 %5496
  %5498 = vrot.lane.b32.xlu0 %v4818, 96
  %v5499 = vpop.permute.xlu0 %5498
  %5500 = vrot.lane.b32.xlu0 %v4819, 96
  %v5501 = vpop.permute.xlu0 %5500
  %5502 = vrot.lane.b32.xlu0 %v4820, 96
  %v5503 = vpop.permute.xlu0 %5502
  %5504 = vrot.lane.b32.xlu0 %v4821, 96
  %v5505 = vpop.permute.xlu0 %5504
  %5506 = vrot.lane.b32.xlu0 %v4822, 96
  %v5507 = vpop.permute.xlu0 %5506
  %5508 = vrot.lane.b32.xlu0 %v4823, 96
  %v5509 = vpop.permute.xlu0 %5508
  %5510 = vrot.lane.b32.xlu0 %v4824, 96
  %v5511 = vpop.permute.xlu0 %5510
  %5512 = vrot.lane.b32.xlu0 %v4825, 96
  %v5513 = vpop.permute.xlu0 %5512
  %5514 = vrot.lane.b32.xlu0 %v4826, 96
  %v5515 = vpop.permute.xlu0 %5514
  %5516 = vrot.lane.b32.xlu0 %v4827, 96
  %v5517 = vpop.permute.xlu0 %5516
  %5518 = vrot.lane.b32.xlu0 %v4828, 96
  %v5519 = vpop.permute.xlu0 %5518
  %5520 = vrot.lane.b32.xlu0 %v4829, 96
  %v5521 = vpop.permute.xlu0 %5520
  %5522 = vrot.lane.b32.xlu0 %v4830, 96
  %v5523 = vpop.permute.xlu0 %5522
  %5524 = vrot.lane.b32.xlu0 %v4831, 96
  %v5525 = vpop.permute.xlu0 %5524
  %5526 = vrot.lane.b32.xlu0 %v4832, 96
  %v5527 = vpop.permute.xlu0 %5526
  %5528 = vrot.lane.b32.xlu0 %v4833, 96
  %v5529 = vpop.permute.xlu0 %5528
  %5530 = vrot.lane.b32.xlu0 %v4834, 96
  %v5531 = vpop.permute.xlu0 %5530
  %5532 = vrot.lane.b32.xlu0 %v4835, 96
  %v5533 = vpop.permute.xlu0 %5532
  %5534 = vrot.lane.b32.xlu0 %v4836, 96
  %v5535 = vpop.permute.xlu0 %5534
  %5536 = vrot.lane.b32.xlu0 %v4837, 96
  %v5537 = vpop.permute.xlu0 %5536
  %5538 = vrot.lane.b32.xlu0 %v4838, 96
  %v5539 = vpop.permute.xlu0 %5538
  %5540 = vrot.lane.b32.xlu0 %v4839, 96
  %v5541 = vpop.permute.xlu0 %5540
  %5542 = vrot.lane.b32.xlu0 %v4840, 96
  %v5543 = vpop.permute.xlu0 %5542
  %5544 = vrot.lane.b32.xlu0 %v4841, 96
  %v5545 = vpop.permute.xlu0 %5544
  %v5610 = vsel %vm4427, %v4586, %v4907
  %v5611 = vsel %vm4427, %v4587, %v4909
  %v5612 = vsel %vm4427, %v4588, %v4911
  %v5613 = vsel %vm4427, %v4589, %v4913
  %v5614 = vsel %vm4427, %v4590, %v4915
  %v5615 = vsel %vm4427, %v4591, %v4917
  %v5616 = vsel %vm4427, %v4592, %v4919
  %v5617 = vsel %vm4427, %v4593, %v4921
  %v5618 = vsel %vm4427, %v4594, %v4923
  %v5619 = vsel %vm4427, %v4595, %v4925
  %v5620 = vsel %vm4427, %v4596, %v4927
  %v5621 = vsel %vm4427, %v4597, %v4929
  %v5622 = vsel %vm4427, %v4598, %v4931
  %v5623 = vsel %vm4427, %v4599, %v4933
  %v5624 = vsel %vm4427, %v4600, %v4935
  %v5625 = vsel %vm4427, %v4601, %v4937
  %v5626 = vsel %vm4427, %v4602, %v4939
  %v5627 = vsel %vm4427, %v4603, %v4941
  %v5628 = vsel %vm4427, %v4604, %v4943
  %v5629 = vsel %vm4427, %v4605, %v4945
  %v5630 = vsel %vm4427, %v4606, %v4947
  %v5631 = vsel %vm4427, %v4607, %v4949
  %v5632 = vsel %vm4427, %v4608, %v4951
  %v5633 = vsel %vm4427, %v4609, %v4953
  %v5634 = vsel %vm4427, %v4610, %v4955
  %v5635 = vsel %vm4427, %v4611, %v4957
  %v5636 = vsel %vm4427, %v4612, %v4959
  %v5637 = vsel %vm4427, %v4613, %v4961
  %v5638 = vsel %vm4427, %v4614, %v4963
  %v5639 = vsel %vm4427, %v4615, %v4965
  %v5640 = vsel %vm4427, %v4616, %v4967
  %v5641 = vsel %vm4427, %v4617, %v4969
  %v5642 = vsel %vm4427, %v4618, %v4971
  %v5643 = vsel %vm4427, %v4619, %v4973
  %v5644 = vsel %vm4427, %v4620, %v4975
  %v5645 = vsel %vm4427, %v4621, %v4977
  %v5646 = vsel %vm4427, %v4622, %v4979
  %v5647 = vsel %vm4427, %v4623, %v4981
  %v5648 = vsel %vm4427, %v4624, %v4983
  %v5649 = vsel %vm4427, %v4625, %v4985
  %v5650 = vsel %vm4427, %v4626, %v4987
  %v5651 = vsel %vm4427, %v4627, %v4989
  %v5652 = vsel %vm4427, %v4628, %v4991
  %v5653 = vsel %vm4427, %v4629, %v4993
  %v5654 = vsel %vm4427, %v4630, %v4995
  %v5655 = vsel %vm4427, %v4631, %v4997
  %v5656 = vsel %vm4427, %v4632, %v4999
  %v5657 = vsel %vm4427, %v4633, %v5001
  %v5658 = vsel %vm4427, %v4634, %v5003
  %v5659 = vsel %vm4427, %v4635, %v5005
  %v5660 = vsel %vm4427, %v4636, %v5007
  %v5661 = vsel %vm4427, %v4637, %v5009
  %v5662 = vsel %vm4427, %v4638, %v5011
  %v5663 = vsel %vm4427, %v4639, %v5013
  %v5664 = vsel %vm4427, %v4640, %v5015
  %v5665 = vsel %vm4427, %v4641, %v5017
  %v5666 = vsel %vm4427, %v4642, %v5019
  %v5667 = vsel %vm4427, %v4643, %v5021
  %v5668 = vsel %vm4427, %v4644, %v5023
  %v5669 = vsel %vm4427, %v4645, %v5025
  %v5670 = vsel %vm4427, %v4646, %v5027
  %v5671 = vsel %vm4427, %v4647, %v5029
  %v5672 = vsel %vm4427, %v4648, %v5031
  %v5673 = vsel %vm4427, %v4649, %v5033
  %v5674 = vsel %vm92, %v5610, %v5163
  %v5675 = vsel %vm92, %v5611, %v5165
  %v5676 = vsel %vm92, %v5612, %v5167
  %v5677 = vsel %vm92, %v5613, %v5169
  %v5678 = vsel %vm92, %v5614, %v5171
  %v5679 = vsel %vm92, %v5615, %v5173
  %v5680 = vsel %vm92, %v5616, %v5175
  %v5681 = vsel %vm92, %v5617, %v5177
  %v5682 = vsel %vm92, %v5618, %v5179
  %v5683 = vsel %vm92, %v5619, %v5181
  %v5684 = vsel %vm92, %v5620, %v5183
  %v5685 = vsel %vm92, %v5621, %v5185
  %v5686 = vsel %vm92, %v5622, %v5187
  %v5687 = vsel %vm92, %v5623, %v5189
  %v5688 = vsel %vm92, %v5624, %v5191
  %v5689 = vsel %vm92, %v5625, %v5193
  %v5690 = vsel %vm92, %v5626, %v5195
  %v5691 = vsel %vm92, %v5627, %v5197
  %v5692 = vsel %vm92, %v5628, %v5199
  %v5693 = vsel %vm92, %v5629, %v5201
  %v5694 = vsel %vm92, %v5630, %v5203
  %v5695 = vsel %vm92, %v5631, %v5205
  %v5696 = vsel %vm92, %v5632, %v5207
  %v5697 = vsel %vm92, %v5633, %v5209
  %v5698 = vsel %vm92, %v5634, %v5211
  %v5699 = vsel %vm92, %v5635, %v5213
  %v5700 = vsel %vm92, %v5636, %v5215
  %v5701 = vsel %vm92, %v5637, %v5217
  %v5702 = vsel %vm92, %v5638, %v5219
  %v5703 = vsel %vm92, %v5639, %v5221
  %v5704 = vsel %vm92, %v5640, %v5223
  %v5705 = vsel %vm92, %v5641, %v5225
  %v5706 = vsel %vm92, %v5642, %v5227
  %v5707 = vsel %vm92, %v5643, %v5229
  %v5708 = vsel %vm92, %v5644, %v5231
  %v5709 = vsel %vm92, %v5645, %v5233
  %v5710 = vsel %vm92, %v5646, %v5235
  %v5711 = vsel %vm92, %v5647, %v5237
  %v5712 = vsel %vm92, %v5648, %v5239
  %v5713 = vsel %vm92, %v5649, %v5241
  %v5714 = vsel %vm92, %v5650, %v5243
  %v5715 = vsel %vm92, %v5651, %v5245
  %v5716 = vsel %vm92, %v5652, %v5247
  %v5717 = vsel %vm92, %v5653, %v5249
  %v5718 = vsel %vm92, %v5654, %v5251
  %v5719 = vsel %vm92, %v5655, %v5253
  %v5720 = vsel %vm92, %v5656, %v5255
  %v5721 = vsel %vm92, %v5657, %v5257
  %v5722 = vsel %vm92, %v5658, %v5259
  %v5723 = vsel %vm92, %v5659, %v5261
  %v5724 = vsel %vm92, %v5660, %v5263
  %v5725 = vsel %vm92, %v5661, %v5265
  %v5726 = vsel %vm92, %v5662, %v5267
  %v5727 = vsel %vm92, %v5663, %v5269
  %v5728 = vsel %vm92, %v5664, %v5271
  %v5729 = vsel %vm92, %v5665, %v5273
  %v5730 = vsel %vm92, %v5666, %v5275
  %v5731 = vsel %vm92, %v5667, %v5277
  %v5732 = vsel %vm92, %v5668, %v5279
  %v5733 = vsel %vm92, %v5669, %v5281
  %v5734 = vsel %vm92, %v5670, %v5283
  %v5735 = vsel %vm92, %v5671, %v5285
  %v5736 = vsel %vm92, %v5672, %v5287
  %v5737 = vsel %vm92, %v5673, %v5289
  %vm5738 = vcmask 785408
  %v5739 = vsel %vm5738, %v5674, %v5419
  %v5740 = vsel %vm5738, %v5675, %v5421
  %v5741 = vsel %vm5738, %v5676, %v5423
  %v5742 = vsel %vm5738, %v5677, %v5425
  %v5743 = vsel %vm5738, %v5678, %v5427
  %v5744 = vsel %vm5738, %v5679, %v5429
  %v5745 = vsel %vm5738, %v5680, %v5431
  %v5746 = vsel %vm5738, %v5681, %v5433
  %v5747 = vsel %vm5738, %v5682, %v5435
  %v5748 = vsel %vm5738, %v5683, %v5437
  %v5749 = vsel %vm5738, %v5684, %v5439
  %v5750 = vsel %vm5738, %v5685, %v5441
  %v5751 = vsel %vm5738, %v5686, %v5443
  %v5752 = vsel %vm5738, %v5687, %v5445
  %v5753 = vsel %vm5738, %v5688, %v5447
  %v5754 = vsel %vm5738, %v5689, %v5449
  %v5755 = vsel %vm5738, %v5690, %v5451
  %v5756 = vsel %vm5738, %v5691, %v5453
  %v5757 = vsel %vm5738, %v5692, %v5455
  %v5758 = vsel %vm5738, %v5693, %v5457
  %v5759 = vsel %vm5738, %v5694, %v5459
  %v5760 = vsel %vm5738, %v5695, %v5461
  %v5761 = vsel %vm5738, %v5696, %v5463
  %v5762 = vsel %vm5738, %v5697, %v5465
  %v5763 = vsel %vm5738, %v5698, %v5467
  %v5764 = vsel %vm5738, %v5699, %v5469
  %v5765 = vsel %vm5738, %v5700, %v5471
  %v5766 = vsel %vm5738, %v5701, %v5473
  %v5767 = vsel %vm5738, %v5702, %v5475
  %v5768 = vsel %vm5738, %v5703, %v5477
  %v5769 = vsel %vm5738, %v5704, %v5479
  %v5770 = vsel %vm5738, %v5705, %v5481
  %v5771 = vsel %vm5738, %v5706, %v5483
  %v5772 = vsel %vm5738, %v5707, %v5485
  %v5773 = vsel %vm5738, %v5708, %v5487
  %v5774 = vsel %vm5738, %v5709, %v5489
  %v5775 = vsel %vm5738, %v5710, %v5491
  %v5776 = vsel %vm5738, %v5711, %v5493
  %v5777 = vsel %vm5738, %v5712, %v5495
  %v5778 = vsel %vm5738, %v5713, %v5497
  %v5779 = vsel %vm5738, %v5714, %v5499
  %v5780 = vsel %vm5738, %v5715, %v5501
  %v5781 = vsel %vm5738, %v5716, %v5503
  %v5782 = vsel %vm5738, %v5717, %v5505
  %v5783 = vsel %vm5738, %v5718, %v5507
  %v5784 = vsel %vm5738, %v5719, %v5509
  %v5785 = vsel %vm5738, %v5720, %v5511
  %v5786 = vsel %vm5738, %v5721, %v5513
  %v5787 = vsel %vm5738, %v5722, %v5515
  %v5788 = vsel %vm5738, %v5723, %v5517
  %v5789 = vsel %vm5738, %v5724, %v5519
  %v5790 = vsel %vm5738, %v5725, %v5521
  %v5791 = vsel %vm5738, %v5726, %v5523
  %v5792 = vsel %vm5738, %v5727, %v5525
  %v5793 = vsel %vm5738, %v5728, %v5527
  %v5794 = vsel %vm5738, %v5729, %v5529
  %v5795 = vsel %vm5738, %v5730, %v5531
  %v5796 = vsel %vm5738, %v5731, %v5533
  %v5797 = vsel %vm5738, %v5732, %v5535
  %v5798 = vsel %vm5738, %v5733, %v5537
  %v5799 = vsel %vm5738, %v5734, %v5539
  %v5800 = vsel %vm5738, %v5735, %v5541
  %v5801 = vsel %vm5738, %v5736, %v5543
  %v5802 = vsel %vm5738, %v5737, %v5545
  %v5803 = vpack.c.bf16 %v5740, %v5739
  %v5804 = vpack.c.bf16 %v5742, %v5741
  %v5805 = vpack.c.bf16 %v5744, %v5743
  %v5806 = vpack.c.bf16 %v5746, %v5745
  %v5807 = vpack.c.bf16 %v5748, %v5747
  %v5808 = vpack.c.bf16 %v5750, %v5749
  %v5809 = vpack.c.bf16 %v5752, %v5751
  %v5810 = vpack.c.bf16 %v5754, %v5753
  %v5811 = vpack.c.bf16 %v5756, %v5755
  %v5812 = vpack.c.bf16 %v5758, %v5757
  %v5813 = vpack.c.bf16 %v5760, %v5759
  %v5814 = vpack.c.bf16 %v5762, %v5761
  %v5815 = vpack.c.bf16 %v5764, %v5763
  %v5816 = vpack.c.bf16 %v5766, %v5765
  %v5817 = vpack.c.bf16 %v5768, %v5767
  %v5818 = vpack.c.bf16 %v5770, %v5769
  %v5819 = vpack.c.bf16 %v5772, %v5771
  %v5820 = vpack.c.bf16 %v5774, %v5773
  %v5821 = vpack.c.bf16 %v5776, %v5775
  %v5822 = vpack.c.bf16 %v5778, %v5777
  %v5823 = vpack.c.bf16 %v5780, %v5779
  %v5824 = vpack.c.bf16 %v5782, %v5781
  %v5825 = vpack.c.bf16 %v5784, %v5783
  %v5826 = vpack.c.bf16 %v5786, %v5785
  %v5827 = vpack.c.bf16 %v5788, %v5787
  %v5828 = vpack.c.bf16 %v5790, %v5789
  %v5829 = vpack.c.bf16 %v5792, %v5791
  %v5830 = vpack.c.bf16 %v5794, %v5793
  %v5831 = vpack.c.bf16 %v5796, %v5795
  %v5832 = vpack.c.bf16 %v5798, %v5797
  %v5833 = vpack.c.bf16 %v5800, %v5799
  %v5834 = vpack.c.bf16 %v5802, %v5801
  %v5835 = vld [vmem:[%s4] sm:$0xf]
  %v5836 = vld [vmem:[%s4 + $0x4] sm:$0xf]
  %v5837 = vld [vmem:[%s4 + $0x8] sm:$0xf]
  %v5838 = vld [vmem:[%s4 + $0xc] sm:$0xf]
  %v5839 = vld [vmem:[%s4 + $0x10] sm:$0xf]
  %v5840 = vld [vmem:[%s4 + $0x14] sm:$0xf]
  %v5841 = vld [vmem:[%s4 + $0x18] sm:$0xf]
  %v5842 = vld [vmem:[%s4 + $0x1c] sm:$0xf]
  %v5843 = vld [vmem:[%s4 + $0x20] sm:$0xf]
  %v5844 = vld [vmem:[%s4 + $0x24] sm:$0xf]
  %v5845 = vld [vmem:[%s4 + $0x28] sm:$0xf]
  %v5846 = vld [vmem:[%s4 + $0x2c] sm:$0xf]
  %v5847 = vld [vmem:[%s4 + $0x30] sm:$0xf]
  %v5848 = vld [vmem:[%s4 + $0x34] sm:$0xf]
  %v5849 = vld [vmem:[%s4 + $0x38] sm:$0xf]
  %v5850 = vld [vmem:[%s4 + $0x3c] sm:$0xf]
  %v5851 = vld [vmem:[%s4426 + $0x1] sm:$0xff]
  %v5852 = vld [vmem:[%s4426 + $0x9] sm:$0xff]
  %v5853 = vld [vmem:[%s4426 + $0x19] sm:$0xff]
  %v5854 = vld [vmem:[%s4426 + $0x21] sm:$0xff]
  %v5855 = vld [vmem:[%s4426 + $0x31] sm:$0xff]
  %v5856 = vld [vmem:[%s4426 + $0x39] sm:$0xff]
  %v5857 = vld [vmem:[%s4426 + $0x49] sm:$0xff]
  %v5858 = vld [vmem:[%s4426 + $0x51] sm:$0xff]
  %v5859 = vld [vmem:[%s4426 + $0x61] sm:$0xff]
  %v5860 = vld [vmem:[%s4426 + $0x69] sm:$0xff]
  %v5861 = vld [vmem:[%s4426 + $0x79] sm:$0xff]
  %v5862 = vld [vmem:[%s4426 + $0x81] sm:$0xff]
  %v5863 = vld [vmem:[%s4426 + $0x91] sm:$0xff]
  %v5864 = vld [vmem:[%s4426 + $0x99] sm:$0xff]
  %v5865 = vld [vmem:[%s4426 + $0xa9] sm:$0xff]
  %v5866 = vld [vmem:[%s4426 + $0xb1] sm:$0xff]
  %v5867 = vld [vmem:[%s4426 + $0xc1] sm:$0xff]
  %v5868 = vld [vmem:[%s4426 + $0xc9] sm:$0xff]
  %v5869 = vld [vmem:[%s4426 + $0xd9] sm:$0xff]
  %v5870 = vld [vmem:[%s4426 + $0xe1] sm:$0xff]
  %v5871 = vld [vmem:[%s4426 + $0xf1] sm:$0xff]
  %v5872 = vld [vmem:[%s4426 + $0xf9] sm:$0xff]
  %v5873 = vld [vmem:[%s4426 + $0x109] sm:$0xff]
  %v5874 = vld [vmem:[%s4426 + $0x111] sm:$0xff]
  %v5875 = vld [vmem:[%s4426 + $0x121] sm:$0xff]
  %v5876 = vld [vmem:[%s4426 + $0x129] sm:$0xff]
  %v5877 = vld [vmem:[%s4426 + $0x139] sm:$0xff]
  %v5878 = vld [vmem:[%s4426 + $0x141] sm:$0xff]
  %v5879 = vld [vmem:[%s4426 + $0x151] sm:$0xff]
  %v5880 = vld [vmem:[%s4426 + $0x159] sm:$0xff]
  %v5881 = vld [vmem:[%s4426 + $0x169] sm:$0xff]
  %v5882 = vld [vmem:[%s4426 + $0x171] sm:$0xff]
  %v5883 = vld [vmem:[%s4426 + $0x1b1] sm:$0xff]
  %v5884 = vld [vmem:[%s4426 + $0x1b9] sm:$0xff]
  %v5885 = vld [vmem:[%s4426 + $0x1c9] sm:$0xff]
  %v5886 = vld [vmem:[%s4426 + $0x1d1] sm:$0xff]
  %v5887 = vld [vmem:[%s4426 + $0x1e1] sm:$0xff]
  %v5888 = vld [vmem:[%s4426 + $0x1e9] sm:$0xff]
  %v5889 = vld [vmem:[%s4426 + $0x1f9] sm:$0xff]
  %v5890 = vld [vmem:[%s4426 + $0x201] sm:$0xff]
  %v5891 = vld [vmem:[%s4426 + $0x211] sm:$0xff]
  %v5892 = vld [vmem:[%s4426 + $0x219] sm:$0xff]
  %v5893 = vld [vmem:[%s4426 + $0x229] sm:$0xff]
  %v5894 = vld [vmem:[%s4426 + $0x231] sm:$0xff]
  %v5895 = vld [vmem:[%s4426 + $0x241] sm:$0xff]
  %v5896 = vld [vmem:[%s4426 + $0x249] sm:$0xff]
  %v5897 = vld [vmem:[%s4426 + $0x259] sm:$0xff]
  %v5898 = vld [vmem:[%s4426 + $0x261] sm:$0xff]
  %v5899 = vld [vmem:[%s4426 + $0x271] sm:$0xff]
  %v5900 = vld [vmem:[%s4426 + $0x279] sm:$0xff]
  %v5901 = vld [vmem:[%s4426 + $0x289] sm:$0xff]
  %v5902 = vld [vmem:[%s4426 + $0x291] sm:$0xff]
  %v5903 = vld [vmem:[%s4426 + $0x2a1] sm:$0xff]
  %v5904 = vld [vmem:[%s4426 + $0x2a9] sm:$0xff]
  %v5905 = vld [vmem:[%s4426 + $0x2b9] sm:$0xff]
  %v5906 = vld [vmem:[%s4426 + $0x2c1] sm:$0xff]
  %v5907 = vld [vmem:[%s4426 + $0x2d1] sm:$0xff]
  %v5908 = vld [vmem:[%s4426 + $0x2d9] sm:$0xff]
  %v5909 = vld [vmem:[%s4426 + $0x2e9] sm:$0xff]
  %v5910 = vld [vmem:[%s4426 + $0x2f1] sm:$0xff]
  %v5911 = vld [vmem:[%s4426 + $0x301] sm:$0xff]
  %v5912 = vld [vmem:[%s4426 + $0x309] sm:$0xff]
  %v5913 = vld [vmem:[%s4426 + $0x319] sm:$0xff]
  %v5914 = vld [vmem:[%s4426 + $0x321] sm:$0xff]
  %v5915 = vld [vmem:[%s4426 + $0x2] sm:$0xff]
  %v5916 = vld [vmem:[%s4426 + $0xa] sm:$0xff]
  %v5917 = vld [vmem:[%s4426 + $0x1a] sm:$0xff]
  %v5918 = vld [vmem:[%s4426 + $0x22] sm:$0xff]
  %v5919 = vld [vmem:[%s4426 + $0x32] sm:$0xff]
  %v5920 = vld [vmem:[%s4426 + $0x3a] sm:$0xff]
  %v5921 = vld [vmem:[%s4426 + $0x4a] sm:$0xff]
  %v5922 = vld [vmem:[%s4426 + $0x52] sm:$0xff]
  %v5923 = vld [vmem:[%s4426 + $0x62] sm:$0xff]
  %v5924 = vld [vmem:[%s4426 + $0x6a] sm:$0xff]
  %v5925 = vld [vmem:[%s4426 + $0x7a] sm:$0xff]
  %v5926 = vld [vmem:[%s4426 + $0x82] sm:$0xff]
  %v5927 = vld [vmem:[%s4426 + $0x92] sm:$0xff]
  %v5928 = vld [vmem:[%s4426 + $0x9a] sm:$0xff]
  %v5929 = vld [vmem:[%s4426 + $0xaa] sm:$0xff]
  %v5930 = vld [vmem:[%s4426 + $0xb2] sm:$0xff]
  %v5931 = vld [vmem:[%s4426 + $0xc2] sm:$0xff]
  %v5932 = vld [vmem:[%s4426 + $0xca] sm:$0xff]
  %v5933 = vld [vmem:[%s4426 + $0xda] sm:$0xff]
  %v5934 = vld [vmem:[%s4426 + $0xe2] sm:$0xff]
  %v5935 = vld [vmem:[%s4426 + $0xf2] sm:$0xff]
  %v5936 = vld [vmem:[%s4426 + $0xfa] sm:$0xff]
  %v5937 = vld [vmem:[%s4426 + $0x10a] sm:$0xff]
  %v5938 = vld [vmem:[%s4426 + $0x112] sm:$0xff]
  %v5939 = vld [vmem:[%s4426 + $0x122] sm:$0xff]
  %v5940 = vld [vmem:[%s4426 + $0x12a] sm:$0xff]
  %v5941 = vld [vmem:[%s4426 + $0x13a] sm:$0xff]
  %v5942 = vld [vmem:[%s4426 + $0x142] sm:$0xff]
  %v5943 = vld [vmem:[%s4426 + $0x152] sm:$0xff]
  %v5944 = vld [vmem:[%s4426 + $0x15a] sm:$0xff]
  %v5945 = vld [vmem:[%s4426 + $0x16a] sm:$0xff]
  %v5946 = vld [vmem:[%s4426 + $0x172] sm:$0xff]
  %v5947 = vld [vmem:[%s4426 + $0x1b2] sm:$0xff]
  %v5948 = vld [vmem:[%s4426 + $0x1ba] sm:$0xff]
  %v5949 = vld [vmem:[%s4426 + $0x1ca] sm:$0xff]
  %v5950 = vld [vmem:[%s4426 + $0x1d2] sm:$0xff]
  %v5951 = vld [vmem:[%s4426 + $0x1e2] sm:$0xff]
  %v5952 = vld [vmem:[%s4426 + $0x1ea] sm:$0xff]
  %v5953 = vld [vmem:[%s4426 + $0x1fa] sm:$0xff]
  %v5954 = vld [vmem:[%s4426 + $0x202] sm:$0xff]
  %v5955 = vld [vmem:[%s4426 + $0x212] sm:$0xff]
  %v5956 = vld [vmem:[%s4426 + $0x21a] sm:$0xff]
  %v5957 = vld [vmem:[%s4426 + $0x22a] sm:$0xff]
  %v5958 = vld [vmem:[%s4426 + $0x232] sm:$0xff]
  %v5959 = vld [vmem:[%s4426 + $0x242] sm:$0xff]
  %v5960 = vld [vmem:[%s4426 + $0x24a] sm:$0xff]
  %v5961 = vld [vmem:[%s4426 + $0x25a] sm:$0xff]
  %v5962 = vld [vmem:[%s4426 + $0x262] sm:$0xff]
  %v5963 = vld [vmem:[%s4426 + $0x272] sm:$0xff]
  %v5964 = vld [vmem:[%s4426 + $0x27a] sm:$0xff]
  %v5965 = vld [vmem:[%s4426 + $0x28a] sm:$0xff]
  %v5966 = vld [vmem:[%s4426 + $0x292] sm:$0xff]
  %v5967 = vld [vmem:[%s4426 + $0x2a2] sm:$0xff]
  %v5968 = vld [vmem:[%s4426 + $0x2aa] sm:$0xff]
  %v5969 = vld [vmem:[%s4426 + $0x2ba] sm:$0xff]
  %v5970 = vld [vmem:[%s4426 + $0x2c2] sm:$0xff]
  %v5971 = vld [vmem:[%s4426 + $0x2d2] sm:$0xff]
  %v5972 = vld [vmem:[%s4426 + $0x2da] sm:$0xff]
  %v5973 = vld [vmem:[%s4426 + $0x2ea] sm:$0xff]
  %v5974 = vld [vmem:[%s4426 + $0x2f2] sm:$0xff]
  %v5975 = vld [vmem:[%s4426 + $0x302] sm:$0xff]
  %v5976 = vld [vmem:[%s4426 + $0x30a] sm:$0xff]
  %v5977 = vld [vmem:[%s4426 + $0x31a] sm:$0xff]
  %v5978 = vld [vmem:[%s4426 + $0x322] sm:$0xff]
  %v5979 = vld [vmem:[%s4558] sm:$0xff]
  %v5980 = vld [vmem:[%s4558 + $0x8] sm:$0xff]
  %v5981 = vld [vmem:[%s4558 + $0x18] sm:$0xff]
  %v5982 = vld [vmem:[%s4558 + $0x20] sm:$0xff]
  %v5983 = vld [vmem:[%s4558 + $0x30] sm:$0xff]
  %v5984 = vld [vmem:[%s4558 + $0x38] sm:$0xff]
  %v5985 = vld [vmem:[%s4558 + $0x48] sm:$0xff]
  %v5986 = vld [vmem:[%s4558 + $0x50] sm:$0xff]
  %v5987 = vld [vmem:[%s4558 + $0x60] sm:$0xff]
  %v5988 = vld [vmem:[%s4558 + $0x68] sm:$0xff]
  %v5989 = vld [vmem:[%s4558 + $0x78] sm:$0xff]
  %v5990 = vld [vmem:[%s4558 + $0x80] sm:$0xff]
  %v5991 = vld [vmem:[%s4558 + $0x90] sm:$0xff]
  %v5992 = vld [vmem:[%s4558 + $0x98] sm:$0xff]
  %v5993 = vld [vmem:[%s4558 + $0xa8] sm:$0xff]
  %v5994 = vld [vmem:[%s4558 + $0xb0] sm:$0xff]
  %v5995 = vld [vmem:[%s4558 + $0xc0] sm:$0xff]
  %v5996 = vld [vmem:[%s4558 + $0xc8] sm:$0xff]
  %v5997 = vld [vmem:[%s4558 + $0xd8] sm:$0xff]
  %v5998 = vld [vmem:[%s4558 + $0xe0] sm:$0xff]
  %v5999 = vld [vmem:[%s4558 + $0xf0] sm:$0xff]
  %v6000 = vld [vmem:[%s4558 + $0xf8] sm:$0xff]
  %v6001 = vld [vmem:[%s4558 + $0x108] sm:$0xff]
  %v6002 = vld [vmem:[%s4558 + $0x110] sm:$0xff]
  %v6003 = vld [vmem:[%s4558 + $0x120] sm:$0xff]
  %v6004 = vld [vmem:[%s4558 + $0x128] sm:$0xff]
  %v6005 = vld [vmem:[%s4558 + $0x138] sm:$0xff]
  %v6006 = vld [vmem:[%s4558 + $0x140] sm:$0xff]
  %v6007 = vld [vmem:[%s4558 + $0x150] sm:$0xff]
  %v6008 = vld [vmem:[%s4558 + $0x158] sm:$0xff]
  %v6009 = vld [vmem:[%s4558 + $0x168] sm:$0xff]
  %v6010 = vld [vmem:[%s4558 + $0x170] sm:$0xff]
  %v6011 = vld [vmem:[%s4558 + $0x1b0] sm:$0xff]
  %v6012 = vld [vmem:[%s4558 + $0x1b8] sm:$0xff]
  %v6013 = vld [vmem:[%s4558 + $0x1c8] sm:$0xff]
  %v6014 = vld [vmem:[%s4558 + $0x1d0] sm:$0xff]
  %v6015 = vld [vmem:[%s4558 + $0x1e0] sm:$0xff]
  %v6016 = vld [vmem:[%s4558 + $0x1e8] sm:$0xff]
  %v6017 = vld [vmem:[%s4558 + $0x1f8] sm:$0xff]
  %v6018 = vld [vmem:[%s4558 + $0x200] sm:$0xff]
  %v6019 = vld [vmem:[%s4558 + $0x210] sm:$0xff]
  %v6020 = vld [vmem:[%s4558 + $0x218] sm:$0xff]
  %v6021 = vld [vmem:[%s4558 + $0x228] sm:$0xff]
  %v6022 = vld [vmem:[%s4558 + $0x230] sm:$0xff]
  %v6023 = vld [vmem:[%s4558 + $0x240] sm:$0xff]
  %v6024 = vld [vmem:[%s4558 + $0x248] sm:$0xff]
  %v6025 = vld [vmem:[%s4558 + $0x258] sm:$0xff]
  %v6026 = vld [vmem:[%s4558 + $0x260] sm:$0xff]
  %v6027 = vld [vmem:[%s4558 + $0x270] sm:$0xff]
  %v6028 = vld [vmem:[%s4558 + $0x278] sm:$0xff]
  %v6029 = vld [vmem:[%s4558 + $0x288] sm:$0xff]
  %v6030 = vld [vmem:[%s4558 + $0x290] sm:$0xff]
  %v6031 = vld [vmem:[%s4558 + $0x2a0] sm:$0xff]
  %v6032 = vld [vmem:[%s4558 + $0x2a8] sm:$0xff]
  %v6033 = vld [vmem:[%s4558 + $0x2b8] sm:$0xff]
  %v6034 = vld [vmem:[%s4558 + $0x2c0] sm:$0xff]
  %v6035 = vld [vmem:[%s4558 + $0x2d0] sm:$0xff]
  %v6036 = vld [vmem:[%s4558 + $0x2d8] sm:$0xff]
  %v6037 = vld [vmem:[%s4558 + $0x2e8] sm:$0xff]
  %v6038 = vld [vmem:[%s4558 + $0x2f0] sm:$0xff]
  %v6039 = vld [vmem:[%s4558 + $0x300] sm:$0xff]
  %v6040 = vld [vmem:[%s4558 + $0x308] sm:$0xff]
  %v6041 = vld [vmem:[%s4558 + $0x318] sm:$0xff]
  %v6042 = vld [vmem:[%s4558 + $0x320] sm:$0xff]
  %v6043 = vld [vmem:[%s4558 + $0x1] sm:$0xff]
  %v6044 = vld [vmem:[%s4558 + $0x9] sm:$0xff]
  %v6045 = vld [vmem:[%s4558 + $0x19] sm:$0xff]
  %v6046 = vld [vmem:[%s4558 + $0x21] sm:$0xff]
  %v6047 = vld [vmem:[%s4558 + $0x31] sm:$0xff]
  %v6048 = vld [vmem:[%s4558 + $0x39] sm:$0xff]
  %v6049 = vld [vmem:[%s4558 + $0x49] sm:$0xff]
  %v6050 = vld [vmem:[%s4558 + $0x51] sm:$0xff]
  %v6051 = vld [vmem:[%s4558 + $0x61] sm:$0xff]
  %v6052 = vld [vmem:[%s4558 + $0x69] sm:$0xff]
  %v6053 = vld [vmem:[%s4558 + $0x79] sm:$0xff]
  %v6054 = vld [vmem:[%s4558 + $0x81] sm:$0xff]
  %v6055 = vld [vmem:[%s4558 + $0x91] sm:$0xff]
  %v6056 = vld [vmem:[%s4558 + $0x99] sm:$0xff]
  %v6057 = vld [vmem:[%s4558 + $0xa9] sm:$0xff]
  %v6058 = vld [vmem:[%s4558 + $0xb1] sm:$0xff]
  %v6059 = vld [vmem:[%s4558 + $0xc1] sm:$0xff]
  %v6060 = vld [vmem:[%s4558 + $0xc9] sm:$0xff]
  %v6061 = vld [vmem:[%s4558 + $0xd9] sm:$0xff]
  %v6062 = vld [vmem:[%s4558 + $0xe1] sm:$0xff]
  %v6063 = vld [vmem:[%s4558 + $0xf1] sm:$0xff]
  %v6064 = vld [vmem:[%s4558 + $0xf9] sm:$0xff]
  %v6065 = vld [vmem:[%s4558 + $0x109] sm:$0xff]
  %v6066 = vld [vmem:[%s4558 + $0x111] sm:$0xff]
  %v6067 = vld [vmem:[%s4558 + $0x121] sm:$0xff]
  %v6068 = vld [vmem:[%s4558 + $0x129] sm:$0xff]
  %v6069 = vld [vmem:[%s4558 + $0x139] sm:$0xff]
  %v6070 = vld [vmem:[%s4558 + $0x141] sm:$0xff]
  %v6071 = vld [vmem:[%s4558 + $0x151] sm:$0xff]
  %v6072 = vld [vmem:[%s4558 + $0x159] sm:$0xff]
  %v6073 = vld [vmem:[%s4558 + $0x169] sm:$0xff]
  %v6074 = vld [vmem:[%s4558 + $0x171] sm:$0xff]
  %v6075 = vld [vmem:[%s4558 + $0x1b1] sm:$0xff]
  %v6076 = vld [vmem:[%s4558 + $0x1b9] sm:$0xff]
  %v6077 = vld [vmem:[%s4558 + $0x1c9] sm:$0xff]
  %v6078 = vld [vmem:[%s4558 + $0x1d1] sm:$0xff]
  %v6079 = vld [vmem:[%s4558 + $0x1e1] sm:$0xff]
  %v6080 = vld [vmem:[%s4558 + $0x1e9] sm:$0xff]
  %v6081 = vld [vmem:[%s4558 + $0x1f9] sm:$0xff]
  %v6082 = vld [vmem:[%s4558 + $0x201] sm:$0xff]
  %v6083 = vld [vmem:[%s4558 + $0x211] sm:$0xff]
  %v6084 = vld [vmem:[%s4558 + $0x219] sm:$0xff]
  %v6085 = vld [vmem:[%s4558 + $0x229] sm:$0xff]
  %v6086 = vld [vmem:[%s4558 + $0x231] sm:$0xff]
  %v6087 = vld [vmem:[%s4558 + $0x241] sm:$0xff]
  %v6088 = vld [vmem:[%s4558 + $0x249] sm:$0xff]
  %v6089 = vld [vmem:[%s4558 + $0x259] sm:$0xff]
  %v6090 = vld [vmem:[%s4558 + $0x261] sm:$0xff]
  %v6091 = vld [vmem:[%s4558 + $0x271] sm:$0xff]
  %v6092 = vld [vmem:[%s4558 + $0x279] sm:$0xff]
  %v6093 = vld [vmem:[%s4558 + $0x289] sm:$0xff]
  %v6094 = vld [vmem:[%s4558 + $0x291] sm:$0xff]
  %v6095 = vld [vmem:[%s4558 + $0x2a1] sm:$0xff]
  %v6096 = vld [vmem:[%s4558 + $0x2a9] sm:$0xff]
  %v6097 = vld [vmem:[%s4558 + $0x2b9] sm:$0xff]
  %v6098 = vld [vmem:[%s4558 + $0x2c1] sm:$0xff]
  %v6099 = vld [vmem:[%s4558 + $0x2d1] sm:$0xff]
  %v6100 = vld [vmem:[%s4558 + $0x2d9] sm:$0xff]
  %v6101 = vld [vmem:[%s4558 + $0x2e9] sm:$0xff]
  %v6102 = vld [vmem:[%s4558 + $0x2f1] sm:$0xff]
  %v6103 = vld [vmem:[%s4558 + $0x301] sm:$0xff]
  %v6104 = vld [vmem:[%s4558 + $0x309] sm:$0xff]
  %v6105 = vld [vmem:[%s4558 + $0x319] sm:$0xff]
  %v6106 = vld [vmem:[%s4558 + $0x321] sm:$0xff]
  %6171 = vrot.lane.b32.xlu0 %v5915, 32
  %v6172 = vpop.permute.xlu0 %6171
  %6173 = vrot.lane.b32.xlu0 %v5916, 32
  %v6174 = vpop.permute.xlu0 %6173
  %6175 = vrot.lane.b32.xlu0 %v5917, 32
  %v6176 = vpop.permute.xlu0 %6175
  %6177 = vrot.lane.b32.xlu0 %v5918, 32
  %v6178 = vpop.permute.xlu0 %6177
  %6179 = vrot.lane.b32.xlu0 %v5919, 32
  %v6180 = vpop.permute.xlu0 %6179
  %6181 = vrot.lane.b32.xlu0 %v5920, 32
  %v6182 = vpop.permute.xlu0 %6181
  %6183 = vrot.lane.b32.xlu0 %v5921, 32
  %v6184 = vpop.permute.xlu0 %6183
  %6185 = vrot.lane.b32.xlu0 %v5922, 32
  %v6186 = vpop.permute.xlu0 %6185
  %6187 = vrot.lane.b32.xlu0 %v5923, 32
  %v6188 = vpop.permute.xlu0 %6187
  %6189 = vrot.lane.b32.xlu0 %v5924, 32
  %v6190 = vpop.permute.xlu0 %6189
  %6191 = vrot.lane.b32.xlu0 %v5925, 32
  %v6192 = vpop.permute.xlu0 %6191
  %6193 = vrot.lane.b32.xlu0 %v5926, 32
  %v6194 = vpop.permute.xlu0 %6193
  %6195 = vrot.lane.b32.xlu0 %v5927, 32
  %v6196 = vpop.permute.xlu0 %6195
  %6197 = vrot.lane.b32.xlu0 %v5928, 32
  %v6198 = vpop.permute.xlu0 %6197
  %6199 = vrot.lane.b32.xlu0 %v5929, 32
  %v6200 = vpop.permute.xlu0 %6199
  %6201 = vrot.lane.b32.xlu0 %v5930, 32
  %v6202 = vpop.permute.xlu0 %6201
  %6203 = vrot.lane.b32.xlu0 %v5931, 32
  %v6204 = vpop.permute.xlu0 %6203
  %6205 = vrot.lane.b32.xlu0 %v5932, 32
  %v6206 = vpop.permute.xlu0 %6205
  %6207 = vrot.lane.b32.xlu0 %v5933, 32
  %v6208 = vpop.permute.xlu0 %6207
  %6209 = vrot.lane.b32.xlu0 %v5934, 32
  %v6210 = vpop.permute.xlu0 %6209
  %6211 = vrot.lane.b32.xlu0 %v5935, 32
  %v6212 = vpop.permute.xlu0 %6211
  %6213 = vrot.lane.b32.xlu0 %v5936, 32
  %v6214 = vpop.permute.xlu0 %6213
  %6215 = vrot.lane.b32.xlu0 %v5937, 32
  %v6216 = vpop.permute.xlu0 %6215
  %6217 = vrot.lane.b32.xlu0 %v5938, 32
  %v6218 = vpop.permute.xlu0 %6217
  %6219 = vrot.lane.b32.xlu0 %v5939, 32
  %v6220 = vpop.permute.xlu0 %6219
  %6221 = vrot.lane.b32.xlu0 %v5940, 32
  %v6222 = vpop.permute.xlu0 %6221
  %6223 = vrot.lane.b32.xlu0 %v5941, 32
  %v6224 = vpop.permute.xlu0 %6223
  %6225 = vrot.lane.b32.xlu0 %v5942, 32
  %v6226 = vpop.permute.xlu0 %6225
  %6227 = vrot.lane.b32.xlu0 %v5943, 32
  %v6228 = vpop.permute.xlu0 %6227
  %6229 = vrot.lane.b32.xlu0 %v5944, 32
  %v6230 = vpop.permute.xlu0 %6229
  %6231 = vrot.lane.b32.xlu0 %v5945, 32
  %v6232 = vpop.permute.xlu0 %6231
  %6233 = vrot.lane.b32.xlu0 %v5946, 32
  %v6234 = vpop.permute.xlu0 %6233
  %6235 = vrot.lane.b32.xlu0 %v5947, 32
  %v6236 = vpop.permute.xlu0 %6235
  %6237 = vrot.lane.b32.xlu0 %v5948, 32
  %v6238 = vpop.permute.xlu0 %6237
  %6239 = vrot.lane.b32.xlu0 %v5949, 32
  %v6240 = vpop.permute.xlu0 %6239
  %6241 = vrot.lane.b32.xlu0 %v5950, 32
  %v6242 = vpop.permute.xlu0 %6241
  %6243 = vrot.lane.b32.xlu0 %v5951, 32
  %v6244 = vpop.permute.xlu0 %6243
  %6245 = vrot.lane.b32.xlu0 %v5952, 32
  %v6246 = vpop.permute.xlu0 %6245
  %6247 = vrot.lane.b32.xlu0 %v5953, 32
  %v6248 = vpop.permute.xlu0 %6247
  %6249 = vrot.lane.b32.xlu0 %v5954, 32
  %v6250 = vpop.permute.xlu0 %6249
  %6251 = vrot.lane.b32.xlu0 %v5955, 32
  %v6252 = vpop.permute.xlu0 %6251
  %6253 = vrot.lane.b32.xlu0 %v5956, 32
  %v6254 = vpop.permute.xlu0 %6253
  %6255 = vrot.lane.b32.xlu0 %v5957, 32
  %v6256 = vpop.permute.xlu0 %6255
  %6257 = vrot.lane.b32.xlu0 %v5958, 32
  %v6258 = vpop.permute.xlu0 %6257
  %6259 = vrot.lane.b32.xlu0 %v5959, 32
  %v6260 = vpop.permute.xlu0 %6259
  %6261 = vrot.lane.b32.xlu0 %v5960, 32
  %v6262 = vpop.permute.xlu0 %6261
  %6263 = vrot.lane.b32.xlu0 %v5961, 32
  %v6264 = vpop.permute.xlu0 %6263
  %6265 = vrot.lane.b32.xlu0 %v5962, 32
  %v6266 = vpop.permute.xlu0 %6265
  %6267 = vrot.lane.b32.xlu0 %v5963, 32
  %v6268 = vpop.permute.xlu0 %6267
  %6269 = vrot.lane.b32.xlu0 %v5964, 32
  %v6270 = vpop.permute.xlu0 %6269
  %6271 = vrot.lane.b32.xlu0 %v5965, 32
  %v6272 = vpop.permute.xlu0 %6271
  %6273 = vrot.lane.b32.xlu0 %v5966, 32
  %v6274 = vpop.permute.xlu0 %6273
  %6275 = vrot.lane.b32.xlu0 %v5967, 32
  %v6276 = vpop.permute.xlu0 %6275
  %6277 = vrot.lane.b32.xlu0 %v5968, 32
  %v6278 = vpop.permute.xlu0 %6277
  %6279 = vrot.lane.b32.xlu0 %v5969, 32
  %v6280 = vpop.permute.xlu0 %6279
  %6281 = vrot.lane.b32.xlu0 %v5970, 32
  %v6282 = vpop.permute.xlu0 %6281
  %6283 = vrot.lane.b32.xlu0 %v5971, 32
  %v6284 = vpop.permute.xlu0 %6283
  %6285 = vrot.lane.b32.xlu0 %v5972, 32
  %v6286 = vpop.permute.xlu0 %6285
  %6287 = vrot.lane.b32.xlu0 %v5973, 32
  %v6288 = vpop.permute.xlu0 %6287
  %6289 = vrot.lane.b32.xlu0 %v5974, 32
  %v6290 = vpop.permute.xlu0 %6289
  %6291 = vrot.lane.b32.xlu0 %v5975, 32
  %v6292 = vpop.permute.xlu0 %6291
  %6293 = vrot.lane.b32.xlu0 %v5976, 32
  %v6294 = vpop.permute.xlu0 %6293
  %6295 = vrot.lane.b32.xlu0 %v5977, 32
  %v6296 = vpop.permute.xlu0 %6295
  %6297 = vrot.lane.b32.xlu0 %v5978, 32
  %v6298 = vpop.permute.xlu0 %6297
  %6427 = vrot.lane.b32.xlu0 %v5979, 64
  %v6428 = vpop.permute.xlu0 %6427
  %6429 = vrot.lane.b32.xlu0 %v5980, 64
  %v6430 = vpop.permute.xlu0 %6429
  %6431 = vrot.lane.b32.xlu0 %v5981, 64
  %v6432 = vpop.permute.xlu0 %6431
  %6433 = vrot.lane.b32.xlu0 %v5982, 64
  %v6434 = vpop.permute.xlu0 %6433
  %6435 = vrot.lane.b32.xlu0 %v5983, 64
  %v6436 = vpop.permute.xlu0 %6435
  %6437 = vrot.lane.b32.xlu0 %v5984, 64
  %v6438 = vpop.permute.xlu0 %6437
  %6439 = vrot.lane.b32.xlu0 %v5985, 64
  %v6440 = vpop.permute.xlu0 %6439
  %6441 = vrot.lane.b32.xlu0 %v5986, 64
  %v6442 = vpop.permute.xlu0 %6441
  %6443 = vrot.lane.b32.xlu0 %v5987, 64
  %v6444 = vpop.permute.xlu0 %6443
  %6445 = vrot.lane.b32.xlu0 %v5988, 64
  %v6446 = vpop.permute.xlu0 %6445
  %6447 = vrot.lane.b32.xlu0 %v5989, 64
  %v6448 = vpop.permute.xlu0 %6447
  %6449 = vrot.lane.b32.xlu0 %v5990, 64
  %v6450 = vpop.permute.xlu0 %6449
  %6451 = vrot.lane.b32.xlu0 %v5991, 64
  %v6452 = vpop.permute.xlu0 %6451
  %6453 = vrot.lane.b32.xlu0 %v5992, 64
  %v6454 = vpop.permute.xlu0 %6453
  %6455 = vrot.lane.b32.xlu0 %v5993, 64
  %v6456 = vpop.permute.xlu0 %6455
  %6457 = vrot.lane.b32.xlu0 %v5994, 64
  %v6458 = vpop.permute.xlu0 %6457
  %6459 = vrot.lane.b32.xlu0 %v5995, 64
  %v6460 = vpop.permute.xlu0 %6459
  %6461 = vrot.lane.b32.xlu0 %v5996, 64
  %v6462 = vpop.permute.xlu0 %6461
  %6463 = vrot.lane.b32.xlu0 %v5997, 64
  %v6464 = vpop.permute.xlu0 %6463
  %6465 = vrot.lane.b32.xlu0 %v5998, 64
  %v6466 = vpop.permute.xlu0 %6465
  %6467 = vrot.lane.b32.xlu0 %v5999, 64
  %v6468 = vpop.permute.xlu0 %6467
  %6469 = vrot.lane.b32.xlu0 %v6000, 64
  %v6470 = vpop.permute.xlu0 %6469
  %6471 = vrot.lane.b32.xlu0 %v6001, 64
  %v6472 = vpop.permute.xlu0 %6471
  %6473 = vrot.lane.b32.xlu0 %v6002, 64
  %v6474 = vpop.permute.xlu0 %6473
  %6475 = vrot.lane.b32.xlu0 %v6003, 64
  %v6476 = vpop.permute.xlu0 %6475
  %6477 = vrot.lane.b32.xlu0 %v6004, 64
  %v6478 = vpop.permute.xlu0 %6477
  %6479 = vrot.lane.b32.xlu0 %v6005, 64
  %v6480 = vpop.permute.xlu0 %6479
  %6481 = vrot.lane.b32.xlu0 %v6006, 64
  %v6482 = vpop.permute.xlu0 %6481
  %6483 = vrot.lane.b32.xlu0 %v6007, 64
  %v6484 = vpop.permute.xlu0 %6483
  %6485 = vrot.lane.b32.xlu0 %v6008, 64
  %v6486 = vpop.permute.xlu0 %6485
  %6487 = vrot.lane.b32.xlu0 %v6009, 64
  %v6488 = vpop.permute.xlu0 %6487
  %6489 = vrot.lane.b32.xlu0 %v6010, 64
  %v6490 = vpop.permute.xlu0 %6489
  %6491 = vrot.lane.b32.xlu0 %v6011, 64
  %v6492 = vpop.permute.xlu0 %6491
  %6493 = vrot.lane.b32.xlu0 %v6012, 64
  %v6494 = vpop.permute.xlu0 %6493
  %6495 = vrot.lane.b32.xlu0 %v6013, 64
  %v6496 = vpop.permute.xlu0 %6495
  %6497 = vrot.lane.b32.xlu0 %v6014, 64
  %v6498 = vpop.permute.xlu0 %6497
  %6499 = vrot.lane.b32.xlu0 %v6015, 64
  %v6500 = vpop.permute.xlu0 %6499
  %6501 = vrot.lane.b32.xlu0 %v6016, 64
  %v6502 = vpop.permute.xlu0 %6501
  %6503 = vrot.lane.b32.xlu0 %v6017, 64
  %v6504 = vpop.permute.xlu0 %6503
  %6505 = vrot.lane.b32.xlu0 %v6018, 64
  %v6506 = vpop.permute.xlu0 %6505
  %6507 = vrot.lane.b32.xlu0 %v6019, 64
  %v6508 = vpop.permute.xlu0 %6507
  %6509 = vrot.lane.b32.xlu0 %v6020, 64
  %v6510 = vpop.permute.xlu0 %6509
  %6511 = vrot.lane.b32.xlu0 %v6021, 64
  %v6512 = vpop.permute.xlu0 %6511
  %6513 = vrot.lane.b32.xlu0 %v6022, 64
  %v6514 = vpop.permute.xlu0 %6513
  %6515 = vrot.lane.b32.xlu0 %v6023, 64
  %v6516 = vpop.permute.xlu0 %6515
  %6517 = vrot.lane.b32.xlu0 %v6024, 64
  %v6518 = vpop.permute.xlu0 %6517
  %6519 = vrot.lane.b32.xlu0 %v6025, 64
  %v6520 = vpop.permute.xlu0 %6519
  %6521 = vrot.lane.b32.xlu0 %v6026, 64
  %v6522 = vpop.permute.xlu0 %6521
  %6523 = vrot.lane.b32.xlu0 %v6027, 64
  %v6524 = vpop.permute.xlu0 %6523
  %6525 = vrot.lane.b32.xlu0 %v6028, 64
  %v6526 = vpop.permute.xlu0 %6525
  %6527 = vrot.lane.b32.xlu0 %v6029, 64
  %v6528 = vpop.permute.xlu0 %6527
  %6529 = vrot.lane.b32.xlu0 %v6030, 64
  %v6530 = vpop.permute.xlu0 %6529
  %6531 = vrot.lane.b32.xlu0 %v6031, 64
  %v6532 = vpop.permute.xlu0 %6531
  %6533 = vrot.lane.b32.xlu0 %v6032, 64
  %v6534 = vpop.permute.xlu0 %6533
  %6535 = vrot.lane.b32.xlu0 %v6033, 64
  %v6536 = vpop.permute.xlu0 %6535
  %6537 = vrot.lane.b32.xlu0 %v6034, 64
  %v6538 = vpop.permute.xlu0 %6537
  %6539 = vrot.lane.b32.xlu0 %v6035, 64
  %v6540 = vpop.permute.xlu0 %6539
  %6541 = vrot.lane.b32.xlu0 %v6036, 64
  %v6542 = vpop.permute.xlu0 %6541
  %6543 = vrot.lane.b32.xlu0 %v6037, 64
  %v6544 = vpop.permute.xlu0 %6543
  %6545 = vrot.lane.b32.xlu0 %v6038, 64
  %v6546 = vpop.permute.xlu0 %6545
  %6547 = vrot.lane.b32.xlu0 %v6039, 64
  %v6548 = vpop.permute.xlu0 %6547
  %6549 = vrot.lane.b32.xlu0 %v6040, 64
  %v6550 = vpop.permute.xlu0 %6549
  %6551 = vrot.lane.b32.xlu0 %v6041, 64
  %v6552 = vpop.permute.xlu0 %6551
  %6553 = vrot.lane.b32.xlu0 %v6042, 64
  %v6554 = vpop.permute.xlu0 %6553
  %6683 = vrot.lane.b32.xlu0 %v6043, 96
  %v6684 = vpop.permute.xlu0 %6683
  %6685 = vrot.lane.b32.xlu0 %v6044, 96
  %v6686 = vpop.permute.xlu0 %6685
  %6687 = vrot.lane.b32.xlu0 %v6045, 96
  %v6688 = vpop.permute.xlu0 %6687
  %6689 = vrot.lane.b32.xlu0 %v6046, 96
  %v6690 = vpop.permute.xlu0 %6689
  %6691 = vrot.lane.b32.xlu0 %v6047, 96
  %v6692 = vpop.permute.xlu0 %6691
  %6693 = vrot.lane.b32.xlu0 %v6048, 96
  %v6694 = vpop.permute.xlu0 %6693
  %6695 = vrot.lane.b32.xlu0 %v6049, 96
  %v6696 = vpop.permute.xlu0 %6695
  %6697 = vrot.lane.b32.xlu0 %v6050, 96
  %v6698 = vpop.permute.xlu0 %6697
  %6699 = vrot.lane.b32.xlu0 %v6051, 96
  %v6700 = vpop.permute.xlu0 %6699
  %6701 = vrot.lane.b32.xlu0 %v6052, 96
  %v6702 = vpop.permute.xlu0 %6701
  %6703 = vrot.lane.b32.xlu0 %v6053, 96
  %v6704 = vpop.permute.xlu0 %6703
  %6705 = vrot.lane.b32.xlu0 %v6054, 96
  %v6706 = vpop.permute.xlu0 %6705
  %6707 = vrot.lane.b32.xlu0 %v6055, 96
  %v6708 = vpop.permute.xlu0 %6707
  %6709 = vrot.lane.b32.xlu0 %v6056, 96
  %v6710 = vpop.permute.xlu0 %6709
  %6711 = vrot.lane.b32.xlu0 %v6057, 96
  %v6712 = vpop.permute.xlu0 %6711
  %6713 = vrot.lane.b32.xlu0 %v6058, 96
  %v6714 = vpop.permute.xlu0 %6713
  %6715 = vrot.lane.b32.xlu0 %v6059, 96
  %v6716 = vpop.permute.xlu0 %6715
  %6717 = vrot.lane.b32.xlu0 %v6060, 96
  %v6718 = vpop.permute.xlu0 %6717
  %6719 = vrot.lane.b32.xlu0 %v6061, 96
  %v6720 = vpop.permute.xlu0 %6719
  %6721 = vrot.lane.b32.xlu0 %v6062, 96
  %v6722 = vpop.permute.xlu0 %6721
  %6723 = vrot.lane.b32.xlu0 %v6063, 96
  %v6724 = vpop.permute.xlu0 %6723
  %6725 = vrot.lane.b32.xlu0 %v6064, 96
  %v6726 = vpop.permute.xlu0 %6725
  %6727 = vrot.lane.b32.xlu0 %v6065, 96
  %v6728 = vpop.permute.xlu0 %6727
  %6729 = vrot.lane.b32.xlu0 %v6066, 96
  %v6730 = vpop.permute.xlu0 %6729
  %6731 = vrot.lane.b32.xlu0 %v6067, 96
  %v6732 = vpop.permute.xlu0 %6731
  %6733 = vrot.lane.b32.xlu0 %v6068, 96
  %v6734 = vpop.permute.xlu0 %6733
  %6735 = vrot.lane.b32.xlu0 %v6069, 96
  %v6736 = vpop.permute.xlu0 %6735
  %6737 = vrot.lane.b32.xlu0 %v6070, 96
  %v6738 = vpop.permute.xlu0 %6737
  %6739 = vrot.lane.b32.xlu0 %v6071, 96
  %v6740 = vpop.permute.xlu0 %6739
  %6741 = vrot.lane.b32.xlu0 %v6072, 96
  %v6742 = vpop.permute.xlu0 %6741
  %6743 = vrot.lane.b32.xlu0 %v6073, 96
  %v6744 = vpop.permute.xlu0 %6743
  %6745 = vrot.lane.b32.xlu0 %v6074, 96
  %v6746 = vpop.permute.xlu0 %6745
  %6747 = vrot.lane.b32.xlu0 %v6075, 96
  %v6748 = vpop.permute.xlu0 %6747
  %6749 = vrot.lane.b32.xlu0 %v6076, 96
  %v6750 = vpop.permute.xlu0 %6749
  %6751 = vrot.lane.b32.xlu0 %v6077, 96
  %v6752 = vpop.permute.xlu0 %6751
  %6753 = vrot.lane.b32.xlu0 %v6078, 96
  %v6754 = vpop.permute.xlu0 %6753
  %6755 = vrot.lane.b32.xlu0 %v6079, 96
  %v6756 = vpop.permute.xlu0 %6755
  %6757 = vrot.lane.b32.xlu0 %v6080, 96
  %v6758 = vpop.permute.xlu0 %6757
  %6759 = vrot.lane.b32.xlu0 %v6081, 96
  %v6760 = vpop.permute.xlu0 %6759
  %6761 = vrot.lane.b32.xlu0 %v6082, 96
  %v6762 = vpop.permute.xlu0 %6761
  %6763 = vrot.lane.b32.xlu0 %v6083, 96
  %v6764 = vpop.permute.xlu0 %6763
  %6765 = vrot.lane.b32.xlu0 %v6084, 96
  %v6766 = vpop.permute.xlu0 %6765
  %6767 = vrot.lane.b32.xlu0 %v6085, 96
  %v6768 = vpop.permute.xlu0 %6767
  %6769 = vrot.lane.b32.xlu0 %v6086, 96
  %v6770 = vpop.permute.xlu0 %6769
  %6771 = vrot.lane.b32.xlu0 %v6087, 96
  %v6772 = vpop.permute.xlu0 %6771
  %6773 = vrot.lane.b32.xlu0 %v6088, 96
  %v6774 = vpop.permute.xlu0 %6773
  %6775 = vrot.lane.b32.xlu0 %v6089, 96
  %v6776 = vpop.permute.xlu0 %6775
  %6777 = vrot.lane.b32.xlu0 %v6090, 96
  %v6778 = vpop.permute.xlu0 %6777
  %6779 = vrot.lane.b32.xlu0 %v6091, 96
  %v6780 = vpop.permute.xlu0 %6779
  %6781 = vrot.lane.b32.xlu0 %v6092, 96
  %v6782 = vpop.permute.xlu0 %6781
  %6783 = vrot.lane.b32.xlu0 %v6093, 96
  %v6784 = vpop.permute.xlu0 %6783
  %6785 = vrot.lane.b32.xlu0 %v6094, 96
  %v6786 = vpop.permute.xlu0 %6785
  %6787 = vrot.lane.b32.xlu0 %v6095, 96
  %v6788 = vpop.permute.xlu0 %6787
  %6789 = vrot.lane.b32.xlu0 %v6096, 96
  %v6790 = vpop.permute.xlu0 %6789
  %6791 = vrot.lane.b32.xlu0 %v6097, 96
  %v6792 = vpop.permute.xlu0 %6791
  %6793 = vrot.lane.b32.xlu0 %v6098, 96
  %v6794 = vpop.permute.xlu0 %6793
  %6795 = vrot.lane.b32.xlu0 %v6099, 96
  %v6796 = vpop.permute.xlu0 %6795
  %6797 = vrot.lane.b32.xlu0 %v6100, 96
  %v6798 = vpop.permute.xlu0 %6797
  %6799 = vrot.lane.b32.xlu0 %v6101, 96
  %v6800 = vpop.permute.xlu0 %6799
  %6801 = vrot.lane.b32.xlu0 %v6102, 96
  %v6802 = vpop.permute.xlu0 %6801
  %6803 = vrot.lane.b32.xlu0 %v6103, 96
  %v6804 = vpop.permute.xlu0 %6803
  %6805 = vrot.lane.b32.xlu0 %v6104, 96
  %v6806 = vpop.permute.xlu0 %6805
  %6807 = vrot.lane.b32.xlu0 %v6105, 96
  %v6808 = vpop.permute.xlu0 %6807
  %6809 = vrot.lane.b32.xlu0 %v6106, 96
  %v6810 = vpop.permute.xlu0 %6809
  %v6875 = vsel %vm4427, %v5851, %v6172
  %v6876 = vsel %vm4427, %v5852, %v6174
  %v6877 = vsel %vm4427, %v5853, %v6176
  %v6878 = vsel %vm4427, %v5854, %v6178
  %v6879 = vsel %vm4427, %v5855, %v6180
  %v6880 = vsel %vm4427, %v5856, %v6182
  %v6881 = vsel %vm4427, %v5857, %v6184
  %v6882 = vsel %vm4427, %v5858, %v6186
  %v6883 = vsel %vm4427, %v5859, %v6188
  %v6884 = vsel %vm4427, %v5860, %v6190
  %v6885 = vsel %vm4427, %v5861, %v6192
  %v6886 = vsel %vm4427, %v5862, %v6194
  %v6887 = vsel %vm4427, %v5863, %v6196
  %v6888 = vsel %vm4427, %v5864, %v6198
  %v6889 = vsel %vm4427, %v5865, %v6200
  %v6890 = vsel %vm4427, %v5866, %v6202
  %v6891 = vsel %vm4427, %v5867, %v6204
  %v6892 = vsel %vm4427, %v5868, %v6206
  %v6893 = vsel %vm4427, %v5869, %v6208
  %v6894 = vsel %vm4427, %v5870, %v6210
  %v6895 = vsel %vm4427, %v5871, %v6212
  %v6896 = vsel %vm4427, %v5872, %v6214
  %v6897 = vsel %vm4427, %v5873, %v6216
  %v6898 = vsel %vm4427, %v5874, %v6218
  %v6899 = vsel %vm4427, %v5875, %v6220
  %v6900 = vsel %vm4427, %v5876, %v6222
  %v6901 = vsel %vm4427, %v5877, %v6224
  %v6902 = vsel %vm4427, %v5878, %v6226
  %v6903 = vsel %vm4427, %v5879, %v6228
  %v6904 = vsel %vm4427, %v5880, %v6230
  %v6905 = vsel %vm4427, %v5881, %v6232
  %v6906 = vsel %vm4427, %v5882, %v6234
  %v6907 = vsel %vm4427, %v5883, %v6236
  %v6908 = vsel %vm4427, %v5884, %v6238
  %v6909 = vsel %vm4427, %v5885, %v6240
  %v6910 = vsel %vm4427, %v5886, %v6242
  %v6911 = vsel %vm4427, %v5887, %v6244
  %v6912 = vsel %vm4427, %v5888, %v6246
  %v6913 = vsel %vm4427, %v5889, %v6248
  %v6914 = vsel %vm4427, %v5890, %v6250
  %v6915 = vsel %vm4427, %v5891, %v6252
  %v6916 = vsel %vm4427, %v5892, %v6254
  %v6917 = vsel %vm4427, %v5893, %v6256
  %v6918 = vsel %vm4427, %v5894, %v6258
  %v6919 = vsel %vm4427, %v5895, %v6260
  %v6920 = vsel %vm4427, %v5896, %v6262
  %v6921 = vsel %vm4427, %v5897, %v6264
  %v6922 = vsel %vm4427, %v5898, %v6266
  %v6923 = vsel %vm4427, %v5899, %v6268
  %v6924 = vsel %vm4427, %v5900, %v6270
  %v6925 = vsel %vm4427, %v5901, %v6272
  %v6926 = vsel %vm4427, %v5902, %v6274
  %v6927 = vsel %vm4427, %v5903, %v6276
  %v6928 = vsel %vm4427, %v5904, %v6278
  %v6929 = vsel %vm4427, %v5905, %v6280
  %v6930 = vsel %vm4427, %v5906, %v6282
  %v6931 = vsel %vm4427, %v5907, %v6284
  %v6932 = vsel %vm4427, %v5908, %v6286
  %v6933 = vsel %vm4427, %v5909, %v6288
  %v6934 = vsel %vm4427, %v5910, %v6290
  %v6935 = vsel %vm4427, %v5911, %v6292
  %v6936 = vsel %vm4427, %v5912, %v6294
  %v6937 = vsel %vm4427, %v5913, %v6296
  %v6938 = vsel %vm4427, %v5914, %v6298
  %v6939 = vsel %vm92, %v6875, %v6428
  %v6940 = vsel %vm92, %v6876, %v6430
  %v6941 = vsel %vm92, %v6877, %v6432
  %v6942 = vsel %vm92, %v6878, %v6434
  %v6943 = vsel %vm92, %v6879, %v6436
  %v6944 = vsel %vm92, %v6880, %v6438
  %v6945 = vsel %vm92, %v6881, %v6440
  %v6946 = vsel %vm92, %v6882, %v6442
  %v6947 = vsel %vm92, %v6883, %v6444
  %v6948 = vsel %vm92, %v6884, %v6446
  %v6949 = vsel %vm92, %v6885, %v6448
  %v6950 = vsel %vm92, %v6886, %v6450
  %v6951 = vsel %vm92, %v6887, %v6452
  %v6952 = vsel %vm92, %v6888, %v6454
  %v6953 = vsel %vm92, %v6889, %v6456
  %v6954 = vsel %vm92, %v6890, %v6458
  %v6955 = vsel %vm92, %v6891, %v6460
  %v6956 = vsel %vm92, %v6892, %v6462
  %v6957 = vsel %vm92, %v6893, %v6464
  %v6958 = vsel %vm92, %v6894, %v6466
  %v6959 = vsel %vm92, %v6895, %v6468
  %v6960 = vsel %vm92, %v6896, %v6470
  %v6961 = vsel %vm92, %v6897, %v6472
  %v6962 = vsel %vm92, %v6898, %v6474
  %v6963 = vsel %vm92, %v6899, %v6476
  %v6964 = vsel %vm92, %v6900, %v6478
  %v6965 = vsel %vm92, %v6901, %v6480
  %v6966 = vsel %vm92, %v6902, %v6482
  %v6967 = vsel %vm92, %v6903, %v6484
  %v6968 = vsel %vm92, %v6904, %v6486
  %v6969 = vsel %vm92, %v6905, %v6488
  %v6970 = vsel %vm92, %v6906, %v6490
  %v6971 = vsel %vm92, %v6907, %v6492
  %v6972 = vsel %vm92, %v6908, %v6494
  %v6973 = vsel %vm92, %v6909, %v6496
  %v6974 = vsel %vm92, %v6910, %v6498
  %v6975 = vsel %vm92, %v6911, %v6500
  %v6976 = vsel %vm92, %v6912, %v6502
  %v6977 = vsel %vm92, %v6913, %v6504
  %v6978 = vsel %vm92, %v6914, %v6506
  %v6979 = vsel %vm92, %v6915, %v6508
  %v6980 = vsel %vm92, %v6916, %v6510
  %v6981 = vsel %vm92, %v6917, %v6512
  %v6982 = vsel %vm92, %v6918, %v6514
  %v6983 = vsel %vm92, %v6919, %v6516
  %v6984 = vsel %vm92, %v6920, %v6518
  %v6985 = vsel %vm92, %v6921, %v6520
  %v6986 = vsel %vm92, %v6922, %v6522
  %v6987 = vsel %vm92, %v6923, %v6524
  %v6988 = vsel %vm92, %v6924, %v6526
  %v6989 = vsel %vm92, %v6925, %v6528
  %v6990 = vsel %vm92, %v6926, %v6530
  %v6991 = vsel %vm92, %v6927, %v6532
  %v6992 = vsel %vm92, %v6928, %v6534
  %v6993 = vsel %vm92, %v6929, %v6536
  %v6994 = vsel %vm92, %v6930, %v6538
  %v6995 = vsel %vm92, %v6931, %v6540
  %v6996 = vsel %vm92, %v6932, %v6542
  %v6997 = vsel %vm92, %v6933, %v6544
  %v6998 = vsel %vm92, %v6934, %v6546
  %v6999 = vsel %vm92, %v6935, %v6548
  %v7000 = vsel %vm92, %v6936, %v6550
  %v7001 = vsel %vm92, %v6937, %v6552
  %v7002 = vsel %vm92, %v6938, %v6554
  %v7003 = vsel %vm5738, %v6939, %v6684
  %v7004 = vsel %vm5738, %v6940, %v6686
  %v7005 = vsel %vm5738, %v6941, %v6688
  %v7006 = vsel %vm5738, %v6942, %v6690
  %v7007 = vsel %vm5738, %v6943, %v6692
  %v7008 = vsel %vm5738, %v6944, %v6694
  %v7009 = vsel %vm5738, %v6945, %v6696
  %v7010 = vsel %vm5738, %v6946, %v6698
  %v7011 = vsel %vm5738, %v6947, %v6700
  %v7012 = vsel %vm5738, %v6948, %v6702
  %v7013 = vsel %vm5738, %v6949, %v6704
  %v7014 = vsel %vm5738, %v6950, %v6706
  %v7015 = vsel %vm5738, %v6951, %v6708
  %v7016 = vsel %vm5738, %v6952, %v6710
  %v7017 = vsel %vm5738, %v6953, %v6712
  %v7018 = vsel %vm5738, %v6954, %v6714
  %v7019 = vsel %vm5738, %v6955, %v6716
  %v7020 = vsel %vm5738, %v6956, %v6718
  %v7021 = vsel %vm5738, %v6957, %v6720
  %v7022 = vsel %vm5738, %v6958, %v6722
  %v7023 = vsel %vm5738, %v6959, %v6724
  %v7024 = vsel %vm5738, %v6960, %v6726
  %v7025 = vsel %vm5738, %v6961, %v6728
  %v7026 = vsel %vm5738, %v6962, %v6730
  %v7027 = vsel %vm5738, %v6963, %v6732
  %v7028 = vsel %vm5738, %v6964, %v6734
  %v7029 = vsel %vm5738, %v6965, %v6736
  %v7030 = vsel %vm5738, %v6966, %v6738
  %v7031 = vsel %vm5738, %v6967, %v6740
  %v7032 = vsel %vm5738, %v6968, %v6742
  %v7033 = vsel %vm5738, %v6969, %v6744
  %v7034 = vsel %vm5738, %v6970, %v6746
  %v7035 = vsel %vm5738, %v6971, %v6748
  %v7036 = vsel %vm5738, %v6972, %v6750
  %v7037 = vsel %vm5738, %v6973, %v6752
  %v7038 = vsel %vm5738, %v6974, %v6754
  %v7039 = vsel %vm5738, %v6975, %v6756
  %v7040 = vsel %vm5738, %v6976, %v6758
  %v7041 = vsel %vm5738, %v6977, %v6760
  %v7042 = vsel %vm5738, %v6978, %v6762
  %v7043 = vsel %vm5738, %v6979, %v6764
  %v7044 = vsel %vm5738, %v6980, %v6766
  %v7045 = vsel %vm5738, %v6981, %v6768
  %v7046 = vsel %vm5738, %v6982, %v6770
  %v7047 = vsel %vm5738, %v6983, %v6772
  %v7048 = vsel %vm5738, %v6984, %v6774
  %v7049 = vsel %vm5738, %v6985, %v6776
  %v7050 = vsel %vm5738, %v6986, %v6778
  %v7051 = vsel %vm5738, %v6987, %v6780
  %v7052 = vsel %vm5738, %v6988, %v6782
  %v7053 = vsel %vm5738, %v6989, %v6784
  %v7054 = vsel %vm5738, %v6990, %v6786
  %v7055 = vsel %vm5738, %v6991, %v6788
  %v7056 = vsel %vm5738, %v6992, %v6790
  %v7057 = vsel %vm5738, %v6993, %v6792
  %v7058 = vsel %vm5738, %v6994, %v6794
  %v7059 = vsel %vm5738, %v6995, %v6796
  %v7060 = vsel %vm5738, %v6996, %v6798
  %v7061 = vsel %vm5738, %v6997, %v6800
  %v7062 = vsel %vm5738, %v6998, %v6802
  %v7063 = vsel %vm5738, %v6999, %v6804
  %v7064 = vsel %vm5738, %v7000, %v6806
  %v7065 = vsel %vm5738, %v7001, %v6808
  %v7066 = vsel %vm5738, %v7002, %v6810
  %v7067 = vpack.c.bf16 %v7004, %v7003
  %v7068 = vpack.c.bf16 %v7006, %v7005
  %v7069 = vpack.c.bf16 %v7008, %v7007
  %v7070 = vpack.c.bf16 %v7010, %v7009
  %v7071 = vpack.c.bf16 %v7012, %v7011
  %v7072 = vpack.c.bf16 %v7014, %v7013
  %v7073 = vpack.c.bf16 %v7016, %v7015
  %v7074 = vpack.c.bf16 %v7018, %v7017
  %v7075 = vpack.c.bf16 %v7020, %v7019
  %v7076 = vpack.c.bf16 %v7022, %v7021
  %v7077 = vpack.c.bf16 %v7024, %v7023
  %v7078 = vpack.c.bf16 %v7026, %v7025
  %v7079 = vpack.c.bf16 %v7028, %v7027
  %v7080 = vpack.c.bf16 %v7030, %v7029
  %v7081 = vpack.c.bf16 %v7032, %v7031
  %v7082 = vpack.c.bf16 %v7034, %v7033
  %v7083 = vpack.c.bf16 %v7036, %v7035
  %v7084 = vpack.c.bf16 %v7038, %v7037
  %v7085 = vpack.c.bf16 %v7040, %v7039
  %v7086 = vpack.c.bf16 %v7042, %v7041
  %v7087 = vpack.c.bf16 %v7044, %v7043
  %v7088 = vpack.c.bf16 %v7046, %v7045
  %v7089 = vpack.c.bf16 %v7048, %v7047
  %v7090 = vpack.c.bf16 %v7050, %v7049
  %v7091 = vpack.c.bf16 %v7052, %v7051
  %v7092 = vpack.c.bf16 %v7054, %v7053
  %v7093 = vpack.c.bf16 %v7056, %v7055
  %v7094 = vpack.c.bf16 %v7058, %v7057
  %v7095 = vpack.c.bf16 %v7060, %v7059
  %v7096 = vpack.c.bf16 %v7062, %v7061
  %v7097 = vpack.c.bf16 %v7064, %v7063
  %v7098 = vpack.c.bf16 %v7066, %v7065
  %s7099 = scalar_lea.vmem %s4, 64
  %v7100 = vld [vmem:[%s7099] sm:$0xf]
  %v7101 = vld [vmem:[%s7099 + $0x4] sm:$0xf]
  %v7102 = vld [vmem:[%s7099 + $0x8] sm:$0xf]
  %v7103 = vld [vmem:[%s7099 + $0xc] sm:$0xf]
  %v7104 = vld [vmem:[%s7099 + $0x10] sm:$0xf]
  %v7105 = vld [vmem:[%s7099 + $0x14] sm:$0xf]
  %v7106 = vld [vmem:[%s7099 + $0x18] sm:$0xf]
  %v7107 = vld [vmem:[%s7099 + $0x1c] sm:$0xf]
  %v7108 = vld [vmem:[%s7099 + $0x20] sm:$0xf]
  %v7109 = vld [vmem:[%s7099 + $0x24] sm:$0xf]
  %v7110 = vld [vmem:[%s7099 + $0x28] sm:$0xf]
  %v7111 = vld [vmem:[%s7099 + $0x2c] sm:$0xf]
  %v7112 = vld [vmem:[%s7099 + $0x30] sm:$0xf]
  %v7113 = vld [vmem:[%s7099 + $0x34] sm:$0xf]
  %v7114 = vld [vmem:[%s7099 + $0x38] sm:$0xf]
  %v7115 = vld [vmem:[%s7099 + $0x3c] sm:$0xf]
  %v7132 = vunpack.c.l.b16 %v7100
  %v7133 = vunpack.c.l.b16 %v7101
  %v7134 = vunpack.c.l.b16 %v7102
  %v7135 = vunpack.c.l.b16 %v7103
  %v7136 = vunpack.c.l.b16 %v7104
  %v7137 = vunpack.c.l.b16 %v7105
  %v7138 = vunpack.c.l.b16 %v7106
  %v7139 = vunpack.c.l.b16 %v7107
  %v7140 = vunpack.c.l.b16 %v7108
  %v7141 = vunpack.c.l.b16 %v7109
  %v7142 = vunpack.c.l.b16 %v7110
  %v7143 = vunpack.c.l.b16 %v7111
  %v7144 = vunpack.c.l.b16 %v7112
  %v7145 = vunpack.c.l.b16 %v7113
  %v7146 = vunpack.c.l.b16 %v7114
  %v7147 = vunpack.c.l.b16 %v7115
  %v7148 = vpack.c.b16 %v7133, %v7132
  %v7149 = vpack.c.b16 %v7135, %v7134
  %v7150 = vpack.c.b16 %v7137, %v7136
  %v7151 = vpack.c.b16 %v7139, %v7138
  %v7152 = vpack.c.b16 %v7141, %v7140
  %v7153 = vpack.c.b16 %v7143, %v7142
  %v7154 = vpack.c.b16 %v7145, %v7144
  %v7155 = vpack.c.b16 %v7147, %v7146
  %7164 = vxpose.xlu0.c.b16.start [1/8] %v7148, 128
  %7165 = vxpose.xlu0.c.b16.cont [2/8] %v7149, 128
  %7166 = vxpose.xlu0.c.b16.cont [3/8] %v7150, 128
  %7167 = vxpose.xlu0.c.b16.cont [4/8] %v7151, 128
  %7168 = vxpose.xlu0.c.b16.cont [5/8] %v7152, 128
  %7169 = vxpose.xlu0.c.b16.cont [6/8] %v7153, 128
  %7170 = vxpose.xlu0.c.b16.cont [7/8] %v7154, 128
  %7171 = vxpose.xlu0.c.b16.end [8/8] %v7155, 128
  %v7172 = vpop.trf.xlu0
  %v7173 = vpop.trf.xlu0
  %v7174 = vpop.trf.xlu0
  %v7175 = vpop.trf.xlu0
  %v7176 = vpop.trf.xlu0
  %v7177 = vpop.trf.xlu0
  %v7178 = vpop.trf.xlu0
  %v7179 = vpop.trf.xlu0
  %7180 = vmatprep.subr.bf16.mxu0 0
  %7181 = vmatpush1.bf16.xpose.msra.mxu0 %v7067
  %7182 = vmatprep.subr.bf16.mxu0 0
  %7183 = vmatpush1.bf16.xpose.msra.mxu0 %v7068
  %7184 = vmatprep.subr.bf16.mxu0 0
  %7185 = vmatpush1.bf16.xpose.msra.mxu0 %v7069
  %7186 = vmatprep.subr.bf16.mxu0 0
  %7187 = vmatpush1.bf16.xpose.msra.mxu0 %v7070
  %7188 = vmatprep.subr.bf16.mxu0 0
  %7189 = vmatpush1.bf16.xpose.msra.mxu0 %v7071
  %7190 = vmatprep.subr.bf16.mxu0 0
  %7191 = vmatpush1.bf16.xpose.msra.mxu0 %v7072
  %7192 = vmatprep.subr.bf16.mxu0 0
  %7193 = vmatpush1.bf16.xpose.msra.mxu0 %v7073
  %7194 = vmatprep.subr.bf16.mxu0 0
  %7195 = vmatpush1.bf16.xpose.msra.mxu0 %v7074
  %7196 = vmatprep.subr.bf16.mxu0 0
  %7197 = vmatpush1.bf16.xpose.msra.mxu0 %v7075
  %7198 = vmatprep.subr.bf16.mxu0 0
  %7199 = vmatpush1.bf16.xpose.msra.mxu0 %v7076
  %7200 = vmatprep.subr.bf16.mxu0 0
  %7201 = vmatpush1.bf16.xpose.msra.mxu0 %v7077
  %7202 = vmatprep.subr.bf16.mxu0 0
  %7203 = vmatpush1.bf16.xpose.msra.mxu0 %v7078
  %7204 = vmatprep.subr.bf16.mxu0 0
  %7205 = vmatpush1.bf16.xpose.msra.mxu0 %v7079
  %7206 = vmatprep.subr.bf16.mxu0 0
  %7207 = vmatpush1.bf16.xpose.msra.mxu0 %v7080
  %7208 = vmatprep.subr.bf16.mxu0 0
  %7209 = vmatpush1.bf16.xpose.msra.mxu0 %v7081
  %7210 = vmatprep.subr.bf16.mxu0 0
  %7211 = vmatpush1.bf16.xpose.msra.mxu0 %v7082
  %7212 = vmatprep.mubr.bf16.mxu0 0
  %7213 = vmatmul.mubr.bf16.gmra.mrb[0].mxu0 %v7172
  %v7214 = vpop.f32.mrb[0].mxu0
  %v7215 = vadd.f32 0.0, %v7214
  %v7216 = vpop.f32.mrb[0].mxu0
  %v7217 = vadd.f32 0.0, %v7216
  %v7218 = vpop.f32.mrb[0].mxu0
  %v7219 = vpop.f32.mrb[0].mxu0
  %7220 = vdwg.mxu0
  %7221 = vmatprep.subr.bf16.mxu0 0
  %7222 = vmatpush1.bf16.xpose.msra.mxu0 %v7083
  %7223 = vmatprep.subr.bf16.mxu0 0
  %7224 = vmatpush1.bf16.xpose.msra.mxu0 %v7084
  %7225 = vmatprep.subr.bf16.mxu0 0
  %7226 = vmatpush1.bf16.xpose.msra.mxu0 %v7085
  %7227 = vmatprep.subr.bf16.mxu0 0
  %7228 = vmatpush1.bf16.xpose.msra.mxu0 %v7086
  %7229 = vmatprep.subr.bf16.mxu0 0
  %7230 = vmatpush1.bf16.xpose.msra.mxu0 %v7087
  %7231 = vmatprep.subr.bf16.mxu0 0
  %7232 = vmatpush1.bf16.xpose.msra.mxu0 %v7088
  %7233 = vmatprep.subr.bf16.mxu0 0
  %7234 = vmatpush1.bf16.xpose.msra.mxu0 %v7089
  %7235 = vmatprep.subr.bf16.mxu0 0
  %7236 = vmatpush1.bf16.xpose.msra.mxu0 %v7090
  %7237 = vmatprep.subr.bf16.mxu0 0
  %7238 = vmatpush1.bf16.xpose.msra.mxu0 %v7091
  %7239 = vmatprep.subr.bf16.mxu0 0
  %7240 = vmatpush1.bf16.xpose.msra.mxu0 %v7092
  %7241 = vmatprep.subr.bf16.mxu0 0
  %7242 = vmatpush1.bf16.xpose.msra.mxu0 %v7093
  %7243 = vmatprep.subr.bf16.mxu0 0
  %7244 = vmatpush1.bf16.xpose.msra.mxu0 %v7094
  %7245 = vmatprep.subr.bf16.mxu0 0
  %7246 = vmatpush1.bf16.xpose.msra.mxu0 %v7095
  %7247 = vmatprep.subr.bf16.mxu0 0
  %7248 = vmatpush1.bf16.xpose.msra.mxu0 %v7096
  %7249 = vmatprep.subr.bf16.mxu0 0
  %7250 = vmatpush1.bf16.xpose.msra.mxu0 %v7097
  %7251 = vmatprep.subr.bf16.mxu0 0
  %7252 = vmatpush1.bf16.xpose.msra.mxu0 %v7098
  %7253 = vmatprep.mubr.bf16.mxu0 0
  %7254 = vmatmul.mubr.bf16.gmra.mrb[0].mxu0 %v7172
  %v7255 = vpop.f32.mrb[0].mxu0
  %v7256 = vadd.f32 0.0, %v7255
  %v7257 = vpop.f32.mrb[0].mxu0
  %v7258 = vadd.f32 0.0, %v7257
  %v7259 = vpop.f32.mrb[0].mxu0
  %v7260 = vpop.f32.mrb[0].mxu0
  %7261 = vdwg.mxu0
  %v7278 = vunpack.c.l.b16 %v5835
  %v7279 = vunpack.c.l.b16 %v5836
  %v7280 = vunpack.c.l.b16 %v5837
  %v7281 = vunpack.c.l.b16 %v5838
  %v7282 = vunpack.c.l.b16 %v5839
  %v7283 = vunpack.c.l.b16 %v5840
  %v7284 = vunpack.c.l.b16 %v5841
  %v7285 = vunpack.c.l.b16 %v5842
  %v7286 = vunpack.c.l.b16 %v5843
  %v7287 = vunpack.c.l.b16 %v5844
  %v7288 = vunpack.c.l.b16 %v5845
  %v7289 = vunpack.c.l.b16 %v5846
  %v7290 = vunpack.c.l.b16 %v5847
  %v7291 = vunpack.c.l.b16 %v5848
  %v7292 = vunpack.c.l.b16 %v5849
  %v7293 = vunpack.c.l.b16 %v5850
  %v7294 = vpack.c.b16 %v7279, %v7278
  %v7295 = vpack.c.b16 %v7281, %v7280
  %v7296 = vpack.c.b16 %v7283, %v7282
  %v7297 = vpack.c.b16 %v7285, %v7284
  %v7298 = vpack.c.b16 %v7287, %v7286
  %v7299 = vpack.c.b16 %v7289, %v7288
  %v7300 = vpack.c.b16 %v7291, %v7290
  %v7301 = vpack.c.b16 %v7293, %v7292
  %7310 = vxpose.xlu0.c.b16.start [1/8] %v7294, 128
  %7311 = vxpose.xlu0.c.b16.cont [2/8] %v7295, 128
  %7312 = vxpose.xlu0.c.b16.cont [3/8] %v7296, 128
  %7313 = vxpose.xlu0.c.b16.cont [4/8] %v7297, 128
  %7314 = vxpose.xlu0.c.b16.cont [5/8] %v7298, 128
  %7315 = vxpose.xlu0.c.b16.cont [6/8] %v7299, 128
  %7316 = vxpose.xlu0.c.b16.cont [7/8] %v7300, 128
  %7317 = vxpose.xlu0.c.b16.end [8/8] %v7301, 128
  %v7318 = vpop.trf.xlu0
  %v7319 = vpop.trf.xlu0
  %v7320 = vpop.trf.xlu0
  %v7321 = vpop.trf.xlu0
  %v7322 = vpop.trf.xlu0
  %v7323 = vpop.trf.xlu0
  %v7324 = vpop.trf.xlu0
  %v7325 = vpop.trf.xlu0
  %7326 = vmatprep.subr.bf16.mxu0 0
  %7327 = vmatpush1.bf16.xpose.msra.mxu0 %v5803
  %7328 = vmatprep.subr.bf16.mxu0 0
  %7329 = vmatpush1.bf16.xpose.msra.mxu0 %v5804
  %7330 = vmatprep.subr.bf16.mxu0 0
  %7331 = vmatpush1.bf16.xpose.msra.mxu0 %v5805
  %7332 = vmatprep.subr.bf16.mxu0 0
  %7333 = vmatpush1.bf16.xpose.msra.mxu0 %v5806
  %7334 = vmatprep.subr.bf16.mxu0 0
  %7335 = vmatpush1.bf16.xpose.msra.mxu0 %v5807
  %7336 = vmatprep.subr.bf16.mxu0 0
  %7337 = vmatpush1.bf16.xpose.msra.mxu0 %v5808
  %7338 = vmatprep.subr.bf16.mxu0 0
  %7339 = vmatpush1.bf16.xpose.msra.mxu0 %v5809
  %7340 = vmatprep.subr.bf16.mxu0 0
  %7341 = vmatpush1.bf16.xpose.msra.mxu0 %v5810
  %7342 = vmatprep.subr.bf16.mxu0 0
  %7343 = vmatpush1.bf16.xpose.msra.mxu0 %v5811
  %7344 = vmatprep.subr.bf16.mxu0 0
  %7345 = vmatpush1.bf16.xpose.msra.mxu0 %v5812
  %7346 = vmatprep.subr.bf16.mxu0 0
  %7347 = vmatpush1.bf16.xpose.msra.mxu0 %v5813
  %7348 = vmatprep.subr.bf16.mxu0 0
  %7349 = vmatpush1.bf16.xpose.msra.mxu0 %v5814
  %7350 = vmatprep.subr.bf16.mxu0 0
  %7351 = vmatpush1.bf16.xpose.msra.mxu0 %v5815
  %7352 = vmatprep.subr.bf16.mxu0 0
  %7353 = vmatpush1.bf16.xpose.msra.mxu0 %v5816
  %7354 = vmatprep.subr.bf16.mxu0 0
  %7355 = vmatpush1.bf16.xpose.msra.mxu0 %v5817
  %7356 = vmatprep.subr.bf16.mxu0 0
  %7357 = vmatpush1.bf16.xpose.msra.mxu0 %v5818
  %7358 = vmatprep.mubr.bf16.mxu0 0
  %7359 = vmatmul.mubr.bf16.gmra.mrb[0].mxu0 %v7318
  %v7360 = vpop.f32.mrb[0].mxu0
  %v7361 = vadd.f32 %v7215, %v7360
  %v7362 = vpop.f32.mrb[0].mxu0
  %v7363 = vadd.f32 %v7217, %v7362
  %v7364 = vpop.f32.mrb[0].mxu0
  %v7365 = vpop.f32.mrb[0].mxu0
  %7366 = vdwg.mxu0
  %7367 = vmatprep.subr.bf16.mxu0 0
  %7368 = vmatpush1.bf16.xpose.msra.mxu0 %v5819
  %7369 = vmatprep.subr.bf16.mxu0 0
  %7370 = vmatpush1.bf16.xpose.msra.mxu0 %v5820
  %7371 = vmatprep.subr.bf16.mxu0 0
  %7372 = vmatpush1.bf16.xpose.msra.mxu0 %v5821
  %7373 = vmatprep.subr.bf16.mxu0 0
  %7374 = vmatpush1.bf16.xpose.msra.mxu0 %v5822
  %7375 = vmatprep.subr.bf16.mxu0 0
  %7376 = vmatpush1.bf16.xpose.msra.mxu0 %v5823
  %7377 = vmatprep.subr.bf16.mxu0 0
  %7378 = vmatpush1.bf16.xpose.msra.mxu0 %v5824
  %7379 = vmatprep.subr.bf16.mxu0 0
  %7380 = vmatpush1.bf16.xpose.msra.mxu0 %v5825
  %7381 = vmatprep.subr.bf16.mxu0 0
  %7382 = vmatpush1.bf16.xpose.msra.mxu0 %v5826
  %7383 = vmatprep.subr.bf16.mxu0 0
  %7384 = vmatpush1.bf16.xpose.msra.mxu0 %v5827
  %7385 = vmatprep.subr.bf16.mxu0 0
  %7386 = vmatpush1.bf16.xpose.msra.mxu0 %v5828
  %7387 = vmatprep.subr.bf16.mxu0 0
  %7388 = vmatpush1.bf16.xpose.msra.mxu0 %v5829
  %7389 = vmatprep.subr.bf16.mxu0 0
  %7390 = vmatpush1.bf16.xpose.msra.mxu0 %v5830
  %7391 = vmatprep.subr.bf16.mxu0 0
  %7392 = vmatpush1.bf16.xpose.msra.mxu0 %v5831
  %7393 = vmatprep.subr.bf16.mxu0 0
  %7394 = vmatpush1.bf16.xpose.msra.mxu0 %v5832
  %7395 = vmatprep.subr.bf16.mxu0 0
  %7396 = vmatpush1.bf16.xpose.msra.mxu0 %v5833
  %7397 = vmatprep.subr.bf16.mxu0 0
  %7398 = vmatpush1.bf16.xpose.msra.mxu0 %v5834
  %7399 = vmatprep.mubr.bf16.mxu0 0
  %7400 = vmatmul.mubr.bf16.gmra.mrb[0].mxu0 %v7318
  %v7401 = vpop.f32.mrb[0].mxu0
  %v7402 = vadd.f32 %v7256, %v7401
  %v7403 = vpop.f32.mrb[0].mxu0
  %v7404 = vadd.f32 %v7258, %v7403
  %v7405 = vpop.f32.mrb[0].mxu0
  %v7406 = vpop.f32.mrb[0].mxu0
  %7407 = vdwg.mxu0
  %v7408 = vld [vmem:[%s4558 + $0x2] sm:$0xff]
  %v7409 = vld [vmem:[%s4558 + $0xa] sm:$0xff]
  %v7410 = vld [vmem:[%s4558 + $0x1a] sm:$0xff]
  %v7411 = vld [vmem:[%s4558 + $0x22] sm:$0xff]
  %v7412 = vld [vmem:[%s4558 + $0x32] sm:$0xff]
  %v7413 = vld [vmem:[%s4558 + $0x3a] sm:$0xff]
  %v7414 = vld [vmem:[%s4558 + $0x4a] sm:$0xff]
  %v7415 = vld [vmem:[%s4558 + $0x52] sm:$0xff]
  %v7416 = vld [vmem:[%s4558 + $0x62] sm:$0xff]
  %v7417 = vld [vmem:[%s4558 + $0x6a] sm:$0xff]
  %v7418 = vld [vmem:[%s4558 + $0x7a] sm:$0xff]
  %v7419 = vld [vmem:[%s4558 + $0x82] sm:$0xff]
  %v7420 = vld [vmem:[%s4558 + $0x92] sm:$0xff]
  %v7421 = vld [vmem:[%s4558 + $0x9a] sm:$0xff]
  %v7422 = vld [vmem:[%s4558 + $0xaa] sm:$0xff]
  %v7423 = vld [vmem:[%s4558 + $0xb2] sm:$0xff]
  %v7424 = vld [vmem:[%s4558 + $0xc2] sm:$0xff]
  %v7425 = vld [vmem:[%s4558 + $0xca] sm:$0xff]
  %v7426 = vld [vmem:[%s4558 + $0xda] sm:$0xff]
  %v7427 = vld [vmem:[%s4558 + $0xe2] sm:$0xff]
  %v7428 = vld [vmem:[%s4558 + $0xf2] sm:$0xff]
  %v7429 = vld [vmem:[%s4558 + $0xfa] sm:$0xff]
  %v7430 = vld [vmem:[%s4558 + $0x10a] sm:$0xff]
  %v7431 = vld [vmem:[%s4558 + $0x112] sm:$0xff]
  %v7432 = vld [vmem:[%s4558 + $0x122] sm:$0xff]
  %v7433 = vld [vmem:[%s4558 + $0x12a] sm:$0xff]
  %v7434 = vld [vmem:[%s4558 + $0x13a] sm:$0xff]
  %v7435 = vld [vmem:[%s4558 + $0x142] sm:$0xff]
  %v7436 = vld [vmem:[%s4558 + $0x152] sm:$0xff]
  %v7437 = vld [vmem:[%s4558 + $0x15a] sm:$0xff]
  %v7438 = vld [vmem:[%s4558 + $0x16a] sm:$0xff]
  %v7439 = vld [vmem:[%s4558 + $0x172] sm:$0xff]
  %v7440 = vld [vmem:[%s4558 + $0x1b2] sm:$0xff]
  %v7441 = vld [vmem:[%s4558 + $0x1ba] sm:$0xff]
  %v7442 = vld [vmem:[%s4558 + $0x1ca] sm:$0xff]
  %v7443 = vld [vmem:[%s4558 + $0x1d2] sm:$0xff]
  %v7444 = vld [vmem:[%s4558 + $0x1e2] sm:$0xff]
  %v7445 = vld [vmem:[%s4558 + $0x1ea] sm:$0xff]
  %v7446 = vld [vmem:[%s4558 + $0x1fa] sm:$0xff]
  %v7447 = vld [vmem:[%s4558 + $0x202] sm:$0xff]
  %v7448 = vld [vmem:[%s4558 + $0x212] sm:$0xff]
  %v7449 = vld [vmem:[%s4558 + $0x21a] sm:$0xff]
  %v7450 = vld [vmem:[%s4558 + $0x22a] sm:$0xff]
  %v7451 = vld [vmem:[%s4558 + $0x232] sm:$0xff]
  %v7452 = vld [vmem:[%s4558 + $0x242] sm:$0xff]
  %v7453 = vld [vmem:[%s4558 + $0x24a] sm:$0xff]
  %v7454 = vld [vmem:[%s4558 + $0x25a] sm:$0xff]
  %v7455 = vld [vmem:[%s4558 + $0x262] sm:$0xff]
  %v7456 = vld [vmem:[%s4558 + $0x272] sm:$0xff]
  %v7457 = vld [vmem:[%s4558 + $0x27a] sm:$0xff]
  %v7458 = vld [vmem:[%s4558 + $0x28a] sm:$0xff]
  %v7459 = vld [vmem:[%s4558 + $0x292] sm:$0xff]
  %v7460 = vld [vmem:[%s4558 + $0x2a2] sm:$0xff]
  %v7461 = vld [vmem:[%s4558 + $0x2aa] sm:$0xff]
  %v7462 = vld [vmem:[%s4558 + $0x2ba] sm:$0xff]
  %v7463 = vld [vmem:[%s4558 + $0x2c2] sm:$0xff]
  %v7464 = vld [vmem:[%s4558 + $0x2d2] sm:$0xff]
  %v7465 = vld [vmem:[%s4558 + $0x2da] sm:$0xff]
  %v7466 = vld [vmem:[%s4558 + $0x2ea] sm:$0xff]
  %v7467 = vld [vmem:[%s4558 + $0x2f2] sm:$0xff]
  %v7468 = vld [vmem:[%s4558 + $0x302] sm:$0xff]
  %v7469 = vld [vmem:[%s4558 + $0x30a] sm:$0xff]
  %v7470 = vld [vmem:[%s4558 + $0x31a] sm:$0xff]
  %v7471 = vld [vmem:[%s4558 + $0x322] sm:$0xff]
  %v7472 = vpack.c.bf16 %v7409, %v7408
  %v7473 = vpack.c.bf16 %v7411, %v7410
  %v7474 = vpack.c.bf16 %v7413, %v7412
  %v7475 = vpack.c.bf16 %v7415, %v7414
  %v7476 = vpack.c.bf16 %v7417, %v7416
  %v7477 = vpack.c.bf16 %v7419, %v7418
  %v7478 = vpack.c.bf16 %v7421, %v7420
  %v7479 = vpack.c.bf16 %v7423, %v7422
  %v7480 = vpack.c.bf16 %v7425, %v7424
  %v7481 = vpack.c.bf16 %v7427, %v7426
  %v7482 = vpack.c.bf16 %v7429, %v7428
  %v7483 = vpack.c.bf16 %v7431, %v7430
  %v7484 = vpack.c.bf16 %v7433, %v7432
  %v7485 = vpack.c.bf16 %v7435, %v7434
  %v7486 = vpack.c.bf16 %v7437, %v7436
  %v7487 = vpack.c.bf16 %v7439, %v7438
  %v7488 = vpack.c.bf16 %v7441, %v7440
  %v7489 = vpack.c.bf16 %v7443, %v7442
  %v7490 = vpack.c.bf16 %v7445, %v7444
  %v7491 = vpack.c.bf16 %v7447, %v7446
  %v7492 = vpack.c.bf16 %v7449, %v7448
  %v7493 = vpack.c.bf16 %v7451, %v7450
  %v7494 = vpack.c.bf16 %v7453, %v7452
  %v7495 = vpack.c.bf16 %v7455, %v7454
  %v7496 = vpack.c.bf16 %v7457, %v7456
  %v7497 = vpack.c.bf16 %v7459, %v7458
  %v7498 = vpack.c.bf16 %v7461, %v7460
  %v7499 = vpack.c.bf16 %v7463, %v7462
  %v7500 = vpack.c.bf16 %v7465, %v7464
  %v7501 = vpack.c.bf16 %v7467, %v7466
  %v7502 = vpack.c.bf16 %v7469, %v7468
  %v7503 = vpack.c.bf16 %v7471, %v7470
  %v7504 = vld [vmem:[%s5] sm:$0xf]
  %v7505 = vld [vmem:[%s5 + $0x4] sm:$0xf]
  %v7506 = vld [vmem:[%s5 + $0x8] sm:$0xf]
  %v7507 = vld [vmem:[%s5 + $0xc] sm:$0xf]
  %v7512 = vunpack.c.l.b16 %v7504
  %v7513 = vunpack.c.l.b16 %v7505
  %v7514 = vunpack.c.l.b16 %v7506
  %v7515 = vunpack.c.l.b16 %v7507
  %v7516 = vpack.c.b16 %v7513, %v7512
  %v7517 = vpack.c.b16 %v7515, %v7514
  %7520 = vxpose.xlu0.c.b16.start [1/8] %v7516, 128
  %7521 = vxpose.xlu0.c.b16.cont [2/8] %v7517, 128
  %7522 = vxpose.xlu0.c.b16.cont [3/8] 0, 128
  %7523 = vxpose.xlu0.c.b16.cont [4/8] 0, 128
  %7524 = vxpose.xlu0.c.b16.cont [5/8] 0, 128
  %7525 = vxpose.xlu0.c.b16.cont [6/8] 0, 128
  %7526 = vxpose.xlu0.c.b16.cont [7/8] 0, 128
  %7527 = vxpose.xlu0.c.b16.end [8/8] 0, 128
  %v7528 = vpop.trf.xlu0
  %v7529 = vpop.trf.xlu0
  %v7530 = vpop.trf.xlu0
  %v7531 = vpop.trf.xlu0
  %v7532 = vpop.trf.xlu0
  %v7533 = vpop.trf.xlu0
  %v7534 = vpop.trf.xlu0
  %v7535 = vpop.trf.xlu0
  %v7537 = vsel %vm4427, %v7528, 0
  %v7540 = vsel %vm4427, %v7472, 0
  %v7543 = vsel %vm4427, %v7473, 0
  %v7546 = vsel %vm4427, %v7474, 0
  %v7549 = vsel %vm4427, %v7475, 0
  %v7552 = vsel %vm4427, %v7476, 0
  %v7555 = vsel %vm4427, %v7477, 0
  %v7558 = vsel %vm4427, %v7478, 0
  %v7561 = vsel %vm4427, %v7479, 0
  %v7564 = vsel %vm4427, %v7480, 0
  %v7567 = vsel %vm4427, %v7481, 0
  %v7570 = vsel %vm4427, %v7482, 0
  %v7573 = vsel %vm4427, %v7483, 0
  %v7576 = vsel %vm4427, %v7484, 0
  %v7579 = vsel %vm4427, %v7485, 0
  %v7582 = vsel %vm4427, %v7486, 0
  %v7585 = vsel %vm4427, %v7487, 0
  %v7588 = vsel %vm4427, %v7488, 0
  %v7591 = vsel %vm4427, %v7489, 0
  %v7594 = vsel %vm4427, %v7490, 0
  %v7597 = vsel %vm4427, %v7491, 0
  %v7600 = vsel %vm4427, %v7492, 0
  %v7603 = vsel %vm4427, %v7493, 0
  %v7606 = vsel %vm4427, %v7494, 0
  %v7609 = vsel %vm4427, %v7495, 0
  %v7612 = vsel %vm4427, %v7496, 0
  %v7615 = vsel %vm4427, %v7497, 0
  %v7618 = vsel %vm4427, %v7498, 0
  %v7621 = vsel %vm4427, %v7499, 0
  %v7624 = vsel %vm4427, %v7500, 0
  %v7627 = vsel %vm4427, %v7501, 0
  %v7630 = vsel %vm4427, %v7502, 0
  %v7633 = vsel %vm4427, %v7503, 0
  %7635 = vmatprep.subr.bf16.mxu0 0
  %7636 = vmatpush1.bf16.xpose.msra.mxu0 %v7540
  %7637 = vmatprep.subr.bf16.mxu0 0
  %7638 = vmatpush1.bf16.xpose.msra.mxu0 %v7543
  %7639 = vmatprep.subr.bf16.mxu0 0
  %7640 = vmatpush1.bf16.xpose.msra.mxu0 %v7546
  %7641 = vmatprep.subr.bf16.mxu0 0
  %7642 = vmatpush1.bf16.xpose.msra.mxu0 %v7549
  %7643 = vmatprep.subr.bf16.mxu0 0
  %7644 = vmatpush1.bf16.xpose.msra.mxu0 %v7552
  %7645 = vmatprep.subr.bf16.mxu0 0
  %7646 = vmatpush1.bf16.xpose.msra.mxu0 %v7555
  %7647 = vmatprep.subr.bf16.mxu0 0
  %7648 = vmatpush1.bf16.xpose.msra.mxu0 %v7558
  %7649 = vmatprep.subr.bf16.mxu0 0
  %7650 = vmatpush1.bf16.xpose.msra.mxu0 %v7561
  %7651 = vmatprep.subr.bf16.mxu0 0
  %7652 = vmatpush1.bf16.xpose.msra.mxu0 %v7564
  %7653 = vmatprep.subr.bf16.mxu0 0
  %7654 = vmatpush1.bf16.xpose.msra.mxu0 %v7567
  %7655 = vmatprep.subr.bf16.mxu0 0
  %7656 = vmatpush1.bf16.xpose.msra.mxu0 %v7570
  %7657 = vmatprep.subr.bf16.mxu0 0
  %7658 = vmatpush1.bf16.xpose.msra.mxu0 %v7573
  %7659 = vmatprep.subr.bf16.mxu0 0
  %7660 = vmatpush1.bf16.xpose.msra.mxu0 %v7576
  %7661 = vmatprep.subr.bf16.mxu0 0
  %7662 = vmatpush1.bf16.xpose.msra.mxu0 %v7579
  %7663 = vmatprep.subr.bf16.mxu0 0
  %7664 = vmatpush1.bf16.xpose.msra.mxu0 %v7582
  %7665 = vmatprep.subr.bf16.mxu0 0
  %7666 = vmatpush1.bf16.xpose.msra.mxu0 %v7585
  %7667 = vmatprep.mubr.bf16.mxu0 0
  %7668 = vmatmul.mubr.bf16.gmra.mrb[0].mxu0 %v7537
  %v7669 = vpop.f32.mrb[0].mxu0
  %v7670 = vadd.f32 0.0, %v7669
  %v7671 = vpop.f32.mrb[0].mxu0
  %v7672 = vadd.f32 0.0, %v7671
  %v7673 = vpop.f32.mrb[0].mxu0
  %v7674 = vpop.f32.mrb[0].mxu0
  %7675 = vdwg.mxu0
  %7676 = vmatprep.subr.bf16.mxu0 0
  %7677 = vmatpush1.bf16.xpose.msra.mxu0 %v7588
  %7678 = vmatprep.subr.bf16.mxu0 0
  %7679 = vmatpush1.bf16.xpose.msra.mxu0 %v7591
  %7680 = vmatprep.subr.bf16.mxu0 0
  %7681 = vmatpush1.bf16.xpose.msra.mxu0 %v7594
  %7682 = vmatprep.subr.bf16.mxu0 0
  %7683 = vmatpush1.bf16.xpose.msra.mxu0 %v7597
  %7684 = vmatprep.subr.bf16.mxu0 0
  %7685 = vmatpush1.bf16.xpose.msra.mxu0 %v7600
  %7686 = vmatprep.subr.bf16.mxu0 0
  %7687 = vmatpush1.bf16.xpose.msra.mxu0 %v7603
  %7688 = vmatprep.subr.bf16.mxu0 0
  %7689 = vmatpush1.bf16.xpose.msra.mxu0 %v7606
  %7690 = vmatprep.subr.bf16.mxu0 0
  %7691 = vmatpush1.bf16.xpose.msra.mxu0 %v7609
  %7692 = vmatprep.subr.bf16.mxu0 0
  %7693 = vmatpush1.bf16.xpose.msra.mxu0 %v7612
  %7694 = vmatprep.subr.bf16.mxu0 0
  %7695 = vmatpush1.bf16.xpose.msra.mxu0 %v7615
  %7696 = vmatprep.subr.bf16.mxu0 0
  %7697 = vmatpush1.bf16.xpose.msra.mxu0 %v7618
  %7698 = vmatprep.subr.bf16.mxu0 0
  %7699 = vmatpush1.bf16.xpose.msra.mxu0 %v7621
  %7700 = vmatprep.subr.bf16.mxu0 0
  %7701 = vmatpush1.bf16.xpose.msra.mxu0 %v7624
  %7702 = vmatprep.subr.bf16.mxu0 0
  %7703 = vmatpush1.bf16.xpose.msra.mxu0 %v7627
  %7704 = vmatprep.subr.bf16.mxu0 0
  %7705 = vmatpush1.bf16.xpose.msra.mxu0 %v7630
  %7706 = vmatprep.subr.bf16.mxu0 0
  %7707 = vmatpush1.bf16.xpose.msra.mxu0 %v7633
  %7708 = vmatprep.mubr.bf16.mxu0 0
  %7709 = vmatmul.mubr.bf16.gmra.mrb[0].mxu0 %v7537
  %v7710 = vpop.f32.mrb[0].mxu0
  %v7711 = vadd.f32 0.0, %v7710
  %v7712 = vpop.f32.mrb[0].mxu0
  %v7713 = vadd.f32 0.0, %v7712
  %v7714 = vpop.f32.mrb[0].mxu0
  %v7715 = vpop.f32.mrb[0].mxu0
  %7716 = vdwg.mxu0
  %v7717 = vadd.f32 %v7361, %v7670
  %v7718 = vadd.f32 %v7363, %v7672
  %v7719 = vadd.f32 %v7402, %v7711
  %v7720 = vadd.f32 %v7404, %v7713
  %v7721 = vld [vmem:[%s6] sm:$0x3]
  %7723 = vset.pattern.permute.xlu0 0
  %7724 = vperm.xlu0 %7723, %v7721
  %v7725 = vpop.permute.xlu0 %7724
  %v7727 = vadd.f32 %v7717, %v7725
  %v7728 = vadd.f32 %v7718, %v7725
  %v7729 = vadd.f32 %v7719, %v7725
  %v7730 = vadd.f32 %v7720, %v7725
  %v7735 = vcombine.low %v7727, %v7728
  %v7736 = vcombine.low %v7729, %v7730
  %v7738 = vunpack.c.l.s4 1983009808
  %v7739 = vunpack.c.0.s8 %v7738
  %v7740 = vlaneseq
  %v7741 = vshrl.u32 %v7740, 7
  %v7742 = vsub.s32 %v7739, %v7741
  %v7743 = vrot.slane %v7735, %v7742
  %v7745 = vunpack.c.l.s4 1983009808
  %v7746 = vunpack.c.0.s8 %v7745
  %v7747 = vlaneseq
  %v7748 = vshrl.u32 %v7747, 7
  %v7749 = vsub.s32 %v7746, %v7748
  %v7750 = vrot.slane %v7736, %v7749
  %v7751 = vcombine.low %v7743, %v7750
  %7753 = vst [vmem:[%s7] sm:$0xff] %v7751
  // Predicated region
  $region30: #{flow_predictor_forward.1} parent=0 // pred_check
    _
  $region31: #{flow_predictor_forward.1} parent=0 // pred_check_branch
    %7755 = sbr.rel (0) target = $region33
  $region32: #{flow_predictor_forward.1} parent=0 // pred_region
    _
  $region33: #{flow_predictor_forward.1} parent=0 // pred_fallthru
    _
  // Predicated region
  $region34: #{flow_predictor_forward.1} parent=0 // pred_check
    _
  $region35: #{flow_predictor_forward.1} parent=0 // pred_check_branch
    %7757 = sbr.rel (0) target = $region37
  $region36: #{flow_predictor_forward.1} parent=0 // pred_region
    _
  $region37: #{flow_predictor_forward.1} parent=0 // pred_fallthru
    _

</llo_original>
